<compile_context>
chip_gen: v6e
topology: v6e:2x2x1
jax: 0.10.0
libtpu: 0.0.40
codegen_flags: <defaults>
</compile_context>

<pallas_src>
import functools

import jax
import jax.numpy as jnp
from jax.experimental import pallas as pl
from jax.experimental.pallas import tpu as pltpu


# ----------------------------------------------------------------------------
# Model constants (EfficientNet-B3 head sizes) + padded layouts
# ----------------------------------------------------------------------------
NUM_FEATURES = 1536   # efficientnet_b3.num_features
STEM_CH = 40          # efficientnet_b3 stem width
STEM_PAD = 64         # stem channels padded for clean MXU/lane layout
K_REAL = 27           # 3 * 3 * 3 im2col contraction
K_PAD = 32            # padded contraction dim
HIDDEN = 256
NUM_CLASSES = 2
CLASS_PAD = 128       # lane-dense padded class dim for the final store


def _round_up(x, m):
    return (x + m - 1) // m * m


# ----------------------------------------------------------------------------
# Fused kernel:
#   stem conv 3x3/s2 (as matmul, BN folded) + SiLU
#   -> conv_head 1x1 -> 1536 (as matmul, BN folded) + SiLU
#   -> global-average-pool accumulation (row-tile reduction)
#   -> on the last tile: fc head (Linear -> ReLU -> Dropout(id) -> Linear) to padded logits.
# Grid: (B, num_row_tiles).  Row-tile axis is a reduction into a per-batch pooled
# accumulator; only padded logits [B,1,CLASS_PAD] leave the kernel.
# ----------------------------------------------------------------------------
def _fused_kernel(cols_ref, ws_ref, bs_ref, wc_ref, bc_ref,
                  w1_ref, b1_ref, w2_ref, b2_ref,
                  out_ref, acc_ref, *, hw, tr):
    r = pl.program_id(1)

    @pl.when(r == 0)
    def _():
        acc_ref[...] = jnp.zeros_like(acc_ref)

    x = cols_ref[0]                                                      # [tr, K_PAD] bf16

    # stem conv as matmul (BN scale pre-folded into weights) + SiLU -- stays in VMEM/registers
    stem = jnp.dot(x, ws_ref[...], preferred_element_type=jnp.float32)   # [tr, STEM_PAD] f32
    stem = stem + bs_ref[...]
    stem = stem * jax.nn.sigmoid(stem)                                   # SiLU

    # conv_head 1x1 to 1536 (BN scale pre-folded) + SiLU
    feat = jnp.dot(stem.astype(jnp.bfloat16), wc_ref[...],
                   preferred_element_type=jnp.float32)                   # [tr, NF] f32
    feat = feat + bc_ref[...]
    feat = feat * jax.nn.sigmoid(feat)

    # mask rows past the real spatial extent (ragged last tile)
    if hw % tr != 0:
        row = r * tr + jax.lax.broadcasted_iota(jnp.int32, (tr, 1), 0)
        feat = jnp.where(row < hw, feat, 0.0)

    # accumulate global-average-pool partial sums
    acc_ref[...] += jnp.sum(feat, axis=0, keepdims=True)                 # [1, NF]

    @pl.when(r == pl.num_programs(1) - 1)
    def _():
        pooled = acc_ref[...] * (1.0 / float(hw))                        # [1, NF] f32
        # fc head: Linear(1536,256) -> ReLU -> Dropout(0.2, eval=identity) -> Linear(256, CLASS_PAD)
        h = jnp.dot(pooled, w1_ref[...], preferred_element_type=jnp.float32) + b1_ref[...]
        h = jnp.maximum(h, 0.0)
        logits = jnp.dot(h, w2_ref[...], preferred_element_type=jnp.float32) + b2_ref[...]
        out_ref[...] = logits[None]                                      # [1, 1, CLASS_PAD]


def backbone_head_forward(cols, stem_w, stem_b, convhead_w, convhead_b,
                          fc1_w, fc1_b, fc2_w, fc2_b, *, hw, tr):
    """cols: [B, HW_pad, K_PAD] bf16 -> padded logits [B, 1, CLASS_PAD] f32."""
    B, HW_pad, Kp = cols.shape
    SP = stem_w.shape[1]
    NF = convhead_w.shape[1]
    H1 = fc1_w.shape[1]
    NCP = fc2_w.shape[1]
    n_r = HW_pad // tr
    grid = (B, n_r)

    flops = (2 * B * HW_pad * (Kp * SP + SP * NF)
             + 2 * B * (NF * H1 + H1 * NCP))
    transcendentals = B * HW_pad * (SP + NF)                 # sigmoid per activation
    bytes_accessed = (cols.size * 2 + stem_w.size * 2 + convhead_w.size * 2
                      + (stem_b.size + convhead_b.size) * 4
                      + (fc1_w.size + fc1_b.size + fc2_w.size + fc2_b.size) * 4
                      + B * NCP * 4)

    return pl.pallas_call(
        functools.partial(_fused_kernel, hw=hw, tr=tr),
        out_shape=jax.ShapeDtypeStruct((B, 1, NCP), jnp.float32),
        grid_spec=pltpu.PrefetchScalarGridSpec(
            num_scalar_prefetch=0,
            grid=grid,
            in_specs=[
                pl.BlockSpec((1, tr, Kp), lambda b, r: (b, r, 0)),
                pl.BlockSpec((Kp, SP), lambda b, r: (0, 0)),
                pl.BlockSpec((1, SP), lambda b, r: (0, 0)),
                pl.BlockSpec((SP, NF), lambda b, r: (0, 0)),
                pl.BlockSpec((1, NF), lambda b, r: (0, 0)),
                pl.BlockSpec((NF, H1), lambda b, r: (0, 0)),
                pl.BlockSpec((1, H1), lambda b, r: (0, 0)),
                pl.BlockSpec((H1, NCP), lambda b, r: (0, 0)),
                pl.BlockSpec((1, NCP), lambda b, r: (0, 0)),
            ],
            out_specs=pl.BlockSpec((1, 1, NCP), lambda b, r: (b, 0, 0)),
            scratch_shapes=[pltpu.VMEM((1, NF), jnp.float32)],
        ),
        compiler_params=pltpu.CompilerParams(
            dimension_semantics=("parallel", "arbitrary"),
            vmem_limit_bytes=32 * 1024 * 1024,
        ),
        cost_estimate=pl.CostEstimate(flops=flops,
                                      transcendentals=transcendentals,
                                      bytes_accessed=bytes_accessed),
    )(cols, stem_w, stem_b, convhead_w, convhead_b, fc1_w, fc1_b, fc2_w, fc2_b)


# ----------------------------------------------------------------------------
# Glue: im2col for the stem 3x3 stride-2 conv (NCHW input) -> [B, Ho*Wo, C*9]
# ----------------------------------------------------------------------------
def im2col(x, k, stride, pad):
    B, C, H, W = x.shape
    xp = jnp.pad(x, ((0, 0), (0, 0), (pad, pad), (pad, pad)))
    Ho = (H + 2 * pad - k) // stride + 1
    Wo = (W + 2 * pad - k) // stride + 1
    cols = []
    for i in range(k):
        for j in range(k):
            cols.append(xp[:, :, i:i + stride * Ho:stride, j:j + stride * Wo:stride])  # [B,C,Ho,Wo]
    cols = jnp.stack(cols, axis=2)                             # [B, C, k*k, Ho, Wo]
    cols = cols.transpose(0, 3, 4, 1, 2).reshape(B, Ho * Wo, C * k * k)
    return cols, Ho, Wo


# ----------------------------------------------------------------------------
# Parameter setup (deterministic, synthetic); padded, BN-folded, bf16 conv weights for the MXU
# ----------------------------------------------------------------------------
def init_params(key):
    ks = jax.random.split(key, 4)

    def dense(k, fan_in, shape):
        return jax.random.normal(k, shape, jnp.float32) / jnp.sqrt(jnp.float32(fan_in))

    eps = 1e-3
    bn_scale = 1.0 / jnp.sqrt(1.0 + eps)  # gamma=1, var=1, mean=0, beta=0 folded into weights
    # TODO(synk): real checkpoints need gamma/sqrt(var+eps) folded into the conv weights and
    #             beta - mean*scale folded into the biases below.

    # stem conv 3x3, 3 -> 40 (im2col weight layout [Cin*k*k, Cout]) padded to [32, 64]
    stem_w = dense(ks[0], K_REAL, (K_REAL, STEM_CH)) * bn_scale
    stem_w = jnp.pad(stem_w, ((0, K_PAD - K_REAL), (0, STEM_PAD - STEM_CH)))
    stem_b = jnp.zeros((1, STEM_PAD), jnp.float32)

    # conv_head 1x1, 40 -> 1536, padded input rows to 64 (zeros -> padding is exact)
    convhead_w = dense(ks[1], STEM_CH, (STEM_CH, NUM_FEATURES)) * bn_scale
    convhead_w = jnp.pad(convhead_w, ((0, STEM_PAD - STEM_CH), (0, 0)))
    convhead_b = jnp.zeros((1, NUM_FEATURES), jnp.float32)

    # fc head: Linear(1536, 256) -> ReLU -> Dropout -> Linear(256, 2) (class dim padded to 128)
    fc1_w = dense(ks[2], NUM_FEATURES, (NUM_FEATURES, HIDDEN))
    fc1_b = jnp.zeros((1, HIDDEN), jnp.float32)
    fc2_w = dense(ks[3], HIDDEN, (HIDDEN, NUM_CLASSES))
    fc2_w = jnp.pad(fc2_w, ((0, 0), (0, CLASS_PAD - NUM_CLASSES)))
    fc2_b = jnp.zeros((1, CLASS_PAD), jnp.float32)

    return {
        "stem_w": stem_w.astype(jnp.bfloat16),
        "stem_b": stem_b,
        "convhead_w": convhead_w.astype(jnp.bfloat16),
        "convhead_b": convhead_b,
        "fc1_w": fc1_w,
        "fc1_b": fc1_b,
        "fc2_w": fc2_w,
        "fc2_b": fc2_b,
    }


# ----------------------------------------------------------------------------
# Full forward pass
# ----------------------------------------------------------------------------
@jax.jit
def cable_attribute_forward(x, params):
    B = x.shape[0]
    # backbone.forward_features(x): stem conv + BN + SiLU, then 1x1 conv_head + BN + SiLU,
    # fused with AdaptiveAvgPool2d((1,1)) + flatten + fc head in a single Pallas kernel.
    # TODO(synk): MBConv stages of EfficientNet-B3 omitted (no clean compact Pallas equivalent here).
    cols, Ho, Wo = im2col(x, k=3, stride=2, pad=1)                    # [B, Ho*Wo, 27]
    HW = Ho * Wo
    K = cols.shape[-1]
    cols = jnp.pad(cols, ((0, 0), (0, 0), (0, K_PAD - K)))            # K 27 -> 32

    tr = min(512, _round_up(HW, 8))                                   # row tile (spatial positions)
    HW_pad = pl.cdiv(HW, tr) * tr
    if HW_pad != HW:
        cols = jnp.pad(cols, ((0, 0), (0, HW_pad - HW), (0, 0)))
    cols = cols.astype(jnp.bfloat16)

    logits = backbone_head_forward(cols,
                                   params["stem_w"], params["stem_b"],
                                   params["convhead_w"], params["convhead_b"],
                                   params["fc1_w"], params["fc1_b"],
                                   params["fc2_w"], params["fc2_b"],
                                   hw=HW, tr=tr)                      # [B, 1, CLASS_PAD]
    return logits.reshape(B, CLASS_PAD)[:, :NUM_CLASSES]


if __name__ == "__main__":
    key = jax.random.PRNGKey(0)
    k_x, k_p = jax.random.split(key)
    x = jax.random.normal(k_x, (2, 3, 32, 32), jnp.float32)  # NCHW, small image
    params = init_params(k_p)

    out = cable_attribute_forward(x, params)
    out = jax.block_until_ready(out)
    assert out.shape == (2, 2) and out.dtype == jnp.float32
    assert bool(jnp.all(jnp.isfinite(out)))
    print("KERNEL_OK")
</pallas_src>

<mosaic_0001>
module attributes {stable_mosaic.version = 11 : i64} {
  func.func @_fused_kernel(%arg0: i32, %arg1: i32, %arg2: memref<1x256x32xbf16, #tpu.memory_space<vmem>>, %arg3: memref<32x64xbf16, #tpu.memory_space<vmem>>, %arg4: memref<1x64xf32, #tpu.memory_space<vmem>>, %arg5: memref<64x1536xbf16, #tpu.memory_space<vmem>>, %arg6: memref<1x1536xf32, #tpu.memory_space<vmem>>, %arg7: memref<1536x256xf32, #tpu.memory_space<vmem>>, %arg8: memref<1x256xf32, #tpu.memory_space<vmem>>, %arg9: memref<256x128xf32, #tpu.memory_space<vmem>>, %arg10: memref<1x128xf32, #tpu.memory_space<vmem>>, %arg11: memref<1x1x128xf32, #tpu.memory_space<vmem>>, %arg12: memref<1x1536xf32, #tpu.memory_space<vmem>>) attributes {dimension_semantics = [#tpu.dimension_semantics<parallel>, #tpu.dimension_semantics<arbitrary>], iteration_bounds = array<i64: 2, 1>, scalar_prefetch = 0 : i64, scratch_operands = 1 : i64, tpu.core_type = #tpu.core_type<tc>, window_params = [{transform_indices = @transform_0, window_bounds = array<i64: 1, 256, 32>}, {pipeline_mode = #tpu.pipeline_mode<synchronous>, transform_indices = @transform_1, window_bounds = array<i64: 32, 64>}, {pipeline_mode = #tpu.pipeline_mode<synchronous>, transform_indices = @transform_2, window_bounds = array<i64: 1, 64>}, {pipeline_mode = #tpu.pipeline_mode<synchronous>, transform_indices = @transform_3, window_bounds = array<i64: 64, 1536>}, {pipeline_mode = #tpu.pipeline_mode<synchronous>, transform_indices = @transform_4, window_bounds = array<i64: 1, 1536>}, {pipeline_mode = #tpu.pipeline_mode<synchronous>, transform_indices = @transform_5, window_bounds = array<i64: 1536, 256>}, {pipeline_mode = #tpu.pipeline_mode<synchronous>, transform_indices = @transform_6, window_bounds = array<i64: 1, 256>}, {pipeline_mode = #tpu.pipeline_mode<synchronous>, transform_indices = @transform_7, window_bounds = array<i64: 256, 128>}, {pipeline_mode = #tpu.pipeline_mode<synchronous>, transform_indices = @transform_8, window_bounds = array<i64: 1, 128>}, {transform_indices = @transform_9, window_bounds = array<i64: 1, 1, 128>}]} {
    %c0_i32 = arith.constant 0 : i32
    %0 = arith.cmpi eq, %arg1, %c0_i32 : i32
    %1 = arith.extui %0 : i1 to i32
    %c0_i32_0 = arith.constant 0 : i32
    %2 = arith.cmpi ne, %1, %c0_i32_0 : i32
    scf.if %2 {
      %cst_21 = arith.constant 0.000000e+00 : f32
      %36 = vector.broadcast %cst_21 : f32 to vector<1x1536xf32>
      %c0_22 = arith.constant 0 : index
      %c0_23 = arith.constant 0 : index
      %37 = vector.load %arg12[%c0_22, %c0_23] : memref<1x1536xf32, #tpu.memory_space<vmem>>, vector<1x1536xf32>
      tpu.vector_store %arg12[%c0_22, %c0_23], %36 {strides = array<i32>} : memref<1x1536xf32, #tpu.memory_space<vmem>>, vector<1x1536xf32>,
    } else {
    }
    %c0 = arith.constant 0 : index
    %c0_1 = arith.constant 0 : index
    %c0_2 = arith.constant 0 : index
    %3 = vector.load %arg2[%c0, %c0_1, %c0_2] : memref<1x256x32xbf16, #tpu.memory_space<vmem>>, vector<1x256x32xbf16>
    %4 = vector.shape_cast %3 : vector<1x256x32xbf16> to vector<256x32xbf16>
    %c0_3 = arith.constant 0 : index
    %c0_4 = arith.constant 0 : index
    %5 = vector.load %arg3[%c0_3, %c0_4] : memref<32x64xbf16, #tpu.memory_space<vmem>>, vector<32x64xbf16>
    %cst = arith.constant dense<0.000000e+00> : vector<256x64xf32>
    %6 = tpu.matmul %4, %5, %cst {dimension_numbers = #tpu.dot_dimension_numbers<[1], [0], [0], [1], [0, 0, 1, 1], [], []>} : vector<256x32xbf16>, vector<32x64xbf16>, vector<256x64xf32> -> vector<256x64xf32>
    %c0_5 = arith.constant 0 : index
    %c0_6 = arith.constant 0 : index
    %7 = vector.load %arg4[%c0_5, %c0_6] : memref<1x64xf32, #tpu.memory_space<vmem>>, vector<1x64xf32>
    %8 = vector.broadcast %7 : vector<1x64xf32> to vector<256x64xf32>
    %9 = arith.addf %6, %8 : vector<256x64xf32>
    %10 = arith.negf %9 : vector<256x64xf32>
    %11 = math.exp %10 : vector<256x64xf32>
    %cst_7 = arith.constant 1.000000e+00 : f32
    %12 = vector.broadcast %cst_7 : f32 to vector<256x64xf32>
    %13 = arith.addf %12, %11 : vector<256x64xf32>
    %14 = arith.divf %12, %13 : vector<256x64xf32>
    %15 = arith.mulf %9, %14 : vector<256x64xf32>
    %16 = arith.truncf %15 : vector<256x64xf32> to vector<256x64xbf16>
    %c0_8 = arith.constant 0 : index
    %c0_9 = arith.constant 0 : index
    %17 = vector.load %arg5[%c0_8, %c0_9] : memref<64x1536xbf16, #tpu.memory_space<vmem>>, vector<64x1536xbf16>
    %cst_10 = arith.constant dense<0.000000e+00> : vector<256x1536xf32>
    %18 = tpu.matmul %16, %17, %cst_10 {dimension_numbers = #tpu.dot_dimension_numbers<[1], [0], [0], [1], [0, 0, 1, 1], [], []>} : vector<256x64xbf16>, vector<64x1536xbf16>, vector<256x1536xf32> -> vector<256x1536xf32>
    %c0_11 = arith.constant 0 : index
    %c0_12 = arith.constant 0 : index
    %19 = vector.load %arg6[%c0_11, %c0_12] : memref<1x1536xf32, #tpu.memory_space<vmem>>, vector<1x1536xf32>
    %20 = vector.broadcast %19 : vector<1x1536xf32> to vector<256x1536xf32>
    %21 = arith.addf %18, %20 : vector<256x1536xf32>
    %22 = arith.negf %21 : vector<256x1536xf32>
    %23 = math.exp %22 : vector<256x1536xf32>
    %cst_13 = arith.constant 1.000000e+00 : f32
    %24 = vector.broadcast %cst_13 : f32 to vector<256x1536xf32>
    %25 = arith.addf %24, %23 : vector<256x1536xf32>
    %26 = arith.divf %24, %25 : vector<256x1536xf32>
    %27 = arith.mulf %21, %26 : vector<256x1536xf32>
    %c0_14 = arith.constant 0 : index
    %c0_15 = arith.constant 0 : index
    %28 = vector.load %arg12[%c0_14, %c0_15] : memref<1x1536xf32, #tpu.memory_space<vmem>>, vector<1x1536xf32>
    %cst_16 = arith.constant dense<0.000000e+00> : vector<1536xf32>
    %29 = vector.multi_reduction <add>, %27, %cst_16 [0] : vector<256x1536xf32> to vector<1536xf32>
    %30 = vector.shape_cast %29 : vector<1536xf32> to vector<1x1536xf32>
    %31 = arith.addf %28, %30 : vector<1x1536xf32>
    %c0_17 = arith.constant 0 : index
    %c0_18 = arith.constant 0 : index
    %32 = vector.load %arg12[%c0_17, %c0_18] : memref<1x1536xf32, #tpu.memory_space<vmem>>, vector<1x1536xf32>
    tpu.vector_store %arg12[%c0_17, %c0_18], %31 {strides = array<i32>} : memref<1x1536xf32, #tpu.memory_space<vmem>>, vector<1x1536xf32>,
    %c0_i32_19 = arith.constant 0 : i32
    %33 = arith.cmpi eq, %arg1, %c0_i32_19 : i32
    %34 = arith.extui %33 : i1 to i32
    %c0_i32_20 = arith.constant 0 : i32
    %35 = arith.cmpi ne, %34, %c0_i32_20 : i32
    scf.if %35 {
      %c0_21 = arith.constant 0 : index
      %c0_22 = arith.constant 0 : index
      %36 = vector.load %arg12[%c0_21, %c0_22] : memref<1x1536xf32, #tpu.memory_space<vmem>>, vector<1x1536xf32>
      %cst_23 = arith.constant 3.906250e-03 : f32
      %37 = vector.broadcast %cst_23 : f32 to vector<1x1536xf32>
      %38 = arith.mulf %36, %37 : vector<1x1536xf32>
      %c0_24 = arith.constant 0 : index
      %c0_25 = arith.constant 0 : index
      %39 = vector.load %arg7[%c0_24, %c0_25] : memref<1536x256xf32, #tpu.memory_space<vmem>>, vector<1536x256xf32>
      %cst_26 = arith.constant dense<0.000000e+00> : vector<1x256xf32>
      %40 = tpu.matmul %38, %39, %cst_26 {dimension_numbers = #tpu.dot_dimension_numbers<[1], [0], [0], [1], [0, 0, 1, 1], [], []>} : vector<1x1536xf32>, vector<1536x256xf32>, vector<1x256xf32> -> vector<1x256xf32>
      %c0_27 = arith.constant 0 : index
      %c0_28 = arith.constant 0 : index
      %41 = vector.load %arg8[%c0_27, %c0_28] : memref<1x256xf32, #tpu.memory_space<vmem>>, vector<1x256xf32>
      %42 = arith.addf %40, %41 : vector<1x256xf32>
      %cst_29 = arith.constant 0.000000e+00 : f32
      %43 = vector.broadcast %cst_29 : f32 to vector<1x256xf32>
      %44 = arith.maximumf %42, %43 : vector<1x256xf32>
      %c0_30 = arith.constant 0 : index
      %c0_31 = arith.constant 0 : index
      %45 = vector.load %arg9[%c0_30, %c0_31] : memref<256x128xf32, #tpu.memory_space<vmem>>, vector<256x128xf32>
      %cst_32 = arith.constant dense<0.000000e+00> : vector<1x128xf32>
      %46 = tpu.matmul %44, %45, %cst_32 {dimension_numbers = #tpu.dot_dimension_numbers<[1], [0], [0], [1], [0, 0, 1, 1], [], []>} : vector<1x256xf32>, vector<256x128xf32>, vector<1x128xf32> -> vector<1x128xf32>
      %c0_33 = arith.constant 0 : index
      %c0_34 = arith.constant 0 : index
      %47 = vector.load %arg10[%c0_33, %c0_34] : memref<1x128xf32, #tpu.memory_space<vmem>>, vector<1x128xf32>
      %48 = arith.addf %46, %47 : vector<1x128xf32>
      %49 = vector.shape_cast %48 : vector<1x128xf32> to vector<1x1x128xf32>
      %c0_35 = arith.constant 0 : index
      %c0_36 = arith.constant 0 : index
      %c0_37 = arith.constant 0 : index
      %50 = vector.load %arg11[%c0_35, %c0_36, %c0_37] : memref<1x1x128xf32, #tpu.memory_space<vmem>>, vector<1x1x128xf32>
      tpu.vector_store %arg11[%c0_35, %c0_36, %c0_37], %49 {strides = array<i32>} : memref<1x1x128xf32, #tpu.memory_space<vmem>>, vector<1x1x128xf32>,
    } else {
    }
    return
  }
  func.func @transform_0(%arg0: i32, %arg1: i32) -> (i32, i32, i32) {
    %c0_i32 = arith.constant 0 : i32
    %c0_i32_0 = arith.constant 0 : i32
    return %arg0, %arg1, %c0_i32 : i32, i32, i32
  }
  func.func @transform_1(%arg0: i32, %arg1: i32) -> (i32, i32) {
    %c0_i32 = arith.constant 0 : i32
    %c0_i32_0 = arith.constant 0 : i32
    %c0_i32_1 = arith.constant 0 : i32
    return %c0_i32, %c0_i32_0 : i32, i32
  }
  func.func @transform_2(%arg0: i32, %arg1: i32) -> (i32, i32) {
    %c0_i32 = arith.constant 0 : i32
    %c0_i32_0 = arith.constant 0 : i32
    %c0_i32_1 = arith.constant 0 : i32
    return %c0_i32, %c0_i32_0 : i32, i32
  }
  func.func @transform_3(%arg0: i32, %arg1: i32) -> (i32, i32) {
    %c0_i32 = arith.constant 0 : i32
    %c0_i32_0 = arith.constant 0 : i32
    %c0_i32_1 = arith.constant 0 : i32
    return %c0_i32, %c0_i32_0 : i32, i32
  }
  func.func @transform_4(%arg0: i32, %arg1: i32) -> (i32, i32) {
    %c0_i32 = arith.constant 0 : i32
    %c0_i32_0 = arith.constant 0 : i32
    %c0_i32_1 = arith.constant 0 : i32
    return %c0_i32, %c0_i32_0 : i32, i32
  }
  func.func @transform_5(%arg0: i32, %arg1: i32) -> (i32, i32) {
    %c0_i32 = arith.constant 0 : i32
    %c0_i32_0 = arith.constant 0 : i32
    %c0_i32_1 = arith.constant 0 : i32
    return %c0_i32, %c0_i32_0 : i32, i32
  }
  func.func @transform_6(%arg0: i32, %arg1: i32) -> (i32, i32) {
    %c0_i32 = arith.constant 0 : i32
    %c0_i32_0 = arith.constant 0 : i32
    %c0_i32_1 = arith.constant 0 : i32
    return %c0_i32, %c0_i32_0 : i32, i32
  }
  func.func @transform_7(%arg0: i32, %arg1: i32) -> (i32, i32) {
    %c0_i32 = arith.constant 0 : i32
    %c0_i32_0 = arith.constant 0 : i32
    %c0_i32_1 = arith.constant 0 : i32
    return %c0_i32, %c0_i32_0 : i32, i32
  }
  func.func @transform_8(%arg0: i32, %arg1: i32) -> (i32, i32) {
    %c0_i32 = arith.constant 0 : i32
    %c0_i32_0 = arith.constant 0 : i32
    %c0_i32_1 = arith.constant 0 : i32
    return %c0_i32, %c0_i32_0 : i32, i32
  }
  func.func @transform_9(%arg0: i32, %arg1: i32) -> (i32, i32, i32) {
    %c0_i32 = arith.constant 0 : i32
    %c0_i32_0 = arith.constant 0 : i32
    %c0_i32_1 = arith.constant 0 : i32
    return %arg0, %c0_i32, %c0_i32_0 : i32, i32, i32
  }
}

</mosaic_0001>

<llo_original>
// kernel: cable_attribute_forward.1
$region0: #{cable_attribute_forward.1}
  #allocation0 [shape = 'u32[]', space=smem, size = 0x4, offset = 0x4, fixed_abs, tag = 'smem constant byte address 0x4 - core index']
  #allocation1 [shape = 'u32[144,128]{1,0:T(1,128)}', space=vmem, size = 0x12000, scoped, tag = 'internal scratch']
  #allocation2 [shape = 'f32[1,1536]{1,0:T(1,128)}', space=vmem, size = 0x1800, scoped, tag = 'scratch operand']
  %s0 = inlined_call_operand.vmem [shape: bf16[2,256,32], index: 0, kind: input, shape index: {}]
  %s1 = inlined_call_operand.vmem [shape: bf16[32,64], index: 1, kind: input, shape index: {}]
  %s2 = inlined_call_operand.vmem [shape: f32[1,64], index: 2, kind: input, shape index: {}]
  %s3 = inlined_call_operand.vmem [shape: bf16[64,1536], index: 3, kind: input, shape index: {}]
  %s4 = inlined_call_operand.vmem [shape: f32[1,1536], index: 4, kind: input, shape index: {}]
  %s5 = inlined_call_operand.vmem [shape: f32[1536,256], index: 5, kind: input, shape index: {}]
  %s6 = inlined_call_operand.vmem [shape: f32[1,256], index: 6, kind: input, shape index: {}]
  %s7 = inlined_call_operand.vmem [shape: f32[256,128], index: 7, kind: input, shape index: {}]
  %s8 = inlined_call_operand.vmem [shape: f32[1,128], index: 8, kind: input, shape index: {}]
  %s9 = inlined_call_operand.hbm [shape: f32[2,1,128], index: 9, kind: output, shape index: {}]
  %s10 = sld [smem:[#allocation0]]
  $region77: #{cable_attribute_forward.1} parent=0
    _
  %s12 = ssub.s32 1, %s10
  %s13 = scalar_select 0, %s12, %s10
  $region1: #{cable_attribute_forward.1} parent=0
    #allocation3 [shape = 'u8[1024]{0}', space=vmem, size = 0x400, scoped, tag = 'output window, operand 0']
    #allocation4 [shape = 's32[2]{0}', space=sflag, size = 0x8, scoped, tag = 'scoped memory for cable_attribute_forward.1']
    %14 = vsyncpa [#allocation4], 0
    %s15 = scalar_lea.sflag [#allocation4], 1
    %16 = vsyncpa %s15, 0
    loop: start=0, step=1, limit=4
    $region2: #{cable_attribute_forward.1} parent=1 // loop_pre_header
      _
    $region3: #{cable_attribute_forward.1} parent=1 // loop_header
      %s18 = sphi 0, %s22
      %p19 = scmp.ge.s32.totalorder %s18, 4
      %s25 = sphi 0, %s37
      %s26 = sphi 0, %s33
      %s27 = sphi 0, %s25
      %s28 = sphi 0, %s26
      %s29 = sphi 0, %s27
      %s30 = sphi 0, %s28
      %s42 = sphi 0, %s44
      %s45 = sphi 0, %s42
      %s46 = sphi 0, %s45
      %s62 = sphi 0, %s46
      %s66 = sphi 0, %s66
      %s68 = sphi 0, %s66
      %s69 = sphi 0, %s68
      %s83 = sphi 0, %s69
      %s87 = sphi 0, %s87
      %s89 = sphi 0, %s87
      %s90 = sphi 0, %s89
      %s104 = sphi 0, %s90
      %s108 = sphi 0, %s108
      %s110 = sphi 0, %s108
      %s111 = sphi 0, %s110
      %s125 = sphi 0, %s111
      %s129 = sphi 0, %s129
      %s131 = sphi 0, %s129
      %s132 = sphi 0, %s131
      %s146 = sphi 0, %s132
      %s150 = sphi 0, %s150
      %s152 = sphi 0, %s150
      %s153 = sphi 0, %s152
      %s167 = sphi 0, %s153
      %s171 = sphi 0, %s171
      %s173 = sphi 0, %s171
      %s174 = sphi 0, %s173
      %s188 = sphi 0, %s174
      %s192 = sphi 0, %s192
      %s194 = sphi 0, %s192
      %s195 = sphi 0, %s194
      %s209 = sphi 0, %s195
      %s213 = sphi 0, %s213
      %s215 = sphi 0, %s213
      %s216 = sphi 0, %s215
      %s230 = sphi 0, %s216
      %s236 = sphi 0, %s238
      %s239 = sphi 0, %s236
      %s240 = sphi 0, %s239
      %s256 = sphi 0, %s240
    $region4: #{cable_attribute_forward.1} parent=1 // loop_header_branch
      %21 = sbr.rel (%p19) target = $region8
    $region5: #{cable_attribute_forward.1} parent=1 // loop_body
      %s23 = ssub.s32 %s18, 1
      %s24 = ssub.s32 %s18, 2
      %s31 = sadd.s32 1, %s26
      %p32 = scmp.ge.s32.totalorder %s31, 1
      %s33 = scalar_select %p32, 0, %s31
      %s34 = sadd.s32 1, %s25
      %s35 = scalar_select %p32, %s34, %s25
      %p36 = scmp.ge.s32.totalorder %s35, 2
      %s37 = scalar_select %p36, 0, %s35
      %s38 = ssub.s32 %s25, %s37
      %s39 = ssub.s32 %s26, %s33
      %s40 = sor.u32 %s38, %s39
      %p41 = scmp.eq.s32.totalorder %s40, 0
      %s43 = sadd.s32 %s42, 1
      %s44 = scalar_select %p41, %s42, %s43
      %p47 = pneg %p41
      %p48 = scmp.eq.s32.totalorder %s18, 1
      %p49 = por %p47, %p48
      %p50 = scmp.ne.s32.totalorder %s42, %s45
      %p51 = scmp.eq.s32.totalorder %s18, 0
      %p52 = por %p50, %p51
      %p53 = scmp.ne.s32.totalorder %s42, %s45
      %p54 = scmp.eq.s32.totalorder %s23, 1
      %p55 = por %p53, %p54
      %p56 = scmp.ne.s32.totalorder %s45, %s46
      %p57 = scmp.eq.s32.totalorder %s23, 0
      %p58 = por %p56, %p57
      %p59 = scmp.ne.s32.totalorder %s45, %s46
      %p60 = scmp.eq.s32.totalorder %s24, 1
      %p61 = por %p59, %p60
      %p63 = scmp.ne.s32.totalorder %s46, %s62
      %p64 = scmp.eq.s32.totalorder %s24, 0
      %p65 = por %p63, %p64
      %s67 = sadd.s32 %s66, 1
      %p70 = scmp.eq.s32.totalorder %s18, 1
      %p71 = scmp.ne.s32.totalorder %s66, %s68
      %p72 = scmp.eq.s32.totalorder %s18, 0
      %p73 = por %p71, %p72
      %p74 = scmp.ne.s32.totalorder %s66, %s68
      %p75 = scmp.eq.s32.totalorder %s23, 1
      %p76 = por %p74, %p75
      %p77 = scmp.ne.s32.totalorder %s68, %s69
      %p78 = scmp.eq.s32.totalorder %s23, 0
      %p79 = por %p77, %p78
      %p80 = scmp.ne.s32.totalorder %s68, %s69
      %p81 = scmp.eq.s32.totalorder %s24, 1
      %p82 = por %p80, %p81
      %p84 = scmp.ne.s32.totalorder %s69, %s83
      %p85 = scmp.eq.s32.totalorder %s24, 0
      %p86 = por %p84, %p85
      %s88 = sadd.s32 %s87, 1
      %p91 = scmp.eq.s32.totalorder %s18, 1
      %p92 = scmp.ne.s32.totalorder %s87, %s89
      %p93 = scmp.eq.s32.totalorder %s18, 0
      %p94 = por %p92, %p93
      %p95 = scmp.ne.s32.totalorder %s87, %s89
      %p96 = scmp.eq.s32.totalorder %s23, 1
      %p97 = por %p95, %p96
      %p98 = scmp.ne.s32.totalorder %s89, %s90
      %p99 = scmp.eq.s32.totalorder %s23, 0
      %p100 = por %p98, %p99
      %p101 = scmp.ne.s32.totalorder %s89, %s90
      %p102 = scmp.eq.s32.totalorder %s24, 1
      %p103 = por %p101, %p102
      %p105 = scmp.ne.s32.totalorder %s90, %s104
      %p106 = scmp.eq.s32.totalorder %s24, 0
      %p107 = por %p105, %p106
      %s109 = sadd.s32 %s108, 1
      %p112 = scmp.eq.s32.totalorder %s18, 1
      %p113 = scmp.ne.s32.totalorder %s108, %s110
      %p114 = scmp.eq.s32.totalorder %s18, 0
      %p115 = por %p113, %p114
      %p116 = scmp.ne.s32.totalorder %s108, %s110
      %p117 = scmp.eq.s32.totalorder %s23, 1
      %p118 = por %p116, %p117
      %p119 = scmp.ne.s32.totalorder %s110, %s111
      %p120 = scmp.eq.s32.totalorder %s23, 0
      %p121 = por %p119, %p120
      %p122 = scmp.ne.s32.totalorder %s110, %s111
      %p123 = scmp.eq.s32.totalorder %s24, 1
      %p124 = por %p122, %p123
      %p126 = scmp.ne.s32.totalorder %s111, %s125
      %p127 = scmp.eq.s32.totalorder %s24, 0
      %p128 = por %p126, %p127
      %s130 = sadd.s32 %s129, 1
      %p133 = scmp.eq.s32.totalorder %s18, 1
      %p134 = scmp.ne.s32.totalorder %s129, %s131
      %p135 = scmp.eq.s32.totalorder %s18, 0
      %p136 = por %p134, %p135
      %p137 = scmp.ne.s32.totalorder %s129, %s131
      %p138 = scmp.eq.s32.totalorder %s23, 1
      %p139 = por %p137, %p138
      %p140 = scmp.ne.s32.totalorder %s131, %s132
      %p141 = scmp.eq.s32.totalorder %s23, 0
      %p142 = por %p140, %p141
      %p143 = scmp.ne.s32.totalorder %s131, %s132
      %p144 = scmp.eq.s32.totalorder %s24, 1
      %p145 = por %p143, %p144
      %p147 = scmp.ne.s32.totalorder %s132, %s146
      %p148 = scmp.eq.s32.totalorder %s24, 0
      %p149 = por %p147, %p148
      %s151 = sadd.s32 %s150, 1
      %p154 = scmp.eq.s32.totalorder %s18, 1
      %p155 = scmp.ne.s32.totalorder %s150, %s152
      %p156 = scmp.eq.s32.totalorder %s18, 0
      %p157 = por %p155, %p156
      %p158 = scmp.ne.s32.totalorder %s150, %s152
      %p159 = scmp.eq.s32.totalorder %s23, 1
      %p160 = por %p158, %p159
      %p161 = scmp.ne.s32.totalorder %s152, %s153
      %p162 = scmp.eq.s32.totalorder %s23, 0
      %p163 = por %p161, %p162
      %p164 = scmp.ne.s32.totalorder %s152, %s153
      %p165 = scmp.eq.s32.totalorder %s24, 1
      %p166 = por %p164, %p165
      %p168 = scmp.ne.s32.totalorder %s153, %s167
      %p169 = scmp.eq.s32.totalorder %s24, 0
      %p170 = por %p168, %p169
      %s172 = sadd.s32 %s171, 1
      %p175 = scmp.eq.s32.totalorder %s18, 1
      %p176 = scmp.ne.s32.totalorder %s171, %s173
      %p177 = scmp.eq.s32.totalorder %s18, 0
      %p178 = por %p176, %p177
      %p179 = scmp.ne.s32.totalorder %s171, %s173
      %p180 = scmp.eq.s32.totalorder %s23, 1
      %p181 = por %p179, %p180
      %p182 = scmp.ne.s32.totalorder %s173, %s174
      %p183 = scmp.eq.s32.totalorder %s23, 0
      %p184 = por %p182, %p183
      %p185 = scmp.ne.s32.totalorder %s173, %s174
      %p186 = scmp.eq.s32.totalorder %s24, 1
      %p187 = por %p185, %p186
      %p189 = scmp.ne.s32.totalorder %s174, %s188
      %p190 = scmp.eq.s32.totalorder %s24, 0
      %p191 = por %p189, %p190
      %s193 = sadd.s32 %s192, 1
      %p196 = scmp.eq.s32.totalorder %s18, 1
      %p197 = scmp.ne.s32.totalorder %s192, %s194
      %p198 = scmp.eq.s32.totalorder %s18, 0
      %p199 = por %p197, %p198
      %p200 = scmp.ne.s32.totalorder %s192, %s194
      %p201 = scmp.eq.s32.totalorder %s23, 1
      %p202 = por %p200, %p201
      %p203 = scmp.ne.s32.totalorder %s194, %s195
      %p204 = scmp.eq.s32.totalorder %s23, 0
      %p205 = por %p203, %p204
      %p206 = scmp.ne.s32.totalorder %s194, %s195
      %p207 = scmp.eq.s32.totalorder %s24, 1
      %p208 = por %p206, %p207
      %p210 = scmp.ne.s32.totalorder %s195, %s209
      %p211 = scmp.eq.s32.totalorder %s24, 0
      %p212 = por %p210, %p211
      %s214 = sadd.s32 %s213, 1
      %p217 = scmp.eq.s32.totalorder %s18, 1
      %p218 = scmp.ne.s32.totalorder %s213, %s215
      %p219 = scmp.eq.s32.totalorder %s18, 0
      %p220 = por %p218, %p219
      %p221 = scmp.ne.s32.totalorder %s213, %s215
      %p222 = scmp.eq.s32.totalorder %s23, 1
      %p223 = por %p221, %p222
      %p224 = scmp.ne.s32.totalorder %s215, %s216
      %p225 = scmp.eq.s32.totalorder %s23, 0
      %p226 = por %p224, %p225
      %p227 = scmp.ne.s32.totalorder %s215, %s216
      %p228 = scmp.eq.s32.totalorder %s24, 1
      %p229 = por %p227, %p228
      %p231 = scmp.ne.s32.totalorder %s216, %s230
      %p232 = scmp.eq.s32.totalorder %s24, 0
      %p233 = por %p231, %p232
      %s234 = ssub.s32 %s25, %s37
      %p235 = scmp.eq.s32.totalorder %s234, 0
      %s237 = sadd.s32 %s236, 1
      %s238 = scalar_select %p235, %s236, %s237
      %p241 = pneg %p235
      %p242 = scmp.eq.s32.totalorder %s18, 1
      %p243 = por %p241, %p242
      %p244 = scmp.ne.s32.totalorder %s236, %s239
      %p245 = scmp.eq.s32.totalorder %s18, 0
      %p246 = por %p244, %p245
      %p247 = scmp.ne.s32.totalorder %s236, %s239
      %p248 = scmp.eq.s32.totalorder %s23, 1
      %p249 = por %p247, %p248
      %p250 = scmp.ne.s32.totalorder %s239, %s240
      %p251 = scmp.eq.s32.totalorder %s23, 0
      %p252 = por %p250, %p251
      %p253 = scmp.ne.s32.totalorder %s239, %s240
      %p254 = scmp.eq.s32.totalorder %s24, 1
      %p255 = por %p253, %p254
      %p257 = scmp.ne.s32.totalorder %s240, %s256
      %p258 = scmp.eq.s32.totalorder %s24, 0
      %p259 = por %p257, %p258
      %p260 = scmp.le.s32.totalorder 1, %s18
      %p261 = scmp.lt.s32.totalorder %s18, 3
      %p262 = pnand %p260, %p261
      %p263 = pneg %p262
      // Predicated region
      $region9: #{cable_attribute_forward.1} parent=5 // pred_check
        _
      $region10: #{cable_attribute_forward.1} parent=5 // pred_check_branch
        %265 = sbr.rel (%p262) target = $region12
      $region11: #{cable_attribute_forward.1} parent=5 // pred_region
        %s266 = ssub.s32 %s18, 1
        // Predicated region
        $region13: #{cable_attribute_forward.1} parent=11 // pred_check
          %p267 = pneg %p79
        $region14: #{cable_attribute_forward.1} parent=11 // pred_check_branch
          %269 = sbr.rel (%p267) target = $region16
        $region15: #{cable_attribute_forward.1} parent=11 // pred_region
          _
        $region16: #{cable_attribute_forward.1} parent=11 // pred_fallthru
          _
        // Predicated region
        $region17: #{cable_attribute_forward.1} parent=11 // pred_check
          %p270 = pneg %p100
        $region18: #{cable_attribute_forward.1} parent=11 // pred_check_branch
          %272 = sbr.rel (%p270) target = $region20
        $region19: #{cable_attribute_forward.1} parent=11 // pred_region
          _
        $region20: #{cable_attribute_forward.1} parent=11 // pred_fallthru
          _
        // Predicated region
        $region21: #{cable_attribute_forward.1} parent=11 // pred_check
          %p273 = pneg %p121
        $region22: #{cable_attribute_forward.1} parent=11 // pred_check_branch
          %275 = sbr.rel (%p273) target = $region24
        $region23: #{cable_attribute_forward.1} parent=11 // pred_region
          _
        $region24: #{cable_attribute_forward.1} parent=11 // pred_fallthru
          _
        // Predicated region
        $region25: #{cable_attribute_forward.1} parent=11 // pred_check
          %p276 = pneg %p142
        $region26: #{cable_attribute_forward.1} parent=11 // pred_check_branch
          %278 = sbr.rel (%p276) target = $region28
        $region27: #{cable_attribute_forward.1} parent=11 // pred_region
          _
        $region28: #{cable_attribute_forward.1} parent=11 // pred_fallthru
          _
        // Predicated region
        $region29: #{cable_attribute_forward.1} parent=11 // pred_check
          %p279 = pneg %p163
        $region30: #{cable_attribute_forward.1} parent=11 // pred_check_branch
          %281 = sbr.rel (%p279) target = $region32
        $region31: #{cable_attribute_forward.1} parent=11 // pred_region
          _
        $region32: #{cable_attribute_forward.1} parent=11 // pred_fallthru
          _
        // Predicated region
        $region33: #{cable_attribute_forward.1} parent=11 // pred_check
          %p282 = pneg %p184
        $region34: #{cable_attribute_forward.1} parent=11 // pred_check_branch
          %284 = sbr.rel (%p282) target = $region36
        $region35: #{cable_attribute_forward.1} parent=11 // pred_region
          _
        $region36: #{cable_attribute_forward.1} parent=11 // pred_fallthru
          _
        // Predicated region
        $region37: #{cable_attribute_forward.1} parent=11 // pred_check
          %p285 = pneg %p205
        $region38: #{cable_attribute_forward.1} parent=11 // pred_check_branch
          %287 = sbr.rel (%p285) target = $region40
        $region39: #{cable_attribute_forward.1} parent=11 // pred_region
          _
        $region40: #{cable_attribute_forward.1} parent=11 // pred_fallthru
          _
        // Predicated region
        $region41: #{cable_attribute_forward.1} parent=11 // pred_check
          %p288 = pneg %p226
        $region42: #{cable_attribute_forward.1} parent=11 // pred_check_branch
          %290 = sbr.rel (%p288) target = $region44
        $region43: #{cable_attribute_forward.1} parent=11 // pred_region
          _
        $region44: #{cable_attribute_forward.1} parent=11 // pred_fallthru
          _
      $region12: #{cable_attribute_forward.1} parent=5 // pred_fallthru
        _
      %p291 = scmp.lt.s32.totalorder %s18, 2
      // Predicated region
      $region45: #{cable_attribute_forward.1} parent=5 // pred_check
        %p292 = pneg %p291
      $region46: #{cable_attribute_forward.1} parent=5 // pred_check_branch
        %294 = sbr.rel (%p292) target = $region48
      $region47: #{cable_attribute_forward.1} parent=5 // pred_region
        // Predicated region
        $region49: #{cable_attribute_forward.1} parent=47 // pred_check
          %p295 = pneg %p52
        $region50: #{cable_attribute_forward.1} parent=47 // pred_check_branch
          %297 = sbr.rel (%p295) target = $region52
        $region51: #{cable_attribute_forward.1} parent=47 // pred_region
          %s298 = smul.u32 32, %s26
          %p299 = scmp.lt.s32.totalorder %s25, 1
          %s300 = scalar_select %p299, %s25, 1
          %p301 = scmp.lt.s32.totalorder %s298, 31
          %s302 = scalar_select %p301, %s298, 31
          %s303 = smul.addr %s300, 32
          %s304 = sadd.s32 %s302, %s303
          %s305 = smul.addr %s304, 4
          %s306 = scalar_lea.vmem %s0, %s305
          %s307 = smul.u32 32, %s26
        $region52: #{cable_attribute_forward.1} parent=47 // pred_fallthru
          _
      $region48: #{cable_attribute_forward.1} parent=5 // pred_fallthru
        _
      %p308 = scmp.le.s32.totalorder 1, %s18
      %p309 = scmp.lt.s32.totalorder %s18, 3
      %p310 = pnand %p308, %p309
      %p311 = pneg %p310
      // Predicated region
      $region53: #{cable_attribute_forward.1} parent=5 // pred_check
        _
      $region54: #{cable_attribute_forward.1} parent=5 // pred_check_branch
        %313 = sbr.rel (%p310) target = $region56
      $region55: #{cable_attribute_forward.1} parent=5 // pred_region
        %s314 = ssub.s32 %s18, 1
        %s315 = smul.u32 32, %s28
        %p316 = scmp.lt.s32.totalorder %s27, 1
        %s317 = scalar_select %p316, %s27, 1
        %p318 = scmp.lt.s32.totalorder %s315, 31
        %s319 = scalar_select %p318, %s315, 31
        %s320 = smul.addr %s317, 32
        %s321 = sadd.s32 %s319, %s320
        %s322 = smul.addr %s321, 4
        %s323 = scalar_lea.vmem %s0, %s322
        %p324 = pneg %p58
        %p325 = pneg %p55
        %p326 = pneg %p79
        %p327 = pneg %p76
        %p328 = pneg %p100
        %p329 = pneg %p97
        %p330 = pneg %p121
        %p331 = pneg %p118
        %p332 = pneg %p142
        %p333 = pneg %p139
        %p334 = pneg %p163
        %p335 = pneg %p160
        %p336 = pneg %p184
        %p337 = pneg %p181
        %p338 = pneg %p205
        %p339 = pneg %p202
        %p340 = pneg %p226
        %p341 = pneg %p223
        %p342 = pneg %p252
        %p343 = pneg %p249
        %s344 = sand.u32 %s239, 1
        %s345 = scalar_lea.sflag [#allocation4], %s344
        %s346 = sand.u32 %s239, 1
        %s347 = scalar_lea.vmem [#allocation3], %s346
        %s348 = smul.u32 32, %s28
        %p349 = scmp.lt.s32.totalorder %s27, 1
        %s350 = scalar_select %p349, %s27, 1
        %p351 = scmp.lt.s32.totalorder %s348, 31
        %s352 = scalar_select %p351, %s348, 31
        %s353 = smul.addr %s350, 32
        %s354 = sadd.s32 %s352, %s353
        %s355 = smul.addr %s354, 4
        %s356 = scalar_lea.vmem %s0, %s355
        %s357 = smul.u32 32, %s28
        %p359 = scmp.eq.s32.totalorder %s28, 0
        // Predicated region
        $region57: #{cable_attribute_forward.1} parent=55 // pred_check
          %p360 = pneg %p359
        $region58: #{cable_attribute_forward.1} parent=55 // pred_check_branch
          %362 = sbr.rel (%p360) target = $region60
        $region59: #{cable_attribute_forward.1} parent=55 // pred_region
          %363 = vst [vmem:[#allocation2] sm:$0xff] 0.0
          %v364 = vlaneseq
          %vm365 = vcmp.ge.s32.totalorder %v364, 0
          %vm366 = vcmp.lt.s32.totalorder %v364, 512
          %vm367 = vmand %vm365, %vm366
          %368 = vst.msk [vmem:[#allocation2 + $0x8] sm:$0xf] %vm367, 0.0
        $region60: #{cable_attribute_forward.1} parent=55 // pred_fallthru
          _
        %v369 = vld [vmem:[%s356] sm:$0xf]
        %v370 = vld [vmem:[%s356 + $0x4] sm:$0xf]
        %v371 = vld [vmem:[%s356 + $0x8] sm:$0xf]
        %v372 = vld [vmem:[%s356 + $0xc] sm:$0xf]
        %v373 = vld [vmem:[%s356 + $0x10] sm:$0xf]
        %v374 = vld [vmem:[%s356 + $0x14] sm:$0xf]
        %v375 = vld [vmem:[%s356 + $0x18] sm:$0xf]
        %v376 = vld [vmem:[%s356 + $0x1c] sm:$0xf]
        %v377 = vld [vmem:[%s356 + $0x20] sm:$0xf]
        %v378 = vld [vmem:[%s356 + $0x24] sm:$0xf]
        %v379 = vld [vmem:[%s356 + $0x28] sm:$0xf]
        %v380 = vld [vmem:[%s356 + $0x2c] sm:$0xf]
        %v381 = vld [vmem:[%s356 + $0x30] sm:$0xf]
        %v382 = vld [vmem:[%s356 + $0x34] sm:$0xf]
        %v383 = vld [vmem:[%s356 + $0x38] sm:$0xf]
        %v384 = vld [vmem:[%s356 + $0x3c] sm:$0xf]
        %v385 = vld [vmem:[%s356 + $0x40] sm:$0xf]
        %v386 = vld [vmem:[%s356 + $0x44] sm:$0xf]
        %v387 = vld [vmem:[%s356 + $0x48] sm:$0xf]
        %v388 = vld [vmem:[%s356 + $0x4c] sm:$0xf]
        %v389 = vld [vmem:[%s356 + $0x50] sm:$0xf]
        %v390 = vld [vmem:[%s356 + $0x54] sm:$0xf]
        %v391 = vld [vmem:[%s356 + $0x58] sm:$0xf]
        %v392 = vld [vmem:[%s356 + $0x5c] sm:$0xf]
        %v393 = vld [vmem:[%s356 + $0x60] sm:$0xf]
        %v394 = vld [vmem:[%s356 + $0x64] sm:$0xf]
        %v395 = vld [vmem:[%s356 + $0x68] sm:$0xf]
        %v396 = vld [vmem:[%s356 + $0x6c] sm:$0xf]
        %v397 = vld [vmem:[%s356 + $0x70] sm:$0xf]
        %v398 = vld [vmem:[%s356 + $0x74] sm:$0xf]
        %v399 = vld [vmem:[%s356 + $0x78] sm:$0xf]
        %v400 = vld [vmem:[%s356 + $0x7c] sm:$0xf]
        %v401 = vld [vmem:[%s1] sm:$0xf]
        %v402 = vld [vmem:[%s1 + $0x4] sm:$0xf]
        %v403 = vld [vmem:[%s1 + $0x8] sm:$0xf]
        %v404 = vld [vmem:[%s1 + $0xc] sm:$0xf]
        %v405 = vld [vmem:[%s2] sm:$0x1]
        %v407 = vlaneseq
        %v408 = vshrl.u32 %v407, 7
        %v409 = vsub.s32 0, %v408
        %v410 = vrot.slane %v405, %v409
        %v444 = vunpack.c.l.b16 %v369
        %v445 = vunpack.c.l.b16 %v370
        %v446 = vunpack.c.l.b16 %v371
        %v447 = vunpack.c.l.b16 %v372
        %v448 = vunpack.c.l.b16 %v373
        %v449 = vunpack.c.l.b16 %v374
        %v450 = vunpack.c.l.b16 %v375
        %v451 = vunpack.c.l.b16 %v376
        %v452 = vunpack.c.l.b16 %v377
        %v453 = vunpack.c.l.b16 %v378
        %v454 = vunpack.c.l.b16 %v379
        %v455 = vunpack.c.l.b16 %v380
        %v456 = vunpack.c.l.b16 %v381
        %v457 = vunpack.c.l.b16 %v382
        %v458 = vunpack.c.l.b16 %v383
        %v459 = vunpack.c.l.b16 %v384
        %v460 = vunpack.c.l.b16 %v385
        %v461 = vunpack.c.l.b16 %v386
        %v462 = vunpack.c.l.b16 %v387
        %v463 = vunpack.c.l.b16 %v388
        %v464 = vunpack.c.l.b16 %v389
        %v465 = vunpack.c.l.b16 %v390
        %v466 = vunpack.c.l.b16 %v391
        %v467 = vunpack.c.l.b16 %v392
        %v468 = vunpack.c.l.b16 %v393
        %v469 = vunpack.c.l.b16 %v394
        %v470 = vunpack.c.l.b16 %v395
        %v471 = vunpack.c.l.b16 %v396
        %v472 = vunpack.c.l.b16 %v397
        %v473 = vunpack.c.l.b16 %v398
        %v474 = vunpack.c.l.b16 %v399
        %v475 = vunpack.c.l.b16 %v400
        %v476 = vpack.c.b16 %v445, %v444
        %v477 = vpack.c.b16 %v447, %v446
        %v478 = vpack.c.b16 %v449, %v448
        %v479 = vpack.c.b16 %v451, %v450
        %v480 = vpack.c.b16 %v453, %v452
        %v481 = vpack.c.b16 %v455, %v454
        %v482 = vpack.c.b16 %v457, %v456
        %v483 = vpack.c.b16 %v459, %v458
        %v484 = vpack.c.b16 %v461, %v460
        %v485 = vpack.c.b16 %v463, %v462
        %v486 = vpack.c.b16 %v465, %v464
        %v487 = vpack.c.b16 %v467, %v466
        %v488 = vpack.c.b16 %v469, %v468
        %v489 = vpack.c.b16 %v471, %v470
        %v490 = vpack.c.b16 %v473, %v472
        %v491 = vpack.c.b16 %v475, %v474
        %v496 = vunpack.c.l.b16 %v401
        %v497 = vunpack.c.l.b16 %v402
        %v498 = vunpack.c.l.b16 %v403
        %v499 = vunpack.c.l.b16 %v404
        %v500 = vpack.c.b16 %v497, %v496
        %v501 = vpack.c.b16 %v499, %v498
        %vm504 = vcmask 261120
        %v506 = vsel %vm504, %v476, 0
        %v509 = vsel %vm504, %v477, 0
        %v512 = vsel %vm504, %v478, 0
        %v515 = vsel %vm504, %v479, 0
        %v518 = vsel %vm504, %v480, 0
        %v521 = vsel %vm504, %v481, 0
        %v524 = vsel %vm504, %v482, 0
        %v527 = vsel %vm504, %v483, 0
        %v530 = vsel %vm504, %v484, 0
        %v533 = vsel %vm504, %v485, 0
        %v536 = vsel %vm504, %v486, 0
        %v539 = vsel %vm504, %v487, 0
        %v542 = vsel %vm504, %v488, 0
        %v545 = vsel %vm504, %v489, 0
        %v548 = vsel %vm504, %v490, 0
        %v551 = vsel %vm504, %v491, 0
        %553 = vmatprep.subr.bf16.mxu0 0
        %554 = vmatpush1.bf16.msra.mxu0 0
        %555 = vmatprep.subr.bf16.mxu0 0
        %556 = vmatpush1.bf16.msra.mxu0 0
        %557 = vmatprep.subr.bf16.mxu0 0
        %558 = vmatpush1.bf16.msra.mxu0 0
        %559 = vmatprep.subr.bf16.mxu0 0
        %560 = vmatpush1.bf16.msra.mxu0 0
        %561 = vmatprep.subr.bf16.mxu0 0
        %562 = vmatpush1.bf16.msra.mxu0 0
        %563 = vmatprep.subr.bf16.mxu0 0
        %564 = vmatpush1.bf16.msra.mxu0 0
        %565 = vmatprep.subr.bf16.mxu0 0
        %566 = vmatpush1.bf16.msra.mxu0 %v501
        %567 = vmatprep.subr.bf16.mxu0 0
        %568 = vmatpush1.bf16.msra.mxu0 %v500
        %569 = vmatprep.subr.bf16.mxu0 0
        %570 = vmatpush2.bf16.msra.mxu0 0
        %571 = vmatprep.subr.bf16.mxu0 0
        %572 = vmatpush2.bf16.msra.mxu0 0
        %573 = vmatprep.subr.bf16.mxu0 0
        %574 = vmatpush2.bf16.msra.mxu0 0
        %575 = vmatprep.subr.bf16.mxu0 0
        %576 = vmatpush2.bf16.msra.mxu0 0
        %577 = vmatprep.subr.bf16.mxu0 0
        %578 = vmatpush2.bf16.msra.mxu0 0
        %579 = vmatprep.subr.bf16.mxu0 0
        %580 = vmatpush2.bf16.msra.mxu0 0
        %581 = vmatprep.subr.bf16.mxu0 0
        %582 = vmatpush2.bf16.msra.mxu0 0
        %583 = vmatprep.subr.bf16.mxu0 0
        %584 = vmatpush2.bf16.msra.mxu0 0
        %585 = vmatprep.mubr.bf16.mxu0 0
        %586 = vmatmul.mubr.bf16.gmra.mxu0 %v506
        %v587 = vpop.f32.mrf.mxu0
        %v588 = vadd.f32 %v410, %v587
        %v589 = vpop.f32.mrf.mxu0
        %v590 = vpop.f32.mrf.mxu0
        %v591 = vadd.f32 %v410, %v590
        %v592 = vpop.f32.mrf.mxu0
        %593 = vmatprep.mubr.bf16.mxu0 0
        %594 = vmatmul.mubr.bf16.gmra.mxu0 %v509
        %v595 = vpop.f32.mrf.mxu0
        %v596 = vadd.f32 %v410, %v595
        %v597 = vpop.f32.mrf.mxu0
        %v598 = vpop.f32.mrf.mxu0
        %v599 = vadd.f32 %v410, %v598
        %v600 = vpop.f32.mrf.mxu0
        %601 = vmatprep.mubr.bf16.mxu0 0
        %602 = vmatmul.mubr.bf16.gmra.mxu0 %v512
        %v603 = vpop.f32.mrf.mxu0
        %v604 = vadd.f32 %v410, %v603
        %v605 = vpop.f32.mrf.mxu0
        %v606 = vpop.f32.mrf.mxu0
        %v607 = vadd.f32 %v410, %v606
        %v608 = vpop.f32.mrf.mxu0
        %609 = vmatprep.mubr.bf16.mxu0 0
        %610 = vmatmul.mubr.bf16.gmra.mxu0 %v515
        %v611 = vpop.f32.mrf.mxu0
        %v612 = vadd.f32 %v410, %v611
        %v613 = vpop.f32.mrf.mxu0
        %v614 = vpop.f32.mrf.mxu0
        %v615 = vadd.f32 %v410, %v614
        %v616 = vpop.f32.mrf.mxu0
        %617 = vmatprep.mubr.bf16.mxu0 0
        %618 = vmatmul.mubr.bf16.gmra.mxu0 %v518
        %v619 = vpop.f32.mrf.mxu0
        %v620 = vadd.f32 %v410, %v619
        %v621 = vpop.f32.mrf.mxu0
        %v622 = vpop.f32.mrf.mxu0
        %v623 = vadd.f32 %v410, %v622
        %v624 = vpop.f32.mrf.mxu0
        %625 = vmatprep.mubr.bf16.mxu0 0
        %626 = vmatmul.mubr.bf16.gmra.mxu0 %v521
        %v627 = vpop.f32.mrf.mxu0
        %v628 = vadd.f32 %v410, %v627
        %v629 = vpop.f32.mrf.mxu0
        %v630 = vpop.f32.mrf.mxu0
        %v631 = vadd.f32 %v410, %v630
        %v632 = vpop.f32.mrf.mxu0
        %633 = vmatprep.mubr.bf16.mxu0 0
        %634 = vmatmul.mubr.bf16.gmra.mxu0 %v524
        %v635 = vpop.f32.mrf.mxu0
        %v636 = vadd.f32 %v410, %v635
        %v637 = vpop.f32.mrf.mxu0
        %v638 = vpop.f32.mrf.mxu0
        %v639 = vadd.f32 %v410, %v638
        %v640 = vpop.f32.mrf.mxu0
        %641 = vmatprep.mubr.bf16.mxu0 0
        %642 = vmatmul.mubr.bf16.gmra.mxu0 %v527
        %v643 = vpop.f32.mrf.mxu0
        %v644 = vadd.f32 %v410, %v643
        %v645 = vpop.f32.mrf.mxu0
        %v646 = vpop.f32.mrf.mxu0
        %v647 = vadd.f32 %v410, %v646
        %v648 = vpop.f32.mrf.mxu0
        %649 = vmatprep.mubr.bf16.mxu0 0
        %650 = vmatmul.mubr.bf16.gmra.mxu0 %v530
        %v651 = vpop.f32.mrf.mxu0
        %v652 = vadd.f32 %v410, %v651
        %v653 = vpop.f32.mrf.mxu0
        %v654 = vpop.f32.mrf.mxu0
        %v655 = vadd.f32 %v410, %v654
        %v656 = vpop.f32.mrf.mxu0
        %657 = vmatprep.mubr.bf16.mxu0 0
        %658 = vmatmul.mubr.bf16.gmra.mxu0 %v533
        %v659 = vpop.f32.mrf.mxu0
        %v660 = vadd.f32 %v410, %v659
        %v661 = vpop.f32.mrf.mxu0
        %v662 = vpop.f32.mrf.mxu0
        %v663 = vadd.f32 %v410, %v662
        %v664 = vpop.f32.mrf.mxu0
        %665 = vmatprep.mubr.bf16.mxu0 0
        %666 = vmatmul.mubr.bf16.gmra.mxu0 %v536
        %v667 = vpop.f32.mrf.mxu0
        %v668 = vadd.f32 %v410, %v667
        %v669 = vpop.f32.mrf.mxu0
        %v670 = vpop.f32.mrf.mxu0
        %v671 = vadd.f32 %v410, %v670
        %v672 = vpop.f32.mrf.mxu0
        %673 = vmatprep.mubr.bf16.mxu0 0
        %674 = vmatmul.mubr.bf16.gmra.mxu0 %v539
        %v675 = vpop.f32.mrf.mxu0
        %v676 = vadd.f32 %v410, %v675
        %v677 = vpop.f32.mrf.mxu0
        %v678 = vpop.f32.mrf.mxu0
        %v679 = vadd.f32 %v410, %v678
        %v680 = vpop.f32.mrf.mxu0
        %681 = vmatprep.mubr.bf16.mxu0 0
        %682 = vmatmul.mubr.bf16.gmra.mxu0 %v542
        %v683 = vpop.f32.mrf.mxu0
        %v684 = vadd.f32 %v410, %v683
        %v685 = vpop.f32.mrf.mxu0
        %v686 = vpop.f32.mrf.mxu0
        %v687 = vadd.f32 %v410, %v686
        %v688 = vpop.f32.mrf.mxu0
        %689 = vmatprep.mubr.bf16.mxu0 0
        %690 = vmatmul.mubr.bf16.gmra.mxu0 %v545
        %v691 = vpop.f32.mrf.mxu0
        %v692 = vadd.f32 %v410, %v691
        %v693 = vpop.f32.mrf.mxu0
        %v694 = vpop.f32.mrf.mxu0
        %v695 = vadd.f32 %v410, %v694
        %v696 = vpop.f32.mrf.mxu0
        %697 = vmatprep.mubr.bf16.mxu0 0
        %698 = vmatmul.mubr.bf16.gmra.mxu0 %v548
        %v699 = vpop.f32.mrf.mxu0
        %v700 = vadd.f32 %v410, %v699
        %v701 = vpop.f32.mrf.mxu0
        %v702 = vpop.f32.mrf.mxu0
        %v703 = vadd.f32 %v410, %v702
        %v704 = vpop.f32.mrf.mxu0
        %705 = vmatprep.mubr.bf16.mxu0 0
        %706 = vmatmul.mubr.bf16.gmra.mxu0 %v551
        %v707 = vpop.f32.mrf.mxu0
        %v708 = vadd.f32 %v410, %v707
        %v709 = vpop.f32.mrf.mxu0
        %v710 = vpop.f32.mrf.mxu0
        %v711 = vadd.f32 %v410, %v710
        %v712 = vpop.f32.mrf.mxu0
        %713 = vdwg.mxu0
        %v714 = vxor.u32 %v588, 2147483648
        %v715 = vxor.u32 %v591, 2147483648
        %v716 = vxor.u32 %v596, 2147483648
        %v717 = vxor.u32 %v599, 2147483648
        %v718 = vxor.u32 %v604, 2147483648
        %v719 = vxor.u32 %v607, 2147483648
        %v720 = vxor.u32 %v612, 2147483648
        %v721 = vxor.u32 %v615, 2147483648
        %v722 = vxor.u32 %v620, 2147483648
        %v723 = vxor.u32 %v623, 2147483648
        %v724 = vxor.u32 %v628, 2147483648
        %v725 = vxor.u32 %v631, 2147483648
        %v726 = vxor.u32 %v636, 2147483648
        %v727 = vxor.u32 %v639, 2147483648
        %v728 = vxor.u32 %v644, 2147483648
        %v729 = vxor.u32 %v647, 2147483648
        %v730 = vxor.u32 %v652, 2147483648
        %v731 = vxor.u32 %v655, 2147483648
        %v732 = vxor.u32 %v660, 2147483648
        %v733 = vxor.u32 %v663, 2147483648
        %v734 = vxor.u32 %v668, 2147483648
        %v735 = vxor.u32 %v671, 2147483648
        %v736 = vxor.u32 %v676, 2147483648
        %v737 = vxor.u32 %v679, 2147483648
        %v738 = vxor.u32 %v684, 2147483648
        %v739 = vxor.u32 %v687, 2147483648
        %v740 = vxor.u32 %v692, 2147483648
        %v741 = vxor.u32 %v695, 2147483648
        %v742 = vxor.u32 %v700, 2147483648
        %v743 = vxor.u32 %v703, 2147483648
        %v744 = vxor.u32 %v708, 2147483648
        %v745 = vxor.u32 %v711, 2147483648
        %v746 = vmul.f32 %v714, 1.442695
        %v747 = vpow.pop %v746
        %v748 = vmul.f32 %v715, 1.442695
        %v749 = vpow.pop %v748
        %v750 = vmul.f32 %v716, 1.442695
        %v751 = vpow.pop %v750
        %v752 = vmul.f32 %v717, 1.442695
        %v753 = vpow.pop %v752
        %v754 = vmul.f32 %v718, 1.442695
        %v755 = vpow.pop %v754
        %v756 = vmul.f32 %v719, 1.442695
        %v757 = vpow.pop %v756
        %v758 = vmul.f32 %v720, 1.442695
        %v759 = vpow.pop %v758
        %v760 = vmul.f32 %v721, 1.442695
        %v761 = vpow.pop %v760
        %v762 = vmul.f32 %v722, 1.442695
        %v763 = vpow.pop %v762
        %v764 = vmul.f32 %v723, 1.442695
        %v765 = vpow.pop %v764
        %v766 = vmul.f32 %v724, 1.442695
        %v767 = vpow.pop %v766
        %v768 = vmul.f32 %v725, 1.442695
        %v769 = vpow.pop %v768
        %v770 = vmul.f32 %v726, 1.442695
        %v771 = vpow.pop %v770
        %v772 = vmul.f32 %v727, 1.442695
        %v773 = vpow.pop %v772
        %v774 = vmul.f32 %v728, 1.442695
        %v775 = vpow.pop %v774
        %v776 = vmul.f32 %v729, 1.442695
        %v777 = vpow.pop %v776
        %v778 = vmul.f32 %v730, 1.442695
        %v779 = vpow.pop %v778
        %v780 = vmul.f32 %v731, 1.442695
        %v781 = vpow.pop %v780
        %v782 = vmul.f32 %v732, 1.442695
        %v783 = vpow.pop %v782
        %v784 = vmul.f32 %v733, 1.442695
        %v785 = vpow.pop %v784
        %v786 = vmul.f32 %v734, 1.442695
        %v787 = vpow.pop %v786
        %v788 = vmul.f32 %v735, 1.442695
        %v789 = vpow.pop %v788
        %v790 = vmul.f32 %v736, 1.442695
        %v791 = vpow.pop %v790
        %v792 = vmul.f32 %v737, 1.442695
        %v793 = vpow.pop %v792
        %v794 = vmul.f32 %v738, 1.442695
        %v795 = vpow.pop %v794
        %v796 = vmul.f32 %v739, 1.442695
        %v797 = vpow.pop %v796
        %v798 = vmul.f32 %v740, 1.442695
        %v799 = vpow.pop %v798
        %v800 = vmul.f32 %v741, 1.442695
        %v801 = vpow.pop %v800
        %v802 = vmul.f32 %v742, 1.442695
        %v803 = vpow.pop %v802
        %v804 = vmul.f32 %v743, 1.442695
        %v805 = vpow.pop %v804
        %v806 = vmul.f32 %v744, 1.442695
        %v807 = vpow.pop %v806
        %v808 = vmul.f32 %v745, 1.442695
        %v809 = vpow.pop %v808
        %v810 = vadd.f32 %v747, 1.0
        %v811 = vadd.f32 %v749, 1.0
        %v812 = vadd.f32 %v751, 1.0
        %v813 = vadd.f32 %v753, 1.0
        %v814 = vadd.f32 %v755, 1.0
        %v815 = vadd.f32 %v757, 1.0
        %v816 = vadd.f32 %v759, 1.0
        %v817 = vadd.f32 %v761, 1.0
        %v818 = vadd.f32 %v763, 1.0
        %v819 = vadd.f32 %v765, 1.0
        %v820 = vadd.f32 %v767, 1.0
        %v821 = vadd.f32 %v769, 1.0
        %v822 = vadd.f32 %v771, 1.0
        %v823 = vadd.f32 %v773, 1.0
        %v824 = vadd.f32 %v775, 1.0
        %v825 = vadd.f32 %v777, 1.0
        %v826 = vadd.f32 %v779, 1.0
        %v827 = vadd.f32 %v781, 1.0
        %v828 = vadd.f32 %v783, 1.0
        %v829 = vadd.f32 %v785, 1.0
        %v830 = vadd.f32 %v787, 1.0
        %v831 = vadd.f32 %v789, 1.0
        %v832 = vadd.f32 %v791, 1.0
        %v833 = vadd.f32 %v793, 1.0
        %v834 = vadd.f32 %v795, 1.0
        %v835 = vadd.f32 %v797, 1.0
        %v836 = vadd.f32 %v799, 1.0
        %v837 = vadd.f32 %v801, 1.0
        %v838 = vadd.f32 %v803, 1.0
        %v839 = vadd.f32 %v805, 1.0
        %v840 = vadd.f32 %v807, 1.0
        %v841 = vadd.f32 %v809, 1.0
        %v842 = vrcp.pop %v810
        %v843 = vmul.f32 1.0, %v842
        %v844 = vrcp.pop %v811
        %v845 = vmul.f32 1.0, %v844
        %v846 = vrcp.pop %v812
        %v847 = vmul.f32 1.0, %v846
        %v848 = vrcp.pop %v813
        %v849 = vmul.f32 1.0, %v848
        %v850 = vrcp.pop %v814
        %v851 = vmul.f32 1.0, %v850
        %v852 = vrcp.pop %v815
        %v853 = vmul.f32 1.0, %v852
        %v854 = vrcp.pop %v816
        %v855 = vmul.f32 1.0, %v854
        %v856 = vrcp.pop %v817
        %v857 = vmul.f32 1.0, %v856
        %v858 = vrcp.pop %v818
        %v859 = vmul.f32 1.0, %v858
        %v860 = vrcp.pop %v819
        %v861 = vmul.f32 1.0, %v860
        %v862 = vrcp.pop %v820
        %v863 = vmul.f32 1.0, %v862
        %v864 = vrcp.pop %v821
        %v865 = vmul.f32 1.0, %v864
        %v866 = vrcp.pop %v822
        %v867 = vmul.f32 1.0, %v866
        %v868 = vrcp.pop %v823
        %v869 = vmul.f32 1.0, %v868
        %v870 = vrcp.pop %v824
        %v871 = vmul.f32 1.0, %v870
        %v872 = vrcp.pop %v825
        %v873 = vmul.f32 1.0, %v872
        %v874 = vrcp.pop %v826
        %v875 = vmul.f32 1.0, %v874
        %v876 = vrcp.pop %v827
        %v877 = vmul.f32 1.0, %v876
        %v878 = vrcp.pop %v828
        %v879 = vmul.f32 1.0, %v878
        %v880 = vrcp.pop %v829
        %v881 = vmul.f32 1.0, %v880
        %v882 = vrcp.pop %v830
        %v883 = vmul.f32 1.0, %v882
        %v884 = vrcp.pop %v831
        %v885 = vmul.f32 1.0, %v884
        %v886 = vrcp.pop %v832
        %v887 = vmul.f32 1.0, %v886
        %v888 = vrcp.pop %v833
        %v889 = vmul.f32 1.0, %v888
        %v890 = vrcp.pop %v834
        %v891 = vmul.f32 1.0, %v890
        %v892 = vrcp.pop %v835
        %v893 = vmul.f32 1.0, %v892
        %v894 = vrcp.pop %v836
        %v895 = vmul.f32 1.0, %v894
        %v896 = vrcp.pop %v837
        %v897 = vmul.f32 1.0, %v896
        %v898 = vrcp.pop %v838
        %v899 = vmul.f32 1.0, %v898
        %v900 = vrcp.pop %v839
        %v901 = vmul.f32 1.0, %v900
        %v902 = vrcp.pop %v840
        %v903 = vmul.f32 1.0, %v902
        %v904 = vrcp.pop %v841
        %v905 = vmul.f32 1.0, %v904
        %v906 = vmul.f32 %v588, %v843
        %v907 = vmul.f32 %v591, %v845
        %v908 = vmul.f32 %v596, %v847
        %v909 = vmul.f32 %v599, %v849
        %v910 = vmul.f32 %v604, %v851
        %v911 = vmul.f32 %v607, %v853
        %v912 = vmul.f32 %v612, %v855
        %v913 = vmul.f32 %v615, %v857
        %v914 = vmul.f32 %v620, %v859
        %v915 = vmul.f32 %v623, %v861
        %v916 = vmul.f32 %v628, %v863
        %v917 = vmul.f32 %v631, %v865
        %v918 = vmul.f32 %v636, %v867
        %v919 = vmul.f32 %v639, %v869
        %v920 = vmul.f32 %v644, %v871
        %v921 = vmul.f32 %v647, %v873
        %v922 = vmul.f32 %v652, %v875
        %v923 = vmul.f32 %v655, %v877
        %v924 = vmul.f32 %v660, %v879
        %v925 = vmul.f32 %v663, %v881
        %v926 = vmul.f32 %v668, %v883
        %v927 = vmul.f32 %v671, %v885
        %v928 = vmul.f32 %v676, %v887
        %v929 = vmul.f32 %v679, %v889
        %v930 = vmul.f32 %v684, %v891
        %v931 = vmul.f32 %v687, %v893
        %v932 = vmul.f32 %v692, %v895
        %v933 = vmul.f32 %v695, %v897
        %v934 = vmul.f32 %v700, %v899
        %v935 = vmul.f32 %v703, %v901
        %v936 = vmul.f32 %v708, %v903
        %v937 = vmul.f32 %v711, %v905
        %v938 = vpack.c.bf16 %v907, %v906
        %v939 = vpack.c.bf16 %v909, %v908
        %v940 = vpack.c.bf16 %v911, %v910
        %v941 = vpack.c.bf16 %v913, %v912
        %v942 = vpack.c.bf16 %v915, %v914
        %v943 = vpack.c.bf16 %v917, %v916
        %v944 = vpack.c.bf16 %v919, %v918
        %v945 = vpack.c.bf16 %v921, %v920
        %v946 = vpack.c.bf16 %v923, %v922
        %v947 = vpack.c.bf16 %v925, %v924
        %v948 = vpack.c.bf16 %v927, %v926
        %v949 = vpack.c.bf16 %v929, %v928
        %v950 = vpack.c.bf16 %v931, %v930
        %v951 = vpack.c.bf16 %v933, %v932
        %v952 = vpack.c.bf16 %v935, %v934
        %v953 = vpack.c.bf16 %v937, %v936
        %v954 = vld [vmem:[%s3] sm:$0xff]
        %v955 = vld [vmem:[%s3 + $0x8] sm:$0xff]
        %v956 = vld [vmem:[%s3 + $0x10] sm:$0xff]
        %v957 = vld [vmem:[%s3 + $0x18] sm:$0xff]
        %v958 = vld [vmem:[%s3 + $0x20] sm:$0xff]
        %v959 = vld [vmem:[%s3 + $0x28] sm:$0xff]
        %v960 = vld [vmem:[%s3 + $0x30] sm:$0xff]
        %v961 = vld [vmem:[%s3 + $0x38] sm:$0xff]
        %v962 = vld [vmem:[%s3 + $0x40] sm:$0xff]
        %v963 = vld [vmem:[%s3 + $0x48] sm:$0xff]
        %v964 = vld [vmem:[%s3 + $0x50] sm:$0xff]
        %v965 = vld [vmem:[%s3 + $0x58] sm:$0xff]
        %v966 = vld [vmem:[%s3 + $0x60] sm:$0xff]
        %v967 = vld [vmem:[%s3 + $0x68] sm:$0xff]
        %v968 = vld [vmem:[%s3 + $0x70] sm:$0xff]
        %v969 = vld [vmem:[%s3 + $0x78] sm:$0xff]
        %v970 = vld [vmem:[%s3 + $0x80] sm:$0xff]
        %v971 = vld [vmem:[%s3 + $0x88] sm:$0xff]
        %v972 = vld [vmem:[%s3 + $0x90] sm:$0xff]
        %v973 = vld [vmem:[%s3 + $0x98] sm:$0xff]
        %v974 = vld [vmem:[%s3 + $0xa0] sm:$0xff]
        %v975 = vld [vmem:[%s3 + $0xa8] sm:$0xff]
        %v976 = vld [vmem:[%s3 + $0xb0] sm:$0xff]
        %v977 = vld [vmem:[%s3 + $0xb8] sm:$0xff]
        %v978 = vld [vmem:[%s3 + $0xc0] sm:$0xff]
        %v979 = vld [vmem:[%s3 + $0xc8] sm:$0xff]
        %v980 = vld [vmem:[%s3 + $0xd0] sm:$0xff]
        %v981 = vld [vmem:[%s3 + $0xd8] sm:$0xff]
        %v982 = vld [vmem:[%s3 + $0xe0] sm:$0xff]
        %v983 = vld [vmem:[%s3 + $0xe8] sm:$0xff]
        %v984 = vld [vmem:[%s3 + $0xf0] sm:$0xff]
        %v985 = vld [vmem:[%s3 + $0xf8] sm:$0xff]
        %v986 = vld [vmem:[%s3 + $0x100] sm:$0xff]
        %v987 = vld [vmem:[%s3 + $0x108] sm:$0xff]
        %v988 = vld [vmem:[%s3 + $0x110] sm:$0xff]
        %v989 = vld [vmem:[%s3 + $0x118] sm:$0xff]
        %v990 = vld [vmem:[%s3 + $0x120] sm:$0xff]
        %v991 = vld [vmem:[%s3 + $0x128] sm:$0xff]
        %v992 = vld [vmem:[%s3 + $0x130] sm:$0xff]
        %v993 = vld [vmem:[%s3 + $0x138] sm:$0xff]
        %v994 = vld [vmem:[%s3 + $0x140] sm:$0xff]
        %v995 = vld [vmem:[%s3 + $0x148] sm:$0xff]
        %v996 = vld [vmem:[%s3 + $0x150] sm:$0xff]
        %v997 = vld [vmem:[%s3 + $0x158] sm:$0xff]
        %v998 = vld [vmem:[%s3 + $0x160] sm:$0xff]
        %v999 = vld [vmem:[%s3 + $0x168] sm:$0xff]
        %v1000 = vld [vmem:[%s3 + $0x170] sm:$0xff]
        %v1001 = vld [vmem:[%s3 + $0x178] sm:$0xff]
        %v1002 = vld [vmem:[%s4] sm:$0xff]
        %v1003 = vld [vmem:[%s4 + $0x8] sm:$0xf]
        %v1006 = vlaneseq
        %v1007 = vshrl.u32 %v1006, 7
        %v1008 = vsub.s32 0, %v1007
        %v1009 = vrot.slane %v1002, %v1008
        %v1010 = vlaneseq
        %v1011 = vshrl.u32 %v1010, 7
        %v1012 = vsub.s32 1, %v1011
        %v1013 = vrot.slane %v1002, %v1012
        %v1014 = vlaneseq
        %v1015 = vshrl.u32 %v1014, 7
        %v1016 = vsub.s32 2, %v1015
        %v1017 = vrot.slane %v1002, %v1016
        %v1018 = vlaneseq
        %v1019 = vshrl.u32 %v1018, 7
        %v1020 = vsub.s32 3, %v1019
        %v1021 = vrot.slane %v1002, %v1020
        %v1022 = vlaneseq
        %v1023 = vshrl.u32 %v1022, 7
        %v1024 = vsub.s32 4, %v1023
        %v1025 = vrot.slane %v1002, %v1024
        %v1026 = vlaneseq
        %v1027 = vshrl.u32 %v1026, 7
        %v1028 = vsub.s32 5, %v1027
        %v1029 = vrot.slane %v1002, %v1028
        %v1030 = vlaneseq
        %v1031 = vshrl.u32 %v1030, 7
        %v1032 = vsub.s32 6, %v1031
        %v1033 = vrot.slane %v1002, %v1032
        %v1034 = vlaneseq
        %v1035 = vshrl.u32 %v1034, 7
        %v1036 = vsub.s32 7, %v1035
        %v1037 = vrot.slane %v1002, %v1036
        %v1038 = vlaneseq
        %v1039 = vshrl.u32 %v1038, 7
        %v1040 = vsub.s32 0, %v1039
        %v1041 = vrot.slane %v1003, %v1040
        %v1042 = vlaneseq
        %v1043 = vshrl.u32 %v1042, 7
        %v1044 = vsub.s32 1, %v1043
        %v1045 = vrot.slane %v1003, %v1044
        %v1046 = vlaneseq
        %v1047 = vshrl.u32 %v1046, 7
        %v1048 = vsub.s32 2, %v1047
        %v1049 = vrot.slane %v1003, %v1048
        %v1050 = vlaneseq
        %v1051 = vshrl.u32 %v1050, 7
        %v1052 = vsub.s32 3, %v1051
        %v1053 = vrot.slane %v1003, %v1052
        %v1114 = vunpack.c.l.b16 %v954
        %v1115 = vunpack.c.h.b16 %v954
        %v1116 = vunpack.c.l.b16 %v955
        %v1117 = vunpack.c.h.b16 %v955
        %v1118 = vunpack.c.l.b16 %v956
        %v1119 = vunpack.c.h.b16 %v956
        %v1120 = vunpack.c.l.b16 %v957
        %v1121 = vunpack.c.h.b16 %v957
        %v1122 = vunpack.c.l.b16 %v958
        %v1123 = vunpack.c.h.b16 %v958
        %v1124 = vunpack.c.l.b16 %v959
        %v1125 = vunpack.c.h.b16 %v959
        %v1126 = vunpack.c.l.b16 %v960
        %v1127 = vunpack.c.h.b16 %v960
        %v1128 = vunpack.c.l.b16 %v961
        %v1129 = vunpack.c.h.b16 %v961
        %v1130 = vunpack.c.l.b16 %v962
        %v1131 = vunpack.c.h.b16 %v962
        %v1132 = vunpack.c.l.b16 %v963
        %v1133 = vunpack.c.h.b16 %v963
        %v1134 = vunpack.c.l.b16 %v964
        %v1135 = vunpack.c.h.b16 %v964
        %v1136 = vunpack.c.l.b16 %v965
        %v1137 = vunpack.c.h.b16 %v965
        %v1138 = vunpack.c.l.b16 %v966
        %v1139 = vunpack.c.h.b16 %v966
        %v1140 = vunpack.c.l.b16 %v967
        %v1141 = vunpack.c.h.b16 %v967
        %v1142 = vunpack.c.l.b16 %v968
        %v1143 = vunpack.c.h.b16 %v968
        %v1144 = vunpack.c.l.b16 %v969
        %v1145 = vunpack.c.h.b16 %v969
        %v1146 = vunpack.c.l.b16 %v970
        %v1147 = vunpack.c.h.b16 %v970
        %v1148 = vunpack.c.l.b16 %v971
        %v1149 = vunpack.c.h.b16 %v971
        %v1150 = vunpack.c.l.b16 %v972
        %v1151 = vunpack.c.h.b16 %v972
        %v1152 = vunpack.c.l.b16 %v973
        %v1153 = vunpack.c.h.b16 %v973
        %v1154 = vunpack.c.l.b16 %v974
        %v1155 = vunpack.c.h.b16 %v974
        %v1156 = vunpack.c.l.b16 %v975
        %v1157 = vunpack.c.h.b16 %v975
        %v1158 = vunpack.c.l.b16 %v976
        %v1159 = vunpack.c.h.b16 %v976
        %v1160 = vunpack.c.l.b16 %v977
        %v1161 = vunpack.c.h.b16 %v977
        %v1162 = vunpack.c.l.b16 %v978
        %v1163 = vunpack.c.h.b16 %v978
        %v1164 = vunpack.c.l.b16 %v979
        %v1165 = vunpack.c.h.b16 %v979
        %v1166 = vunpack.c.l.b16 %v980
        %v1167 = vunpack.c.h.b16 %v980
        %v1168 = vunpack.c.l.b16 %v981
        %v1169 = vunpack.c.h.b16 %v981
        %v1170 = vunpack.c.l.b16 %v982
        %v1171 = vunpack.c.h.b16 %v982
        %v1172 = vunpack.c.l.b16 %v983
        %v1173 = vunpack.c.h.b16 %v983
        %v1174 = vunpack.c.l.b16 %v984
        %v1175 = vunpack.c.h.b16 %v984
        %v1176 = vunpack.c.l.b16 %v985
        %v1177 = vunpack.c.h.b16 %v985
        %v1178 = vunpack.c.l.b16 %v986
        %v1179 = vunpack.c.h.b16 %v986
        %v1180 = vunpack.c.l.b16 %v987
        %v1181 = vunpack.c.h.b16 %v987
        %v1182 = vunpack.c.l.b16 %v988
        %v1183 = vunpack.c.h.b16 %v988
        %v1184 = vunpack.c.l.b16 %v989
        %v1185 = vunpack.c.h.b16 %v989
        %v1186 = vunpack.c.l.b16 %v990
        %v1187 = vunpack.c.h.b16 %v990
        %v1188 = vunpack.c.l.b16 %v991
        %v1189 = vunpack.c.h.b16 %v991
        %v1190 = vunpack.c.l.b16 %v992
        %v1191 = vunpack.c.h.b16 %v992
        %v1192 = vunpack.c.l.b16 %v993
        %v1193 = vunpack.c.h.b16 %v993
        %v1194 = vunpack.c.l.b16 %v994
        %v1195 = vunpack.c.h.b16 %v994
        %v1196 = vunpack.c.l.b16 %v995
        %v1197 = vunpack.c.h.b16 %v995
        %v1198 = vunpack.c.l.b16 %v996
        %v1199 = vunpack.c.h.b16 %v996
        %v1200 = vunpack.c.l.b16 %v997
        %v1201 = vunpack.c.h.b16 %v997
        %v1202 = vunpack.c.l.b16 %v998
        %v1203 = vunpack.c.h.b16 %v998
        %v1204 = vunpack.c.l.b16 %v999
        %v1205 = vunpack.c.h.b16 %v999
        %v1206 = vunpack.c.l.b16 %v1000
        %v1207 = vunpack.c.h.b16 %v1000
        %v1208 = vunpack.c.l.b16 %v1001
        %v1209 = vunpack.c.h.b16 %v1001
        %v1210 = vpack.c.b16 %v1126, %v1114
        %v1211 = vpack.c.b16 %v1127, %v1115
        %v1212 = vpack.c.b16 %v1128, %v1116
        %v1213 = vpack.c.b16 %v1129, %v1117
        %v1214 = vpack.c.b16 %v1130, %v1118
        %v1215 = vpack.c.b16 %v1131, %v1119
        %v1216 = vpack.c.b16 %v1132, %v1120
        %v1217 = vpack.c.b16 %v1133, %v1121
        %v1218 = vpack.c.b16 %v1134, %v1122
        %v1219 = vpack.c.b16 %v1135, %v1123
        %v1220 = vpack.c.b16 %v1136, %v1124
        %v1221 = vpack.c.b16 %v1137, %v1125
        %v1222 = vpack.c.b16 %v1150, %v1138
        %v1223 = vpack.c.b16 %v1151, %v1139
        %v1224 = vpack.c.b16 %v1152, %v1140
        %v1225 = vpack.c.b16 %v1153, %v1141
        %v1226 = vpack.c.b16 %v1154, %v1142
        %v1227 = vpack.c.b16 %v1155, %v1143
        %v1228 = vpack.c.b16 %v1156, %v1144
        %v1229 = vpack.c.b16 %v1157, %v1145
        %v1230 = vpack.c.b16 %v1158, %v1146
        %v1231 = vpack.c.b16 %v1159, %v1147
        %v1232 = vpack.c.b16 %v1160, %v1148
        %v1233 = vpack.c.b16 %v1161, %v1149
        %v1234 = vpack.c.b16 %v1174, %v1162
        %v1235 = vpack.c.b16 %v1175, %v1163
        %v1236 = vpack.c.b16 %v1176, %v1164
        %v1237 = vpack.c.b16 %v1177, %v1165
        %v1238 = vpack.c.b16 %v1178, %v1166
        %v1239 = vpack.c.b16 %v1179, %v1167
        %v1240 = vpack.c.b16 %v1180, %v1168
        %v1241 = vpack.c.b16 %v1181, %v1169
        %v1242 = vpack.c.b16 %v1182, %v1170
        %v1243 = vpack.c.b16 %v1183, %v1171
        %v1244 = vpack.c.b16 %v1184, %v1172
        %v1245 = vpack.c.b16 %v1185, %v1173
        %v1246 = vpack.c.b16 %v1198, %v1186
        %v1247 = vpack.c.b16 %v1199, %v1187
        %v1248 = vpack.c.b16 %v1200, %v1188
        %v1249 = vpack.c.b16 %v1201, %v1189
        %v1250 = vpack.c.b16 %v1202, %v1190
        %v1251 = vpack.c.b16 %v1203, %v1191
        %v1252 = vpack.c.b16 %v1204, %v1192
        %v1253 = vpack.c.b16 %v1205, %v1193
        %v1254 = vpack.c.b16 %v1206, %v1194
        %v1255 = vpack.c.b16 %v1207, %v1195
        %v1256 = vpack.c.b16 %v1208, %v1196
        %v1257 = vpack.c.b16 %v1209, %v1197
        %vm1306 = vcmask 523264
        %v1308 = vsel %vm1306, %v938, 0
        %v1311 = vsel %vm1306, %v939, 0
        %v1314 = vsel %vm1306, %v940, 0
        %v1317 = vsel %vm1306, %v941, 0
        %v1320 = vsel %vm1306, %v942, 0
        %v1323 = vsel %vm1306, %v943, 0
        %v1326 = vsel %vm1306, %v944, 0
        %v1329 = vsel %vm1306, %v945, 0
        %v1332 = vsel %vm1306, %v946, 0
        %v1335 = vsel %vm1306, %v947, 0
        %v1338 = vsel %vm1306, %v948, 0
        %v1341 = vsel %vm1306, %v949, 0
        %v1344 = vsel %vm1306, %v950, 0
        %v1347 = vsel %vm1306, %v951, 0
        %v1350 = vsel %vm1306, %v952, 0
        %v1353 = vsel %vm1306, %v953, 0
        %1355 = vmatprep.subr.bf16.mxu0 0
        %1356 = vmatpush1.bf16.msra.mxu0 0
        %1357 = vmatprep.subr.bf16.mxu0 0
        %1358 = vmatpush1.bf16.msra.mxu0 0
        %1359 = vmatprep.subr.bf16.mxu0 0
        %1360 = vmatpush1.bf16.msra.mxu0 0
        %1361 = vmatprep.subr.bf16.mxu0 0
        %1362 = vmatpush1.bf16.msra.mxu0 0
        %1363 = vmatprep.subr.bf16.mxu0 %v1247
        %1364 = vmatpush1.bf16.msra.mxu0 %v1246
        %1365 = vmatprep.subr.bf16.mxu0 %v1235
        %1366 = vmatpush1.bf16.msra.mxu0 %v1234
        %1367 = vmatprep.subr.bf16.mxu0 %v1223
        %1368 = vmatpush1.bf16.msra.mxu0 %v1222
        %1369 = vmatprep.subr.bf16.mxu0 %v1211
        %1370 = vmatpush1.bf16.msra.mxu0 %v1210
        %1371 = vmatprep.subr.bf16.mxu0 0
        %1372 = vmatpush2.bf16.msra.mxu0 0
        %1373 = vmatprep.subr.bf16.mxu0 0
        %1374 = vmatpush2.bf16.msra.mxu0 0
        %1375 = vmatprep.subr.bf16.mxu0 0
        %1376 = vmatpush2.bf16.msra.mxu0 0
        %1377 = vmatprep.subr.bf16.mxu0 0
        %1378 = vmatpush2.bf16.msra.mxu0 0
        %1379 = vmatprep.subr.bf16.mxu0 0
        %1380 = vmatpush2.bf16.msra.mxu0 0
        %1381 = vmatprep.subr.bf16.mxu0 0
        %1382 = vmatpush2.bf16.msra.mxu0 0
        %1383 = vmatprep.subr.bf16.mxu0 0
        %1384 = vmatpush2.bf16.msra.mxu0 0
        %1385 = vmatprep.subr.bf16.mxu0 0
        %1386 = vmatpush2.bf16.msra.mxu0 0
        %1387 = vmatprep.mubr.bf16.mxu0 0
        %1388 = vmatmul.mubr.bf16.gmra.mxu0 %v1308
        %v1389 = vpop.f32.mrf.mxu0
        %v1390 = vadd.f32 %v1009, %v1389
        %v1391 = vpop.f32.mrf.mxu0
        %v1392 = vadd.f32 %v1013, %v1391
        %v1393 = vpop.f32.mrf.mxu0
        %v1394 = vadd.f32 %v1009, %v1393
        %v1395 = vpop.f32.mrf.mxu0
        %v1396 = vadd.f32 %v1013, %v1395
        %1397 = vmatprep.mubr.bf16.mxu0 0
        %1398 = vmatmul.mubr.bf16.gmra.mxu0 %v1311
        %v1399 = vpop.f32.mrf.mxu0
        %v1400 = vadd.f32 %v1009, %v1399
        %v1401 = vpop.f32.mrf.mxu0
        %v1402 = vadd.f32 %v1013, %v1401
        %v1403 = vpop.f32.mrf.mxu0
        %v1404 = vadd.f32 %v1009, %v1403
        %v1405 = vpop.f32.mrf.mxu0
        %v1406 = vadd.f32 %v1013, %v1405
        %1407 = vmatprep.mubr.bf16.mxu0 0
        %1408 = vmatmul.mubr.bf16.gmra.mxu0 %v1314
        %v1409 = vpop.f32.mrf.mxu0
        %v1410 = vadd.f32 %v1009, %v1409
        %v1411 = vpop.f32.mrf.mxu0
        %v1412 = vadd.f32 %v1013, %v1411
        %v1413 = vpop.f32.mrf.mxu0
        %v1414 = vadd.f32 %v1009, %v1413
        %v1415 = vpop.f32.mrf.mxu0
        %v1416 = vadd.f32 %v1013, %v1415
        %1417 = vmatprep.mubr.bf16.mxu0 0
        %1418 = vmatmul.mubr.bf16.gmra.mxu0 %v1317
        %v1419 = vpop.f32.mrf.mxu0
        %v1420 = vadd.f32 %v1009, %v1419
        %v1421 = vpop.f32.mrf.mxu0
        %v1422 = vadd.f32 %v1013, %v1421
        %v1423 = vpop.f32.mrf.mxu0
        %v1424 = vadd.f32 %v1009, %v1423
        %v1425 = vpop.f32.mrf.mxu0
        %v1426 = vadd.f32 %v1013, %v1425
        %1427 = vmatprep.mubr.bf16.mxu0 0
        %1428 = vmatmul.mubr.bf16.gmra.mxu0 %v1320
        %v1429 = vpop.f32.mrf.mxu0
        %v1430 = vadd.f32 %v1009, %v1429
        %v1431 = vpop.f32.mrf.mxu0
        %v1432 = vadd.f32 %v1013, %v1431
        %v1433 = vpop.f32.mrf.mxu0
        %v1434 = vadd.f32 %v1009, %v1433
        %v1435 = vpop.f32.mrf.mxu0
        %v1436 = vadd.f32 %v1013, %v1435
        %1437 = vmatprep.mubr.bf16.mxu0 0
        %1438 = vmatmul.mubr.bf16.gmra.mxu0 %v1323
        %v1439 = vpop.f32.mrf.mxu0
        %v1440 = vadd.f32 %v1009, %v1439
        %v1441 = vpop.f32.mrf.mxu0
        %v1442 = vadd.f32 %v1013, %v1441
        %v1443 = vpop.f32.mrf.mxu0
        %v1444 = vadd.f32 %v1009, %v1443
        %v1445 = vpop.f32.mrf.mxu0
        %v1446 = vadd.f32 %v1013, %v1445
        %1447 = vmatprep.mubr.bf16.mxu0 0
        %1448 = vmatmul.mubr.bf16.gmra.mxu0 %v1326
        %v1449 = vpop.f32.mrf.mxu0
        %v1450 = vadd.f32 %v1009, %v1449
        %v1451 = vpop.f32.mrf.mxu0
        %v1452 = vadd.f32 %v1013, %v1451
        %v1453 = vpop.f32.mrf.mxu0
        %v1454 = vadd.f32 %v1009, %v1453
        %v1455 = vpop.f32.mrf.mxu0
        %v1456 = vadd.f32 %v1013, %v1455
        %1457 = vmatprep.mubr.bf16.mxu0 0
        %1458 = vmatmul.mubr.bf16.gmra.mxu0 %v1329
        %v1459 = vpop.f32.mrf.mxu0
        %v1460 = vadd.f32 %v1009, %v1459
        %v1461 = vpop.f32.mrf.mxu0
        %v1462 = vadd.f32 %v1013, %v1461
        %v1463 = vpop.f32.mrf.mxu0
        %v1464 = vadd.f32 %v1009, %v1463
        %v1465 = vpop.f32.mrf.mxu0
        %v1466 = vadd.f32 %v1013, %v1465
        %1467 = vmatprep.mubr.bf16.mxu0 0
        %1468 = vmatmul.mubr.bf16.gmra.mxu0 %v1332
        %v1469 = vpop.f32.mrf.mxu0
        %v1470 = vadd.f32 %v1009, %v1469
        %v1471 = vpop.f32.mrf.mxu0
        %v1472 = vadd.f32 %v1013, %v1471
        %v1473 = vpop.f32.mrf.mxu0
        %v1474 = vadd.f32 %v1009, %v1473
        %v1475 = vpop.f32.mrf.mxu0
        %v1476 = vadd.f32 %v1013, %v1475
        %1477 = vmatprep.mubr.bf16.mxu0 0
        %1478 = vmatmul.mubr.bf16.gmra.mxu0 %v1335
        %v1479 = vpop.f32.mrf.mxu0
        %v1480 = vadd.f32 %v1009, %v1479
        %v1481 = vpop.f32.mrf.mxu0
        %v1482 = vadd.f32 %v1013, %v1481
        %v1483 = vpop.f32.mrf.mxu0
        %v1484 = vadd.f32 %v1009, %v1483
        %v1485 = vpop.f32.mrf.mxu0
        %v1486 = vadd.f32 %v1013, %v1485
        %1487 = vmatprep.mubr.bf16.mxu0 0
        %1488 = vmatmul.mubr.bf16.gmra.mxu0 %v1338
        %v1489 = vpop.f32.mrf.mxu0
        %v1490 = vadd.f32 %v1009, %v1489
        %v1491 = vpop.f32.mrf.mxu0
        %v1492 = vadd.f32 %v1013, %v1491
        %v1493 = vpop.f32.mrf.mxu0
        %v1494 = vadd.f32 %v1009, %v1493
        %v1495 = vpop.f32.mrf.mxu0
        %v1496 = vadd.f32 %v1013, %v1495
        %1497 = vmatprep.mubr.bf16.mxu0 0
        %1498 = vmatmul.mubr.bf16.gmra.mxu0 %v1341
        %v1499 = vpop.f32.mrf.mxu0
        %v1500 = vadd.f32 %v1009, %v1499
        %v1501 = vpop.f32.mrf.mxu0
        %v1502 = vadd.f32 %v1013, %v1501
        %v1503 = vpop.f32.mrf.mxu0
        %v1504 = vadd.f32 %v1009, %v1503
        %v1505 = vpop.f32.mrf.mxu0
        %v1506 = vadd.f32 %v1013, %v1505
        %1507 = vmatprep.mubr.bf16.mxu0 0
        %1508 = vmatmul.mubr.bf16.gmra.mxu0 %v1344
        %v1509 = vpop.f32.mrf.mxu0
        %v1510 = vadd.f32 %v1009, %v1509
        %v1511 = vpop.f32.mrf.mxu0
        %v1512 = vadd.f32 %v1013, %v1511
        %v1513 = vpop.f32.mrf.mxu0
        %v1514 = vadd.f32 %v1009, %v1513
        %v1515 = vpop.f32.mrf.mxu0
        %v1516 = vadd.f32 %v1013, %v1515
        %1517 = vmatprep.mubr.bf16.mxu0 0
        %1518 = vmatmul.mubr.bf16.gmra.mxu0 %v1347
        %v1519 = vpop.f32.mrf.mxu0
        %v1520 = vadd.f32 %v1009, %v1519
        %v1521 = vpop.f32.mrf.mxu0
        %v1522 = vadd.f32 %v1013, %v1521
        %v1523 = vpop.f32.mrf.mxu0
        %v1524 = vadd.f32 %v1009, %v1523
        %v1525 = vpop.f32.mrf.mxu0
        %v1526 = vadd.f32 %v1013, %v1525
        %1527 = vmatprep.mubr.bf16.mxu0 0
        %1528 = vmatmul.mubr.bf16.gmra.mxu0 %v1350
        %v1529 = vpop.f32.mrf.mxu0
        %v1530 = vadd.f32 %v1009, %v1529
        %v1531 = vpop.f32.mrf.mxu0
        %v1532 = vadd.f32 %v1013, %v1531
        %v1533 = vpop.f32.mrf.mxu0
        %v1534 = vadd.f32 %v1009, %v1533
        %v1535 = vpop.f32.mrf.mxu0
        %v1536 = vadd.f32 %v1013, %v1535
        %1537 = vmatprep.mubr.bf16.mxu0 0
        %1538 = vmatmul.mubr.bf16.gmra.mxu0 %v1353
        %v1539 = vpop.f32.mrf.mxu0
        %v1540 = vadd.f32 %v1009, %v1539
        %v1541 = vpop.f32.mrf.mxu0
        %v1542 = vadd.f32 %v1013, %v1541
        %v1543 = vpop.f32.mrf.mxu0
        %v1544 = vadd.f32 %v1009, %v1543
        %v1545 = vpop.f32.mrf.mxu0
        %v1546 = vadd.f32 %v1013, %v1545
        %1547 = vdwg.mxu0
        %1548 = vmatprep.subr.bf16.mxu0 0
        %1549 = vmatpush1.bf16.msra.mxu0 0
        %1550 = vmatprep.subr.bf16.mxu0 0
        %1551 = vmatpush1.bf16.msra.mxu0 0
        %1552 = vmatprep.subr.bf16.mxu0 0
        %1553 = vmatpush1.bf16.msra.mxu0 0
        %1554 = vmatprep.subr.bf16.mxu0 0
        %1555 = vmatpush1.bf16.msra.mxu0 0
        %1556 = vmatprep.subr.bf16.mxu0 %v1249
        %1557 = vmatpush1.bf16.msra.mxu0 %v1248
        %1558 = vmatprep.subr.bf16.mxu0 %v1237
        %1559 = vmatpush1.bf16.msra.mxu0 %v1236
        %1560 = vmatprep.subr.bf16.mxu0 %v1225
        %1561 = vmatpush1.bf16.msra.mxu0 %v1224
        %1562 = vmatprep.subr.bf16.mxu0 %v1213
        %1563 = vmatpush1.bf16.msra.mxu0 %v1212
        %1564 = vmatprep.subr.bf16.mxu0 0
        %1565 = vmatpush2.bf16.msra.mxu0 0
        %1566 = vmatprep.subr.bf16.mxu0 0
        %1567 = vmatpush2.bf16.msra.mxu0 0
        %1568 = vmatprep.subr.bf16.mxu0 0
        %1569 = vmatpush2.bf16.msra.mxu0 0
        %1570 = vmatprep.subr.bf16.mxu0 0
        %1571 = vmatpush2.bf16.msra.mxu0 0
        %1572 = vmatprep.subr.bf16.mxu0 0
        %1573 = vmatpush2.bf16.msra.mxu0 0
        %1574 = vmatprep.subr.bf16.mxu0 0
        %1575 = vmatpush2.bf16.msra.mxu0 0
        %1576 = vmatprep.subr.bf16.mxu0 0
        %1577 = vmatpush2.bf16.msra.mxu0 0
        %1578 = vmatprep.subr.bf16.mxu0 0
        %1579 = vmatpush2.bf16.msra.mxu0 0
        %1580 = vmatprep.mubr.bf16.mxu0 0
        %1581 = vmatmul.mubr.bf16.gmra.mxu0 %v1308
        %v1582 = vpop.f32.mrf.mxu0
        %v1583 = vadd.f32 %v1017, %v1582
        %v1584 = vpop.f32.mrf.mxu0
        %v1585 = vadd.f32 %v1021, %v1584
        %v1586 = vpop.f32.mrf.mxu0
        %v1587 = vadd.f32 %v1017, %v1586
        %v1588 = vpop.f32.mrf.mxu0
        %v1589 = vadd.f32 %v1021, %v1588
        %1590 = vmatprep.mubr.bf16.mxu0 0
        %1591 = vmatmul.mubr.bf16.gmra.mxu0 %v1311
        %v1592 = vpop.f32.mrf.mxu0
        %v1593 = vadd.f32 %v1017, %v1592
        %v1594 = vpop.f32.mrf.mxu0
        %v1595 = vadd.f32 %v1021, %v1594
        %v1596 = vpop.f32.mrf.mxu0
        %v1597 = vadd.f32 %v1017, %v1596
        %v1598 = vpop.f32.mrf.mxu0
        %v1599 = vadd.f32 %v1021, %v1598
        %1600 = vmatprep.mubr.bf16.mxu0 0
        %1601 = vmatmul.mubr.bf16.gmra.mxu0 %v1314
        %v1602 = vpop.f32.mrf.mxu0
        %v1603 = vadd.f32 %v1017, %v1602
        %v1604 = vpop.f32.mrf.mxu0
        %v1605 = vadd.f32 %v1021, %v1604
        %v1606 = vpop.f32.mrf.mxu0
        %v1607 = vadd.f32 %v1017, %v1606
        %v1608 = vpop.f32.mrf.mxu0
        %v1609 = vadd.f32 %v1021, %v1608
        %1610 = vmatprep.mubr.bf16.mxu0 0
        %1611 = vmatmul.mubr.bf16.gmra.mxu0 %v1317
        %v1612 = vpop.f32.mrf.mxu0
        %v1613 = vadd.f32 %v1017, %v1612
        %v1614 = vpop.f32.mrf.mxu0
        %v1615 = vadd.f32 %v1021, %v1614
        %v1616 = vpop.f32.mrf.mxu0
        %v1617 = vadd.f32 %v1017, %v1616
        %v1618 = vpop.f32.mrf.mxu0
        %v1619 = vadd.f32 %v1021, %v1618
        %1620 = vmatprep.mubr.bf16.mxu0 0
        %1621 = vmatmul.mubr.bf16.gmra.mxu0 %v1320
        %v1622 = vpop.f32.mrf.mxu0
        %v1623 = vadd.f32 %v1017, %v1622
        %v1624 = vpop.f32.mrf.mxu0
        %v1625 = vadd.f32 %v1021, %v1624
        %v1626 = vpop.f32.mrf.mxu0
        %v1627 = vadd.f32 %v1017, %v1626
        %v1628 = vpop.f32.mrf.mxu0
        %v1629 = vadd.f32 %v1021, %v1628
        %1630 = vmatprep.mubr.bf16.mxu0 0
        %1631 = vmatmul.mubr.bf16.gmra.mxu0 %v1323
        %v1632 = vpop.f32.mrf.mxu0
        %v1633 = vadd.f32 %v1017, %v1632
        %v1634 = vpop.f32.mrf.mxu0
        %v1635 = vadd.f32 %v1021, %v1634
        %v1636 = vpop.f32.mrf.mxu0
        %v1637 = vadd.f32 %v1017, %v1636
        %v1638 = vpop.f32.mrf.mxu0
        %v1639 = vadd.f32 %v1021, %v1638
        %1640 = vmatprep.mubr.bf16.mxu0 0
        %1641 = vmatmul.mubr.bf16.gmra.mxu0 %v1326
        %v1642 = vpop.f32.mrf.mxu0
        %v1643 = vadd.f32 %v1017, %v1642
        %v1644 = vpop.f32.mrf.mxu0
        %v1645 = vadd.f32 %v1021, %v1644
        %v1646 = vpop.f32.mrf.mxu0
        %v1647 = vadd.f32 %v1017, %v1646
        %v1648 = vpop.f32.mrf.mxu0
        %v1649 = vadd.f32 %v1021, %v1648
        %1650 = vmatprep.mubr.bf16.mxu0 0
        %1651 = vmatmul.mubr.bf16.gmra.mxu0 %v1329
        %v1652 = vpop.f32.mrf.mxu0
        %v1653 = vadd.f32 %v1017, %v1652
        %v1654 = vpop.f32.mrf.mxu0
        %v1655 = vadd.f32 %v1021, %v1654
        %v1656 = vpop.f32.mrf.mxu0
        %v1657 = vadd.f32 %v1017, %v1656
        %v1658 = vpop.f32.mrf.mxu0
        %v1659 = vadd.f32 %v1021, %v1658
        %1660 = vmatprep.mubr.bf16.mxu0 0
        %1661 = vmatmul.mubr.bf16.gmra.mxu0 %v1332
        %v1662 = vpop.f32.mrf.mxu0
        %v1663 = vadd.f32 %v1017, %v1662
        %v1664 = vpop.f32.mrf.mxu0
        %v1665 = vadd.f32 %v1021, %v1664
        %v1666 = vpop.f32.mrf.mxu0
        %v1667 = vadd.f32 %v1017, %v1666
        %v1668 = vpop.f32.mrf.mxu0
        %v1669 = vadd.f32 %v1021, %v1668
        %1670 = vmatprep.mubr.bf16.mxu0 0
        %1671 = vmatmul.mubr.bf16.gmra.mxu0 %v1335
        %v1672 = vpop.f32.mrf.mxu0
        %v1673 = vadd.f32 %v1017, %v1672
        %v1674 = vpop.f32.mrf.mxu0
        %v1675 = vadd.f32 %v1021, %v1674
        %v1676 = vpop.f32.mrf.mxu0
        %v1677 = vadd.f32 %v1017, %v1676
        %v1678 = vpop.f32.mrf.mxu0
        %v1679 = vadd.f32 %v1021, %v1678
        %1680 = vmatprep.mubr.bf16.mxu0 0
        %1681 = vmatmul.mubr.bf16.gmra.mxu0 %v1338
        %v1682 = vpop.f32.mrf.mxu0
        %v1683 = vadd.f32 %v1017, %v1682
        %v1684 = vpop.f32.mrf.mxu0
        %v1685 = vadd.f32 %v1021, %v1684
        %v1686 = vpop.f32.mrf.mxu0
        %v1687 = vadd.f32 %v1017, %v1686
        %v1688 = vpop.f32.mrf.mxu0
        %v1689 = vadd.f32 %v1021, %v1688
        %1690 = vmatprep.mubr.bf16.mxu0 0
        %1691 = vmatmul.mubr.bf16.gmra.mxu0 %v1341
        %v1692 = vpop.f32.mrf.mxu0
        %v1693 = vadd.f32 %v1017, %v1692
        %v1694 = vpop.f32.mrf.mxu0
        %v1695 = vadd.f32 %v1021, %v1694
        %v1696 = vpop.f32.mrf.mxu0
        %v1697 = vadd.f32 %v1017, %v1696
        %v1698 = vpop.f32.mrf.mxu0
        %v1699 = vadd.f32 %v1021, %v1698
        %1700 = vmatprep.mubr.bf16.mxu0 0
        %1701 = vmatmul.mubr.bf16.gmra.mxu0 %v1344
        %v1702 = vpop.f32.mrf.mxu0
        %v1703 = vadd.f32 %v1017, %v1702
        %v1704 = vpop.f32.mrf.mxu0
        %v1705 = vadd.f32 %v1021, %v1704
        %v1706 = vpop.f32.mrf.mxu0
        %v1707 = vadd.f32 %v1017, %v1706
        %v1708 = vpop.f32.mrf.mxu0
        %v1709 = vadd.f32 %v1021, %v1708
        %1710 = vmatprep.mubr.bf16.mxu0 0
        %1711 = vmatmul.mubr.bf16.gmra.mxu0 %v1347
        %v1712 = vpop.f32.mrf.mxu0
        %v1713 = vadd.f32 %v1017, %v1712
        %v1714 = vpop.f32.mrf.mxu0
        %v1715 = vadd.f32 %v1021, %v1714
        %v1716 = vpop.f32.mrf.mxu0
        %v1717 = vadd.f32 %v1017, %v1716
        %v1718 = vpop.f32.mrf.mxu0
        %v1719 = vadd.f32 %v1021, %v1718
        %1720 = vmatprep.mubr.bf16.mxu0 0
        %1721 = vmatmul.mubr.bf16.gmra.mxu0 %v1350
        %v1722 = vpop.f32.mrf.mxu0
        %v1723 = vadd.f32 %v1017, %v1722
        %v1724 = vpop.f32.mrf.mxu0
        %v1725 = vadd.f32 %v1021, %v1724
        %v1726 = vpop.f32.mrf.mxu0
        %v1727 = vadd.f32 %v1017, %v1726
        %v1728 = vpop.f32.mrf.mxu0
        %v1729 = vadd.f32 %v1021, %v1728
        %1730 = vmatprep.mubr.bf16.mxu0 0
        %1731 = vmatmul.mubr.bf16.gmra.mxu0 %v1353
        %v1732 = vpop.f32.mrf.mxu0
        %v1733 = vadd.f32 %v1017, %v1732
        %v1734 = vpop.f32.mrf.mxu0
        %v1735 = vadd.f32 %v1021, %v1734
        %v1736 = vpop.f32.mrf.mxu0
        %v1737 = vadd.f32 %v1017, %v1736
        %v1738 = vpop.f32.mrf.mxu0
        %v1739 = vadd.f32 %v1021, %v1738
        %1740 = vdwg.mxu0
        %1741 = vmatprep.subr.bf16.mxu0 0
        %1742 = vmatpush1.bf16.msra.mxu0 0
        %1743 = vmatprep.subr.bf16.mxu0 0
        %1744 = vmatpush1.bf16.msra.mxu0 0
        %1745 = vmatprep.subr.bf16.mxu0 0
        %1746 = vmatpush1.bf16.msra.mxu0 0
        %1747 = vmatprep.subr.bf16.mxu0 0
        %1748 = vmatpush1.bf16.msra.mxu0 0
        %1749 = vmatprep.subr.bf16.mxu0 %v1251
        %1750 = vmatpush1.bf16.msra.mxu0 %v1250
        %1751 = vmatprep.subr.bf16.mxu0 %v1239
        %1752 = vmatpush1.bf16.msra.mxu0 %v1238
        %1753 = vmatprep.subr.bf16.mxu0 %v1227
        %1754 = vmatpush1.bf16.msra.mxu0 %v1226
        %1755 = vmatprep.subr.bf16.mxu0 %v1215
        %1756 = vmatpush1.bf16.msra.mxu0 %v1214
        %1757 = vmatprep.subr.bf16.mxu0 0
        %1758 = vmatpush2.bf16.msra.mxu0 0
        %1759 = vmatprep.subr.bf16.mxu0 0
        %1760 = vmatpush2.bf16.msra.mxu0 0
        %1761 = vmatprep.subr.bf16.mxu0 0
        %1762 = vmatpush2.bf16.msra.mxu0 0
        %1763 = vmatprep.subr.bf16.mxu0 0
        %1764 = vmatpush2.bf16.msra.mxu0 0
        %1765 = vmatprep.subr.bf16.mxu0 0
        %1766 = vmatpush2.bf16.msra.mxu0 0
        %1767 = vmatprep.subr.bf16.mxu0 0
        %1768 = vmatpush2.bf16.msra.mxu0 0
        %1769 = vmatprep.subr.bf16.mxu0 0
        %1770 = vmatpush2.bf16.msra.mxu0 0
        %1771 = vmatprep.subr.bf16.mxu0 0
        %1772 = vmatpush2.bf16.msra.mxu0 0
        %1773 = vmatprep.mubr.bf16.mxu0 0
        %1774 = vmatmul.mubr.bf16.gmra.mxu0 %v1308
        %v1775 = vpop.f32.mrf.mxu0
        %v1776 = vadd.f32 %v1025, %v1775
        %v1777 = vpop.f32.mrf.mxu0
        %v1778 = vadd.f32 %v1029, %v1777
        %v1779 = vpop.f32.mrf.mxu0
        %v1780 = vadd.f32 %v1025, %v1779
        %v1781 = vpop.f32.mrf.mxu0
        %v1782 = vadd.f32 %v1029, %v1781
        %1783 = vmatprep.mubr.bf16.mxu0 0
        %1784 = vmatmul.mubr.bf16.gmra.mxu0 %v1311
        %v1785 = vpop.f32.mrf.mxu0
        %v1786 = vadd.f32 %v1025, %v1785
        %v1787 = vpop.f32.mrf.mxu0
        %v1788 = vadd.f32 %v1029, %v1787
        %v1789 = vpop.f32.mrf.mxu0
        %v1790 = vadd.f32 %v1025, %v1789
        %v1791 = vpop.f32.mrf.mxu0
        %v1792 = vadd.f32 %v1029, %v1791
        %1793 = vmatprep.mubr.bf16.mxu0 0
        %1794 = vmatmul.mubr.bf16.gmra.mxu0 %v1314
        %v1795 = vpop.f32.mrf.mxu0
        %v1796 = vadd.f32 %v1025, %v1795
        %v1797 = vpop.f32.mrf.mxu0
        %v1798 = vadd.f32 %v1029, %v1797
        %v1799 = vpop.f32.mrf.mxu0
        %v1800 = vadd.f32 %v1025, %v1799
        %v1801 = vpop.f32.mrf.mxu0
        %v1802 = vadd.f32 %v1029, %v1801
        %1803 = vmatprep.mubr.bf16.mxu0 0
        %1804 = vmatmul.mubr.bf16.gmra.mxu0 %v1317
        %v1805 = vpop.f32.mrf.mxu0
        %v1806 = vadd.f32 %v1025, %v1805
        %v1807 = vpop.f32.mrf.mxu0
        %v1808 = vadd.f32 %v1029, %v1807
        %v1809 = vpop.f32.mrf.mxu0
        %v1810 = vadd.f32 %v1025, %v1809
        %v1811 = vpop.f32.mrf.mxu0
        %v1812 = vadd.f32 %v1029, %v1811
        %1813 = vmatprep.mubr.bf16.mxu0 0
        %1814 = vmatmul.mubr.bf16.gmra.mxu0 %v1320
        %v1815 = vpop.f32.mrf.mxu0
        %v1816 = vadd.f32 %v1025, %v1815
        %v1817 = vpop.f32.mrf.mxu0
        %v1818 = vadd.f32 %v1029, %v1817
        %v1819 = vpop.f32.mrf.mxu0
        %v1820 = vadd.f32 %v1025, %v1819
        %v1821 = vpop.f32.mrf.mxu0
        %v1822 = vadd.f32 %v1029, %v1821
        %1823 = vmatprep.mubr.bf16.mxu0 0
        %1824 = vmatmul.mubr.bf16.gmra.mxu0 %v1323
        %v1825 = vpop.f32.mrf.mxu0
        %v1826 = vadd.f32 %v1025, %v1825
        %v1827 = vpop.f32.mrf.mxu0
        %v1828 = vadd.f32 %v1029, %v1827
        %v1829 = vpop.f32.mrf.mxu0
        %v1830 = vadd.f32 %v1025, %v1829
        %v1831 = vpop.f32.mrf.mxu0
        %v1832 = vadd.f32 %v1029, %v1831
        %1833 = vmatprep.mubr.bf16.mxu0 0
        %1834 = vmatmul.mubr.bf16.gmra.mxu0 %v1326
        %v1835 = vpop.f32.mrf.mxu0
        %v1836 = vadd.f32 %v1025, %v1835
        %v1837 = vpop.f32.mrf.mxu0
        %v1838 = vadd.f32 %v1029, %v1837
        %v1839 = vpop.f32.mrf.mxu0
        %v1840 = vadd.f32 %v1025, %v1839
        %v1841 = vpop.f32.mrf.mxu0
        %v1842 = vadd.f32 %v1029, %v1841
        %1843 = vmatprep.mubr.bf16.mxu0 0
        %1844 = vmatmul.mubr.bf16.gmra.mxu0 %v1329
        %v1845 = vpop.f32.mrf.mxu0
        %v1846 = vadd.f32 %v1025, %v1845
        %v1847 = vpop.f32.mrf.mxu0
        %v1848 = vadd.f32 %v1029, %v1847
        %v1849 = vpop.f32.mrf.mxu0
        %v1850 = vadd.f32 %v1025, %v1849
        %v1851 = vpop.f32.mrf.mxu0
        %v1852 = vadd.f32 %v1029, %v1851
        %1853 = vmatprep.mubr.bf16.mxu0 0
        %1854 = vmatmul.mubr.bf16.gmra.mxu0 %v1332
        %v1855 = vpop.f32.mrf.mxu0
        %v1856 = vadd.f32 %v1025, %v1855
        %v1857 = vpop.f32.mrf.mxu0
        %v1858 = vadd.f32 %v1029, %v1857
        %v1859 = vpop.f32.mrf.mxu0
        %v1860 = vadd.f32 %v1025, %v1859
        %v1861 = vpop.f32.mrf.mxu0
        %v1862 = vadd.f32 %v1029, %v1861
        %1863 = vmatprep.mubr.bf16.mxu0 0
        %1864 = vmatmul.mubr.bf16.gmra.mxu0 %v1335
        %v1865 = vpop.f32.mrf.mxu0
        %v1866 = vadd.f32 %v1025, %v1865
        %v1867 = vpop.f32.mrf.mxu0
        %v1868 = vadd.f32 %v1029, %v1867
        %v1869 = vpop.f32.mrf.mxu0
        %v1870 = vadd.f32 %v1025, %v1869
        %v1871 = vpop.f32.mrf.mxu0
        %v1872 = vadd.f32 %v1029, %v1871
        %1873 = vmatprep.mubr.bf16.mxu0 0
        %1874 = vmatmul.mubr.bf16.gmra.mxu0 %v1338
        %v1875 = vpop.f32.mrf.mxu0
        %v1876 = vadd.f32 %v1025, %v1875
        %v1877 = vpop.f32.mrf.mxu0
        %v1878 = vadd.f32 %v1029, %v1877
        %v1879 = vpop.f32.mrf.mxu0
        %v1880 = vadd.f32 %v1025, %v1879
        %v1881 = vpop.f32.mrf.mxu0
        %v1882 = vadd.f32 %v1029, %v1881
        %1883 = vmatprep.mubr.bf16.mxu0 0
        %1884 = vmatmul.mubr.bf16.gmra.mxu0 %v1341
        %v1885 = vpop.f32.mrf.mxu0
        %v1886 = vadd.f32 %v1025, %v1885
        %v1887 = vpop.f32.mrf.mxu0
        %v1888 = vadd.f32 %v1029, %v1887
        %v1889 = vpop.f32.mrf.mxu0
        %v1890 = vadd.f32 %v1025, %v1889
        %v1891 = vpop.f32.mrf.mxu0
        %v1892 = vadd.f32 %v1029, %v1891
        %1893 = vmatprep.mubr.bf16.mxu0 0
        %1894 = vmatmul.mubr.bf16.gmra.mxu0 %v1344
        %v1895 = vpop.f32.mrf.mxu0
        %v1896 = vadd.f32 %v1025, %v1895
        %v1897 = vpop.f32.mrf.mxu0
        %v1898 = vadd.f32 %v1029, %v1897
        %v1899 = vpop.f32.mrf.mxu0
        %v1900 = vadd.f32 %v1025, %v1899
        %v1901 = vpop.f32.mrf.mxu0
        %v1902 = vadd.f32 %v1029, %v1901
        %1903 = vmatprep.mubr.bf16.mxu0 0
        %1904 = vmatmul.mubr.bf16.gmra.mxu0 %v1347
        %v1905 = vpop.f32.mrf.mxu0
        %v1906 = vadd.f32 %v1025, %v1905
        %v1907 = vpop.f32.mrf.mxu0
        %v1908 = vadd.f32 %v1029, %v1907
        %v1909 = vpop.f32.mrf.mxu0
        %v1910 = vadd.f32 %v1025, %v1909
        %v1911 = vpop.f32.mrf.mxu0
        %v1912 = vadd.f32 %v1029, %v1911
        %1913 = vmatprep.mubr.bf16.mxu0 0
        %1914 = vmatmul.mubr.bf16.gmra.mxu0 %v1350
        %v1915 = vpop.f32.mrf.mxu0
        %v1916 = vadd.f32 %v1025, %v1915
        %v1917 = vpop.f32.mrf.mxu0
        %v1918 = vadd.f32 %v1029, %v1917
        %v1919 = vpop.f32.mrf.mxu0
        %v1920 = vadd.f32 %v1025, %v1919
        %v1921 = vpop.f32.mrf.mxu0
        %v1922 = vadd.f32 %v1029, %v1921
        %1923 = vmatprep.mubr.bf16.mxu0 0
        %1924 = vmatmul.mubr.bf16.gmra.mxu0 %v1353
        %v1925 = vpop.f32.mrf.mxu0
        %v1926 = vadd.f32 %v1025, %v1925
        %v1927 = vpop.f32.mrf.mxu0
        %v1928 = vadd.f32 %v1029, %v1927
        %v1929 = vpop.f32.mrf.mxu0
        %v1930 = vadd.f32 %v1025, %v1929
        %v1931 = vpop.f32.mrf.mxu0
        %v1932 = vadd.f32 %v1029, %v1931
        %1933 = vdwg.mxu0
        %1934 = vmatprep.subr.bf16.mxu0 0
        %1935 = vmatpush1.bf16.msra.mxu0 0
        %1936 = vmatprep.subr.bf16.mxu0 0
        %1937 = vmatpush1.bf16.msra.mxu0 0
        %1938 = vmatprep.subr.bf16.mxu0 0
        %1939 = vmatpush1.bf16.msra.mxu0 0
        %1940 = vmatprep.subr.bf16.mxu0 0
        %1941 = vmatpush1.bf16.msra.mxu0 0
        %1942 = vmatprep.subr.bf16.mxu0 %v1253
        %1943 = vmatpush1.bf16.msra.mxu0 %v1252
        %1944 = vmatprep.subr.bf16.mxu0 %v1241
        %1945 = vmatpush1.bf16.msra.mxu0 %v1240
        %1946 = vmatprep.subr.bf16.mxu0 %v1229
        %1947 = vmatpush1.bf16.msra.mxu0 %v1228
        %1948 = vmatprep.subr.bf16.mxu0 %v1217
        %1949 = vmatpush1.bf16.msra.mxu0 %v1216
        %1950 = vmatprep.subr.bf16.mxu0 0
        %1951 = vmatpush2.bf16.msra.mxu0 0
        %1952 = vmatprep.subr.bf16.mxu0 0
        %1953 = vmatpush2.bf16.msra.mxu0 0
        %1954 = vmatprep.subr.bf16.mxu0 0
        %1955 = vmatpush2.bf16.msra.mxu0 0
        %1956 = vmatprep.subr.bf16.mxu0 0
        %1957 = vmatpush2.bf16.msra.mxu0 0
        %1958 = vmatprep.subr.bf16.mxu0 0
        %1959 = vmatpush2.bf16.msra.mxu0 0
        %1960 = vmatprep.subr.bf16.mxu0 0
        %1961 = vmatpush2.bf16.msra.mxu0 0
        %1962 = vmatprep.subr.bf16.mxu0 0
        %1963 = vmatpush2.bf16.msra.mxu0 0
        %1964 = vmatprep.subr.bf16.mxu0 0
        %1965 = vmatpush2.bf16.msra.mxu0 0
        %1966 = vmatprep.mubr.bf16.mxu0 0
        %1967 = vmatmul.mubr.bf16.gmra.mxu0 %v1308
        %v1968 = vpop.f32.mrf.mxu0
        %v1969 = vadd.f32 %v1033, %v1968
        %v1970 = vpop.f32.mrf.mxu0
        %v1971 = vadd.f32 %v1037, %v1970
        %v1972 = vpop.f32.mrf.mxu0
        %v1973 = vadd.f32 %v1033, %v1972
        %v1974 = vpop.f32.mrf.mxu0
        %v1975 = vadd.f32 %v1037, %v1974
        %1976 = vmatprep.mubr.bf16.mxu0 0
        %1977 = vmatmul.mubr.bf16.gmra.mxu0 %v1311
        %v1978 = vpop.f32.mrf.mxu0
        %v1979 = vadd.f32 %v1033, %v1978
        %v1980 = vpop.f32.mrf.mxu0
        %v1981 = vadd.f32 %v1037, %v1980
        %v1982 = vpop.f32.mrf.mxu0
        %v1983 = vadd.f32 %v1033, %v1982
        %v1984 = vpop.f32.mrf.mxu0
        %v1985 = vadd.f32 %v1037, %v1984
        %1986 = vmatprep.mubr.bf16.mxu0 0
        %1987 = vmatmul.mubr.bf16.gmra.mxu0 %v1314
        %v1988 = vpop.f32.mrf.mxu0
        %v1989 = vadd.f32 %v1033, %v1988
        %v1990 = vpop.f32.mrf.mxu0
        %v1991 = vadd.f32 %v1037, %v1990
        %v1992 = vpop.f32.mrf.mxu0
        %v1993 = vadd.f32 %v1033, %v1992
        %v1994 = vpop.f32.mrf.mxu0
        %v1995 = vadd.f32 %v1037, %v1994
        %1996 = vmatprep.mubr.bf16.mxu0 0
        %1997 = vmatmul.mubr.bf16.gmra.mxu0 %v1317
        %v1998 = vpop.f32.mrf.mxu0
        %v1999 = vadd.f32 %v1033, %v1998
        %v2000 = vpop.f32.mrf.mxu0
        %v2001 = vadd.f32 %v1037, %v2000
        %v2002 = vpop.f32.mrf.mxu0
        %v2003 = vadd.f32 %v1033, %v2002
        %v2004 = vpop.f32.mrf.mxu0
        %v2005 = vadd.f32 %v1037, %v2004
        %2006 = vmatprep.mubr.bf16.mxu0 0
        %2007 = vmatmul.mubr.bf16.gmra.mxu0 %v1320
        %v2008 = vpop.f32.mrf.mxu0
        %v2009 = vadd.f32 %v1033, %v2008
        %v2010 = vpop.f32.mrf.mxu0
        %v2011 = vadd.f32 %v1037, %v2010
        %v2012 = vpop.f32.mrf.mxu0
        %v2013 = vadd.f32 %v1033, %v2012
        %v2014 = vpop.f32.mrf.mxu0
        %v2015 = vadd.f32 %v1037, %v2014
        %2016 = vmatprep.mubr.bf16.mxu0 0
        %2017 = vmatmul.mubr.bf16.gmra.mxu0 %v1323
        %v2018 = vpop.f32.mrf.mxu0
        %v2019 = vadd.f32 %v1033, %v2018
        %v2020 = vpop.f32.mrf.mxu0
        %v2021 = vadd.f32 %v1037, %v2020
        %v2022 = vpop.f32.mrf.mxu0
        %v2023 = vadd.f32 %v1033, %v2022
        %v2024 = vpop.f32.mrf.mxu0
        %v2025 = vadd.f32 %v1037, %v2024
        %2026 = vmatprep.mubr.bf16.mxu0 0
        %2027 = vmatmul.mubr.bf16.gmra.mxu0 %v1326
        %v2028 = vpop.f32.mrf.mxu0
        %v2029 = vadd.f32 %v1033, %v2028
        %v2030 = vpop.f32.mrf.mxu0
        %v2031 = vadd.f32 %v1037, %v2030
        %v2032 = vpop.f32.mrf.mxu0
        %v2033 = vadd.f32 %v1033, %v2032
        %v2034 = vpop.f32.mrf.mxu0
        %v2035 = vadd.f32 %v1037, %v2034
        %2036 = vmatprep.mubr.bf16.mxu0 0
        %2037 = vmatmul.mubr.bf16.gmra.mxu0 %v1329
        %v2038 = vpop.f32.mrf.mxu0
        %v2039 = vadd.f32 %v1033, %v2038
        %v2040 = vpop.f32.mrf.mxu0
        %v2041 = vadd.f32 %v1037, %v2040
        %v2042 = vpop.f32.mrf.mxu0
        %v2043 = vadd.f32 %v1033, %v2042
        %v2044 = vpop.f32.mrf.mxu0
        %v2045 = vadd.f32 %v1037, %v2044
        %2046 = vmatprep.mubr.bf16.mxu0 0
        %2047 = vmatmul.mubr.bf16.gmra.mxu0 %v1332
        %v2048 = vpop.f32.mrf.mxu0
        %v2049 = vadd.f32 %v1033, %v2048
        %v2050 = vpop.f32.mrf.mxu0
        %v2051 = vadd.f32 %v1037, %v2050
        %v2052 = vpop.f32.mrf.mxu0
        %v2053 = vadd.f32 %v1033, %v2052
        %v2054 = vpop.f32.mrf.mxu0
        %v2055 = vadd.f32 %v1037, %v2054
        %2056 = vmatprep.mubr.bf16.mxu0 0
        %2057 = vmatmul.mubr.bf16.gmra.mxu0 %v1335
        %v2058 = vpop.f32.mrf.mxu0
        %v2059 = vadd.f32 %v1033, %v2058
        %v2060 = vpop.f32.mrf.mxu0
        %v2061 = vadd.f32 %v1037, %v2060
        %v2062 = vpop.f32.mrf.mxu0
        %v2063 = vadd.f32 %v1033, %v2062
        %v2064 = vpop.f32.mrf.mxu0
        %v2065 = vadd.f32 %v1037, %v2064
        %2066 = vmatprep.mubr.bf16.mxu0 0
        %2067 = vmatmul.mubr.bf16.gmra.mxu0 %v1338
        %v2068 = vpop.f32.mrf.mxu0
        %v2069 = vadd.f32 %v1033, %v2068
        %v2070 = vpop.f32.mrf.mxu0
        %v2071 = vadd.f32 %v1037, %v2070
        %v2072 = vpop.f32.mrf.mxu0
        %v2073 = vadd.f32 %v1033, %v2072
        %v2074 = vpop.f32.mrf.mxu0
        %v2075 = vadd.f32 %v1037, %v2074
        %2076 = vmatprep.mubr.bf16.mxu0 0
        %2077 = vmatmul.mubr.bf16.gmra.mxu0 %v1341
        %v2078 = vpop.f32.mrf.mxu0
        %v2079 = vadd.f32 %v1033, %v2078
        %v2080 = vpop.f32.mrf.mxu0
        %v2081 = vadd.f32 %v1037, %v2080
        %v2082 = vpop.f32.mrf.mxu0
        %v2083 = vadd.f32 %v1033, %v2082
        %v2084 = vpop.f32.mrf.mxu0
        %v2085 = vadd.f32 %v1037, %v2084
        %2086 = vmatprep.mubr.bf16.mxu0 0
        %2087 = vmatmul.mubr.bf16.gmra.mxu0 %v1344
        %v2088 = vpop.f32.mrf.mxu0
        %v2089 = vadd.f32 %v1033, %v2088
        %v2090 = vpop.f32.mrf.mxu0
        %v2091 = vadd.f32 %v1037, %v2090
        %v2092 = vpop.f32.mrf.mxu0
        %v2093 = vadd.f32 %v1033, %v2092
        %v2094 = vpop.f32.mrf.mxu0
        %v2095 = vadd.f32 %v1037, %v2094
        %2096 = vmatprep.mubr.bf16.mxu0 0
        %2097 = vmatmul.mubr.bf16.gmra.mxu0 %v1347
        %v2098 = vpop.f32.mrf.mxu0
        %v2099 = vadd.f32 %v1033, %v2098
        %v2100 = vpop.f32.mrf.mxu0
        %v2101 = vadd.f32 %v1037, %v2100
        %v2102 = vpop.f32.mrf.mxu0
        %v2103 = vadd.f32 %v1033, %v2102
        %v2104 = vpop.f32.mrf.mxu0
        %v2105 = vadd.f32 %v1037, %v2104
        %2106 = vmatprep.mubr.bf16.mxu0 0
        %2107 = vmatmul.mubr.bf16.gmra.mxu0 %v1350
        %v2108 = vpop.f32.mrf.mxu0
        %v2109 = vadd.f32 %v1033, %v2108
        %v2110 = vpop.f32.mrf.mxu0
        %v2111 = vadd.f32 %v1037, %v2110
        %v2112 = vpop.f32.mrf.mxu0
        %v2113 = vadd.f32 %v1033, %v2112
        %v2114 = vpop.f32.mrf.mxu0
        %v2115 = vadd.f32 %v1037, %v2114
        %2116 = vmatprep.mubr.bf16.mxu0 0
        %2117 = vmatmul.mubr.bf16.gmra.mxu0 %v1353
        %v2118 = vpop.f32.mrf.mxu0
        %v2119 = vadd.f32 %v1033, %v2118
        %v2120 = vpop.f32.mrf.mxu0
        %v2121 = vadd.f32 %v1037, %v2120
        %v2122 = vpop.f32.mrf.mxu0
        %v2123 = vadd.f32 %v1033, %v2122
        %v2124 = vpop.f32.mrf.mxu0
        %v2125 = vadd.f32 %v1037, %v2124
        %2126 = vdwg.mxu0
        %2127 = vmatprep.subr.bf16.mxu0 0
        %2128 = vmatpush1.bf16.msra.mxu0 0
        %2129 = vmatprep.subr.bf16.mxu0 0
        %2130 = vmatpush1.bf16.msra.mxu0 0
        %2131 = vmatprep.subr.bf16.mxu0 0
        %2132 = vmatpush1.bf16.msra.mxu0 0
        %2133 = vmatprep.subr.bf16.mxu0 0
        %2134 = vmatpush1.bf16.msra.mxu0 0
        %2135 = vmatprep.subr.bf16.mxu0 %v1255
        %2136 = vmatpush1.bf16.msra.mxu0 %v1254
        %2137 = vmatprep.subr.bf16.mxu0 %v1243
        %2138 = vmatpush1.bf16.msra.mxu0 %v1242
        %2139 = vmatprep.subr.bf16.mxu0 %v1231
        %2140 = vmatpush1.bf16.msra.mxu0 %v1230
        %2141 = vmatprep.subr.bf16.mxu0 %v1219
        %2142 = vmatpush1.bf16.msra.mxu0 %v1218
        %2143 = vmatprep.subr.bf16.mxu0 0
        %2144 = vmatpush2.bf16.msra.mxu0 0
        %2145 = vmatprep.subr.bf16.mxu0 0
        %2146 = vmatpush2.bf16.msra.mxu0 0
        %2147 = vmatprep.subr.bf16.mxu0 0
        %2148 = vmatpush2.bf16.msra.mxu0 0
        %2149 = vmatprep.subr.bf16.mxu0 0
        %2150 = vmatpush2.bf16.msra.mxu0 0
        %2151 = vmatprep.subr.bf16.mxu0 0
        %2152 = vmatpush2.bf16.msra.mxu0 0
        %2153 = vmatprep.subr.bf16.mxu0 0
        %2154 = vmatpush2.bf16.msra.mxu0 0
        %2155 = vmatprep.subr.bf16.mxu0 0
        %2156 = vmatpush2.bf16.msra.mxu0 0
        %2157 = vmatprep.subr.bf16.mxu0 0
        %2158 = vmatpush2.bf16.msra.mxu0 0
        %2159 = vmatprep.mubr.bf16.mxu0 0
        %2160 = vmatmul.mubr.bf16.gmra.mxu0 %v1308
        %v2161 = vpop.f32.mrf.mxu0
        %v2162 = vadd.f32 %v1041, %v2161
        %v2163 = vpop.f32.mrf.mxu0
        %v2164 = vadd.f32 %v1045, %v2163
        %v2165 = vpop.f32.mrf.mxu0
        %v2166 = vadd.f32 %v1041, %v2165
        %v2167 = vpop.f32.mrf.mxu0
        %v2168 = vadd.f32 %v1045, %v2167
        %2169 = vmatprep.mubr.bf16.mxu0 0
        %2170 = vmatmul.mubr.bf16.gmra.mxu0 %v1311
        %v2171 = vpop.f32.mrf.mxu0
        %v2172 = vadd.f32 %v1041, %v2171
        %v2173 = vpop.f32.mrf.mxu0
        %v2174 = vadd.f32 %v1045, %v2173
        %v2175 = vpop.f32.mrf.mxu0
        %v2176 = vadd.f32 %v1041, %v2175
        %v2177 = vpop.f32.mrf.mxu0
        %v2178 = vadd.f32 %v1045, %v2177
        %2179 = vmatprep.mubr.bf16.mxu0 0
        %2180 = vmatmul.mubr.bf16.gmra.mxu0 %v1314
        %v2181 = vpop.f32.mrf.mxu0
        %v2182 = vadd.f32 %v1041, %v2181
        %v2183 = vpop.f32.mrf.mxu0
        %v2184 = vadd.f32 %v1045, %v2183
        %v2185 = vpop.f32.mrf.mxu0
        %v2186 = vadd.f32 %v1041, %v2185
        %v2187 = vpop.f32.mrf.mxu0
        %v2188 = vadd.f32 %v1045, %v2187
        %2189 = vmatprep.mubr.bf16.mxu0 0
        %2190 = vmatmul.mubr.bf16.gmra.mxu0 %v1317
        %v2191 = vpop.f32.mrf.mxu0
        %v2192 = vadd.f32 %v1041, %v2191
        %v2193 = vpop.f32.mrf.mxu0
        %v2194 = vadd.f32 %v1045, %v2193
        %v2195 = vpop.f32.mrf.mxu0
        %v2196 = vadd.f32 %v1041, %v2195
        %v2197 = vpop.f32.mrf.mxu0
        %v2198 = vadd.f32 %v1045, %v2197
        %2199 = vmatprep.mubr.bf16.mxu0 0
        %2200 = vmatmul.mubr.bf16.gmra.mxu0 %v1320
        %v2201 = vpop.f32.mrf.mxu0
        %v2202 = vadd.f32 %v1041, %v2201
        %v2203 = vpop.f32.mrf.mxu0
        %v2204 = vadd.f32 %v1045, %v2203
        %v2205 = vpop.f32.mrf.mxu0
        %v2206 = vadd.f32 %v1041, %v2205
        %v2207 = vpop.f32.mrf.mxu0
        %v2208 = vadd.f32 %v1045, %v2207
        %2209 = vmatprep.mubr.bf16.mxu0 0
        %2210 = vmatmul.mubr.bf16.gmra.mxu0 %v1323
        %v2211 = vpop.f32.mrf.mxu0
        %v2212 = vadd.f32 %v1041, %v2211
        %v2213 = vpop.f32.mrf.mxu0
        %v2214 = vadd.f32 %v1045, %v2213
        %v2215 = vpop.f32.mrf.mxu0
        %v2216 = vadd.f32 %v1041, %v2215
        %v2217 = vpop.f32.mrf.mxu0
        %v2218 = vadd.f32 %v1045, %v2217
        %2219 = vmatprep.mubr.bf16.mxu0 0
        %2220 = vmatmul.mubr.bf16.gmra.mxu0 %v1326
        %v2221 = vpop.f32.mrf.mxu0
        %v2222 = vadd.f32 %v1041, %v2221
        %v2223 = vpop.f32.mrf.mxu0
        %v2224 = vadd.f32 %v1045, %v2223
        %v2225 = vpop.f32.mrf.mxu0
        %v2226 = vadd.f32 %v1041, %v2225
        %v2227 = vpop.f32.mrf.mxu0
        %v2228 = vadd.f32 %v1045, %v2227
        %2229 = vmatprep.mubr.bf16.mxu0 0
        %2230 = vmatmul.mubr.bf16.gmra.mxu0 %v1329
        %v2231 = vpop.f32.mrf.mxu0
        %v2232 = vadd.f32 %v1041, %v2231
        %v2233 = vpop.f32.mrf.mxu0
        %v2234 = vadd.f32 %v1045, %v2233
        %v2235 = vpop.f32.mrf.mxu0
        %v2236 = vadd.f32 %v1041, %v2235
        %v2237 = vpop.f32.mrf.mxu0
        %v2238 = vadd.f32 %v1045, %v2237
        %2239 = vmatprep.mubr.bf16.mxu0 0
        %2240 = vmatmul.mubr.bf16.gmra.mxu0 %v1332
        %v2241 = vpop.f32.mrf.mxu0
        %v2242 = vadd.f32 %v1041, %v2241
        %v2243 = vpop.f32.mrf.mxu0
        %v2244 = vadd.f32 %v1045, %v2243
        %v2245 = vpop.f32.mrf.mxu0
        %v2246 = vadd.f32 %v1041, %v2245
        %v2247 = vpop.f32.mrf.mxu0
        %v2248 = vadd.f32 %v1045, %v2247
        %2249 = vmatprep.mubr.bf16.mxu0 0
        %2250 = vmatmul.mubr.bf16.gmra.mxu0 %v1335
        %v2251 = vpop.f32.mrf.mxu0
        %v2252 = vadd.f32 %v1041, %v2251
        %v2253 = vpop.f32.mrf.mxu0
        %v2254 = vadd.f32 %v1045, %v2253
        %v2255 = vpop.f32.mrf.mxu0
        %v2256 = vadd.f32 %v1041, %v2255
        %v2257 = vpop.f32.mrf.mxu0
        %v2258 = vadd.f32 %v1045, %v2257
        %2259 = vmatprep.mubr.bf16.mxu0 0
        %2260 = vmatmul.mubr.bf16.gmra.mxu0 %v1338
        %v2261 = vpop.f32.mrf.mxu0
        %v2262 = vadd.f32 %v1041, %v2261
        %v2263 = vpop.f32.mrf.mxu0
        %v2264 = vadd.f32 %v1045, %v2263
        %v2265 = vpop.f32.mrf.mxu0
        %v2266 = vadd.f32 %v1041, %v2265
        %v2267 = vpop.f32.mrf.mxu0
        %v2268 = vadd.f32 %v1045, %v2267
        %2269 = vmatprep.mubr.bf16.mxu0 0
        %2270 = vmatmul.mubr.bf16.gmra.mxu0 %v1341
        %v2271 = vpop.f32.mrf.mxu0
        %v2272 = vadd.f32 %v1041, %v2271
        %v2273 = vpop.f32.mrf.mxu0
        %v2274 = vadd.f32 %v1045, %v2273
        %v2275 = vpop.f32.mrf.mxu0
        %v2276 = vadd.f32 %v1041, %v2275
        %v2277 = vpop.f32.mrf.mxu0
        %v2278 = vadd.f32 %v1045, %v2277
        %2279 = vmatprep.mubr.bf16.mxu0 0
        %2280 = vmatmul.mubr.bf16.gmra.mxu0 %v1344
        %v2281 = vpop.f32.mrf.mxu0
        %v2282 = vadd.f32 %v1041, %v2281
        %v2283 = vpop.f32.mrf.mxu0
        %v2284 = vadd.f32 %v1045, %v2283
        %v2285 = vpop.f32.mrf.mxu0
        %v2286 = vadd.f32 %v1041, %v2285
        %v2287 = vpop.f32.mrf.mxu0
        %v2288 = vadd.f32 %v1045, %v2287
        %2289 = vmatprep.mubr.bf16.mxu0 0
        %2290 = vmatmul.mubr.bf16.gmra.mxu0 %v1347
        %v2291 = vpop.f32.mrf.mxu0
        %v2292 = vadd.f32 %v1041, %v2291
        %v2293 = vpop.f32.mrf.mxu0
        %v2294 = vadd.f32 %v1045, %v2293
        %v2295 = vpop.f32.mrf.mxu0
        %v2296 = vadd.f32 %v1041, %v2295
        %v2297 = vpop.f32.mrf.mxu0
        %v2298 = vadd.f32 %v1045, %v2297
        %2299 = vmatprep.mubr.bf16.mxu0 0
        %2300 = vmatmul.mubr.bf16.gmra.mxu0 %v1350
        %v2301 = vpop.f32.mrf.mxu0
        %v2302 = vadd.f32 %v1041, %v2301
        %v2303 = vpop.f32.mrf.mxu0
        %v2304 = vadd.f32 %v1045, %v2303
        %v2305 = vpop.f32.mrf.mxu0
        %v2306 = vadd.f32 %v1041, %v2305
        %v2307 = vpop.f32.mrf.mxu0
        %v2308 = vadd.f32 %v1045, %v2307
        %2309 = vmatprep.mubr.bf16.mxu0 0
        %2310 = vmatmul.mubr.bf16.gmra.mxu0 %v1353
        %v2311 = vpop.f32.mrf.mxu0
        %v2312 = vadd.f32 %v1041, %v2311
        %v2313 = vpop.f32.mrf.mxu0
        %v2314 = vadd.f32 %v1045, %v2313
        %v2315 = vpop.f32.mrf.mxu0
        %v2316 = vadd.f32 %v1041, %v2315
        %v2317 = vpop.f32.mrf.mxu0
        %v2318 = vadd.f32 %v1045, %v2317
        %2319 = vdwg.mxu0
        %2320 = vmatprep.subr.bf16.mxu0 0
        %2321 = vmatpush1.bf16.msra.mxu0 0
        %2322 = vmatprep.subr.bf16.mxu0 0
        %2323 = vmatpush1.bf16.msra.mxu0 0
        %2324 = vmatprep.subr.bf16.mxu0 0
        %2325 = vmatpush1.bf16.msra.mxu0 0
        %2326 = vmatprep.subr.bf16.mxu0 0
        %2327 = vmatpush1.bf16.msra.mxu0 0
        %2328 = vmatprep.subr.bf16.mxu0 %v1257
        %2329 = vmatpush1.bf16.msra.mxu0 %v1256
        %2330 = vmatprep.subr.bf16.mxu0 %v1245
        %2331 = vmatpush1.bf16.msra.mxu0 %v1244
        %2332 = vmatprep.subr.bf16.mxu0 %v1233
        %2333 = vmatpush1.bf16.msra.mxu0 %v1232
        %2334 = vmatprep.subr.bf16.mxu0 %v1221
        %2335 = vmatpush1.bf16.msra.mxu0 %v1220
        %2336 = vmatprep.subr.bf16.mxu0 0
        %2337 = vmatpush2.bf16.msra.mxu0 0
        %2338 = vmatprep.subr.bf16.mxu0 0
        %2339 = vmatpush2.bf16.msra.mxu0 0
        %2340 = vmatprep.subr.bf16.mxu0 0
        %2341 = vmatpush2.bf16.msra.mxu0 0
        %2342 = vmatprep.subr.bf16.mxu0 0
        %2343 = vmatpush2.bf16.msra.mxu0 0
        %2344 = vmatprep.subr.bf16.mxu0 0
        %2345 = vmatpush2.bf16.msra.mxu0 0
        %2346 = vmatprep.subr.bf16.mxu0 0
        %2347 = vmatpush2.bf16.msra.mxu0 0
        %2348 = vmatprep.subr.bf16.mxu0 0
        %2349 = vmatpush2.bf16.msra.mxu0 0
        %2350 = vmatprep.subr.bf16.mxu0 0
        %2351 = vmatpush2.bf16.msra.mxu0 0
        %2352 = vmatprep.mubr.bf16.mxu0 0
        %2353 = vmatmul.mubr.bf16.gmra.mxu0 %v1308
        %v2354 = vpop.f32.mrf.mxu0
        %v2355 = vadd.f32 %v1049, %v2354
        %v2356 = vpop.f32.mrf.mxu0
        %v2357 = vadd.f32 %v1053, %v2356
        %v2358 = vpop.f32.mrf.mxu0
        %v2359 = vadd.f32 %v1049, %v2358
        %v2360 = vpop.f32.mrf.mxu0
        %v2361 = vadd.f32 %v1053, %v2360
        %2362 = vmatprep.mubr.bf16.mxu0 0
        %2363 = vmatmul.mubr.bf16.gmra.mxu0 %v1311
        %v2364 = vpop.f32.mrf.mxu0
        %v2365 = vadd.f32 %v1049, %v2364
        %v2366 = vpop.f32.mrf.mxu0
        %v2367 = vadd.f32 %v1053, %v2366
        %v2368 = vpop.f32.mrf.mxu0
        %v2369 = vadd.f32 %v1049, %v2368
        %v2370 = vpop.f32.mrf.mxu0
        %v2371 = vadd.f32 %v1053, %v2370
        %2372 = vmatprep.mubr.bf16.mxu0 0
        %2373 = vmatmul.mubr.bf16.gmra.mxu0 %v1314
        %v2374 = vpop.f32.mrf.mxu0
        %v2375 = vadd.f32 %v1049, %v2374
        %v2376 = vpop.f32.mrf.mxu0
        %v2377 = vadd.f32 %v1053, %v2376
        %v2378 = vpop.f32.mrf.mxu0
        %v2379 = vadd.f32 %v1049, %v2378
        %v2380 = vpop.f32.mrf.mxu0
        %v2381 = vadd.f32 %v1053, %v2380
        %2382 = vmatprep.mubr.bf16.mxu0 0
        %2383 = vmatmul.mubr.bf16.gmra.mxu0 %v1317
        %v2384 = vpop.f32.mrf.mxu0
        %v2385 = vadd.f32 %v1049, %v2384
        %v2386 = vpop.f32.mrf.mxu0
        %v2387 = vadd.f32 %v1053, %v2386
        %v2388 = vpop.f32.mrf.mxu0
        %v2389 = vadd.f32 %v1049, %v2388
        %v2390 = vpop.f32.mrf.mxu0
        %v2391 = vadd.f32 %v1053, %v2390
        %2392 = vmatprep.mubr.bf16.mxu0 0
        %2393 = vmatmul.mubr.bf16.gmra.mxu0 %v1320
        %v2394 = vpop.f32.mrf.mxu0
        %v2395 = vadd.f32 %v1049, %v2394
        %v2396 = vpop.f32.mrf.mxu0
        %v2397 = vadd.f32 %v1053, %v2396
        %v2398 = vpop.f32.mrf.mxu0
        %v2399 = vadd.f32 %v1049, %v2398
        %v2400 = vpop.f32.mrf.mxu0
        %v2401 = vadd.f32 %v1053, %v2400
        %2402 = vmatprep.mubr.bf16.mxu0 0
        %2403 = vmatmul.mubr.bf16.gmra.mxu0 %v1323
        %v2404 = vpop.f32.mrf.mxu0
        %v2405 = vadd.f32 %v1049, %v2404
        %v2406 = vpop.f32.mrf.mxu0
        %v2407 = vadd.f32 %v1053, %v2406
        %v2408 = vpop.f32.mrf.mxu0
        %v2409 = vadd.f32 %v1049, %v2408
        %v2410 = vpop.f32.mrf.mxu0
        %v2411 = vadd.f32 %v1053, %v2410
        %2412 = vmatprep.mubr.bf16.mxu0 0
        %2413 = vmatmul.mubr.bf16.gmra.mxu0 %v1326
        %v2414 = vpop.f32.mrf.mxu0
        %v2415 = vadd.f32 %v1049, %v2414
        %v2416 = vpop.f32.mrf.mxu0
        %v2417 = vadd.f32 %v1053, %v2416
        %v2418 = vpop.f32.mrf.mxu0
        %v2419 = vadd.f32 %v1049, %v2418
        %v2420 = vpop.f32.mrf.mxu0
        %v2421 = vadd.f32 %v1053, %v2420
        %2422 = vmatprep.mubr.bf16.mxu0 0
        %2423 = vmatmul.mubr.bf16.gmra.mxu0 %v1329
        %v2424 = vpop.f32.mrf.mxu0
        %v2425 = vadd.f32 %v1049, %v2424
        %v2426 = vpop.f32.mrf.mxu0
        %v2427 = vadd.f32 %v1053, %v2426
        %v2428 = vpop.f32.mrf.mxu0
        %v2429 = vadd.f32 %v1049, %v2428
        %v2430 = vpop.f32.mrf.mxu0
        %v2431 = vadd.f32 %v1053, %v2430
        %2432 = vmatprep.mubr.bf16.mxu0 0
        %2433 = vmatmul.mubr.bf16.gmra.mxu0 %v1332
        %v2434 = vpop.f32.mrf.mxu0
        %v2435 = vadd.f32 %v1049, %v2434
        %v2436 = vpop.f32.mrf.mxu0
        %v2437 = vadd.f32 %v1053, %v2436
        %v2438 = vpop.f32.mrf.mxu0
        %v2439 = vadd.f32 %v1049, %v2438
        %v2440 = vpop.f32.mrf.mxu0
        %v2441 = vadd.f32 %v1053, %v2440
        %2442 = vmatprep.mubr.bf16.mxu0 0
        %2443 = vmatmul.mubr.bf16.gmra.mxu0 %v1335
        %v2444 = vpop.f32.mrf.mxu0
        %v2445 = vadd.f32 %v1049, %v2444
        %v2446 = vpop.f32.mrf.mxu0
        %v2447 = vadd.f32 %v1053, %v2446
        %v2448 = vpop.f32.mrf.mxu0
        %v2449 = vadd.f32 %v1049, %v2448
        %v2450 = vpop.f32.mrf.mxu0
        %v2451 = vadd.f32 %v1053, %v2450
        %2452 = vmatprep.mubr.bf16.mxu0 0
        %2453 = vmatmul.mubr.bf16.gmra.mxu0 %v1338
        %v2454 = vpop.f32.mrf.mxu0
        %v2455 = vadd.f32 %v1049, %v2454
        %v2456 = vpop.f32.mrf.mxu0
        %v2457 = vadd.f32 %v1053, %v2456
        %v2458 = vpop.f32.mrf.mxu0
        %v2459 = vadd.f32 %v1049, %v2458
        %v2460 = vpop.f32.mrf.mxu0
        %v2461 = vadd.f32 %v1053, %v2460
        %2462 = vmatprep.mubr.bf16.mxu0 0
        %2463 = vmatmul.mubr.bf16.gmra.mxu0 %v1341
        %v2464 = vpop.f32.mrf.mxu0
        %v2465 = vadd.f32 %v1049, %v2464
        %v2466 = vpop.f32.mrf.mxu0
        %v2467 = vadd.f32 %v1053, %v2466
        %v2468 = vpop.f32.mrf.mxu0
        %v2469 = vadd.f32 %v1049, %v2468
        %v2470 = vpop.f32.mrf.mxu0
        %v2471 = vadd.f32 %v1053, %v2470
        %2472 = vmatprep.mubr.bf16.mxu0 0
        %2473 = vmatmul.mubr.bf16.gmra.mxu0 %v1344
        %v2474 = vpop.f32.mrf.mxu0
        %v2475 = vadd.f32 %v1049, %v2474
        %v2476 = vpop.f32.mrf.mxu0
        %v2477 = vadd.f32 %v1053, %v2476
        %v2478 = vpop.f32.mrf.mxu0
        %v2479 = vadd.f32 %v1049, %v2478
        %v2480 = vpop.f32.mrf.mxu0
        %v2481 = vadd.f32 %v1053, %v2480
        %2482 = vmatprep.mubr.bf16.mxu0 0
        %2483 = vmatmul.mubr.bf16.gmra.mxu0 %v1347
        %v2484 = vpop.f32.mrf.mxu0
        %v2485 = vadd.f32 %v1049, %v2484
        %v2486 = vpop.f32.mrf.mxu0
        %v2487 = vadd.f32 %v1053, %v2486
        %v2488 = vpop.f32.mrf.mxu0
        %v2489 = vadd.f32 %v1049, %v2488
        %v2490 = vpop.f32.mrf.mxu0
        %v2491 = vadd.f32 %v1053, %v2490
        %2492 = vmatprep.mubr.bf16.mxu0 0
        %2493 = vmatmul.mubr.bf16.gmra.mxu0 %v1350
        %v2494 = vpop.f32.mrf.mxu0
        %v2495 = vadd.f32 %v1049, %v2494
        %v2496 = vpop.f32.mrf.mxu0
        %v2497 = vadd.f32 %v1053, %v2496
        %v2498 = vpop.f32.mrf.mxu0
        %v2499 = vadd.f32 %v1049, %v2498
        %v2500 = vpop.f32.mrf.mxu0
        %v2501 = vadd.f32 %v1053, %v2500
        %2502 = vmatprep.mubr.bf16.mxu0 0
        %2503 = vmatmul.mubr.bf16.gmra.mxu0 %v1353
        %v2504 = vpop.f32.mrf.mxu0
        %v2505 = vadd.f32 %v1049, %v2504
        %v2506 = vpop.f32.mrf.mxu0
        %v2507 = vadd.f32 %v1053, %v2506
        %v2508 = vpop.f32.mrf.mxu0
        %v2509 = vadd.f32 %v1049, %v2508
        %v2510 = vpop.f32.mrf.mxu0
        %v2511 = vadd.f32 %v1053, %v2510
        %2512 = vdwg.mxu0
        %v2513 = vxor.u32 %v1390, 2147483648
        %v2514 = vxor.u32 %v1392, 2147483648
        %v2515 = vxor.u32 %v1583, 2147483648
        %v2516 = vxor.u32 %v1585, 2147483648
        %v2517 = vxor.u32 %v1776, 2147483648
        %v2518 = vxor.u32 %v1778, 2147483648
        %v2519 = vxor.u32 %v1969, 2147483648
        %v2520 = vxor.u32 %v1971, 2147483648
        %v2521 = vxor.u32 %v2162, 2147483648
        %v2522 = vxor.u32 %v2164, 2147483648
        %v2523 = vxor.u32 %v2355, 2147483648
        %v2524 = vxor.u32 %v2357, 2147483648
        %v2525 = vxor.u32 %v1394, 2147483648
        %v2526 = vxor.u32 %v1396, 2147483648
        %v2527 = vxor.u32 %v1587, 2147483648
        %v2528 = vxor.u32 %v1589, 2147483648
        %v2529 = vxor.u32 %v1780, 2147483648
        %v2530 = vxor.u32 %v1782, 2147483648
        %v2531 = vxor.u32 %v1973, 2147483648
        %v2532 = vxor.u32 %v1975, 2147483648
        %v2533 = vxor.u32 %v2166, 2147483648
        %v2534 = vxor.u32 %v2168, 2147483648
        %v2535 = vxor.u32 %v2359, 2147483648
        %v2536 = vxor.u32 %v2361, 2147483648
        %v2537 = vxor.u32 %v1400, 2147483648
        %v2538 = vxor.u32 %v1402, 2147483648
        %v2539 = vxor.u32 %v1593, 2147483648
        %v2540 = vxor.u32 %v1595, 2147483648
        %v2541 = vxor.u32 %v1786, 2147483648
        %v2542 = vxor.u32 %v1788, 2147483648
        %v2543 = vxor.u32 %v1979, 2147483648
        %v2544 = vxor.u32 %v1981, 2147483648
        %v2545 = vxor.u32 %v2172, 2147483648
        %v2546 = vxor.u32 %v2174, 2147483648
        %v2547 = vxor.u32 %v2365, 2147483648
        %v2548 = vxor.u32 %v2367, 2147483648
        %v2549 = vxor.u32 %v1404, 2147483648
        %v2550 = vxor.u32 %v1406, 2147483648
        %v2551 = vxor.u32 %v1597, 2147483648
        %v2552 = vxor.u32 %v1599, 2147483648
        %v2553 = vxor.u32 %v1790, 2147483648
        %v2554 = vxor.u32 %v1792, 2147483648
        %v2555 = vxor.u32 %v1983, 2147483648
        %v2556 = vxor.u32 %v1985, 2147483648
        %v2557 = vxor.u32 %v2176, 2147483648
        %v2558 = vxor.u32 %v2178, 2147483648
        %v2559 = vxor.u32 %v2369, 2147483648
        %v2560 = vxor.u32 %v2371, 2147483648
        %v2561 = vxor.u32 %v1410, 2147483648
        %v2562 = vxor.u32 %v1412, 2147483648
        %v2563 = vxor.u32 %v1603, 2147483648
        %v2564 = vxor.u32 %v1605, 2147483648
        %v2565 = vxor.u32 %v1796, 2147483648
        %v2566 = vxor.u32 %v1798, 2147483648
        %v2567 = vxor.u32 %v1989, 2147483648
        %v2568 = vxor.u32 %v1991, 2147483648
        %v2569 = vxor.u32 %v2182, 2147483648
        %v2570 = vxor.u32 %v2184, 2147483648
        %v2571 = vxor.u32 %v2375, 2147483648
        %v2572 = vxor.u32 %v2377, 2147483648
        %v2573 = vxor.u32 %v1414, 2147483648
        %v2574 = vxor.u32 %v1416, 2147483648
        %v2575 = vxor.u32 %v1607, 2147483648
        %v2576 = vxor.u32 %v1609, 2147483648
        %v2577 = vxor.u32 %v1800, 2147483648
        %v2578 = vxor.u32 %v1802, 2147483648
        %v2579 = vxor.u32 %v1993, 2147483648
        %v2580 = vxor.u32 %v1995, 2147483648
        %v2581 = vxor.u32 %v2186, 2147483648
        %v2582 = vxor.u32 %v2188, 2147483648
        %v2583 = vxor.u32 %v2379, 2147483648
        %v2584 = vxor.u32 %v2381, 2147483648
        %v2585 = vxor.u32 %v1420, 2147483648
        %v2586 = vxor.u32 %v1422, 2147483648
        %v2587 = vxor.u32 %v1613, 2147483648
        %v2588 = vxor.u32 %v1615, 2147483648
        %v2589 = vxor.u32 %v1806, 2147483648
        %v2590 = vxor.u32 %v1808, 2147483648
        %v2591 = vxor.u32 %v1999, 2147483648
        %v2592 = vxor.u32 %v2001, 2147483648
        %v2593 = vxor.u32 %v2192, 2147483648
        %v2594 = vxor.u32 %v2194, 2147483648
        %v2595 = vxor.u32 %v2385, 2147483648
        %v2596 = vxor.u32 %v2387, 2147483648
        %v2597 = vxor.u32 %v1424, 2147483648
        %v2598 = vxor.u32 %v1426, 2147483648
        %v2599 = vxor.u32 %v1617, 2147483648
        %v2600 = vxor.u32 %v1619, 2147483648
        %v2601 = vxor.u32 %v1810, 2147483648
        %v2602 = vxor.u32 %v1812, 2147483648
        %v2603 = vxor.u32 %v2003, 2147483648
        %v2604 = vxor.u32 %v2005, 2147483648
        %v2605 = vxor.u32 %v2196, 2147483648
        %v2606 = vxor.u32 %v2198, 2147483648
        %v2607 = vxor.u32 %v2389, 2147483648
        %v2608 = vxor.u32 %v2391, 2147483648
        %v2609 = vxor.u32 %v1430, 2147483648
        %v2610 = vxor.u32 %v1432, 2147483648
        %v2611 = vxor.u32 %v1623, 2147483648
        %v2612 = vxor.u32 %v1625, 2147483648
        %v2613 = vxor.u32 %v1816, 2147483648
        %v2614 = vxor.u32 %v1818, 2147483648
        %v2615 = vxor.u32 %v2009, 2147483648
        %v2616 = vxor.u32 %v2011, 2147483648
        %v2617 = vxor.u32 %v2202, 2147483648
        %v2618 = vxor.u32 %v2204, 2147483648
        %v2619 = vxor.u32 %v2395, 2147483648
        %v2620 = vxor.u32 %v2397, 2147483648
        %v2621 = vxor.u32 %v1434, 2147483648
        %v2622 = vxor.u32 %v1436, 2147483648
        %v2623 = vxor.u32 %v1627, 2147483648
        %v2624 = vxor.u32 %v1629, 2147483648
        %v2625 = vxor.u32 %v1820, 2147483648
        %v2626 = vxor.u32 %v1822, 2147483648
        %v2627 = vxor.u32 %v2013, 2147483648
        %v2628 = vxor.u32 %v2015, 2147483648
        %v2629 = vxor.u32 %v2206, 2147483648
        %v2630 = vxor.u32 %v2208, 2147483648
        %v2631 = vxor.u32 %v2399, 2147483648
        %v2632 = vxor.u32 %v2401, 2147483648
        %v2633 = vxor.u32 %v1440, 2147483648
        %v2634 = vxor.u32 %v1442, 2147483648
        %v2635 = vxor.u32 %v1633, 2147483648
        %v2636 = vxor.u32 %v1635, 2147483648
        %v2637 = vxor.u32 %v1826, 2147483648
        %v2638 = vxor.u32 %v1828, 2147483648
        %v2639 = vxor.u32 %v2019, 2147483648
        %v2640 = vxor.u32 %v2021, 2147483648
        %v2641 = vxor.u32 %v2212, 2147483648
        %v2642 = vxor.u32 %v2214, 2147483648
        %v2643 = vxor.u32 %v2405, 2147483648
        %v2644 = vxor.u32 %v2407, 2147483648
        %v2645 = vxor.u32 %v1444, 2147483648
        %v2646 = vxor.u32 %v1446, 2147483648
        %v2647 = vxor.u32 %v1637, 2147483648
        %v2648 = vxor.u32 %v1639, 2147483648
        %v2649 = vxor.u32 %v1830, 2147483648
        %v2650 = vxor.u32 %v1832, 2147483648
        %v2651 = vxor.u32 %v2023, 2147483648
        %v2652 = vxor.u32 %v2025, 2147483648
        %v2653 = vxor.u32 %v2216, 2147483648
        %v2654 = vxor.u32 %v2218, 2147483648
        %v2655 = vxor.u32 %v2409, 2147483648
        %v2656 = vxor.u32 %v2411, 2147483648
        %v2657 = vxor.u32 %v1450, 2147483648
        %v2658 = vxor.u32 %v1452, 2147483648
        %v2659 = vxor.u32 %v1643, 2147483648
        %v2660 = vxor.u32 %v1645, 2147483648
        %v2661 = vxor.u32 %v1836, 2147483648
        %v2662 = vxor.u32 %v1838, 2147483648
        %v2663 = vxor.u32 %v2029, 2147483648
        %v2664 = vxor.u32 %v2031, 2147483648
        %v2665 = vxor.u32 %v2222, 2147483648
        %v2666 = vxor.u32 %v2224, 2147483648
        %v2667 = vxor.u32 %v2415, 2147483648
        %v2668 = vxor.u32 %v2417, 2147483648
        %v2669 = vxor.u32 %v1454, 2147483648
        %v2670 = vxor.u32 %v1456, 2147483648
        %v2671 = vxor.u32 %v1647, 2147483648
        %v2672 = vxor.u32 %v1649, 2147483648
        %v2673 = vxor.u32 %v1840, 2147483648
        %v2674 = vxor.u32 %v1842, 2147483648
        %v2675 = vxor.u32 %v2033, 2147483648
        %v2676 = vxor.u32 %v2035, 2147483648
        %v2677 = vxor.u32 %v2226, 2147483648
        %v2678 = vxor.u32 %v2228, 2147483648
        %v2679 = vxor.u32 %v2419, 2147483648
        %v2680 = vxor.u32 %v2421, 2147483648
        %v2681 = vxor.u32 %v1460, 2147483648
        %v2682 = vxor.u32 %v1462, 2147483648
        %v2683 = vxor.u32 %v1653, 2147483648
        %v2684 = vxor.u32 %v1655, 2147483648
        %v2685 = vxor.u32 %v1846, 2147483648
        %v2686 = vxor.u32 %v1848, 2147483648
        %v2687 = vxor.u32 %v2039, 2147483648
        %v2688 = vxor.u32 %v2041, 2147483648
        %v2689 = vxor.u32 %v2232, 2147483648
        %v2690 = vxor.u32 %v2234, 2147483648
        %v2691 = vxor.u32 %v2425, 2147483648
        %v2692 = vxor.u32 %v2427, 2147483648
        %v2693 = vxor.u32 %v1464, 2147483648
        %v2694 = vxor.u32 %v1466, 2147483648
        %v2695 = vxor.u32 %v1657, 2147483648
        %v2696 = vxor.u32 %v1659, 2147483648
        %v2697 = vxor.u32 %v1850, 2147483648
        %v2698 = vxor.u32 %v1852, 2147483648
        %v2699 = vxor.u32 %v2043, 2147483648
        %v2700 = vxor.u32 %v2045, 2147483648
        %v2701 = vxor.u32 %v2236, 2147483648
        %v2702 = vxor.u32 %v2238, 2147483648
        %v2703 = vxor.u32 %v2429, 2147483648
        %v2704 = vxor.u32 %v2431, 2147483648
        %v2705 = vxor.u32 %v1470, 2147483648
        %v2706 = vxor.u32 %v1472, 2147483648
        %v2707 = vxor.u32 %v1663, 2147483648
        %v2708 = vxor.u32 %v1665, 2147483648
        %v2709 = vxor.u32 %v1856, 2147483648
        %v2710 = vxor.u32 %v1858, 2147483648
        %v2711 = vxor.u32 %v2049, 2147483648
        %v2712 = vxor.u32 %v2051, 2147483648
        %v2713 = vxor.u32 %v2242, 2147483648
        %v2714 = vxor.u32 %v2244, 2147483648
        %v2715 = vxor.u32 %v2435, 2147483648
        %v2716 = vxor.u32 %v2437, 2147483648
        %v2717 = vxor.u32 %v1474, 2147483648
        %v2718 = vxor.u32 %v1476, 2147483648
        %v2719 = vxor.u32 %v1667, 2147483648
        %v2720 = vxor.u32 %v1669, 2147483648
        %v2721 = vxor.u32 %v1860, 2147483648
        %v2722 = vxor.u32 %v1862, 2147483648
        %v2723 = vxor.u32 %v2053, 2147483648
        %v2724 = vxor.u32 %v2055, 2147483648
        %v2725 = vxor.u32 %v2246, 2147483648
        %v2726 = vxor.u32 %v2248, 2147483648
        %v2727 = vxor.u32 %v2439, 2147483648
        %v2728 = vxor.u32 %v2441, 2147483648
        %v2729 = vxor.u32 %v1480, 2147483648
        %v2730 = vxor.u32 %v1482, 2147483648
        %v2731 = vxor.u32 %v1673, 2147483648
        %v2732 = vxor.u32 %v1675, 2147483648
        %v2733 = vxor.u32 %v1866, 2147483648
        %v2734 = vxor.u32 %v1868, 2147483648
        %v2735 = vxor.u32 %v2059, 2147483648
        %v2736 = vxor.u32 %v2061, 2147483648
        %v2737 = vxor.u32 %v2252, 2147483648
        %v2738 = vxor.u32 %v2254, 2147483648
        %v2739 = vxor.u32 %v2445, 2147483648
        %v2740 = vxor.u32 %v2447, 2147483648
        %v2741 = vxor.u32 %v1484, 2147483648
        %v2742 = vxor.u32 %v1486, 2147483648
        %v2743 = vxor.u32 %v1677, 2147483648
        %v2744 = vxor.u32 %v1679, 2147483648
        %v2745 = vxor.u32 %v1870, 2147483648
        %v2746 = vxor.u32 %v1872, 2147483648
        %v2747 = vxor.u32 %v2063, 2147483648
        %v2748 = vxor.u32 %v2065, 2147483648
        %v2749 = vxor.u32 %v2256, 2147483648
        %v2750 = vxor.u32 %v2258, 2147483648
        %v2751 = vxor.u32 %v2449, 2147483648
        %v2752 = vxor.u32 %v2451, 2147483648
        %v2753 = vxor.u32 %v1490, 2147483648
        %v2754 = vxor.u32 %v1492, 2147483648
        %v2755 = vxor.u32 %v1683, 2147483648
        %v2756 = vxor.u32 %v1685, 2147483648
        %v2757 = vxor.u32 %v1876, 2147483648
        %v2758 = vxor.u32 %v1878, 2147483648
        %v2759 = vxor.u32 %v2069, 2147483648
        %v2760 = vxor.u32 %v2071, 2147483648
        %v2761 = vxor.u32 %v2262, 2147483648
        %v2762 = vxor.u32 %v2264, 2147483648
        %v2763 = vxor.u32 %v2455, 2147483648
        %v2764 = vxor.u32 %v2457, 2147483648
        %v2765 = vxor.u32 %v1494, 2147483648
        %v2766 = vxor.u32 %v1496, 2147483648
        %v2767 = vxor.u32 %v1687, 2147483648
        %v2768 = vxor.u32 %v1689, 2147483648
        %v2769 = vxor.u32 %v1880, 2147483648
        %v2770 = vxor.u32 %v1882, 2147483648
        %v2771 = vxor.u32 %v2073, 2147483648
        %v2772 = vxor.u32 %v2075, 2147483648
        %v2773 = vxor.u32 %v2266, 2147483648
        %v2774 = vxor.u32 %v2268, 2147483648
        %v2775 = vxor.u32 %v2459, 2147483648
        %v2776 = vxor.u32 %v2461, 2147483648
        %v2777 = vxor.u32 %v1500, 2147483648
        %v2778 = vxor.u32 %v1502, 2147483648
        %v2779 = vxor.u32 %v1693, 2147483648
        %v2780 = vxor.u32 %v1695, 2147483648
        %v2781 = vxor.u32 %v1886, 2147483648
        %v2782 = vxor.u32 %v1888, 2147483648
        %v2783 = vxor.u32 %v2079, 2147483648
        %v2784 = vxor.u32 %v2081, 2147483648
        %v2785 = vxor.u32 %v2272, 2147483648
        %v2786 = vxor.u32 %v2274, 2147483648
        %v2787 = vxor.u32 %v2465, 2147483648
        %v2788 = vxor.u32 %v2467, 2147483648
        %v2789 = vxor.u32 %v1504, 2147483648
        %v2790 = vxor.u32 %v1506, 2147483648
        %v2791 = vxor.u32 %v1697, 2147483648
        %v2792 = vxor.u32 %v1699, 2147483648
        %v2793 = vxor.u32 %v1890, 2147483648
        %v2794 = vxor.u32 %v1892, 2147483648
        %v2795 = vxor.u32 %v2083, 2147483648
        %v2796 = vxor.u32 %v2085, 2147483648
        %v2797 = vxor.u32 %v2276, 2147483648
        %v2798 = vxor.u32 %v2278, 2147483648
        %v2799 = vxor.u32 %v2469, 2147483648
        %v2800 = vxor.u32 %v2471, 2147483648
        %v2801 = vxor.u32 %v1510, 2147483648
        %v2802 = vxor.u32 %v1512, 2147483648
        %v2803 = vxor.u32 %v1703, 2147483648
        %v2804 = vxor.u32 %v1705, 2147483648
        %v2805 = vxor.u32 %v1896, 2147483648
        %v2806 = vxor.u32 %v1898, 2147483648
        %v2807 = vxor.u32 %v2089, 2147483648
        %v2808 = vxor.u32 %v2091, 2147483648
        %v2809 = vxor.u32 %v2282, 2147483648
        %v2810 = vxor.u32 %v2284, 2147483648
        %v2811 = vxor.u32 %v2475, 2147483648
        %v2812 = vxor.u32 %v2477, 2147483648
        %v2813 = vxor.u32 %v1514, 2147483648
        %v2814 = vxor.u32 %v1516, 2147483648
        %v2815 = vxor.u32 %v1707, 2147483648
        %v2816 = vxor.u32 %v1709, 2147483648
        %v2817 = vxor.u32 %v1900, 2147483648
        %v2818 = vxor.u32 %v1902, 2147483648
        %v2819 = vxor.u32 %v2093, 2147483648
        %v2820 = vxor.u32 %v2095, 2147483648
        %v2821 = vxor.u32 %v2286, 2147483648
        %v2822 = vxor.u32 %v2288, 2147483648
        %v2823 = vxor.u32 %v2479, 2147483648
        %v2824 = vxor.u32 %v2481, 2147483648
        %v2825 = vxor.u32 %v1520, 2147483648
        %v2826 = vxor.u32 %v1522, 2147483648
        %v2827 = vxor.u32 %v1713, 2147483648
        %v2828 = vxor.u32 %v1715, 2147483648
        %v2829 = vxor.u32 %v1906, 2147483648
        %v2830 = vxor.u32 %v1908, 2147483648
        %v2831 = vxor.u32 %v2099, 2147483648
        %v2832 = vxor.u32 %v2101, 2147483648
        %v2833 = vxor.u32 %v2292, 2147483648
        %v2834 = vxor.u32 %v2294, 2147483648
        %v2835 = vxor.u32 %v2485, 2147483648
        %v2836 = vxor.u32 %v2487, 2147483648
        %v2837 = vxor.u32 %v1524, 2147483648
        %v2838 = vxor.u32 %v1526, 2147483648
        %v2839 = vxor.u32 %v1717, 2147483648
        %v2840 = vxor.u32 %v1719, 2147483648
        %v2841 = vxor.u32 %v1910, 2147483648
        %v2842 = vxor.u32 %v1912, 2147483648
        %v2843 = vxor.u32 %v2103, 2147483648
        %v2844 = vxor.u32 %v2105, 2147483648
        %v2845 = vxor.u32 %v2296, 2147483648
        %v2846 = vxor.u32 %v2298, 2147483648
        %v2847 = vxor.u32 %v2489, 2147483648
        %v2848 = vxor.u32 %v2491, 2147483648
        %v2849 = vxor.u32 %v1530, 2147483648
        %v2850 = vxor.u32 %v1532, 2147483648
        %v2851 = vxor.u32 %v1723, 2147483648
        %v2852 = vxor.u32 %v1725, 2147483648
        %v2853 = vxor.u32 %v1916, 2147483648
        %v2854 = vxor.u32 %v1918, 2147483648
        %v2855 = vxor.u32 %v2109, 2147483648
        %v2856 = vxor.u32 %v2111, 2147483648
        %v2857 = vxor.u32 %v2302, 2147483648
        %v2858 = vxor.u32 %v2304, 2147483648
        %v2859 = vxor.u32 %v2495, 2147483648
        %v2860 = vxor.u32 %v2497, 2147483648
        %v2861 = vxor.u32 %v1534, 2147483648
        %v2862 = vxor.u32 %v1536, 2147483648
        %v2863 = vxor.u32 %v1727, 2147483648
        %v2864 = vxor.u32 %v1729, 2147483648
        %v2865 = vxor.u32 %v1920, 2147483648
        %v2866 = vxor.u32 %v1922, 2147483648
        %v2867 = vxor.u32 %v2113, 2147483648
        %v2868 = vxor.u32 %v2115, 2147483648
        %v2869 = vxor.u32 %v2306, 2147483648
        %v2870 = vxor.u32 %v2308, 2147483648
        %v2871 = vxor.u32 %v2499, 2147483648
        %v2872 = vxor.u32 %v2501, 2147483648
        %v2873 = vxor.u32 %v1540, 2147483648
        %v2874 = vxor.u32 %v1542, 2147483648
        %v2875 = vxor.u32 %v1733, 2147483648
        %v2876 = vxor.u32 %v1735, 2147483648
        %v2877 = vxor.u32 %v1926, 2147483648
        %v2878 = vxor.u32 %v1928, 2147483648
        %v2879 = vxor.u32 %v2119, 2147483648
        %v2880 = vxor.u32 %v2121, 2147483648
        %v2881 = vxor.u32 %v2312, 2147483648
        %v2882 = vxor.u32 %v2314, 2147483648
        %v2883 = vxor.u32 %v2505, 2147483648
        %v2884 = vxor.u32 %v2507, 2147483648
        %v2885 = vxor.u32 %v1544, 2147483648
        %v2886 = vxor.u32 %v1546, 2147483648
        %v2887 = vxor.u32 %v1737, 2147483648
        %v2888 = vxor.u32 %v1739, 2147483648
        %v2889 = vxor.u32 %v1930, 2147483648
        %v2890 = vxor.u32 %v1932, 2147483648
        %v2891 = vxor.u32 %v2123, 2147483648
        %v2892 = vxor.u32 %v2125, 2147483648
        %v2893 = vxor.u32 %v2316, 2147483648
        %v2894 = vxor.u32 %v2318, 2147483648
        %v2895 = vxor.u32 %v2509, 2147483648
        %v2896 = vxor.u32 %v2511, 2147483648
        %v2897 = vmul.f32 %v2513, 1.442695
        %v2898 = vpow.pop %v2897
        %v2899 = vmul.f32 %v2514, 1.442695
        %v2900 = vpow.pop %v2899
        %v2901 = vmul.f32 %v2515, 1.442695
        %v2902 = vpow.pop %v2901
        %v2903 = vmul.f32 %v2516, 1.442695
        %v2904 = vpow.pop %v2903
        %v2905 = vmul.f32 %v2517, 1.442695
        %v2906 = vpow.pop %v2905
        %v2907 = vmul.f32 %v2518, 1.442695
        %v2908 = vpow.pop %v2907
        %v2909 = vmul.f32 %v2519, 1.442695
        %v2910 = vpow.pop %v2909
        %v2911 = vmul.f32 %v2520, 1.442695
        %v2912 = vpow.pop %v2911
        %v2913 = vmul.f32 %v2521, 1.442695
        %v2914 = vpow.pop %v2913
        %v2915 = vmul.f32 %v2522, 1.442695
        %v2916 = vpow.pop %v2915
        %v2917 = vmul.f32 %v2523, 1.442695
        %v2918 = vpow.pop %v2917
        %v2919 = vmul.f32 %v2524, 1.442695
        %v2920 = vpow.pop %v2919
        %v2921 = vmul.f32 %v2525, 1.442695
        %v2922 = vpow.pop %v2921
        %v2923 = vmul.f32 %v2526, 1.442695
        %v2924 = vpow.pop %v2923
        %v2925 = vmul.f32 %v2527, 1.442695
        %v2926 = vpow.pop %v2925
        %v2927 = vmul.f32 %v2528, 1.442695
        %v2928 = vpow.pop %v2927
        %v2929 = vmul.f32 %v2529, 1.442695
        %v2930 = vpow.pop %v2929
        %v2931 = vmul.f32 %v2530, 1.442695
        %v2932 = vpow.pop %v2931
        %v2933 = vmul.f32 %v2531, 1.442695
        %v2934 = vpow.pop %v2933
        %v2935 = vmul.f32 %v2532, 1.442695
        %v2936 = vpow.pop %v2935
        %v2937 = vmul.f32 %v2533, 1.442695
        %v2938 = vpow.pop %v2937
        %v2939 = vmul.f32 %v2534, 1.442695
        %v2940 = vpow.pop %v2939
        %v2941 = vmul.f32 %v2535, 1.442695
        %v2942 = vpow.pop %v2941
        %v2943 = vmul.f32 %v2536, 1.442695
        %v2944 = vpow.pop %v2943
        %v2945 = vmul.f32 %v2537, 1.442695
        %v2946 = vpow.pop %v2945
        %v2947 = vmul.f32 %v2538, 1.442695
        %v2948 = vpow.pop %v2947
        %v2949 = vmul.f32 %v2539, 1.442695
        %v2950 = vpow.pop %v2949
        %v2951 = vmul.f32 %v2540, 1.442695
        %v2952 = vpow.pop %v2951
        %v2953 = vmul.f32 %v2541, 1.442695
        %v2954 = vpow.pop %v2953
        %v2955 = vmul.f32 %v2542, 1.442695
        %v2956 = vpow.pop %v2955
        %v2957 = vmul.f32 %v2543, 1.442695
        %v2958 = vpow.pop %v2957
        %v2959 = vmul.f32 %v2544, 1.442695
        %v2960 = vpow.pop %v2959
        %v2961 = vmul.f32 %v2545, 1.442695
        %v2962 = vpow.pop %v2961
        %v2963 = vmul.f32 %v2546, 1.442695
        %v2964 = vpow.pop %v2963
        %v2965 = vmul.f32 %v2547, 1.442695
        %v2966 = vpow.pop %v2965
        %v2967 = vmul.f32 %v2548, 1.442695
        %v2968 = vpow.pop %v2967
        %v2969 = vmul.f32 %v2549, 1.442695
        %v2970 = vpow.pop %v2969
        %v2971 = vmul.f32 %v2550, 1.442695
        %v2972 = vpow.pop %v2971
        %v2973 = vmul.f32 %v2551, 1.442695
        %v2974 = vpow.pop %v2973
        %v2975 = vmul.f32 %v2552, 1.442695
        %v2976 = vpow.pop %v2975
        %v2977 = vmul.f32 %v2553, 1.442695
        %v2978 = vpow.pop %v2977
        %v2979 = vmul.f32 %v2554, 1.442695
        %v2980 = vpow.pop %v2979
        %v2981 = vmul.f32 %v2555, 1.442695
        %v2982 = vpow.pop %v2981
        %v2983 = vmul.f32 %v2556, 1.442695
        %v2984 = vpow.pop %v2983
        %v2985 = vmul.f32 %v2557, 1.442695
        %v2986 = vpow.pop %v2985
        %v2987 = vmul.f32 %v2558, 1.442695
        %v2988 = vpow.pop %v2987
        %v2989 = vmul.f32 %v2559, 1.442695
        %v2990 = vpow.pop %v2989
        %v2991 = vmul.f32 %v2560, 1.442695
        %v2992 = vpow.pop %v2991
        %v2993 = vmul.f32 %v2561, 1.442695
        %v2994 = vpow.pop %v2993
        %v2995 = vmul.f32 %v2562, 1.442695
        %v2996 = vpow.pop %v2995
        %v2997 = vmul.f32 %v2563, 1.442695
        %v2998 = vpow.pop %v2997
        %v2999 = vmul.f32 %v2564, 1.442695
        %v3000 = vpow.pop %v2999
        %v3001 = vmul.f32 %v2565, 1.442695
        %v3002 = vpow.pop %v3001
        %v3003 = vmul.f32 %v2566, 1.442695
        %v3004 = vpow.pop %v3003
        %v3005 = vmul.f32 %v2567, 1.442695
        %v3006 = vpow.pop %v3005
        %v3007 = vmul.f32 %v2568, 1.442695
        %v3008 = vpow.pop %v3007
        %v3009 = vmul.f32 %v2569, 1.442695
        %v3010 = vpow.pop %v3009
        %v3011 = vmul.f32 %v2570, 1.442695
        %v3012 = vpow.pop %v3011
        %v3013 = vmul.f32 %v2571, 1.442695
        %v3014 = vpow.pop %v3013
        %v3015 = vmul.f32 %v2572, 1.442695
        %v3016 = vpow.pop %v3015
        %v3017 = vmul.f32 %v2573, 1.442695
        %v3018 = vpow.pop %v3017
        %v3019 = vmul.f32 %v2574, 1.442695
        %v3020 = vpow.pop %v3019
        %v3021 = vmul.f32 %v2575, 1.442695
        %v3022 = vpow.pop %v3021
        %v3023 = vmul.f32 %v2576, 1.442695
        %v3024 = vpow.pop %v3023
        %v3025 = vmul.f32 %v2577, 1.442695
        %v3026 = vpow.pop %v3025
        %v3027 = vmul.f32 %v2578, 1.442695
        %v3028 = vpow.pop %v3027
        %v3029 = vmul.f32 %v2579, 1.442695
        %v3030 = vpow.pop %v3029
        %v3031 = vmul.f32 %v2580, 1.442695
        %v3032 = vpow.pop %v3031
        %v3033 = vmul.f32 %v2581, 1.442695
        %v3034 = vpow.pop %v3033
        %v3035 = vmul.f32 %v2582, 1.442695
        %v3036 = vpow.pop %v3035
        %v3037 = vmul.f32 %v2583, 1.442695
        %v3038 = vpow.pop %v3037
        %v3039 = vmul.f32 %v2584, 1.442695
        %v3040 = vpow.pop %v3039
        %v3041 = vmul.f32 %v2585, 1.442695
        %v3042 = vpow.pop %v3041
        %v3043 = vmul.f32 %v2586, 1.442695
        %v3044 = vpow.pop %v3043
        %v3045 = vmul.f32 %v2587, 1.442695
        %v3046 = vpow.pop %v3045
        %v3047 = vmul.f32 %v2588, 1.442695
        %v3048 = vpow.pop %v3047
        %v3049 = vmul.f32 %v2589, 1.442695
        %v3050 = vpow.pop %v3049
        %v3051 = vmul.f32 %v2590, 1.442695
        %v3052 = vpow.pop %v3051
        %v3053 = vmul.f32 %v2591, 1.442695
        %v3054 = vpow.pop %v3053
        %v3055 = vmul.f32 %v2592, 1.442695
        %v3056 = vpow.pop %v3055
        %v3057 = vmul.f32 %v2593, 1.442695
        %v3058 = vpow.pop %v3057
        %v3059 = vmul.f32 %v2594, 1.442695
        %v3060 = vpow.pop %v3059
        %v3061 = vmul.f32 %v2595, 1.442695
        %v3062 = vpow.pop %v3061
        %v3063 = vmul.f32 %v2596, 1.442695
        %v3064 = vpow.pop %v3063
        %v3065 = vmul.f32 %v2597, 1.442695
        %v3066 = vpow.pop %v3065
        %v3067 = vmul.f32 %v2598, 1.442695
        %v3068 = vpow.pop %v3067
        %v3069 = vmul.f32 %v2599, 1.442695
        %v3070 = vpow.pop %v3069
        %v3071 = vmul.f32 %v2600, 1.442695
        %v3072 = vpow.pop %v3071
        %v3073 = vmul.f32 %v2601, 1.442695
        %v3074 = vpow.pop %v3073
        %v3075 = vmul.f32 %v2602, 1.442695
        %v3076 = vpow.pop %v3075
        %v3077 = vmul.f32 %v2603, 1.442695
        %v3078 = vpow.pop %v3077
        %v3079 = vmul.f32 %v2604, 1.442695
        %v3080 = vpow.pop %v3079
        %v3081 = vmul.f32 %v2605, 1.442695
        %v3082 = vpow.pop %v3081
        %v3083 = vmul.f32 %v2606, 1.442695
        %v3084 = vpow.pop %v3083
        %v3085 = vmul.f32 %v2607, 1.442695
        %v3086 = vpow.pop %v3085
        %v3087 = vmul.f32 %v2608, 1.442695
        %v3088 = vpow.pop %v3087
        %v3089 = vmul.f32 %v2609, 1.442695
        %v3090 = vpow.pop %v3089
        %v3091 = vmul.f32 %v2610, 1.442695
        %v3092 = vpow.pop %v3091
        %v3093 = vmul.f32 %v2611, 1.442695
        %v3094 = vpow.pop %v3093
        %v3095 = vmul.f32 %v2612, 1.442695
        %v3096 = vpow.pop %v3095
        %v3097 = vmul.f32 %v2613, 1.442695
        %v3098 = vpow.pop %v3097
        %v3099 = vmul.f32 %v2614, 1.442695
        %v3100 = vpow.pop %v3099
        %v3101 = vmul.f32 %v2615, 1.442695
        %v3102 = vpow.pop %v3101
        %v3103 = vmul.f32 %v2616, 1.442695
        %v3104 = vpow.pop %v3103
        %v3105 = vmul.f32 %v2617, 1.442695
        %v3106 = vpow.pop %v3105
        %v3107 = vmul.f32 %v2618, 1.442695
        %v3108 = vpow.pop %v3107
        %v3109 = vmul.f32 %v2619, 1.442695
        %v3110 = vpow.pop %v3109
        %v3111 = vmul.f32 %v2620, 1.442695
        %v3112 = vpow.pop %v3111
        %v3113 = vmul.f32 %v2621, 1.442695
        %v3114 = vpow.pop %v3113
        %v3115 = vmul.f32 %v2622, 1.442695
        %v3116 = vpow.pop %v3115
        %v3117 = vmul.f32 %v2623, 1.442695
        %v3118 = vpow.pop %v3117
        %v3119 = vmul.f32 %v2624, 1.442695
        %v3120 = vpow.pop %v3119
        %v3121 = vmul.f32 %v2625, 1.442695
        %v3122 = vpow.pop %v3121
        %v3123 = vmul.f32 %v2626, 1.442695
        %v3124 = vpow.pop %v3123
        %v3125 = vmul.f32 %v2627, 1.442695
        %v3126 = vpow.pop %v3125
        %v3127 = vmul.f32 %v2628, 1.442695
        %v3128 = vpow.pop %v3127
        %v3129 = vmul.f32 %v2629, 1.442695
        %v3130 = vpow.pop %v3129
        %v3131 = vmul.f32 %v2630, 1.442695
        %v3132 = vpow.pop %v3131
        %v3133 = vmul.f32 %v2631, 1.442695
        %v3134 = vpow.pop %v3133
        %v3135 = vmul.f32 %v2632, 1.442695
        %v3136 = vpow.pop %v3135
        %v3137 = vmul.f32 %v2633, 1.442695
        %v3138 = vpow.pop %v3137
        %v3139 = vmul.f32 %v2634, 1.442695
        %v3140 = vpow.pop %v3139
        %v3141 = vmul.f32 %v2635, 1.442695
        %v3142 = vpow.pop %v3141
        %v3143 = vmul.f32 %v2636, 1.442695
        %v3144 = vpow.pop %v3143
        %v3145 = vmul.f32 %v2637, 1.442695
        %v3146 = vpow.pop %v3145
        %v3147 = vmul.f32 %v2638, 1.442695
        %v3148 = vpow.pop %v3147
        %v3149 = vmul.f32 %v2639, 1.442695
        %v3150 = vpow.pop %v3149
        %v3151 = vmul.f32 %v2640, 1.442695
        %v3152 = vpow.pop %v3151
        %v3153 = vmul.f32 %v2641, 1.442695
        %v3154 = vpow.pop %v3153
        %v3155 = vmul.f32 %v2642, 1.442695
        %v3156 = vpow.pop %v3155
        %v3157 = vmul.f32 %v2643, 1.442695
        %v3158 = vpow.pop %v3157
        %v3159 = vmul.f32 %v2644, 1.442695
        %v3160 = vpow.pop %v3159
        %v3161 = vmul.f32 %v2645, 1.442695
        %v3162 = vpow.pop %v3161
        %v3163 = vmul.f32 %v2646, 1.442695
        %v3164 = vpow.pop %v3163
        %v3165 = vmul.f32 %v2647, 1.442695
        %v3166 = vpow.pop %v3165
        %v3167 = vmul.f32 %v2648, 1.442695
        %v3168 = vpow.pop %v3167
        %v3169 = vmul.f32 %v2649, 1.442695
        %v3170 = vpow.pop %v3169
        %v3171 = vmul.f32 %v2650, 1.442695
        %v3172 = vpow.pop %v3171
        %v3173 = vmul.f32 %v2651, 1.442695
        %v3174 = vpow.pop %v3173
        %v3175 = vmul.f32 %v2652, 1.442695
        %v3176 = vpow.pop %v3175
        %v3177 = vmul.f32 %v2653, 1.442695
        %v3178 = vpow.pop %v3177
        %v3179 = vmul.f32 %v2654, 1.442695
        %v3180 = vpow.pop %v3179
        %v3181 = vmul.f32 %v2655, 1.442695
        %v3182 = vpow.pop %v3181
        %v3183 = vmul.f32 %v2656, 1.442695
        %v3184 = vpow.pop %v3183
        %v3185 = vmul.f32 %v2657, 1.442695
        %v3186 = vpow.pop %v3185
        %v3187 = vmul.f32 %v2658, 1.442695
        %v3188 = vpow.pop %v3187
        %v3189 = vmul.f32 %v2659, 1.442695
        %v3190 = vpow.pop %v3189
        %v3191 = vmul.f32 %v2660, 1.442695
        %v3192 = vpow.pop %v3191
        %v3193 = vmul.f32 %v2661, 1.442695
        %v3194 = vpow.pop %v3193
        %v3195 = vmul.f32 %v2662, 1.442695
        %v3196 = vpow.pop %v3195
        %v3197 = vmul.f32 %v2663, 1.442695
        %v3198 = vpow.pop %v3197
        %v3199 = vmul.f32 %v2664, 1.442695
        %v3200 = vpow.pop %v3199
        %v3201 = vmul.f32 %v2665, 1.442695
        %v3202 = vpow.pop %v3201
        %v3203 = vmul.f32 %v2666, 1.442695
        %v3204 = vpow.pop %v3203
        %v3205 = vmul.f32 %v2667, 1.442695
        %v3206 = vpow.pop %v3205
        %v3207 = vmul.f32 %v2668, 1.442695
        %v3208 = vpow.pop %v3207
        %v3209 = vmul.f32 %v2669, 1.442695
        %v3210 = vpow.pop %v3209
        %v3211 = vmul.f32 %v2670, 1.442695
        %v3212 = vpow.pop %v3211
        %v3213 = vmul.f32 %v2671, 1.442695
        %v3214 = vpow.pop %v3213
        %v3215 = vmul.f32 %v2672, 1.442695
        %v3216 = vpow.pop %v3215
        %v3217 = vmul.f32 %v2673, 1.442695
        %v3218 = vpow.pop %v3217
        %v3219 = vmul.f32 %v2674, 1.442695
        %v3220 = vpow.pop %v3219
        %v3221 = vmul.f32 %v2675, 1.442695
        %v3222 = vpow.pop %v3221
        %v3223 = vmul.f32 %v2676, 1.442695
        %v3224 = vpow.pop %v3223
        %v3225 = vmul.f32 %v2677, 1.442695
        %v3226 = vpow.pop %v3225
        %v3227 = vmul.f32 %v2678, 1.442695
        %v3228 = vpow.pop %v3227
        %v3229 = vmul.f32 %v2679, 1.442695
        %v3230 = vpow.pop %v3229
        %v3231 = vmul.f32 %v2680, 1.442695
        %v3232 = vpow.pop %v3231
        %v3233 = vmul.f32 %v2681, 1.442695
        %v3234 = vpow.pop %v3233
        %v3235 = vmul.f32 %v2682, 1.442695
        %v3236 = vpow.pop %v3235
        %v3237 = vmul.f32 %v2683, 1.442695
        %v3238 = vpow.pop %v3237
        %v3239 = vmul.f32 %v2684, 1.442695
        %v3240 = vpow.pop %v3239
        %v3241 = vmul.f32 %v2685, 1.442695
        %v3242 = vpow.pop %v3241
        %v3243 = vmul.f32 %v2686, 1.442695
        %v3244 = vpow.pop %v3243
        %v3245 = vmul.f32 %v2687, 1.442695
        %v3246 = vpow.pop %v3245
        %v3247 = vmul.f32 %v2688, 1.442695
        %v3248 = vpow.pop %v3247
        %v3249 = vmul.f32 %v2689, 1.442695
        %v3250 = vpow.pop %v3249
        %v3251 = vmul.f32 %v2690, 1.442695
        %v3252 = vpow.pop %v3251
        %v3253 = vmul.f32 %v2691, 1.442695
        %v3254 = vpow.pop %v3253
        %v3255 = vmul.f32 %v2692, 1.442695
        %v3256 = vpow.pop %v3255
        %v3257 = vmul.f32 %v2693, 1.442695
        %v3258 = vpow.pop %v3257
        %v3259 = vmul.f32 %v2694, 1.442695
        %v3260 = vpow.pop %v3259
        %v3261 = vmul.f32 %v2695, 1.442695
        %v3262 = vpow.pop %v3261
        %v3263 = vmul.f32 %v2696, 1.442695
        %v3264 = vpow.pop %v3263
        %v3265 = vmul.f32 %v2697, 1.442695
        %v3266 = vpow.pop %v3265
        %v3267 = vmul.f32 %v2698, 1.442695
        %v3268 = vpow.pop %v3267
        %v3269 = vmul.f32 %v2699, 1.442695
        %v3270 = vpow.pop %v3269
        %v3271 = vmul.f32 %v2700, 1.442695
        %v3272 = vpow.pop %v3271
        %v3273 = vmul.f32 %v2701, 1.442695
        %v3274 = vpow.pop %v3273
        %v3275 = vmul.f32 %v2702, 1.442695
        %v3276 = vpow.pop %v3275
        %v3277 = vmul.f32 %v2703, 1.442695
        %v3278 = vpow.pop %v3277
        %v3279 = vmul.f32 %v2704, 1.442695
        %v3280 = vpow.pop %v3279
        %v3281 = vmul.f32 %v2705, 1.442695
        %v3282 = vpow.pop %v3281
        %v3283 = vmul.f32 %v2706, 1.442695
        %v3284 = vpow.pop %v3283
        %v3285 = vmul.f32 %v2707, 1.442695
        %v3286 = vpow.pop %v3285
        %v3287 = vmul.f32 %v2708, 1.442695
        %v3288 = vpow.pop %v3287
        %v3289 = vmul.f32 %v2709, 1.442695
        %v3290 = vpow.pop %v3289
        %v3291 = vmul.f32 %v2710, 1.442695
        %v3292 = vpow.pop %v3291
        %v3293 = vmul.f32 %v2711, 1.442695
        %v3294 = vpow.pop %v3293
        %v3295 = vmul.f32 %v2712, 1.442695
        %v3296 = vpow.pop %v3295
        %v3297 = vmul.f32 %v2713, 1.442695
        %v3298 = vpow.pop %v3297
        %v3299 = vmul.f32 %v2714, 1.442695
        %v3300 = vpow.pop %v3299
        %v3301 = vmul.f32 %v2715, 1.442695
        %v3302 = vpow.pop %v3301
        %v3303 = vmul.f32 %v2716, 1.442695
        %v3304 = vpow.pop %v3303
        %v3305 = vmul.f32 %v2717, 1.442695
        %v3306 = vpow.pop %v3305
        %v3307 = vmul.f32 %v2718, 1.442695
        %v3308 = vpow.pop %v3307
        %v3309 = vmul.f32 %v2719, 1.442695
        %v3310 = vpow.pop %v3309
        %v3311 = vmul.f32 %v2720, 1.442695
        %v3312 = vpow.pop %v3311
        %v3313 = vmul.f32 %v2721, 1.442695
        %v3314 = vpow.pop %v3313
        %v3315 = vmul.f32 %v2722, 1.442695
        %v3316 = vpow.pop %v3315
        %v3317 = vmul.f32 %v2723, 1.442695
        %v3318 = vpow.pop %v3317
        %v3319 = vmul.f32 %v2724, 1.442695
        %v3320 = vpow.pop %v3319
        %v3321 = vmul.f32 %v2725, 1.442695
        %v3322 = vpow.pop %v3321
        %v3323 = vmul.f32 %v2726, 1.442695
        %v3324 = vpow.pop %v3323
        %v3325 = vmul.f32 %v2727, 1.442695
        %v3326 = vpow.pop %v3325
        %v3327 = vmul.f32 %v2728, 1.442695
        %v3328 = vpow.pop %v3327
        %v3329 = vmul.f32 %v2729, 1.442695
        %v3330 = vpow.pop %v3329
        %v3331 = vmul.f32 %v2730, 1.442695
        %v3332 = vpow.pop %v3331
        %v3333 = vmul.f32 %v2731, 1.442695
        %v3334 = vpow.pop %v3333
        %v3335 = vmul.f32 %v2732, 1.442695
        %v3336 = vpow.pop %v3335
        %v3337 = vmul.f32 %v2733, 1.442695
        %v3338 = vpow.pop %v3337
        %v3339 = vmul.f32 %v2734, 1.442695
        %v3340 = vpow.pop %v3339
        %v3341 = vmul.f32 %v2735, 1.442695
        %v3342 = vpow.pop %v3341
        %v3343 = vmul.f32 %v2736, 1.442695
        %v3344 = vpow.pop %v3343
        %v3345 = vmul.f32 %v2737, 1.442695
        %v3346 = vpow.pop %v3345
        %v3347 = vmul.f32 %v2738, 1.442695
        %v3348 = vpow.pop %v3347
        %v3349 = vmul.f32 %v2739, 1.442695
        %v3350 = vpow.pop %v3349
        %v3351 = vmul.f32 %v2740, 1.442695
        %v3352 = vpow.pop %v3351
        %v3353 = vmul.f32 %v2741, 1.442695
        %v3354 = vpow.pop %v3353
        %v3355 = vmul.f32 %v2742, 1.442695
        %v3356 = vpow.pop %v3355
        %v3357 = vmul.f32 %v2743, 1.442695
        %v3358 = vpow.pop %v3357
        %v3359 = vmul.f32 %v2744, 1.442695
        %v3360 = vpow.pop %v3359
        %v3361 = vmul.f32 %v2745, 1.442695
        %v3362 = vpow.pop %v3361
        %v3363 = vmul.f32 %v2746, 1.442695
        %v3364 = vpow.pop %v3363
        %v3365 = vmul.f32 %v2747, 1.442695
        %v3366 = vpow.pop %v3365
        %v3367 = vmul.f32 %v2748, 1.442695
        %v3368 = vpow.pop %v3367
        %v3369 = vmul.f32 %v2749, 1.442695
        %v3370 = vpow.pop %v3369
        %v3371 = vmul.f32 %v2750, 1.442695
        %v3372 = vpow.pop %v3371
        %v3373 = vmul.f32 %v2751, 1.442695
        %v3374 = vpow.pop %v3373
        %v3375 = vmul.f32 %v2752, 1.442695
        %v3376 = vpow.pop %v3375
        %v3377 = vmul.f32 %v2753, 1.442695
        %v3378 = vpow.pop %v3377
        %v3379 = vmul.f32 %v2754, 1.442695
        %v3380 = vpow.pop %v3379
        %v3381 = vmul.f32 %v2755, 1.442695
        %v3382 = vpow.pop %v3381
        %v3383 = vmul.f32 %v2756, 1.442695
        %v3384 = vpow.pop %v3383
        %v3385 = vmul.f32 %v2757, 1.442695
        %v3386 = vpow.pop %v3385
        %v3387 = vmul.f32 %v2758, 1.442695
        %v3388 = vpow.pop %v3387
        %v3389 = vmul.f32 %v2759, 1.442695
        %v3390 = vpow.pop %v3389
        %v3391 = vmul.f32 %v2760, 1.442695
        %v3392 = vpow.pop %v3391
        %v3393 = vmul.f32 %v2761, 1.442695
        %v3394 = vpow.pop %v3393
        %v3395 = vmul.f32 %v2762, 1.442695
        %v3396 = vpow.pop %v3395
        %v3397 = vmul.f32 %v2763, 1.442695
        %v3398 = vpow.pop %v3397
        %v3399 = vmul.f32 %v2764, 1.442695
        %v3400 = vpow.pop %v3399
        %v3401 = vmul.f32 %v2765, 1.442695
        %v3402 = vpow.pop %v3401
        %v3403 = vmul.f32 %v2766, 1.442695
        %v3404 = vpow.pop %v3403
        %v3405 = vmul.f32 %v2767, 1.442695
        %v3406 = vpow.pop %v3405
        %v3407 = vmul.f32 %v2768, 1.442695
        %v3408 = vpow.pop %v3407
        %v3409 = vmul.f32 %v2769, 1.442695
        %v3410 = vpow.pop %v3409
        %v3411 = vmul.f32 %v2770, 1.442695
        %v3412 = vpow.pop %v3411
        %v3413 = vmul.f32 %v2771, 1.442695
        %v3414 = vpow.pop %v3413
        %v3415 = vmul.f32 %v2772, 1.442695
        %v3416 = vpow.pop %v3415
        %v3417 = vmul.f32 %v2773, 1.442695
        %v3418 = vpow.pop %v3417
        %v3419 = vmul.f32 %v2774, 1.442695
        %v3420 = vpow.pop %v3419
        %v3421 = vmul.f32 %v2775, 1.442695
        %v3422 = vpow.pop %v3421
        %v3423 = vmul.f32 %v2776, 1.442695
        %v3424 = vpow.pop %v3423
        %v3425 = vmul.f32 %v2777, 1.442695
        %v3426 = vpow.pop %v3425
        %v3427 = vmul.f32 %v2778, 1.442695
        %v3428 = vpow.pop %v3427
        %v3429 = vmul.f32 %v2779, 1.442695
        %v3430 = vpow.pop %v3429
        %v3431 = vmul.f32 %v2780, 1.442695
        %v3432 = vpow.pop %v3431
        %v3433 = vmul.f32 %v2781, 1.442695
        %v3434 = vpow.pop %v3433
        %v3435 = vmul.f32 %v2782, 1.442695
        %v3436 = vpow.pop %v3435
        %v3437 = vmul.f32 %v2783, 1.442695
        %v3438 = vpow.pop %v3437
        %v3439 = vmul.f32 %v2784, 1.442695
        %v3440 = vpow.pop %v3439
        %v3441 = vmul.f32 %v2785, 1.442695
        %v3442 = vpow.pop %v3441
        %v3443 = vmul.f32 %v2786, 1.442695
        %v3444 = vpow.pop %v3443
        %v3445 = vmul.f32 %v2787, 1.442695
        %v3446 = vpow.pop %v3445
        %v3447 = vmul.f32 %v2788, 1.442695
        %v3448 = vpow.pop %v3447
        %v3449 = vmul.f32 %v2789, 1.442695
        %v3450 = vpow.pop %v3449
        %v3451 = vmul.f32 %v2790, 1.442695
        %v3452 = vpow.pop %v3451
        %v3453 = vmul.f32 %v2791, 1.442695
        %v3454 = vpow.pop %v3453
        %v3455 = vmul.f32 %v2792, 1.442695
        %v3456 = vpow.pop %v3455
        %v3457 = vmul.f32 %v2793, 1.442695
        %v3458 = vpow.pop %v3457
        %v3459 = vmul.f32 %v2794, 1.442695
        %v3460 = vpow.pop %v3459
        %v3461 = vmul.f32 %v2795, 1.442695
        %v3462 = vpow.pop %v3461
        %v3463 = vmul.f32 %v2796, 1.442695
        %v3464 = vpow.pop %v3463
        %v3465 = vmul.f32 %v2797, 1.442695
        %v3466 = vpow.pop %v3465
        %v3467 = vmul.f32 %v2798, 1.442695
        %v3468 = vpow.pop %v3467
        %v3469 = vmul.f32 %v2799, 1.442695
        %v3470 = vpow.pop %v3469
        %v3471 = vmul.f32 %v2800, 1.442695
        %v3472 = vpow.pop %v3471
        %v3473 = vmul.f32 %v2801, 1.442695
        %v3474 = vpow.pop %v3473
        %v3475 = vmul.f32 %v2802, 1.442695
        %v3476 = vpow.pop %v3475
        %v3477 = vmul.f32 %v2803, 1.442695
        %v3478 = vpow.pop %v3477
        %v3479 = vmul.f32 %v2804, 1.442695
        %v3480 = vpow.pop %v3479
        %v3481 = vmul.f32 %v2805, 1.442695
        %v3482 = vpow.pop %v3481
        %v3483 = vmul.f32 %v2806, 1.442695
        %v3484 = vpow.pop %v3483
        %v3485 = vmul.f32 %v2807, 1.442695
        %v3486 = vpow.pop %v3485
        %v3487 = vmul.f32 %v2808, 1.442695
        %v3488 = vpow.pop %v3487
        %v3489 = vmul.f32 %v2809, 1.442695
        %v3490 = vpow.pop %v3489
        %v3491 = vmul.f32 %v2810, 1.442695
        %v3492 = vpow.pop %v3491
        %v3493 = vmul.f32 %v2811, 1.442695
        %v3494 = vpow.pop %v3493
        %v3495 = vmul.f32 %v2812, 1.442695
        %v3496 = vpow.pop %v3495
        %v3497 = vmul.f32 %v2813, 1.442695
        %v3498 = vpow.pop %v3497
        %v3499 = vmul.f32 %v2814, 1.442695
        %v3500 = vpow.pop %v3499
        %v3501 = vmul.f32 %v2815, 1.442695
        %v3502 = vpow.pop %v3501
        %v3503 = vmul.f32 %v2816, 1.442695
        %v3504 = vpow.pop %v3503
        %v3505 = vmul.f32 %v2817, 1.442695
        %v3506 = vpow.pop %v3505
        %v3507 = vmul.f32 %v2818, 1.442695
        %v3508 = vpow.pop %v3507
        %v3509 = vmul.f32 %v2819, 1.442695
        %v3510 = vpow.pop %v3509
        %v3511 = vmul.f32 %v2820, 1.442695
        %v3512 = vpow.pop %v3511
        %v3513 = vmul.f32 %v2821, 1.442695
        %v3514 = vpow.pop %v3513
        %v3515 = vmul.f32 %v2822, 1.442695
        %v3516 = vpow.pop %v3515
        %v3517 = vmul.f32 %v2823, 1.442695
        %v3518 = vpow.pop %v3517
        %v3519 = vmul.f32 %v2824, 1.442695
        %v3520 = vpow.pop %v3519
        %v3521 = vmul.f32 %v2825, 1.442695
        %v3522 = vpow.pop %v3521
        %v3523 = vmul.f32 %v2826, 1.442695
        %v3524 = vpow.pop %v3523
        %v3525 = vmul.f32 %v2827, 1.442695
        %v3526 = vpow.pop %v3525
        %v3527 = vmul.f32 %v2828, 1.442695
        %v3528 = vpow.pop %v3527
        %v3529 = vmul.f32 %v2829, 1.442695
        %v3530 = vpow.pop %v3529
        %v3531 = vmul.f32 %v2830, 1.442695
        %v3532 = vpow.pop %v3531
        %v3533 = vmul.f32 %v2831, 1.442695
        %v3534 = vpow.pop %v3533
        %v3535 = vmul.f32 %v2832, 1.442695
        %v3536 = vpow.pop %v3535
        %v3537 = vmul.f32 %v2833, 1.442695
        %v3538 = vpow.pop %v3537
        %v3539 = vmul.f32 %v2834, 1.442695
        %v3540 = vpow.pop %v3539
        %v3541 = vmul.f32 %v2835, 1.442695
        %v3542 = vpow.pop %v3541
        %v3543 = vmul.f32 %v2836, 1.442695
        %v3544 = vpow.pop %v3543
        %v3545 = vmul.f32 %v2837, 1.442695
        %v3546 = vpow.pop %v3545
        %v3547 = vmul.f32 %v2838, 1.442695
        %v3548 = vpow.pop %v3547
        %v3549 = vmul.f32 %v2839, 1.442695
        %v3550 = vpow.pop %v3549
        %v3551 = vmul.f32 %v2840, 1.442695
        %v3552 = vpow.pop %v3551
        %v3553 = vmul.f32 %v2841, 1.442695
        %v3554 = vpow.pop %v3553
        %v3555 = vmul.f32 %v2842, 1.442695
        %v3556 = vpow.pop %v3555
        %v3557 = vmul.f32 %v2843, 1.442695
        %v3558 = vpow.pop %v3557
        %v3559 = vmul.f32 %v2844, 1.442695
        %v3560 = vpow.pop %v3559
        %v3561 = vmul.f32 %v2845, 1.442695
        %v3562 = vpow.pop %v3561
        %v3563 = vmul.f32 %v2846, 1.442695
        %v3564 = vpow.pop %v3563
        %v3565 = vmul.f32 %v2847, 1.442695
        %v3566 = vpow.pop %v3565
        %v3567 = vmul.f32 %v2848, 1.442695
        %v3568 = vpow.pop %v3567
        %v3569 = vmul.f32 %v2849, 1.442695
        %v3570 = vpow.pop %v3569
        %v3571 = vmul.f32 %v2850, 1.442695
        %v3572 = vpow.pop %v3571
        %v3573 = vmul.f32 %v2851, 1.442695
        %v3574 = vpow.pop %v3573
        %v3575 = vmul.f32 %v2852, 1.442695
        %v3576 = vpow.pop %v3575
        %v3577 = vmul.f32 %v2853, 1.442695
        %v3578 = vpow.pop %v3577
        %v3579 = vmul.f32 %v2854, 1.442695
        %v3580 = vpow.pop %v3579
        %v3581 = vmul.f32 %v2855, 1.442695
        %v3582 = vpow.pop %v3581
        %v3583 = vmul.f32 %v2856, 1.442695
        %v3584 = vpow.pop %v3583
        %v3585 = vmul.f32 %v2857, 1.442695
        %v3586 = vpow.pop %v3585
        %v3587 = vmul.f32 %v2858, 1.442695
        %v3588 = vpow.pop %v3587
        %v3589 = vmul.f32 %v2859, 1.442695
        %v3590 = vpow.pop %v3589
        %v3591 = vmul.f32 %v2860, 1.442695
        %v3592 = vpow.pop %v3591
        %v3593 = vmul.f32 %v2861, 1.442695
        %v3594 = vpow.pop %v3593
        %v3595 = vmul.f32 %v2862, 1.442695
        %v3596 = vpow.pop %v3595
        %v3597 = vmul.f32 %v2863, 1.442695
        %v3598 = vpow.pop %v3597
        %v3599 = vmul.f32 %v2864, 1.442695
        %v3600 = vpow.pop %v3599
        %v3601 = vmul.f32 %v2865, 1.442695
        %v3602 = vpow.pop %v3601
        %v3603 = vmul.f32 %v2866, 1.442695
        %v3604 = vpow.pop %v3603
        %v3605 = vmul.f32 %v2867, 1.442695
        %v3606 = vpow.pop %v3605
        %v3607 = vmul.f32 %v2868, 1.442695
        %v3608 = vpow.pop %v3607
        %v3609 = vmul.f32 %v2869, 1.442695
        %v3610 = vpow.pop %v3609
        %v3611 = vmul.f32 %v2870, 1.442695
        %v3612 = vpow.pop %v3611
        %v3613 = vmul.f32 %v2871, 1.442695
        %v3614 = vpow.pop %v3613
        %v3615 = vmul.f32 %v2872, 1.442695
        %v3616 = vpow.pop %v3615
        %v3617 = vmul.f32 %v2873, 1.442695
        %v3618 = vpow.pop %v3617
        %v3619 = vmul.f32 %v2874, 1.442695
        %v3620 = vpow.pop %v3619
        %v3621 = vmul.f32 %v2875, 1.442695
        %v3622 = vpow.pop %v3621
        %v3623 = vmul.f32 %v2876, 1.442695
        %v3624 = vpow.pop %v3623
        %v3625 = vmul.f32 %v2877, 1.442695
        %v3626 = vpow.pop %v3625
        %v3627 = vmul.f32 %v2878, 1.442695
        %v3628 = vpow.pop %v3627
        %v3629 = vmul.f32 %v2879, 1.442695
        %v3630 = vpow.pop %v3629
        %v3631 = vmul.f32 %v2880, 1.442695
        %v3632 = vpow.pop %v3631
        %v3633 = vmul.f32 %v2881, 1.442695
        %v3634 = vpow.pop %v3633
        %v3635 = vmul.f32 %v2882, 1.442695
        %v3636 = vpow.pop %v3635
        %v3637 = vmul.f32 %v2883, 1.442695
        %v3638 = vpow.pop %v3637
        %v3639 = vmul.f32 %v2884, 1.442695
        %v3640 = vpow.pop %v3639
        %v3641 = vmul.f32 %v2885, 1.442695
        %v3642 = vpow.pop %v3641
        %v3643 = vmul.f32 %v2886, 1.442695
        %v3644 = vpow.pop %v3643
        %v3645 = vmul.f32 %v2887, 1.442695
        %v3646 = vpow.pop %v3645
        %v3647 = vmul.f32 %v2888, 1.442695
        %v3648 = vpow.pop %v3647
        %v3649 = vmul.f32 %v2889, 1.442695
        %v3650 = vpow.pop %v3649
        %v3651 = vmul.f32 %v2890, 1.442695
        %v3652 = vpow.pop %v3651
        %v3653 = vmul.f32 %v2891, 1.442695
        %v3654 = vpow.pop %v3653
        %v3655 = vmul.f32 %v2892, 1.442695
        %v3656 = vpow.pop %v3655
        %v3657 = vmul.f32 %v2893, 1.442695
        %v3658 = vpow.pop %v3657
        %v3659 = vmul.f32 %v2894, 1.442695
        %v3660 = vpow.pop %v3659
        %v3661 = vmul.f32 %v2895, 1.442695
        %v3662 = vpow.pop %v3661
        %v3663 = vmul.f32 %v2896, 1.442695
        %v3664 = vpow.pop %v3663
        %v3665 = vadd.f32 %v2898, 1.0
        %v3666 = vadd.f32 %v2900, 1.0
        %v3667 = vadd.f32 %v2902, 1.0
        %v3668 = vadd.f32 %v2904, 1.0
        %v3669 = vadd.f32 %v2906, 1.0
        %v3670 = vadd.f32 %v2908, 1.0
        %v3671 = vadd.f32 %v2910, 1.0
        %v3672 = vadd.f32 %v2912, 1.0
        %v3673 = vadd.f32 %v2914, 1.0
        %v3674 = vadd.f32 %v2916, 1.0
        %v3675 = vadd.f32 %v2918, 1.0
        %v3676 = vadd.f32 %v2920, 1.0
        %v3677 = vadd.f32 %v2922, 1.0
        %v3678 = vadd.f32 %v2924, 1.0
        %v3679 = vadd.f32 %v2926, 1.0
        %v3680 = vadd.f32 %v2928, 1.0
        %v3681 = vadd.f32 %v2930, 1.0
        %v3682 = vadd.f32 %v2932, 1.0
        %v3683 = vadd.f32 %v2934, 1.0
        %v3684 = vadd.f32 %v2936, 1.0
        %v3685 = vadd.f32 %v2938, 1.0
        %v3686 = vadd.f32 %v2940, 1.0
        %v3687 = vadd.f32 %v2942, 1.0
        %v3688 = vadd.f32 %v2944, 1.0
        %v3689 = vadd.f32 %v2946, 1.0
        %v3690 = vadd.f32 %v2948, 1.0
        %v3691 = vadd.f32 %v2950, 1.0
        %v3692 = vadd.f32 %v2952, 1.0
        %v3693 = vadd.f32 %v2954, 1.0
        %v3694 = vadd.f32 %v2956, 1.0
        %v3695 = vadd.f32 %v2958, 1.0
        %v3696 = vadd.f32 %v2960, 1.0
        %v3697 = vadd.f32 %v2962, 1.0
        %v3698 = vadd.f32 %v2964, 1.0
        %v3699 = vadd.f32 %v2966, 1.0
        %v3700 = vadd.f32 %v2968, 1.0
        %v3701 = vadd.f32 %v2970, 1.0
        %v3702 = vadd.f32 %v2972, 1.0
        %v3703 = vadd.f32 %v2974, 1.0
        %v3704 = vadd.f32 %v2976, 1.0
        %v3705 = vadd.f32 %v2978, 1.0
        %v3706 = vadd.f32 %v2980, 1.0
        %v3707 = vadd.f32 %v2982, 1.0
        %v3708 = vadd.f32 %v2984, 1.0
        %v3709 = vadd.f32 %v2986, 1.0
        %v3710 = vadd.f32 %v2988, 1.0
        %v3711 = vadd.f32 %v2990, 1.0
        %v3712 = vadd.f32 %v2992, 1.0
        %v3713 = vadd.f32 %v2994, 1.0
        %v3714 = vadd.f32 %v2996, 1.0
        %v3715 = vadd.f32 %v2998, 1.0
        %v3716 = vadd.f32 %v3000, 1.0
        %v3717 = vadd.f32 %v3002, 1.0
        %v3718 = vadd.f32 %v3004, 1.0
        %v3719 = vadd.f32 %v3006, 1.0
        %v3720 = vadd.f32 %v3008, 1.0
        %v3721 = vadd.f32 %v3010, 1.0
        %v3722 = vadd.f32 %v3012, 1.0
        %v3723 = vadd.f32 %v3014, 1.0
        %v3724 = vadd.f32 %v3016, 1.0
        %v3725 = vadd.f32 %v3018, 1.0
        %v3726 = vadd.f32 %v3020, 1.0
        %v3727 = vadd.f32 %v3022, 1.0
        %v3728 = vadd.f32 %v3024, 1.0
        %v3729 = vadd.f32 %v3026, 1.0
        %v3730 = vadd.f32 %v3028, 1.0
        %v3731 = vadd.f32 %v3030, 1.0
        %v3732 = vadd.f32 %v3032, 1.0
        %v3733 = vadd.f32 %v3034, 1.0
        %v3734 = vadd.f32 %v3036, 1.0
        %v3735 = vadd.f32 %v3038, 1.0
        %v3736 = vadd.f32 %v3040, 1.0
        %v3737 = vadd.f32 %v3042, 1.0
        %v3738 = vadd.f32 %v3044, 1.0
        %v3739 = vadd.f32 %v3046, 1.0
        %v3740 = vadd.f32 %v3048, 1.0
        %v3741 = vadd.f32 %v3050, 1.0
        %v3742 = vadd.f32 %v3052, 1.0
        %v3743 = vadd.f32 %v3054, 1.0
        %v3744 = vadd.f32 %v3056, 1.0
        %v3745 = vadd.f32 %v3058, 1.0
        %v3746 = vadd.f32 %v3060, 1.0
        %v3747 = vadd.f32 %v3062, 1.0
        %v3748 = vadd.f32 %v3064, 1.0
        %v3749 = vadd.f32 %v3066, 1.0
        %v3750 = vadd.f32 %v3068, 1.0
        %v3751 = vadd.f32 %v3070, 1.0
        %v3752 = vadd.f32 %v3072, 1.0
        %v3753 = vadd.f32 %v3074, 1.0
        %v3754 = vadd.f32 %v3076, 1.0
        %v3755 = vadd.f32 %v3078, 1.0
        %v3756 = vadd.f32 %v3080, 1.0
        %v3757 = vadd.f32 %v3082, 1.0
        %v3758 = vadd.f32 %v3084, 1.0
        %v3759 = vadd.f32 %v3086, 1.0
        %v3760 = vadd.f32 %v3088, 1.0
        %v3761 = vadd.f32 %v3090, 1.0
        %v3762 = vadd.f32 %v3092, 1.0
        %v3763 = vadd.f32 %v3094, 1.0
        %v3764 = vadd.f32 %v3096, 1.0
        %v3765 = vadd.f32 %v3098, 1.0
        %v3766 = vadd.f32 %v3100, 1.0
        %v3767 = vadd.f32 %v3102, 1.0
        %v3768 = vadd.f32 %v3104, 1.0
        %v3769 = vadd.f32 %v3106, 1.0
        %v3770 = vadd.f32 %v3108, 1.0
        %v3771 = vadd.f32 %v3110, 1.0
        %v3772 = vadd.f32 %v3112, 1.0
        %v3773 = vadd.f32 %v3114, 1.0
        %v3774 = vadd.f32 %v3116, 1.0
        %v3775 = vadd.f32 %v3118, 1.0
        %v3776 = vadd.f32 %v3120, 1.0
        %v3777 = vadd.f32 %v3122, 1.0
        %v3778 = vadd.f32 %v3124, 1.0
        %v3779 = vadd.f32 %v3126, 1.0
        %v3780 = vadd.f32 %v3128, 1.0
        %v3781 = vadd.f32 %v3130, 1.0
        %v3782 = vadd.f32 %v3132, 1.0
        %v3783 = vadd.f32 %v3134, 1.0
        %v3784 = vadd.f32 %v3136, 1.0
        %v3785 = vadd.f32 %v3138, 1.0
        %v3786 = vadd.f32 %v3140, 1.0
        %v3787 = vadd.f32 %v3142, 1.0
        %v3788 = vadd.f32 %v3144, 1.0
        %v3789 = vadd.f32 %v3146, 1.0
        %v3790 = vadd.f32 %v3148, 1.0
        %v3791 = vadd.f32 %v3150, 1.0
        %v3792 = vadd.f32 %v3152, 1.0
        %v3793 = vadd.f32 %v3154, 1.0
        %v3794 = vadd.f32 %v3156, 1.0
        %v3795 = vadd.f32 %v3158, 1.0
        %v3796 = vadd.f32 %v3160, 1.0
        %v3797 = vadd.f32 %v3162, 1.0
        %v3798 = vadd.f32 %v3164, 1.0
        %v3799 = vadd.f32 %v3166, 1.0
        %v3800 = vadd.f32 %v3168, 1.0
        %v3801 = vadd.f32 %v3170, 1.0
        %v3802 = vadd.f32 %v3172, 1.0
        %v3803 = vadd.f32 %v3174, 1.0
        %v3804 = vadd.f32 %v3176, 1.0
        %v3805 = vadd.f32 %v3178, 1.0
        %v3806 = vadd.f32 %v3180, 1.0
        %v3807 = vadd.f32 %v3182, 1.0
        %v3808 = vadd.f32 %v3184, 1.0
        %v3809 = vadd.f32 %v3186, 1.0
        %v3810 = vadd.f32 %v3188, 1.0
        %v3811 = vadd.f32 %v3190, 1.0
        %v3812 = vadd.f32 %v3192, 1.0
        %v3813 = vadd.f32 %v3194, 1.0
        %v3814 = vadd.f32 %v3196, 1.0
        %v3815 = vadd.f32 %v3198, 1.0
        %v3816 = vadd.f32 %v3200, 1.0
        %v3817 = vadd.f32 %v3202, 1.0
        %v3818 = vadd.f32 %v3204, 1.0
        %v3819 = vadd.f32 %v3206, 1.0
        %v3820 = vadd.f32 %v3208, 1.0
        %v3821 = vadd.f32 %v3210, 1.0
        %v3822 = vadd.f32 %v3212, 1.0
        %v3823 = vadd.f32 %v3214, 1.0
        %v3824 = vadd.f32 %v3216, 1.0
        %v3825 = vadd.f32 %v3218, 1.0
        %v3826 = vadd.f32 %v3220, 1.0
        %v3827 = vadd.f32 %v3222, 1.0
        %v3828 = vadd.f32 %v3224, 1.0
        %v3829 = vadd.f32 %v3226, 1.0
        %v3830 = vadd.f32 %v3228, 1.0
        %v3831 = vadd.f32 %v3230, 1.0
        %v3832 = vadd.f32 %v3232, 1.0
        %v3833 = vadd.f32 %v3234, 1.0
        %v3834 = vadd.f32 %v3236, 1.0
        %v3835 = vadd.f32 %v3238, 1.0
        %v3836 = vadd.f32 %v3240, 1.0
        %v3837 = vadd.f32 %v3242, 1.0
        %v3838 = vadd.f32 %v3244, 1.0
        %v3839 = vadd.f32 %v3246, 1.0
        %v3840 = vadd.f32 %v3248, 1.0
        %v3841 = vadd.f32 %v3250, 1.0
        %v3842 = vadd.f32 %v3252, 1.0
        %v3843 = vadd.f32 %v3254, 1.0
        %v3844 = vadd.f32 %v3256, 1.0
        %v3845 = vadd.f32 %v3258, 1.0
        %v3846 = vadd.f32 %v3260, 1.0
        %v3847 = vadd.f32 %v3262, 1.0
        %v3848 = vadd.f32 %v3264, 1.0
        %v3849 = vadd.f32 %v3266, 1.0
        %v3850 = vadd.f32 %v3268, 1.0
        %v3851 = vadd.f32 %v3270, 1.0
        %v3852 = vadd.f32 %v3272, 1.0
        %v3853 = vadd.f32 %v3274, 1.0
        %v3854 = vadd.f32 %v3276, 1.0
        %v3855 = vadd.f32 %v3278, 1.0
        %v3856 = vadd.f32 %v3280, 1.0
        %v3857 = vadd.f32 %v3282, 1.0
        %v3858 = vadd.f32 %v3284, 1.0
        %v3859 = vadd.f32 %v3286, 1.0
        %v3860 = vadd.f32 %v3288, 1.0
        %v3861 = vadd.f32 %v3290, 1.0
        %v3862 = vadd.f32 %v3292, 1.0
        %v3863 = vadd.f32 %v3294, 1.0
        %v3864 = vadd.f32 %v3296, 1.0
        %v3865 = vadd.f32 %v3298, 1.0
        %v3866 = vadd.f32 %v3300, 1.0
        %v3867 = vadd.f32 %v3302, 1.0
        %v3868 = vadd.f32 %v3304, 1.0
        %v3869 = vadd.f32 %v3306, 1.0
        %v3870 = vadd.f32 %v3308, 1.0
        %v3871 = vadd.f32 %v3310, 1.0
        %v3872 = vadd.f32 %v3312, 1.0
        %v3873 = vadd.f32 %v3314, 1.0
        %v3874 = vadd.f32 %v3316, 1.0
        %v3875 = vadd.f32 %v3318, 1.0
        %v3876 = vadd.f32 %v3320, 1.0
        %v3877 = vadd.f32 %v3322, 1.0
        %v3878 = vadd.f32 %v3324, 1.0
        %v3879 = vadd.f32 %v3326, 1.0
        %v3880 = vadd.f32 %v3328, 1.0
        %v3881 = vadd.f32 %v3330, 1.0
        %v3882 = vadd.f32 %v3332, 1.0
        %v3883 = vadd.f32 %v3334, 1.0
        %v3884 = vadd.f32 %v3336, 1.0
        %v3885 = vadd.f32 %v3338, 1.0
        %v3886 = vadd.f32 %v3340, 1.0
        %v3887 = vadd.f32 %v3342, 1.0
        %v3888 = vadd.f32 %v3344, 1.0
        %v3889 = vadd.f32 %v3346, 1.0
        %v3890 = vadd.f32 %v3348, 1.0
        %v3891 = vadd.f32 %v3350, 1.0
        %v3892 = vadd.f32 %v3352, 1.0
        %v3893 = vadd.f32 %v3354, 1.0
        %v3894 = vadd.f32 %v3356, 1.0
        %v3895 = vadd.f32 %v3358, 1.0
        %v3896 = vadd.f32 %v3360, 1.0
        %v3897 = vadd.f32 %v3362, 1.0
        %v3898 = vadd.f32 %v3364, 1.0
        %v3899 = vadd.f32 %v3366, 1.0
        %v3900 = vadd.f32 %v3368, 1.0
        %v3901 = vadd.f32 %v3370, 1.0
        %v3902 = vadd.f32 %v3372, 1.0
        %v3903 = vadd.f32 %v3374, 1.0
        %v3904 = vadd.f32 %v3376, 1.0
        %v3905 = vadd.f32 %v3378, 1.0
        %v3906 = vadd.f32 %v3380, 1.0
        %v3907 = vadd.f32 %v3382, 1.0
        %v3908 = vadd.f32 %v3384, 1.0
        %v3909 = vadd.f32 %v3386, 1.0
        %v3910 = vadd.f32 %v3388, 1.0
        %v3911 = vadd.f32 %v3390, 1.0
        %v3912 = vadd.f32 %v3392, 1.0
        %v3913 = vadd.f32 %v3394, 1.0
        %v3914 = vadd.f32 %v3396, 1.0
        %v3915 = vadd.f32 %v3398, 1.0
        %v3916 = vadd.f32 %v3400, 1.0
        %v3917 = vadd.f32 %v3402, 1.0
        %v3918 = vadd.f32 %v3404, 1.0
        %v3919 = vadd.f32 %v3406, 1.0
        %v3920 = vadd.f32 %v3408, 1.0
        %v3921 = vadd.f32 %v3410, 1.0
        %v3922 = vadd.f32 %v3412, 1.0
        %v3923 = vadd.f32 %v3414, 1.0
        %v3924 = vadd.f32 %v3416, 1.0
        %v3925 = vadd.f32 %v3418, 1.0
        %v3926 = vadd.f32 %v3420, 1.0
        %v3927 = vadd.f32 %v3422, 1.0
        %v3928 = vadd.f32 %v3424, 1.0
        %v3929 = vadd.f32 %v3426, 1.0
        %v3930 = vadd.f32 %v3428, 1.0
        %v3931 = vadd.f32 %v3430, 1.0
        %v3932 = vadd.f32 %v3432, 1.0
        %v3933 = vadd.f32 %v3434, 1.0
        %v3934 = vadd.f32 %v3436, 1.0
        %v3935 = vadd.f32 %v3438, 1.0
        %v3936 = vadd.f32 %v3440, 1.0
        %v3937 = vadd.f32 %v3442, 1.0
        %v3938 = vadd.f32 %v3444, 1.0
        %v3939 = vadd.f32 %v3446, 1.0
        %v3940 = vadd.f32 %v3448, 1.0
        %v3941 = vadd.f32 %v3450, 1.0
        %v3942 = vadd.f32 %v3452, 1.0
        %v3943 = vadd.f32 %v3454, 1.0
        %v3944 = vadd.f32 %v3456, 1.0
        %v3945 = vadd.f32 %v3458, 1.0
        %v3946 = vadd.f32 %v3460, 1.0
        %v3947 = vadd.f32 %v3462, 1.0
        %v3948 = vadd.f32 %v3464, 1.0
        %v3949 = vadd.f32 %v3466, 1.0
        %v3950 = vadd.f32 %v3468, 1.0
        %v3951 = vadd.f32 %v3470, 1.0
        %v3952 = vadd.f32 %v3472, 1.0
        %v3953 = vadd.f32 %v3474, 1.0
        %v3954 = vadd.f32 %v3476, 1.0
        %v3955 = vadd.f32 %v3478, 1.0
        %v3956 = vadd.f32 %v3480, 1.0
        %v3957 = vadd.f32 %v3482, 1.0
        %v3958 = vadd.f32 %v3484, 1.0
        %v3959 = vadd.f32 %v3486, 1.0
        %v3960 = vadd.f32 %v3488, 1.0
        %v3961 = vadd.f32 %v3490, 1.0
        %v3962 = vadd.f32 %v3492, 1.0
        %v3963 = vadd.f32 %v3494, 1.0
        %v3964 = vadd.f32 %v3496, 1.0
        %v3965 = vadd.f32 %v3498, 1.0
        %v3966 = vadd.f32 %v3500, 1.0
        %v3967 = vadd.f32 %v3502, 1.0
        %v3968 = vadd.f32 %v3504, 1.0
        %v3969 = vadd.f32 %v3506, 1.0
        %v3970 = vadd.f32 %v3508, 1.0
        %v3971 = vadd.f32 %v3510, 1.0
        %v3972 = vadd.f32 %v3512, 1.0
        %v3973 = vadd.f32 %v3514, 1.0
        %v3974 = vadd.f32 %v3516, 1.0
        %v3975 = vadd.f32 %v3518, 1.0
        %v3976 = vadd.f32 %v3520, 1.0
        %v3977 = vadd.f32 %v3522, 1.0
        %v3978 = vadd.f32 %v3524, 1.0
        %v3979 = vadd.f32 %v3526, 1.0
        %v3980 = vadd.f32 %v3528, 1.0
        %v3981 = vadd.f32 %v3530, 1.0
        %v3982 = vadd.f32 %v3532, 1.0
        %v3983 = vadd.f32 %v3534, 1.0
        %v3984 = vadd.f32 %v3536, 1.0
        %v3985 = vadd.f32 %v3538, 1.0
        %v3986 = vadd.f32 %v3540, 1.0
        %v3987 = vadd.f32 %v3542, 1.0
        %v3988 = vadd.f32 %v3544, 1.0
        %v3989 = vadd.f32 %v3546, 1.0
        %v3990 = vadd.f32 %v3548, 1.0
        %v3991 = vadd.f32 %v3550, 1.0
        %v3992 = vadd.f32 %v3552, 1.0
        %v3993 = vadd.f32 %v3554, 1.0
        %v3994 = vadd.f32 %v3556, 1.0
        %v3995 = vadd.f32 %v3558, 1.0
        %v3996 = vadd.f32 %v3560, 1.0
        %v3997 = vadd.f32 %v3562, 1.0
        %v3998 = vadd.f32 %v3564, 1.0
        %v3999 = vadd.f32 %v3566, 1.0
        %v4000 = vadd.f32 %v3568, 1.0
        %v4001 = vadd.f32 %v3570, 1.0
        %v4002 = vadd.f32 %v3572, 1.0
        %v4003 = vadd.f32 %v3574, 1.0
        %v4004 = vadd.f32 %v3576, 1.0
        %v4005 = vadd.f32 %v3578, 1.0
        %v4006 = vadd.f32 %v3580, 1.0
        %v4007 = vadd.f32 %v3582, 1.0
        %v4008 = vadd.f32 %v3584, 1.0
        %v4009 = vadd.f32 %v3586, 1.0
        %v4010 = vadd.f32 %v3588, 1.0
        %v4011 = vadd.f32 %v3590, 1.0
        %v4012 = vadd.f32 %v3592, 1.0
        %v4013 = vadd.f32 %v3594, 1.0
        %v4014 = vadd.f32 %v3596, 1.0
        %v4015 = vadd.f32 %v3598, 1.0
        %v4016 = vadd.f32 %v3600, 1.0
        %v4017 = vadd.f32 %v3602, 1.0
        %v4018 = vadd.f32 %v3604, 1.0
        %v4019 = vadd.f32 %v3606, 1.0
        %v4020 = vadd.f32 %v3608, 1.0
        %v4021 = vadd.f32 %v3610, 1.0
        %v4022 = vadd.f32 %v3612, 1.0
        %v4023 = vadd.f32 %v3614, 1.0
        %v4024 = vadd.f32 %v3616, 1.0
        %v4025 = vadd.f32 %v3618, 1.0
        %v4026 = vadd.f32 %v3620, 1.0
        %v4027 = vadd.f32 %v3622, 1.0
        %v4028 = vadd.f32 %v3624, 1.0
        %v4029 = vadd.f32 %v3626, 1.0
        %v4030 = vadd.f32 %v3628, 1.0
        %v4031 = vadd.f32 %v3630, 1.0
        %v4032 = vadd.f32 %v3632, 1.0
        %v4033 = vadd.f32 %v3634, 1.0
        %v4034 = vadd.f32 %v3636, 1.0
        %v4035 = vadd.f32 %v3638, 1.0
        %v4036 = vadd.f32 %v3640, 1.0
        %v4037 = vadd.f32 %v3642, 1.0
        %v4038 = vadd.f32 %v3644, 1.0
        %v4039 = vadd.f32 %v3646, 1.0
        %v4040 = vadd.f32 %v3648, 1.0
        %v4041 = vadd.f32 %v3650, 1.0
        %v4042 = vadd.f32 %v3652, 1.0
        %v4043 = vadd.f32 %v3654, 1.0
        %v4044 = vadd.f32 %v3656, 1.0
        %v4045 = vadd.f32 %v3658, 1.0
        %v4046 = vadd.f32 %v3660, 1.0
        %v4047 = vadd.f32 %v3662, 1.0
        %v4048 = vadd.f32 %v3664, 1.0
        %v4049 = vrcp.pop %v3665
        %v4050 = vmul.f32 1.0, %v4049
        %v4051 = vrcp.pop %v3666
        %v4052 = vmul.f32 1.0, %v4051
        %v4053 = vrcp.pop %v3667
        %v4054 = vmul.f32 1.0, %v4053
        %v4055 = vrcp.pop %v3668
        %v4056 = vmul.f32 1.0, %v4055
        %v4057 = vrcp.pop %v3669
        %v4058 = vmul.f32 1.0, %v4057
        %v4059 = vrcp.pop %v3670
        %v4060 = vmul.f32 1.0, %v4059
        %v4061 = vrcp.pop %v3671
        %v4062 = vmul.f32 1.0, %v4061
        %v4063 = vrcp.pop %v3672
        %v4064 = vmul.f32 1.0, %v4063
        %v4065 = vrcp.pop %v3673
        %v4066 = vmul.f32 1.0, %v4065
        %v4067 = vrcp.pop %v3674
        %v4068 = vmul.f32 1.0, %v4067
        %v4069 = vrcp.pop %v3675
        %v4070 = vmul.f32 1.0, %v4069
        %v4071 = vrcp.pop %v3676
        %v4072 = vmul.f32 1.0, %v4071
        %v4073 = vrcp.pop %v3677
        %v4074 = vmul.f32 1.0, %v4073
        %v4075 = vrcp.pop %v3678
        %v4076 = vmul.f32 1.0, %v4075
        %v4077 = vrcp.pop %v3679
        %v4078 = vmul.f32 1.0, %v4077
        %v4079 = vrcp.pop %v3680
        %v4080 = vmul.f32 1.0, %v4079
        %v4081 = vrcp.pop %v3681
        %v4082 = vmul.f32 1.0, %v4081
        %v4083 = vrcp.pop %v3682
        %v4084 = vmul.f32 1.0, %v4083
        %v4085 = vrcp.pop %v3683
        %v4086 = vmul.f32 1.0, %v4085
        %v4087 = vrcp.pop %v3684
        %v4088 = vmul.f32 1.0, %v4087
        %v4089 = vrcp.pop %v3685
        %v4090 = vmul.f32 1.0, %v4089
        %v4091 = vrcp.pop %v3686
        %v4092 = vmul.f32 1.0, %v4091
        %v4093 = vrcp.pop %v3687
        %v4094 = vmul.f32 1.0, %v4093
        %v4095 = vrcp.pop %v3688
        %v4096 = vmul.f32 1.0, %v4095
        %v4097 = vrcp.pop %v3689
        %v4098 = vmul.f32 1.0, %v4097
        %v4099 = vrcp.pop %v3690
        %v4100 = vmul.f32 1.0, %v4099
        %v4101 = vrcp.pop %v3691
        %v4102 = vmul.f32 1.0, %v4101
        %v4103 = vrcp.pop %v3692
        %v4104 = vmul.f32 1.0, %v4103
        %v4105 = vrcp.pop %v3693
        %v4106 = vmul.f32 1.0, %v4105
        %v4107 = vrcp.pop %v3694
        %v4108 = vmul.f32 1.0, %v4107
        %v4109 = vrcp.pop %v3695
        %v4110 = vmul.f32 1.0, %v4109
        %v4111 = vrcp.pop %v3696
        %v4112 = vmul.f32 1.0, %v4111
        %v4113 = vrcp.pop %v3697
        %v4114 = vmul.f32 1.0, %v4113
        %v4115 = vrcp.pop %v3698
        %v4116 = vmul.f32 1.0, %v4115
        %v4117 = vrcp.pop %v3699
        %v4118 = vmul.f32 1.0, %v4117
        %v4119 = vrcp.pop %v3700
        %v4120 = vmul.f32 1.0, %v4119
        %v4121 = vrcp.pop %v3701
        %v4122 = vmul.f32 1.0, %v4121
        %v4123 = vrcp.pop %v3702
        %v4124 = vmul.f32 1.0, %v4123
        %v4125 = vrcp.pop %v3703
        %v4126 = vmul.f32 1.0, %v4125
        %v4127 = vrcp.pop %v3704
        %v4128 = vmul.f32 1.0, %v4127
        %v4129 = vrcp.pop %v3705
        %v4130 = vmul.f32 1.0, %v4129
        %v4131 = vrcp.pop %v3706
        %v4132 = vmul.f32 1.0, %v4131
        %v4133 = vrcp.pop %v3707
        %v4134 = vmul.f32 1.0, %v4133
        %v4135 = vrcp.pop %v3708
        %v4136 = vmul.f32 1.0, %v4135
        %v4137 = vrcp.pop %v3709
        %v4138 = vmul.f32 1.0, %v4137
        %v4139 = vrcp.pop %v3710
        %v4140 = vmul.f32 1.0, %v4139
        %v4141 = vrcp.pop %v3711
        %v4142 = vmul.f32 1.0, %v4141
        %v4143 = vrcp.pop %v3712
        %v4144 = vmul.f32 1.0, %v4143
        %v4145 = vrcp.pop %v3713
        %v4146 = vmul.f32 1.0, %v4145
        %v4147 = vrcp.pop %v3714
        %v4148 = vmul.f32 1.0, %v4147
        %v4149 = vrcp.pop %v3715
        %v4150 = vmul.f32 1.0, %v4149
        %v4151 = vrcp.pop %v3716
        %v4152 = vmul.f32 1.0, %v4151
        %v4153 = vrcp.pop %v3717
        %v4154 = vmul.f32 1.0, %v4153
        %v4155 = vrcp.pop %v3718
        %v4156 = vmul.f32 1.0, %v4155
        %v4157 = vrcp.pop %v3719
        %v4158 = vmul.f32 1.0, %v4157
        %v4159 = vrcp.pop %v3720
        %v4160 = vmul.f32 1.0, %v4159
        %v4161 = vrcp.pop %v3721
        %v4162 = vmul.f32 1.0, %v4161
        %v4163 = vrcp.pop %v3722
        %v4164 = vmul.f32 1.0, %v4163
        %v4165 = vrcp.pop %v3723
        %v4166 = vmul.f32 1.0, %v4165
        %v4167 = vrcp.pop %v3724
        %v4168 = vmul.f32 1.0, %v4167
        %v4169 = vrcp.pop %v3725
        %v4170 = vmul.f32 1.0, %v4169
        %v4171 = vrcp.pop %v3726
        %v4172 = vmul.f32 1.0, %v4171
        %v4173 = vrcp.pop %v3727
        %v4174 = vmul.f32 1.0, %v4173
        %v4175 = vrcp.pop %v3728
        %v4176 = vmul.f32 1.0, %v4175
        %v4177 = vrcp.pop %v3729
        %v4178 = vmul.f32 1.0, %v4177
        %v4179 = vrcp.pop %v3730
        %v4180 = vmul.f32 1.0, %v4179
        %v4181 = vrcp.pop %v3731
        %v4182 = vmul.f32 1.0, %v4181
        %v4183 = vrcp.pop %v3732
        %v4184 = vmul.f32 1.0, %v4183
        %v4185 = vrcp.pop %v3733
        %v4186 = vmul.f32 1.0, %v4185
        %v4187 = vrcp.pop %v3734
        %v4188 = vmul.f32 1.0, %v4187
        %v4189 = vrcp.pop %v3735
        %v4190 = vmul.f32 1.0, %v4189
        %v4191 = vrcp.pop %v3736
        %v4192 = vmul.f32 1.0, %v4191
        %v4193 = vrcp.pop %v3737
        %v4194 = vmul.f32 1.0, %v4193
        %v4195 = vrcp.pop %v3738
        %v4196 = vmul.f32 1.0, %v4195
        %v4197 = vrcp.pop %v3739
        %v4198 = vmul.f32 1.0, %v4197
        %v4199 = vrcp.pop %v3740
        %v4200 = vmul.f32 1.0, %v4199
        %v4201 = vrcp.pop %v3741
        %v4202 = vmul.f32 1.0, %v4201
        %v4203 = vrcp.pop %v3742
        %v4204 = vmul.f32 1.0, %v4203
        %v4205 = vrcp.pop %v3743
        %v4206 = vmul.f32 1.0, %v4205
        %v4207 = vrcp.pop %v3744
        %v4208 = vmul.f32 1.0, %v4207
        %v4209 = vrcp.pop %v3745
        %v4210 = vmul.f32 1.0, %v4209
        %v4211 = vrcp.pop %v3746
        %v4212 = vmul.f32 1.0, %v4211
        %v4213 = vrcp.pop %v3747
        %v4214 = vmul.f32 1.0, %v4213
        %v4215 = vrcp.pop %v3748
        %v4216 = vmul.f32 1.0, %v4215
        %v4217 = vrcp.pop %v3749
        %v4218 = vmul.f32 1.0, %v4217
        %v4219 = vrcp.pop %v3750
        %v4220 = vmul.f32 1.0, %v4219
        %v4221 = vrcp.pop %v3751
        %v4222 = vmul.f32 1.0, %v4221
        %v4223 = vrcp.pop %v3752
        %v4224 = vmul.f32 1.0, %v4223
        %v4225 = vrcp.pop %v3753
        %v4226 = vmul.f32 1.0, %v4225
        %v4227 = vrcp.pop %v3754
        %v4228 = vmul.f32 1.0, %v4227
        %v4229 = vrcp.pop %v3755
        %v4230 = vmul.f32 1.0, %v4229
        %v4231 = vrcp.pop %v3756
        %v4232 = vmul.f32 1.0, %v4231
        %v4233 = vrcp.pop %v3757
        %v4234 = vmul.f32 1.0, %v4233
        %v4235 = vrcp.pop %v3758
        %v4236 = vmul.f32 1.0, %v4235
        %v4237 = vrcp.pop %v3759
        %v4238 = vmul.f32 1.0, %v4237
        %v4239 = vrcp.pop %v3760
        %v4240 = vmul.f32 1.0, %v4239
        %v4241 = vrcp.pop %v3761
        %v4242 = vmul.f32 1.0, %v4241
        %v4243 = vrcp.pop %v3762
        %v4244 = vmul.f32 1.0, %v4243
        %v4245 = vrcp.pop %v3763
        %v4246 = vmul.f32 1.0, %v4245
        %v4247 = vrcp.pop %v3764
        %v4248 = vmul.f32 1.0, %v4247
        %v4249 = vrcp.pop %v3765
        %v4250 = vmul.f32 1.0, %v4249
        %v4251 = vrcp.pop %v3766
        %v4252 = vmul.f32 1.0, %v4251
        %v4253 = vrcp.pop %v3767
        %v4254 = vmul.f32 1.0, %v4253
        %v4255 = vrcp.pop %v3768
        %v4256 = vmul.f32 1.0, %v4255
        %v4257 = vrcp.pop %v3769
        %v4258 = vmul.f32 1.0, %v4257
        %v4259 = vrcp.pop %v3770
        %v4260 = vmul.f32 1.0, %v4259
        %v4261 = vrcp.pop %v3771
        %v4262 = vmul.f32 1.0, %v4261
        %v4263 = vrcp.pop %v3772
        %v4264 = vmul.f32 1.0, %v4263
        %v4265 = vrcp.pop %v3773
        %v4266 = vmul.f32 1.0, %v4265
        %v4267 = vrcp.pop %v3774
        %v4268 = vmul.f32 1.0, %v4267
        %v4269 = vrcp.pop %v3775
        %v4270 = vmul.f32 1.0, %v4269
        %v4271 = vrcp.pop %v3776
        %v4272 = vmul.f32 1.0, %v4271
        %v4273 = vrcp.pop %v3777
        %v4274 = vmul.f32 1.0, %v4273
        %v4275 = vrcp.pop %v3778
        %v4276 = vmul.f32 1.0, %v4275
        %v4277 = vrcp.pop %v3779
        %v4278 = vmul.f32 1.0, %v4277
        %v4279 = vrcp.pop %v3780
        %v4280 = vmul.f32 1.0, %v4279
        %v4281 = vrcp.pop %v3781
        %v4282 = vmul.f32 1.0, %v4281
        %v4283 = vrcp.pop %v3782
        %v4284 = vmul.f32 1.0, %v4283
        %v4285 = vrcp.pop %v3783
        %v4286 = vmul.f32 1.0, %v4285
        %v4287 = vrcp.pop %v3784
        %v4288 = vmul.f32 1.0, %v4287
        %v4289 = vrcp.pop %v3785
        %v4290 = vmul.f32 1.0, %v4289
        %v4291 = vrcp.pop %v3786
        %v4292 = vmul.f32 1.0, %v4291
        %v4293 = vrcp.pop %v3787
        %v4294 = vmul.f32 1.0, %v4293
        %v4295 = vrcp.pop %v3788
        %v4296 = vmul.f32 1.0, %v4295
        %v4297 = vrcp.pop %v3789
        %v4298 = vmul.f32 1.0, %v4297
        %v4299 = vrcp.pop %v3790
        %v4300 = vmul.f32 1.0, %v4299
        %v4301 = vrcp.pop %v3791
        %v4302 = vmul.f32 1.0, %v4301
        %v4303 = vrcp.pop %v3792
        %v4304 = vmul.f32 1.0, %v4303
        %v4305 = vrcp.pop %v3793
        %v4306 = vmul.f32 1.0, %v4305
        %v4307 = vrcp.pop %v3794
        %v4308 = vmul.f32 1.0, %v4307
        %v4309 = vrcp.pop %v3795
        %v4310 = vmul.f32 1.0, %v4309
        %v4311 = vrcp.pop %v3796
        %v4312 = vmul.f32 1.0, %v4311
        %v4313 = vrcp.pop %v3797
        %v4314 = vmul.f32 1.0, %v4313
        %v4315 = vrcp.pop %v3798
        %v4316 = vmul.f32 1.0, %v4315
        %v4317 = vrcp.pop %v3799
        %v4318 = vmul.f32 1.0, %v4317
        %v4319 = vrcp.pop %v3800
        %v4320 = vmul.f32 1.0, %v4319
        %v4321 = vrcp.pop %v3801
        %v4322 = vmul.f32 1.0, %v4321
        %v4323 = vrcp.pop %v3802
        %v4324 = vmul.f32 1.0, %v4323
        %v4325 = vrcp.pop %v3803
        %v4326 = vmul.f32 1.0, %v4325
        %v4327 = vrcp.pop %v3804
        %v4328 = vmul.f32 1.0, %v4327
        %v4329 = vrcp.pop %v3805
        %v4330 = vmul.f32 1.0, %v4329
        %v4331 = vrcp.pop %v3806
        %v4332 = vmul.f32 1.0, %v4331
        %v4333 = vrcp.pop %v3807
        %v4334 = vmul.f32 1.0, %v4333
        %v4335 = vrcp.pop %v3808
        %v4336 = vmul.f32 1.0, %v4335
        %v4337 = vrcp.pop %v3809
        %v4338 = vmul.f32 1.0, %v4337
        %v4339 = vrcp.pop %v3810
        %v4340 = vmul.f32 1.0, %v4339
        %v4341 = vrcp.pop %v3811
        %v4342 = vmul.f32 1.0, %v4341
        %v4343 = vrcp.pop %v3812
        %v4344 = vmul.f32 1.0, %v4343
        %v4345 = vrcp.pop %v3813
        %v4346 = vmul.f32 1.0, %v4345
        %v4347 = vrcp.pop %v3814
        %v4348 = vmul.f32 1.0, %v4347
        %v4349 = vrcp.pop %v3815
        %v4350 = vmul.f32 1.0, %v4349
        %v4351 = vrcp.pop %v3816
        %v4352 = vmul.f32 1.0, %v4351
        %v4353 = vrcp.pop %v3817
        %v4354 = vmul.f32 1.0, %v4353
        %v4355 = vrcp.pop %v3818
        %v4356 = vmul.f32 1.0, %v4355
        %v4357 = vrcp.pop %v3819
        %v4358 = vmul.f32 1.0, %v4357
        %v4359 = vrcp.pop %v3820
        %v4360 = vmul.f32 1.0, %v4359
        %v4361 = vrcp.pop %v3821
        %v4362 = vmul.f32 1.0, %v4361
        %v4363 = vrcp.pop %v3822
        %v4364 = vmul.f32 1.0, %v4363
        %v4365 = vrcp.pop %v3823
        %v4366 = vmul.f32 1.0, %v4365
        %v4367 = vrcp.pop %v3824
        %v4368 = vmul.f32 1.0, %v4367
        %v4369 = vrcp.pop %v3825
        %v4370 = vmul.f32 1.0, %v4369
        %v4371 = vrcp.pop %v3826
        %v4372 = vmul.f32 1.0, %v4371
        %v4373 = vrcp.pop %v3827
        %v4374 = vmul.f32 1.0, %v4373
        %v4375 = vrcp.pop %v3828
        %v4376 = vmul.f32 1.0, %v4375
        %v4377 = vrcp.pop %v3829
        %v4378 = vmul.f32 1.0, %v4377
        %v4379 = vrcp.pop %v3830
        %v4380 = vmul.f32 1.0, %v4379
        %v4381 = vrcp.pop %v3831
        %v4382 = vmul.f32 1.0, %v4381
        %v4383 = vrcp.pop %v3832
        %v4384 = vmul.f32 1.0, %v4383
        %v4385 = vrcp.pop %v3833
        %v4386 = vmul.f32 1.0, %v4385
        %v4387 = vrcp.pop %v3834
        %v4388 = vmul.f32 1.0, %v4387
        %v4389 = vrcp.pop %v3835
        %v4390 = vmul.f32 1.0, %v4389
        %v4391 = vrcp.pop %v3836
        %v4392 = vmul.f32 1.0, %v4391
        %v4393 = vrcp.pop %v3837
        %v4394 = vmul.f32 1.0, %v4393
        %v4395 = vrcp.pop %v3838
        %v4396 = vmul.f32 1.0, %v4395
        %v4397 = vrcp.pop %v3839
        %v4398 = vmul.f32 1.0, %v4397
        %v4399 = vrcp.pop %v3840
        %v4400 = vmul.f32 1.0, %v4399
        %v4401 = vrcp.pop %v3841
        %v4402 = vmul.f32 1.0, %v4401
        %v4403 = vrcp.pop %v3842
        %v4404 = vmul.f32 1.0, %v4403
        %v4405 = vrcp.pop %v3843
        %v4406 = vmul.f32 1.0, %v4405
        %v4407 = vrcp.pop %v3844
        %v4408 = vmul.f32 1.0, %v4407
        %v4409 = vrcp.pop %v3845
        %v4410 = vmul.f32 1.0, %v4409
        %v4411 = vrcp.pop %v3846
        %v4412 = vmul.f32 1.0, %v4411
        %v4413 = vrcp.pop %v3847
        %v4414 = vmul.f32 1.0, %v4413
        %v4415 = vrcp.pop %v3848
        %v4416 = vmul.f32 1.0, %v4415
        %v4417 = vrcp.pop %v3849
        %v4418 = vmul.f32 1.0, %v4417
        %v4419 = vrcp.pop %v3850
        %v4420 = vmul.f32 1.0, %v4419
        %v4421 = vrcp.pop %v3851
        %v4422 = vmul.f32 1.0, %v4421
        %v4423 = vrcp.pop %v3852
        %v4424 = vmul.f32 1.0, %v4423
        %v4425 = vrcp.pop %v3853
        %v4426 = vmul.f32 1.0, %v4425
        %v4427 = vrcp.pop %v3854
        %v4428 = vmul.f32 1.0, %v4427
        %v4429 = vrcp.pop %v3855
        %v4430 = vmul.f32 1.0, %v4429
        %v4431 = vrcp.pop %v3856
        %v4432 = vmul.f32 1.0, %v4431
        %v4433 = vrcp.pop %v3857
        %v4434 = vmul.f32 1.0, %v4433
        %v4435 = vrcp.pop %v3858
        %v4436 = vmul.f32 1.0, %v4435
        %v4437 = vrcp.pop %v3859
        %v4438 = vmul.f32 1.0, %v4437
        %v4439 = vrcp.pop %v3860
        %v4440 = vmul.f32 1.0, %v4439
        %v4441 = vrcp.pop %v3861
        %v4442 = vmul.f32 1.0, %v4441
        %v4443 = vrcp.pop %v3862
        %v4444 = vmul.f32 1.0, %v4443
        %v4445 = vrcp.pop %v3863
        %v4446 = vmul.f32 1.0, %v4445
        %v4447 = vrcp.pop %v3864
        %v4448 = vmul.f32 1.0, %v4447
        %v4449 = vrcp.pop %v3865
        %v4450 = vmul.f32 1.0, %v4449
        %v4451 = vrcp.pop %v3866
        %v4452 = vmul.f32 1.0, %v4451
        %v4453 = vrcp.pop %v3867
        %v4454 = vmul.f32 1.0, %v4453
        %v4455 = vrcp.pop %v3868
        %v4456 = vmul.f32 1.0, %v4455
        %v4457 = vrcp.pop %v3869
        %v4458 = vmul.f32 1.0, %v4457
        %v4459 = vrcp.pop %v3870
        %v4460 = vmul.f32 1.0, %v4459
        %v4461 = vrcp.pop %v3871
        %v4462 = vmul.f32 1.0, %v4461
        %v4463 = vrcp.pop %v3872
        %v4464 = vmul.f32 1.0, %v4463
        %v4465 = vrcp.pop %v3873
        %v4466 = vmul.f32 1.0, %v4465
        %v4467 = vrcp.pop %v3874
        %v4468 = vmul.f32 1.0, %v4467
        %v4469 = vrcp.pop %v3875
        %v4470 = vmul.f32 1.0, %v4469
        %v4471 = vrcp.pop %v3876
        %v4472 = vmul.f32 1.0, %v4471
        %v4473 = vrcp.pop %v3877
        %v4474 = vmul.f32 1.0, %v4473
        %v4475 = vrcp.pop %v3878
        %v4476 = vmul.f32 1.0, %v4475
        %v4477 = vrcp.pop %v3879
        %v4478 = vmul.f32 1.0, %v4477
        %v4479 = vrcp.pop %v3880
        %v4480 = vmul.f32 1.0, %v4479
        %v4481 = vrcp.pop %v3881
        %v4482 = vmul.f32 1.0, %v4481
        %v4483 = vrcp.pop %v3882
        %v4484 = vmul.f32 1.0, %v4483
        %v4485 = vrcp.pop %v3883
        %v4486 = vmul.f32 1.0, %v4485
        %v4487 = vrcp.pop %v3884
        %v4488 = vmul.f32 1.0, %v4487
        %v4489 = vrcp.pop %v3885
        %v4490 = vmul.f32 1.0, %v4489
        %v4491 = vrcp.pop %v3886
        %v4492 = vmul.f32 1.0, %v4491
        %v4493 = vrcp.pop %v3887
        %v4494 = vmul.f32 1.0, %v4493
        %v4495 = vrcp.pop %v3888
        %v4496 = vmul.f32 1.0, %v4495
        %v4497 = vrcp.pop %v3889
        %v4498 = vmul.f32 1.0, %v4497
        %v4499 = vrcp.pop %v3890
        %v4500 = vmul.f32 1.0, %v4499
        %v4501 = vrcp.pop %v3891
        %v4502 = vmul.f32 1.0, %v4501
        %v4503 = vrcp.pop %v3892
        %v4504 = vmul.f32 1.0, %v4503
        %v4505 = vrcp.pop %v3893
        %v4506 = vmul.f32 1.0, %v4505
        %v4507 = vrcp.pop %v3894
        %v4508 = vmul.f32 1.0, %v4507
        %v4509 = vrcp.pop %v3895
        %v4510 = vmul.f32 1.0, %v4509
        %v4511 = vrcp.pop %v3896
        %v4512 = vmul.f32 1.0, %v4511
        %v4513 = vrcp.pop %v3897
        %v4514 = vmul.f32 1.0, %v4513
        %v4515 = vrcp.pop %v3898
        %v4516 = vmul.f32 1.0, %v4515
        %v4517 = vrcp.pop %v3899
        %v4518 = vmul.f32 1.0, %v4517
        %v4519 = vrcp.pop %v3900
        %v4520 = vmul.f32 1.0, %v4519
        %v4521 = vrcp.pop %v3901
        %v4522 = vmul.f32 1.0, %v4521
        %v4523 = vrcp.pop %v3902
        %v4524 = vmul.f32 1.0, %v4523
        %v4525 = vrcp.pop %v3903
        %v4526 = vmul.f32 1.0, %v4525
        %v4527 = vrcp.pop %v3904
        %v4528 = vmul.f32 1.0, %v4527
        %v4529 = vrcp.pop %v3905
        %v4530 = vmul.f32 1.0, %v4529
        %v4531 = vrcp.pop %v3906
        %v4532 = vmul.f32 1.0, %v4531
        %v4533 = vrcp.pop %v3907
        %v4534 = vmul.f32 1.0, %v4533
        %v4535 = vrcp.pop %v3908
        %v4536 = vmul.f32 1.0, %v4535
        %v4537 = vrcp.pop %v3909
        %v4538 = vmul.f32 1.0, %v4537
        %v4539 = vrcp.pop %v3910
        %v4540 = vmul.f32 1.0, %v4539
        %v4541 = vrcp.pop %v3911
        %v4542 = vmul.f32 1.0, %v4541
        %v4543 = vrcp.pop %v3912
        %v4544 = vmul.f32 1.0, %v4543
        %v4545 = vrcp.pop %v3913
        %v4546 = vmul.f32 1.0, %v4545
        %v4547 = vrcp.pop %v3914
        %v4548 = vmul.f32 1.0, %v4547
        %v4549 = vrcp.pop %v3915
        %v4550 = vmul.f32 1.0, %v4549
        %v4551 = vrcp.pop %v3916
        %v4552 = vmul.f32 1.0, %v4551
        %v4553 = vrcp.pop %v3917
        %v4554 = vmul.f32 1.0, %v4553
        %v4555 = vrcp.pop %v3918
        %v4556 = vmul.f32 1.0, %v4555
        %v4557 = vrcp.pop %v3919
        %v4558 = vmul.f32 1.0, %v4557
        %v4559 = vrcp.pop %v3920
        %v4560 = vmul.f32 1.0, %v4559
        %v4561 = vrcp.pop %v3921
        %v4562 = vmul.f32 1.0, %v4561
        %v4563 = vrcp.pop %v3922
        %v4564 = vmul.f32 1.0, %v4563
        %v4565 = vrcp.pop %v3923
        %v4566 = vmul.f32 1.0, %v4565
        %v4567 = vrcp.pop %v3924
        %v4568 = vmul.f32 1.0, %v4567
        %v4569 = vrcp.pop %v3925
        %v4570 = vmul.f32 1.0, %v4569
        %v4571 = vrcp.pop %v3926
        %v4572 = vmul.f32 1.0, %v4571
        %v4573 = vrcp.pop %v3927
        %v4574 = vmul.f32 1.0, %v4573
        %v4575 = vrcp.pop %v3928
        %v4576 = vmul.f32 1.0, %v4575
        %v4577 = vrcp.pop %v3929
        %v4578 = vmul.f32 1.0, %v4577
        %v4579 = vrcp.pop %v3930
        %v4580 = vmul.f32 1.0, %v4579
        %v4581 = vrcp.pop %v3931
        %v4582 = vmul.f32 1.0, %v4581
        %v4583 = vrcp.pop %v3932
        %v4584 = vmul.f32 1.0, %v4583
        %v4585 = vrcp.pop %v3933
        %v4586 = vmul.f32 1.0, %v4585
        %v4587 = vrcp.pop %v3934
        %v4588 = vmul.f32 1.0, %v4587
        %v4589 = vrcp.pop %v3935
        %v4590 = vmul.f32 1.0, %v4589
        %v4591 = vrcp.pop %v3936
        %v4592 = vmul.f32 1.0, %v4591
        %v4593 = vrcp.pop %v3937
        %v4594 = vmul.f32 1.0, %v4593
        %v4595 = vrcp.pop %v3938
        %v4596 = vmul.f32 1.0, %v4595
        %v4597 = vrcp.pop %v3939
        %v4598 = vmul.f32 1.0, %v4597
        %v4599 = vrcp.pop %v3940
        %v4600 = vmul.f32 1.0, %v4599
        %v4601 = vrcp.pop %v3941
        %v4602 = vmul.f32 1.0, %v4601
        %v4603 = vrcp.pop %v3942
        %v4604 = vmul.f32 1.0, %v4603
        %v4605 = vrcp.pop %v3943
        %v4606 = vmul.f32 1.0, %v4605
        %v4607 = vrcp.pop %v3944
        %v4608 = vmul.f32 1.0, %v4607
        %v4609 = vrcp.pop %v3945
        %v4610 = vmul.f32 1.0, %v4609
        %v4611 = vrcp.pop %v3946
        %v4612 = vmul.f32 1.0, %v4611
        %v4613 = vrcp.pop %v3947
        %v4614 = vmul.f32 1.0, %v4613
        %v4615 = vrcp.pop %v3948
        %v4616 = vmul.f32 1.0, %v4615
        %v4617 = vrcp.pop %v3949
        %v4618 = vmul.f32 1.0, %v4617
        %v4619 = vrcp.pop %v3950
        %v4620 = vmul.f32 1.0, %v4619
        %v4621 = vrcp.pop %v3951
        %v4622 = vmul.f32 1.0, %v4621
        %v4623 = vrcp.pop %v3952
        %v4624 = vmul.f32 1.0, %v4623
        %v4625 = vrcp.pop %v3953
        %v4626 = vmul.f32 1.0, %v4625
        %v4627 = vrcp.pop %v3954
        %v4628 = vmul.f32 1.0, %v4627
        %v4629 = vrcp.pop %v3955
        %v4630 = vmul.f32 1.0, %v4629
        %v4631 = vrcp.pop %v3956
        %v4632 = vmul.f32 1.0, %v4631
        %v4633 = vrcp.pop %v3957
        %v4634 = vmul.f32 1.0, %v4633
        %v4635 = vrcp.pop %v3958
        %v4636 = vmul.f32 1.0, %v4635
        %v4637 = vrcp.pop %v3959
        %v4638 = vmul.f32 1.0, %v4637
        %v4639 = vrcp.pop %v3960
        %v4640 = vmul.f32 1.0, %v4639
        %v4641 = vrcp.pop %v3961
        %v4642 = vmul.f32 1.0, %v4641
        %v4643 = vrcp.pop %v3962
        %v4644 = vmul.f32 1.0, %v4643
        %v4645 = vrcp.pop %v3963
        %v4646 = vmul.f32 1.0, %v4645
        %v4647 = vrcp.pop %v3964
        %v4648 = vmul.f32 1.0, %v4647
        %v4649 = vrcp.pop %v3965
        %v4650 = vmul.f32 1.0, %v4649
        %v4651 = vrcp.pop %v3966
        %v4652 = vmul.f32 1.0, %v4651
        %v4653 = vrcp.pop %v3967
        %v4654 = vmul.f32 1.0, %v4653
        %v4655 = vrcp.pop %v3968
        %v4656 = vmul.f32 1.0, %v4655
        %v4657 = vrcp.pop %v3969
        %v4658 = vmul.f32 1.0, %v4657
        %v4659 = vrcp.pop %v3970
        %v4660 = vmul.f32 1.0, %v4659
        %v4661 = vrcp.pop %v3971
        %v4662 = vmul.f32 1.0, %v4661
        %v4663 = vrcp.pop %v3972
        %v4664 = vmul.f32 1.0, %v4663
        %v4665 = vrcp.pop %v3973
        %v4666 = vmul.f32 1.0, %v4665
        %v4667 = vrcp.pop %v3974
        %v4668 = vmul.f32 1.0, %v4667
        %v4669 = vrcp.pop %v3975
        %v4670 = vmul.f32 1.0, %v4669
        %v4671 = vrcp.pop %v3976
        %v4672 = vmul.f32 1.0, %v4671
        %v4673 = vrcp.pop %v3977
        %v4674 = vmul.f32 1.0, %v4673
        %v4675 = vrcp.pop %v3978
        %v4676 = vmul.f32 1.0, %v4675
        %v4677 = vrcp.pop %v3979
        %v4678 = vmul.f32 1.0, %v4677
        %v4679 = vrcp.pop %v3980
        %v4680 = vmul.f32 1.0, %v4679
        %v4681 = vrcp.pop %v3981
        %v4682 = vmul.f32 1.0, %v4681
        %v4683 = vrcp.pop %v3982
        %v4684 = vmul.f32 1.0, %v4683
        %v4685 = vrcp.pop %v3983
        %v4686 = vmul.f32 1.0, %v4685
        %v4687 = vrcp.pop %v3984
        %v4688 = vmul.f32 1.0, %v4687
        %v4689 = vrcp.pop %v3985
        %v4690 = vmul.f32 1.0, %v4689
        %v4691 = vrcp.pop %v3986
        %v4692 = vmul.f32 1.0, %v4691
        %v4693 = vrcp.pop %v3987
        %v4694 = vmul.f32 1.0, %v4693
        %v4695 = vrcp.pop %v3988
        %v4696 = vmul.f32 1.0, %v4695
        %v4697 = vrcp.pop %v3989
        %v4698 = vmul.f32 1.0, %v4697
        %v4699 = vrcp.pop %v3990
        %v4700 = vmul.f32 1.0, %v4699
        %v4701 = vrcp.pop %v3991
        %v4702 = vmul.f32 1.0, %v4701
        %v4703 = vrcp.pop %v3992
        %v4704 = vmul.f32 1.0, %v4703
        %v4705 = vrcp.pop %v3993
        %v4706 = vmul.f32 1.0, %v4705
        %v4707 = vrcp.pop %v3994
        %v4708 = vmul.f32 1.0, %v4707
        %v4709 = vrcp.pop %v3995
        %v4710 = vmul.f32 1.0, %v4709
        %v4711 = vrcp.pop %v3996
        %v4712 = vmul.f32 1.0, %v4711
        %v4713 = vrcp.pop %v3997
        %v4714 = vmul.f32 1.0, %v4713
        %v4715 = vrcp.pop %v3998
        %v4716 = vmul.f32 1.0, %v4715
        %v4717 = vrcp.pop %v3999
        %v4718 = vmul.f32 1.0, %v4717
        %v4719 = vrcp.pop %v4000
        %v4720 = vmul.f32 1.0, %v4719
        %v4721 = vrcp.pop %v4001
        %v4722 = vmul.f32 1.0, %v4721
        %v4723 = vrcp.pop %v4002
        %v4724 = vmul.f32 1.0, %v4723
        %v4725 = vrcp.pop %v4003
        %v4726 = vmul.f32 1.0, %v4725
        %v4727 = vrcp.pop %v4004
        %v4728 = vmul.f32 1.0, %v4727
        %v4729 = vrcp.pop %v4005
        %v4730 = vmul.f32 1.0, %v4729
        %v4731 = vrcp.pop %v4006
        %v4732 = vmul.f32 1.0, %v4731
        %v4733 = vrcp.pop %v4007
        %v4734 = vmul.f32 1.0, %v4733
        %v4735 = vrcp.pop %v4008
        %v4736 = vmul.f32 1.0, %v4735
        %v4737 = vrcp.pop %v4009
        %v4738 = vmul.f32 1.0, %v4737
        %v4739 = vrcp.pop %v4010
        %v4740 = vmul.f32 1.0, %v4739
        %v4741 = vrcp.pop %v4011
        %v4742 = vmul.f32 1.0, %v4741
        %v4743 = vrcp.pop %v4012
        %v4744 = vmul.f32 1.0, %v4743
        %v4745 = vrcp.pop %v4013
        %v4746 = vmul.f32 1.0, %v4745
        %v4747 = vrcp.pop %v4014
        %v4748 = vmul.f32 1.0, %v4747
        %v4749 = vrcp.pop %v4015
        %v4750 = vmul.f32 1.0, %v4749
        %v4751 = vrcp.pop %v4016
        %v4752 = vmul.f32 1.0, %v4751
        %v4753 = vrcp.pop %v4017
        %v4754 = vmul.f32 1.0, %v4753
        %v4755 = vrcp.pop %v4018
        %v4756 = vmul.f32 1.0, %v4755
        %v4757 = vrcp.pop %v4019
        %v4758 = vmul.f32 1.0, %v4757
        %v4759 = vrcp.pop %v4020
        %v4760 = vmul.f32 1.0, %v4759
        %v4761 = vrcp.pop %v4021
        %v4762 = vmul.f32 1.0, %v4761
        %v4763 = vrcp.pop %v4022
        %v4764 = vmul.f32 1.0, %v4763
        %v4765 = vrcp.pop %v4023
        %v4766 = vmul.f32 1.0, %v4765
        %v4767 = vrcp.pop %v4024
        %v4768 = vmul.f32 1.0, %v4767
        %v4769 = vrcp.pop %v4025
        %v4770 = vmul.f32 1.0, %v4769
        %v4771 = vrcp.pop %v4026
        %v4772 = vmul.f32 1.0, %v4771
        %v4773 = vrcp.pop %v4027
        %v4774 = vmul.f32 1.0, %v4773
        %v4775 = vrcp.pop %v4028
        %v4776 = vmul.f32 1.0, %v4775
        %v4777 = vrcp.pop %v4029
        %v4778 = vmul.f32 1.0, %v4777
        %v4779 = vrcp.pop %v4030
        %v4780 = vmul.f32 1.0, %v4779
        %v4781 = vrcp.pop %v4031
        %v4782 = vmul.f32 1.0, %v4781
        %v4783 = vrcp.pop %v4032
        %v4784 = vmul.f32 1.0, %v4783
        %v4785 = vrcp.pop %v4033
        %v4786 = vmul.f32 1.0, %v4785
        %v4787 = vrcp.pop %v4034
        %v4788 = vmul.f32 1.0, %v4787
        %v4789 = vrcp.pop %v4035
        %v4790 = vmul.f32 1.0, %v4789
        %v4791 = vrcp.pop %v4036
        %v4792 = vmul.f32 1.0, %v4791
        %v4793 = vrcp.pop %v4037
        %v4794 = vmul.f32 1.0, %v4793
        %v4795 = vrcp.pop %v4038
        %v4796 = vmul.f32 1.0, %v4795
        %v4797 = vrcp.pop %v4039
        %v4798 = vmul.f32 1.0, %v4797
        %v4799 = vrcp.pop %v4040
        %v4800 = vmul.f32 1.0, %v4799
        %v4801 = vrcp.pop %v4041
        %v4802 = vmul.f32 1.0, %v4801
        %v4803 = vrcp.pop %v4042
        %v4804 = vmul.f32 1.0, %v4803
        %v4805 = vrcp.pop %v4043
        %v4806 = vmul.f32 1.0, %v4805
        %v4807 = vrcp.pop %v4044
        %v4808 = vmul.f32 1.0, %v4807
        %v4809 = vrcp.pop %v4045
        %v4810 = vmul.f32 1.0, %v4809
        %v4811 = vrcp.pop %v4046
        %v4812 = vmul.f32 1.0, %v4811
        %v4813 = vrcp.pop %v4047
        %v4814 = vmul.f32 1.0, %v4813
        %v4815 = vrcp.pop %v4048
        %v4816 = vmul.f32 1.0, %v4815
        %v4817 = vmul.f32 %v1390, %v4050
        %v4818 = vmul.f32 %v1392, %v4052
        %v4819 = vmul.f32 %v1583, %v4054
        %v4820 = vmul.f32 %v1585, %v4056
        %v4821 = vmul.f32 %v1776, %v4058
        %v4822 = vmul.f32 %v1778, %v4060
        %v4823 = vmul.f32 %v1969, %v4062
        %v4824 = vmul.f32 %v1971, %v4064
        %v4825 = vmul.f32 %v2162, %v4066
        %v4826 = vmul.f32 %v2164, %v4068
        %v4827 = vmul.f32 %v2355, %v4070
        %v4828 = vmul.f32 %v2357, %v4072
        %v4829 = vmul.f32 %v1394, %v4074
        %v4830 = vmul.f32 %v1396, %v4076
        %v4831 = vmul.f32 %v1587, %v4078
        %v4832 = vmul.f32 %v1589, %v4080
        %v4833 = vmul.f32 %v1780, %v4082
        %v4834 = vmul.f32 %v1782, %v4084
        %v4835 = vmul.f32 %v1973, %v4086
        %v4836 = vmul.f32 %v1975, %v4088
        %v4837 = vmul.f32 %v2166, %v4090
        %v4838 = vmul.f32 %v2168, %v4092
        %v4839 = vmul.f32 %v2359, %v4094
        %v4840 = vmul.f32 %v2361, %v4096
        %v4841 = vmul.f32 %v1400, %v4098
        %v4842 = vmul.f32 %v1402, %v4100
        %v4843 = vmul.f32 %v1593, %v4102
        %v4844 = vmul.f32 %v1595, %v4104
        %v4845 = vmul.f32 %v1786, %v4106
        %v4846 = vmul.f32 %v1788, %v4108
        %v4847 = vmul.f32 %v1979, %v4110
        %v4848 = vmul.f32 %v1981, %v4112
        %v4849 = vmul.f32 %v2172, %v4114
        %v4850 = vmul.f32 %v2174, %v4116
        %v4851 = vmul.f32 %v2365, %v4118
        %v4852 = vmul.f32 %v2367, %v4120
        %v4853 = vmul.f32 %v1404, %v4122
        %v4854 = vmul.f32 %v1406, %v4124
        %v4855 = vmul.f32 %v1597, %v4126
        %v4856 = vmul.f32 %v1599, %v4128
        %v4857 = vmul.f32 %v1790, %v4130
        %v4858 = vmul.f32 %v1792, %v4132
        %v4859 = vmul.f32 %v1983, %v4134
        %v4860 = vmul.f32 %v1985, %v4136
        %v4861 = vmul.f32 %v2176, %v4138
        %v4862 = vmul.f32 %v2178, %v4140
        %v4863 = vmul.f32 %v2369, %v4142
        %v4864 = vmul.f32 %v2371, %v4144
        %v4865 = vmul.f32 %v1410, %v4146
        %v4866 = vmul.f32 %v1412, %v4148
        %v4867 = vmul.f32 %v1603, %v4150
        %v4868 = vmul.f32 %v1605, %v4152
        %v4869 = vmul.f32 %v1796, %v4154
        %v4870 = vmul.f32 %v1798, %v4156
        %v4871 = vmul.f32 %v1989, %v4158
        %v4872 = vmul.f32 %v1991, %v4160
        %v4873 = vmul.f32 %v2182, %v4162
        %v4874 = vmul.f32 %v2184, %v4164
        %v4875 = vmul.f32 %v2375, %v4166
        %v4876 = vmul.f32 %v2377, %v4168
        %v4877 = vmul.f32 %v1414, %v4170
        %v4878 = vmul.f32 %v1416, %v4172
        %v4879 = vmul.f32 %v1607, %v4174
        %v4880 = vmul.f32 %v1609, %v4176
        %v4881 = vmul.f32 %v1800, %v4178
        %v4882 = vmul.f32 %v1802, %v4180
        %v4883 = vmul.f32 %v1993, %v4182
        %v4884 = vmul.f32 %v1995, %v4184
        %v4885 = vmul.f32 %v2186, %v4186
        %v4886 = vmul.f32 %v2188, %v4188
        %v4887 = vmul.f32 %v2379, %v4190
        %v4888 = vmul.f32 %v2381, %v4192
        %v4889 = vmul.f32 %v1420, %v4194
        %v4890 = vmul.f32 %v1422, %v4196
        %v4891 = vmul.f32 %v1613, %v4198
        %v4892 = vmul.f32 %v1615, %v4200
        %v4893 = vmul.f32 %v1806, %v4202
        %v4894 = vmul.f32 %v1808, %v4204
        %v4895 = vmul.f32 %v1999, %v4206
        %v4896 = vmul.f32 %v2001, %v4208
        %v4897 = vmul.f32 %v2192, %v4210
        %v4898 = vmul.f32 %v2194, %v4212
        %v4899 = vmul.f32 %v2385, %v4214
        %v4900 = vmul.f32 %v2387, %v4216
        %v4901 = vmul.f32 %v1424, %v4218
        %v4902 = vmul.f32 %v1426, %v4220
        %v4903 = vmul.f32 %v1617, %v4222
        %v4904 = vmul.f32 %v1619, %v4224
        %v4905 = vmul.f32 %v1810, %v4226
        %v4906 = vmul.f32 %v1812, %v4228
        %v4907 = vmul.f32 %v2003, %v4230
        %v4908 = vmul.f32 %v2005, %v4232
        %v4909 = vmul.f32 %v2196, %v4234
        %v4910 = vmul.f32 %v2198, %v4236
        %v4911 = vmul.f32 %v2389, %v4238
        %v4912 = vmul.f32 %v2391, %v4240
        %v4913 = vmul.f32 %v1430, %v4242
        %v4914 = vmul.f32 %v1432, %v4244
        %v4915 = vmul.f32 %v1623, %v4246
        %v4916 = vmul.f32 %v1625, %v4248
        %v4917 = vmul.f32 %v1816, %v4250
        %v4918 = vmul.f32 %v1818, %v4252
        %v4919 = vmul.f32 %v2009, %v4254
        %v4920 = vmul.f32 %v2011, %v4256
        %v4921 = vmul.f32 %v2202, %v4258
        %v4922 = vmul.f32 %v2204, %v4260
        %v4923 = vmul.f32 %v2395, %v4262
        %v4924 = vmul.f32 %v2397, %v4264
        %v4925 = vmul.f32 %v1434, %v4266
        %v4926 = vmul.f32 %v1436, %v4268
        %v4927 = vmul.f32 %v1627, %v4270
        %v4928 = vmul.f32 %v1629, %v4272
        %v4929 = vmul.f32 %v1820, %v4274
        %v4930 = vmul.f32 %v1822, %v4276
        %v4931 = vmul.f32 %v2013, %v4278
        %v4932 = vmul.f32 %v2015, %v4280
        %v4933 = vmul.f32 %v2206, %v4282
        %v4934 = vmul.f32 %v2208, %v4284
        %v4935 = vmul.f32 %v2399, %v4286
        %v4936 = vmul.f32 %v2401, %v4288
        %v4937 = vmul.f32 %v1440, %v4290
        %v4938 = vmul.f32 %v1442, %v4292
        %v4939 = vmul.f32 %v1633, %v4294
        %v4940 = vmul.f32 %v1635, %v4296
        %v4941 = vmul.f32 %v1826, %v4298
        %v4942 = vmul.f32 %v1828, %v4300
        %v4943 = vmul.f32 %v2019, %v4302
        %v4944 = vmul.f32 %v2021, %v4304
        %v4945 = vmul.f32 %v2212, %v4306
        %v4946 = vmul.f32 %v2214, %v4308
        %v4947 = vmul.f32 %v2405, %v4310
        %v4948 = vmul.f32 %v2407, %v4312
        %v4949 = vmul.f32 %v1444, %v4314
        %v4950 = vmul.f32 %v1446, %v4316
        %v4951 = vmul.f32 %v1637, %v4318
        %v4952 = vmul.f32 %v1639, %v4320
        %v4953 = vmul.f32 %v1830, %v4322
        %v4954 = vmul.f32 %v1832, %v4324
        %v4955 = vmul.f32 %v2023, %v4326
        %v4956 = vmul.f32 %v2025, %v4328
        %v4957 = vmul.f32 %v2216, %v4330
        %v4958 = vmul.f32 %v2218, %v4332
        %v4959 = vmul.f32 %v2409, %v4334
        %v4960 = vmul.f32 %v2411, %v4336
        %v4961 = vmul.f32 %v1450, %v4338
        %v4962 = vmul.f32 %v1452, %v4340
        %v4963 = vmul.f32 %v1643, %v4342
        %v4964 = vmul.f32 %v1645, %v4344
        %v4965 = vmul.f32 %v1836, %v4346
        %v4966 = vmul.f32 %v1838, %v4348
        %v4967 = vmul.f32 %v2029, %v4350
        %v4968 = vmul.f32 %v2031, %v4352
        %v4969 = vmul.f32 %v2222, %v4354
        %v4970 = vmul.f32 %v2224, %v4356
        %v4971 = vmul.f32 %v2415, %v4358
        %v4972 = vmul.f32 %v2417, %v4360
        %v4973 = vmul.f32 %v1454, %v4362
        %v4974 = vmul.f32 %v1456, %v4364
        %v4975 = vmul.f32 %v1647, %v4366
        %v4976 = vmul.f32 %v1649, %v4368
        %v4977 = vmul.f32 %v1840, %v4370
        %v4978 = vmul.f32 %v1842, %v4372
        %v4979 = vmul.f32 %v2033, %v4374
        %v4980 = vmul.f32 %v2035, %v4376
        %v4981 = vmul.f32 %v2226, %v4378
        %v4982 = vmul.f32 %v2228, %v4380
        %v4983 = vmul.f32 %v2419, %v4382
        %v4984 = vmul.f32 %v2421, %v4384
        %v4985 = vmul.f32 %v1460, %v4386
        %v4986 = vmul.f32 %v1462, %v4388
        %v4987 = vmul.f32 %v1653, %v4390
        %v4988 = vmul.f32 %v1655, %v4392
        %v4989 = vmul.f32 %v1846, %v4394
        %v4990 = vmul.f32 %v1848, %v4396
        %v4991 = vmul.f32 %v2039, %v4398
        %v4992 = vmul.f32 %v2041, %v4400
        %v4993 = vmul.f32 %v2232, %v4402
        %v4994 = vmul.f32 %v2234, %v4404
        %v4995 = vmul.f32 %v2425, %v4406
        %v4996 = vmul.f32 %v2427, %v4408
        %v4997 = vmul.f32 %v1464, %v4410
        %v4998 = vmul.f32 %v1466, %v4412
        %v4999 = vmul.f32 %v1657, %v4414
        %v5000 = vmul.f32 %v1659, %v4416
        %v5001 = vmul.f32 %v1850, %v4418
        %v5002 = vmul.f32 %v1852, %v4420
        %v5003 = vmul.f32 %v2043, %v4422
        %v5004 = vmul.f32 %v2045, %v4424
        %v5005 = vmul.f32 %v2236, %v4426
        %v5006 = vmul.f32 %v2238, %v4428
        %v5007 = vmul.f32 %v2429, %v4430
        %v5008 = vmul.f32 %v2431, %v4432
        %v5009 = vmul.f32 %v1470, %v4434
        %v5010 = vmul.f32 %v1472, %v4436
        %v5011 = vmul.f32 %v1663, %v4438
        %v5012 = vmul.f32 %v1665, %v4440
        %v5013 = vmul.f32 %v1856, %v4442
        %v5014 = vmul.f32 %v1858, %v4444
        %v5015 = vmul.f32 %v2049, %v4446
        %v5016 = vmul.f32 %v2051, %v4448
        %v5017 = vmul.f32 %v2242, %v4450
        %v5018 = vmul.f32 %v2244, %v4452
        %v5019 = vmul.f32 %v2435, %v4454
        %v5020 = vmul.f32 %v2437, %v4456
        %v5021 = vmul.f32 %v1474, %v4458
        %v5022 = vmul.f32 %v1476, %v4460
        %v5023 = vmul.f32 %v1667, %v4462
        %v5024 = vmul.f32 %v1669, %v4464
        %v5025 = vmul.f32 %v1860, %v4466
        %v5026 = vmul.f32 %v1862, %v4468
        %v5027 = vmul.f32 %v2053, %v4470
        %v5028 = vmul.f32 %v2055, %v4472
        %v5029 = vmul.f32 %v2246, %v4474
        %v5030 = vmul.f32 %v2248, %v4476
        %v5031 = vmul.f32 %v2439, %v4478
        %v5032 = vmul.f32 %v2441, %v4480
        %v5033 = vmul.f32 %v1480, %v4482
        %v5034 = vmul.f32 %v1482, %v4484
        %v5035 = vmul.f32 %v1673, %v4486
        %v5036 = vmul.f32 %v1675, %v4488
        %v5037 = vmul.f32 %v1866, %v4490
        %v5038 = vmul.f32 %v1868, %v4492
        %v5039 = vmul.f32 %v2059, %v4494
        %v5040 = vmul.f32 %v2061, %v4496
        %v5041 = vmul.f32 %v2252, %v4498
        %v5042 = vmul.f32 %v2254, %v4500
        %v5043 = vmul.f32 %v2445, %v4502
        %v5044 = vmul.f32 %v2447, %v4504
        %v5045 = vmul.f32 %v1484, %v4506
        %v5046 = vmul.f32 %v1486, %v4508
        %v5047 = vmul.f32 %v1677, %v4510
        %v5048 = vmul.f32 %v1679, %v4512
        %v5049 = vmul.f32 %v1870, %v4514
        %v5050 = vmul.f32 %v1872, %v4516
        %v5051 = vmul.f32 %v2063, %v4518
        %v5052 = vmul.f32 %v2065, %v4520
        %v5053 = vmul.f32 %v2256, %v4522
        %v5054 = vmul.f32 %v2258, %v4524
        %v5055 = vmul.f32 %v2449, %v4526
        %v5056 = vmul.f32 %v2451, %v4528
        %v5057 = vmul.f32 %v1490, %v4530
        %v5058 = vmul.f32 %v1492, %v4532
        %v5059 = vmul.f32 %v1683, %v4534
        %v5060 = vmul.f32 %v1685, %v4536
        %v5061 = vmul.f32 %v1876, %v4538
        %v5062 = vmul.f32 %v1878, %v4540
        %v5063 = vmul.f32 %v2069, %v4542
        %v5064 = vmul.f32 %v2071, %v4544
        %v5065 = vmul.f32 %v2262, %v4546
        %v5066 = vmul.f32 %v2264, %v4548
        %v5067 = vmul.f32 %v2455, %v4550
        %v5068 = vmul.f32 %v2457, %v4552
        %v5069 = vmul.f32 %v1494, %v4554
        %v5070 = vmul.f32 %v1496, %v4556
        %v5071 = vmul.f32 %v1687, %v4558
        %v5072 = vmul.f32 %v1689, %v4560
        %v5073 = vmul.f32 %v1880, %v4562
        %v5074 = vmul.f32 %v1882, %v4564
        %v5075 = vmul.f32 %v2073, %v4566
        %v5076 = vmul.f32 %v2075, %v4568
        %v5077 = vmul.f32 %v2266, %v4570
        %v5078 = vmul.f32 %v2268, %v4572
        %v5079 = vmul.f32 %v2459, %v4574
        %v5080 = vmul.f32 %v2461, %v4576
        %v5081 = vmul.f32 %v1500, %v4578
        %v5082 = vmul.f32 %v1502, %v4580
        %v5083 = vmul.f32 %v1693, %v4582
        %v5084 = vmul.f32 %v1695, %v4584
        %v5085 = vmul.f32 %v1886, %v4586
        %v5086 = vmul.f32 %v1888, %v4588
        %v5087 = vmul.f32 %v2079, %v4590
        %v5088 = vmul.f32 %v2081, %v4592
        %v5089 = vmul.f32 %v2272, %v4594
        %v5090 = vmul.f32 %v2274, %v4596
        %v5091 = vmul.f32 %v2465, %v4598
        %v5092 = vmul.f32 %v2467, %v4600
        %v5093 = vmul.f32 %v1504, %v4602
        %v5094 = vmul.f32 %v1506, %v4604
        %v5095 = vmul.f32 %v1697, %v4606
        %v5096 = vmul.f32 %v1699, %v4608
        %v5097 = vmul.f32 %v1890, %v4610
        %v5098 = vmul.f32 %v1892, %v4612
        %v5099 = vmul.f32 %v2083, %v4614
        %v5100 = vmul.f32 %v2085, %v4616
        %v5101 = vmul.f32 %v2276, %v4618
        %v5102 = vmul.f32 %v2278, %v4620
        %v5103 = vmul.f32 %v2469, %v4622
        %v5104 = vmul.f32 %v2471, %v4624
        %v5105 = vmul.f32 %v1510, %v4626
        %v5106 = vmul.f32 %v1512, %v4628
        %v5107 = vmul.f32 %v1703, %v4630
        %v5108 = vmul.f32 %v1705, %v4632
        %v5109 = vmul.f32 %v1896, %v4634
        %v5110 = vmul.f32 %v1898, %v4636
        %v5111 = vmul.f32 %v2089, %v4638
        %v5112 = vmul.f32 %v2091, %v4640
        %v5113 = vmul.f32 %v2282, %v4642
        %v5114 = vmul.f32 %v2284, %v4644
        %v5115 = vmul.f32 %v2475, %v4646
        %v5116 = vmul.f32 %v2477, %v4648
        %v5117 = vmul.f32 %v1514, %v4650
        %v5118 = vmul.f32 %v1516, %v4652
        %v5119 = vmul.f32 %v1707, %v4654
        %v5120 = vmul.f32 %v1709, %v4656
        %v5121 = vmul.f32 %v1900, %v4658
        %v5122 = vmul.f32 %v1902, %v4660
        %v5123 = vmul.f32 %v2093, %v4662
        %v5124 = vmul.f32 %v2095, %v4664
        %v5125 = vmul.f32 %v2286, %v4666
        %v5126 = vmul.f32 %v2288, %v4668
        %v5127 = vmul.f32 %v2479, %v4670
        %v5128 = vmul.f32 %v2481, %v4672
        %v5129 = vmul.f32 %v1520, %v4674
        %v5130 = vmul.f32 %v1522, %v4676
        %v5131 = vmul.f32 %v1713, %v4678
        %v5132 = vmul.f32 %v1715, %v4680
        %v5133 = vmul.f32 %v1906, %v4682
        %v5134 = vmul.f32 %v1908, %v4684
        %v5135 = vmul.f32 %v2099, %v4686
        %v5136 = vmul.f32 %v2101, %v4688
        %v5137 = vmul.f32 %v2292, %v4690
        %v5138 = vmul.f32 %v2294, %v4692
        %v5139 = vmul.f32 %v2485, %v4694
        %v5140 = vmul.f32 %v2487, %v4696
        %v5141 = vmul.f32 %v1524, %v4698
        %v5142 = vmul.f32 %v1526, %v4700
        %v5143 = vmul.f32 %v1717, %v4702
        %v5144 = vmul.f32 %v1719, %v4704
        %v5145 = vmul.f32 %v1910, %v4706
        %v5146 = vmul.f32 %v1912, %v4708
        %v5147 = vmul.f32 %v2103, %v4710
        %v5148 = vmul.f32 %v2105, %v4712
        %v5149 = vmul.f32 %v2296, %v4714
        %v5150 = vmul.f32 %v2298, %v4716
        %v5151 = vmul.f32 %v2489, %v4718
        %v5152 = vmul.f32 %v2491, %v4720
        %v5153 = vmul.f32 %v1530, %v4722
        %v5154 = vmul.f32 %v1532, %v4724
        %v5155 = vmul.f32 %v1723, %v4726
        %v5156 = vmul.f32 %v1725, %v4728
        %v5157 = vmul.f32 %v1916, %v4730
        %v5158 = vmul.f32 %v1918, %v4732
        %v5159 = vmul.f32 %v2109, %v4734
        %v5160 = vmul.f32 %v2111, %v4736
        %v5161 = vmul.f32 %v2302, %v4738
        %v5162 = vmul.f32 %v2304, %v4740
        %v5163 = vmul.f32 %v2495, %v4742
        %v5164 = vmul.f32 %v2497, %v4744
        %v5165 = vmul.f32 %v1534, %v4746
        %v5166 = vmul.f32 %v1536, %v4748
        %v5167 = vmul.f32 %v1727, %v4750
        %v5168 = vmul.f32 %v1729, %v4752
        %v5169 = vmul.f32 %v1920, %v4754
        %v5170 = vmul.f32 %v1922, %v4756
        %v5171 = vmul.f32 %v2113, %v4758
        %v5172 = vmul.f32 %v2115, %v4760
        %v5173 = vmul.f32 %v2306, %v4762
        %v5174 = vmul.f32 %v2308, %v4764
        %v5175 = vmul.f32 %v2499, %v4766
        %v5176 = vmul.f32 %v2501, %v4768
        %v5177 = vmul.f32 %v1540, %v4770
        %v5178 = vmul.f32 %v1542, %v4772
        %v5179 = vmul.f32 %v1733, %v4774
        %v5180 = vmul.f32 %v1735, %v4776
        %v5181 = vmul.f32 %v1926, %v4778
        %v5182 = vmul.f32 %v1928, %v4780
        %v5183 = vmul.f32 %v2119, %v4782
        %v5184 = vmul.f32 %v2121, %v4784
        %v5185 = vmul.f32 %v2312, %v4786
        %v5186 = vmul.f32 %v2314, %v4788
        %v5187 = vmul.f32 %v2505, %v4790
        %v5188 = vmul.f32 %v2507, %v4792
        %v5189 = vmul.f32 %v1544, %v4794
        %v5190 = vmul.f32 %v1546, %v4796
        %v5191 = vmul.f32 %v1737, %v4798
        %v5192 = vmul.f32 %v1739, %v4800
        %v5193 = vmul.f32 %v1930, %v4802
        %v5194 = vmul.f32 %v1932, %v4804
        %v5195 = vmul.f32 %v2123, %v4806
        %v5196 = vmul.f32 %v2125, %v4808
        %v5197 = vmul.f32 %v2316, %v4810
        %v5198 = vmul.f32 %v2318, %v4812
        %v5199 = vmul.f32 %v2509, %v4814
        %v5200 = vmul.f32 %v2511, %v4816
        %v5201 = vld [vmem:[#allocation2] sm:$0xff]
        %v5202 = vld [vmem:[#allocation2 + $0x8] sm:$0xf]
        %v5203 = vadd.f32 %v4817, %v4829
        %v5204 = vadd.f32 %v5203, %v4841
        %v5205 = vadd.f32 %v5204, %v4853
        %v5206 = vadd.f32 %v5205, %v4865
        %v5207 = vadd.f32 %v5206, %v4877
        %v5208 = vadd.f32 %v5207, %v4889
        %v5209 = vadd.f32 %v5208, %v4901
        %v5210 = vadd.f32 %v5209, %v4913
        %v5211 = vadd.f32 %v5210, %v4925
        %v5212 = vadd.f32 %v5211, %v4937
        %v5213 = vadd.f32 %v5212, %v4949
        %v5214 = vadd.f32 %v5213, %v4961
        %v5215 = vadd.f32 %v5214, %v4973
        %v5216 = vadd.f32 %v5215, %v4985
        %v5217 = vadd.f32 %v5216, %v4997
        %v5218 = vadd.f32 %v5217, %v5009
        %v5219 = vadd.f32 %v5218, %v5021
        %v5220 = vadd.f32 %v5219, %v5033
        %v5221 = vadd.f32 %v5220, %v5045
        %v5222 = vadd.f32 %v5221, %v5057
        %v5223 = vadd.f32 %v5222, %v5069
        %v5224 = vadd.f32 %v5223, %v5081
        %v5225 = vadd.f32 %v5224, %v5093
        %v5226 = vadd.f32 %v5225, %v5105
        %v5227 = vadd.f32 %v5226, %v5117
        %v5228 = vadd.f32 %v5227, %v5129
        %v5229 = vadd.f32 %v5228, %v5141
        %v5230 = vadd.f32 %v5229, %v5153
        %v5231 = vadd.f32 %v5230, %v5165
        %v5232 = vadd.f32 %v5231, %v5177
        %v5233 = vadd.f32 %v5232, %v5189
        %v5234 = vrot.slane %v5233, 4
        %v5235 = vadd.f32 %v5233, %v5234
        %v5236 = vrot.slane %v5235, 2
        %v5237 = vadd.f32 %v5235, %v5236
        %v5238 = vrot.slane %v5237, 1
        %v5239 = vadd.f32 %v5237, %v5238
        %v5240 = vadd.f32 %v4818, %v4830
        %v5241 = vadd.f32 %v5240, %v4842
        %v5242 = vadd.f32 %v5241, %v4854
        %v5243 = vadd.f32 %v5242, %v4866
        %v5244 = vadd.f32 %v5243, %v4878
        %v5245 = vadd.f32 %v5244, %v4890
        %v5246 = vadd.f32 %v5245, %v4902
        %v5247 = vadd.f32 %v5246, %v4914
        %v5248 = vadd.f32 %v5247, %v4926
        %v5249 = vadd.f32 %v5248, %v4938
        %v5250 = vadd.f32 %v5249, %v4950
        %v5251 = vadd.f32 %v5250, %v4962
        %v5252 = vadd.f32 %v5251, %v4974
        %v5253 = vadd.f32 %v5252, %v4986
        %v5254 = vadd.f32 %v5253, %v4998
        %v5255 = vadd.f32 %v5254, %v5010
        %v5256 = vadd.f32 %v5255, %v5022
        %v5257 = vadd.f32 %v5256, %v5034
        %v5258 = vadd.f32 %v5257, %v5046
        %v5259 = vadd.f32 %v5258, %v5058
        %v5260 = vadd.f32 %v5259, %v5070
        %v5261 = vadd.f32 %v5260, %v5082
        %v5262 = vadd.f32 %v5261, %v5094
        %v5263 = vadd.f32 %v5262, %v5106
        %v5264 = vadd.f32 %v5263, %v5118
        %v5265 = vadd.f32 %v5264, %v5130
        %v5266 = vadd.f32 %v5265, %v5142
        %v5267 = vadd.f32 %v5266, %v5154
        %v5268 = vadd.f32 %v5267, %v5166
        %v5269 = vadd.f32 %v5268, %v5178
        %v5270 = vadd.f32 %v5269, %v5190
        %v5271 = vrot.slane %v5270, 4
        %v5272 = vadd.f32 %v5270, %v5271
        %v5273 = vrot.slane %v5272, 2
        %v5274 = vadd.f32 %v5272, %v5273
        %v5275 = vrot.slane %v5274, 1
        %v5276 = vadd.f32 %v5274, %v5275
        %v5277 = vadd.f32 %v4819, %v4831
        %v5278 = vadd.f32 %v5277, %v4843
        %v5279 = vadd.f32 %v5278, %v4855
        %v5280 = vadd.f32 %v5279, %v4867
        %v5281 = vadd.f32 %v5280, %v4879
        %v5282 = vadd.f32 %v5281, %v4891
        %v5283 = vadd.f32 %v5282, %v4903
        %v5284 = vadd.f32 %v5283, %v4915
        %v5285 = vadd.f32 %v5284, %v4927
        %v5286 = vadd.f32 %v5285, %v4939
        %v5287 = vadd.f32 %v5286, %v4951
        %v5288 = vadd.f32 %v5287, %v4963
        %v5289 = vadd.f32 %v5288, %v4975
        %v5290 = vadd.f32 %v5289, %v4987
        %v5291 = vadd.f32 %v5290, %v4999
        %v5292 = vadd.f32 %v5291, %v5011
        %v5293 = vadd.f32 %v5292, %v5023
        %v5294 = vadd.f32 %v5293, %v5035
        %v5295 = vadd.f32 %v5294, %v5047
        %v5296 = vadd.f32 %v5295, %v5059
        %v5297 = vadd.f32 %v5296, %v5071
        %v5298 = vadd.f32 %v5297, %v5083
        %v5299 = vadd.f32 %v5298, %v5095
        %v5300 = vadd.f32 %v5299, %v5107
        %v5301 = vadd.f32 %v5300, %v5119
        %v5302 = vadd.f32 %v5301, %v5131
        %v5303 = vadd.f32 %v5302, %v5143
        %v5304 = vadd.f32 %v5303, %v5155
        %v5305 = vadd.f32 %v5304, %v5167
        %v5306 = vadd.f32 %v5305, %v5179
        %v5307 = vadd.f32 %v5306, %v5191
        %v5308 = vrot.slane %v5307, 4
        %v5309 = vadd.f32 %v5307, %v5308
        %v5310 = vrot.slane %v5309, 2
        %v5311 = vadd.f32 %v5309, %v5310
        %v5312 = vrot.slane %v5311, 1
        %v5313 = vadd.f32 %v5311, %v5312
        %v5314 = vadd.f32 %v4820, %v4832
        %v5315 = vadd.f32 %v5314, %v4844
        %v5316 = vadd.f32 %v5315, %v4856
        %v5317 = vadd.f32 %v5316, %v4868
        %v5318 = vadd.f32 %v5317, %v4880
        %v5319 = vadd.f32 %v5318, %v4892
        %v5320 = vadd.f32 %v5319, %v4904
        %v5321 = vadd.f32 %v5320, %v4916
        %v5322 = vadd.f32 %v5321, %v4928
        %v5323 = vadd.f32 %v5322, %v4940
        %v5324 = vadd.f32 %v5323, %v4952
        %v5325 = vadd.f32 %v5324, %v4964
        %v5326 = vadd.f32 %v5325, %v4976
        %v5327 = vadd.f32 %v5326, %v4988
        %v5328 = vadd.f32 %v5327, %v5000
        %v5329 = vadd.f32 %v5328, %v5012
        %v5330 = vadd.f32 %v5329, %v5024
        %v5331 = vadd.f32 %v5330, %v5036
        %v5332 = vadd.f32 %v5331, %v5048
        %v5333 = vadd.f32 %v5332, %v5060
        %v5334 = vadd.f32 %v5333, %v5072
        %v5335 = vadd.f32 %v5334, %v5084
        %v5336 = vadd.f32 %v5335, %v5096
        %v5337 = vadd.f32 %v5336, %v5108
        %v5338 = vadd.f32 %v5337, %v5120
        %v5339 = vadd.f32 %v5338, %v5132
        %v5340 = vadd.f32 %v5339, %v5144
        %v5341 = vadd.f32 %v5340, %v5156
        %v5342 = vadd.f32 %v5341, %v5168
        %v5343 = vadd.f32 %v5342, %v5180
        %v5344 = vadd.f32 %v5343, %v5192
        %v5345 = vrot.slane %v5344, 4
        %v5346 = vadd.f32 %v5344, %v5345
        %v5347 = vrot.slane %v5346, 2
        %v5348 = vadd.f32 %v5346, %v5347
        %v5349 = vrot.slane %v5348, 1
        %v5350 = vadd.f32 %v5348, %v5349
        %v5351 = vadd.f32 %v4821, %v4833
        %v5352 = vadd.f32 %v5351, %v4845
        %v5353 = vadd.f32 %v5352, %v4857
        %v5354 = vadd.f32 %v5353, %v4869
        %v5355 = vadd.f32 %v5354, %v4881
        %v5356 = vadd.f32 %v5355, %v4893
        %v5357 = vadd.f32 %v5356, %v4905
        %v5358 = vadd.f32 %v5357, %v4917
        %v5359 = vadd.f32 %v5358, %v4929
        %v5360 = vadd.f32 %v5359, %v4941
        %v5361 = vadd.f32 %v5360, %v4953
        %v5362 = vadd.f32 %v5361, %v4965
        %v5363 = vadd.f32 %v5362, %v4977
        %v5364 = vadd.f32 %v5363, %v4989
        %v5365 = vadd.f32 %v5364, %v5001
        %v5366 = vadd.f32 %v5365, %v5013
        %v5367 = vadd.f32 %v5366, %v5025
        %v5368 = vadd.f32 %v5367, %v5037
        %v5369 = vadd.f32 %v5368, %v5049
        %v5370 = vadd.f32 %v5369, %v5061
        %v5371 = vadd.f32 %v5370, %v5073
        %v5372 = vadd.f32 %v5371, %v5085
        %v5373 = vadd.f32 %v5372, %v5097
        %v5374 = vadd.f32 %v5373, %v5109
        %v5375 = vadd.f32 %v5374, %v5121
        %v5376 = vadd.f32 %v5375, %v5133
        %v5377 = vadd.f32 %v5376, %v5145
        %v5378 = vadd.f32 %v5377, %v5157
        %v5379 = vadd.f32 %v5378, %v5169
        %v5380 = vadd.f32 %v5379, %v5181
        %v5381 = vadd.f32 %v5380, %v5193
        %v5382 = vrot.slane %v5381, 4
        %v5383 = vadd.f32 %v5381, %v5382
        %v5384 = vrot.slane %v5383, 2
        %v5385 = vadd.f32 %v5383, %v5384
        %v5386 = vrot.slane %v5385, 1
        %v5387 = vadd.f32 %v5385, %v5386
        %v5388 = vadd.f32 %v4822, %v4834
        %v5389 = vadd.f32 %v5388, %v4846
        %v5390 = vadd.f32 %v5389, %v4858
        %v5391 = vadd.f32 %v5390, %v4870
        %v5392 = vadd.f32 %v5391, %v4882
        %v5393 = vadd.f32 %v5392, %v4894
        %v5394 = vadd.f32 %v5393, %v4906
        %v5395 = vadd.f32 %v5394, %v4918
        %v5396 = vadd.f32 %v5395, %v4930
        %v5397 = vadd.f32 %v5396, %v4942
        %v5398 = vadd.f32 %v5397, %v4954
        %v5399 = vadd.f32 %v5398, %v4966
        %v5400 = vadd.f32 %v5399, %v4978
        %v5401 = vadd.f32 %v5400, %v4990
        %v5402 = vadd.f32 %v5401, %v5002
        %v5403 = vadd.f32 %v5402, %v5014
        %v5404 = vadd.f32 %v5403, %v5026
        %v5405 = vadd.f32 %v5404, %v5038
        %v5406 = vadd.f32 %v5405, %v5050
        %v5407 = vadd.f32 %v5406, %v5062
        %v5408 = vadd.f32 %v5407, %v5074
        %v5409 = vadd.f32 %v5408, %v5086
        %v5410 = vadd.f32 %v5409, %v5098
        %v5411 = vadd.f32 %v5410, %v5110
        %v5412 = vadd.f32 %v5411, %v5122
        %v5413 = vadd.f32 %v5412, %v5134
        %v5414 = vadd.f32 %v5413, %v5146
        %v5415 = vadd.f32 %v5414, %v5158
        %v5416 = vadd.f32 %v5415, %v5170
        %v5417 = vadd.f32 %v5416, %v5182
        %v5418 = vadd.f32 %v5417, %v5194
        %v5419 = vrot.slane %v5418, 4
        %v5420 = vadd.f32 %v5418, %v5419
        %v5421 = vrot.slane %v5420, 2
        %v5422 = vadd.f32 %v5420, %v5421
        %v5423 = vrot.slane %v5422, 1
        %v5424 = vadd.f32 %v5422, %v5423
        %v5425 = vadd.f32 %v4823, %v4835
        %v5426 = vadd.f32 %v5425, %v4847
        %v5427 = vadd.f32 %v5426, %v4859
        %v5428 = vadd.f32 %v5427, %v4871
        %v5429 = vadd.f32 %v5428, %v4883
        %v5430 = vadd.f32 %v5429, %v4895
        %v5431 = vadd.f32 %v5430, %v4907
        %v5432 = vadd.f32 %v5431, %v4919
        %v5433 = vadd.f32 %v5432, %v4931
        %v5434 = vadd.f32 %v5433, %v4943
        %v5435 = vadd.f32 %v5434, %v4955
        %v5436 = vadd.f32 %v5435, %v4967
        %v5437 = vadd.f32 %v5436, %v4979
        %v5438 = vadd.f32 %v5437, %v4991
        %v5439 = vadd.f32 %v5438, %v5003
        %v5440 = vadd.f32 %v5439, %v5015
        %v5441 = vadd.f32 %v5440, %v5027
        %v5442 = vadd.f32 %v5441, %v5039
        %v5443 = vadd.f32 %v5442, %v5051
        %v5444 = vadd.f32 %v5443, %v5063
        %v5445 = vadd.f32 %v5444, %v5075
        %v5446 = vadd.f32 %v5445, %v5087
        %v5447 = vadd.f32 %v5446, %v5099
        %v5448 = vadd.f32 %v5447, %v5111
        %v5449 = vadd.f32 %v5448, %v5123
        %v5450 = vadd.f32 %v5449, %v5135
        %v5451 = vadd.f32 %v5450, %v5147
        %v5452 = vadd.f32 %v5451, %v5159
        %v5453 = vadd.f32 %v5452, %v5171
        %v5454 = vadd.f32 %v5453, %v5183
        %v5455 = vadd.f32 %v5454, %v5195
        %v5456 = vrot.slane %v5455, 4
        %v5457 = vadd.f32 %v5455, %v5456
        %v5458 = vrot.slane %v5457, 2
        %v5459 = vadd.f32 %v5457, %v5458
        %v5460 = vrot.slane %v5459, 1
        %v5461 = vadd.f32 %v5459, %v5460
        %v5462 = vadd.f32 %v4824, %v4836
        %v5463 = vadd.f32 %v5462, %v4848
        %v5464 = vadd.f32 %v5463, %v4860
        %v5465 = vadd.f32 %v5464, %v4872
        %v5466 = vadd.f32 %v5465, %v4884
        %v5467 = vadd.f32 %v5466, %v4896
        %v5468 = vadd.f32 %v5467, %v4908
        %v5469 = vadd.f32 %v5468, %v4920
        %v5470 = vadd.f32 %v5469, %v4932
        %v5471 = vadd.f32 %v5470, %v4944
        %v5472 = vadd.f32 %v5471, %v4956
        %v5473 = vadd.f32 %v5472, %v4968
        %v5474 = vadd.f32 %v5473, %v4980
        %v5475 = vadd.f32 %v5474, %v4992
        %v5476 = vadd.f32 %v5475, %v5004
        %v5477 = vadd.f32 %v5476, %v5016
        %v5478 = vadd.f32 %v5477, %v5028
        %v5479 = vadd.f32 %v5478, %v5040
        %v5480 = vadd.f32 %v5479, %v5052
        %v5481 = vadd.f32 %v5480, %v5064
        %v5482 = vadd.f32 %v5481, %v5076
        %v5483 = vadd.f32 %v5482, %v5088
        %v5484 = vadd.f32 %v5483, %v5100
        %v5485 = vadd.f32 %v5484, %v5112
        %v5486 = vadd.f32 %v5485, %v5124
        %v5487 = vadd.f32 %v5486, %v5136
        %v5488 = vadd.f32 %v5487, %v5148
        %v5489 = vadd.f32 %v5488, %v5160
        %v5490 = vadd.f32 %v5489, %v5172
        %v5491 = vadd.f32 %v5490, %v5184
        %v5492 = vadd.f32 %v5491, %v5196
        %v5493 = vrot.slane %v5492, 4
        %v5494 = vadd.f32 %v5492, %v5493
        %v5495 = vrot.slane %v5494, 2
        %v5496 = vadd.f32 %v5494, %v5495
        %v5497 = vrot.slane %v5496, 1
        %v5498 = vadd.f32 %v5496, %v5497
        %v5499 = vadd.f32 %v4825, %v4837
        %v5500 = vadd.f32 %v5499, %v4849
        %v5501 = vadd.f32 %v5500, %v4861
        %v5502 = vadd.f32 %v5501, %v4873
        %v5503 = vadd.f32 %v5502, %v4885
        %v5504 = vadd.f32 %v5503, %v4897
        %v5505 = vadd.f32 %v5504, %v4909
        %v5506 = vadd.f32 %v5505, %v4921
        %v5507 = vadd.f32 %v5506, %v4933
        %v5508 = vadd.f32 %v5507, %v4945
        %v5509 = vadd.f32 %v5508, %v4957
        %v5510 = vadd.f32 %v5509, %v4969
        %v5511 = vadd.f32 %v5510, %v4981
        %v5512 = vadd.f32 %v5511, %v4993
        %v5513 = vadd.f32 %v5512, %v5005
        %v5514 = vadd.f32 %v5513, %v5017
        %v5515 = vadd.f32 %v5514, %v5029
        %v5516 = vadd.f32 %v5515, %v5041
        %v5517 = vadd.f32 %v5516, %v5053
        %v5518 = vadd.f32 %v5517, %v5065
        %v5519 = vadd.f32 %v5518, %v5077
        %v5520 = vadd.f32 %v5519, %v5089
        %v5521 = vadd.f32 %v5520, %v5101
        %v5522 = vadd.f32 %v5521, %v5113
        %v5523 = vadd.f32 %v5522, %v5125
        %v5524 = vadd.f32 %v5523, %v5137
        %v5525 = vadd.f32 %v5524, %v5149
        %v5526 = vadd.f32 %v5525, %v5161
        %v5527 = vadd.f32 %v5526, %v5173
        %v5528 = vadd.f32 %v5527, %v5185
        %v5529 = vadd.f32 %v5528, %v5197
        %v5530 = vrot.slane %v5529, 4
        %v5531 = vadd.f32 %v5529, %v5530
        %v5532 = vrot.slane %v5531, 2
        %v5533 = vadd.f32 %v5531, %v5532
        %v5534 = vrot.slane %v5533, 1
        %v5535 = vadd.f32 %v5533, %v5534
        %v5536 = vadd.f32 %v4826, %v4838
        %v5537 = vadd.f32 %v5536, %v4850
        %v5538 = vadd.f32 %v5537, %v4862
        %v5539 = vadd.f32 %v5538, %v4874
        %v5540 = vadd.f32 %v5539, %v4886
        %v5541 = vadd.f32 %v5540, %v4898
        %v5542 = vadd.f32 %v5541, %v4910
        %v5543 = vadd.f32 %v5542, %v4922
        %v5544 = vadd.f32 %v5543, %v4934
        %v5545 = vadd.f32 %v5544, %v4946
        %v5546 = vadd.f32 %v5545, %v4958
        %v5547 = vadd.f32 %v5546, %v4970
        %v5548 = vadd.f32 %v5547, %v4982
        %v5549 = vadd.f32 %v5548, %v4994
        %v5550 = vadd.f32 %v5549, %v5006
        %v5551 = vadd.f32 %v5550, %v5018
        %v5552 = vadd.f32 %v5551, %v5030
        %v5553 = vadd.f32 %v5552, %v5042
        %v5554 = vadd.f32 %v5553, %v5054
        %v5555 = vadd.f32 %v5554, %v5066
        %v5556 = vadd.f32 %v5555, %v5078
        %v5557 = vadd.f32 %v5556, %v5090
        %v5558 = vadd.f32 %v5557, %v5102
        %v5559 = vadd.f32 %v5558, %v5114
        %v5560 = vadd.f32 %v5559, %v5126
        %v5561 = vadd.f32 %v5560, %v5138
        %v5562 = vadd.f32 %v5561, %v5150
        %v5563 = vadd.f32 %v5562, %v5162
        %v5564 = vadd.f32 %v5563, %v5174
        %v5565 = vadd.f32 %v5564, %v5186
        %v5566 = vadd.f32 %v5565, %v5198
        %v5567 = vrot.slane %v5566, 4
        %v5568 = vadd.f32 %v5566, %v5567
        %v5569 = vrot.slane %v5568, 2
        %v5570 = vadd.f32 %v5568, %v5569
        %v5571 = vrot.slane %v5570, 1
        %v5572 = vadd.f32 %v5570, %v5571
        %v5573 = vadd.f32 %v4827, %v4839
        %v5574 = vadd.f32 %v5573, %v4851
        %v5575 = vadd.f32 %v5574, %v4863
        %v5576 = vadd.f32 %v5575, %v4875
        %v5577 = vadd.f32 %v5576, %v4887
        %v5578 = vadd.f32 %v5577, %v4899
        %v5579 = vadd.f32 %v5578, %v4911
        %v5580 = vadd.f32 %v5579, %v4923
        %v5581 = vadd.f32 %v5580, %v4935
        %v5582 = vadd.f32 %v5581, %v4947
        %v5583 = vadd.f32 %v5582, %v4959
        %v5584 = vadd.f32 %v5583, %v4971
        %v5585 = vadd.f32 %v5584, %v4983
        %v5586 = vadd.f32 %v5585, %v4995
        %v5587 = vadd.f32 %v5586, %v5007
        %v5588 = vadd.f32 %v5587, %v5019
        %v5589 = vadd.f32 %v5588, %v5031
        %v5590 = vadd.f32 %v5589, %v5043
        %v5591 = vadd.f32 %v5590, %v5055
        %v5592 = vadd.f32 %v5591, %v5067
        %v5593 = vadd.f32 %v5592, %v5079
        %v5594 = vadd.f32 %v5593, %v5091
        %v5595 = vadd.f32 %v5594, %v5103
        %v5596 = vadd.f32 %v5595, %v5115
        %v5597 = vadd.f32 %v5596, %v5127
        %v5598 = vadd.f32 %v5597, %v5139
        %v5599 = vadd.f32 %v5598, %v5151
        %v5600 = vadd.f32 %v5599, %v5163
        %v5601 = vadd.f32 %v5600, %v5175
        %v5602 = vadd.f32 %v5601, %v5187
        %v5603 = vadd.f32 %v5602, %v5199
        %v5604 = vrot.slane %v5603, 4
        %v5605 = vadd.f32 %v5603, %v5604
        %v5606 = vrot.slane %v5605, 2
        %v5607 = vadd.f32 %v5605, %v5606
        %v5608 = vrot.slane %v5607, 1
        %v5609 = vadd.f32 %v5607, %v5608
        %v5610 = vadd.f32 %v4828, %v4840
        %v5611 = vadd.f32 %v5610, %v4852
        %v5612 = vadd.f32 %v5611, %v4864
        %v5613 = vadd.f32 %v5612, %v4876
        %v5614 = vadd.f32 %v5613, %v4888
        %v5615 = vadd.f32 %v5614, %v4900
        %v5616 = vadd.f32 %v5615, %v4912
        %v5617 = vadd.f32 %v5616, %v4924
        %v5618 = vadd.f32 %v5617, %v4936
        %v5619 = vadd.f32 %v5618, %v4948
        %v5620 = vadd.f32 %v5619, %v4960
        %v5621 = vadd.f32 %v5620, %v4972
        %v5622 = vadd.f32 %v5621, %v4984
        %v5623 = vadd.f32 %v5622, %v4996
        %v5624 = vadd.f32 %v5623, %v5008
        %v5625 = vadd.f32 %v5624, %v5020
        %v5626 = vadd.f32 %v5625, %v5032
        %v5627 = vadd.f32 %v5626, %v5044
        %v5628 = vadd.f32 %v5627, %v5056
        %v5629 = vadd.f32 %v5628, %v5068
        %v5630 = vadd.f32 %v5629, %v5080
        %v5631 = vadd.f32 %v5630, %v5092
        %v5632 = vadd.f32 %v5631, %v5104
        %v5633 = vadd.f32 %v5632, %v5116
        %v5634 = vadd.f32 %v5633, %v5128
        %v5635 = vadd.f32 %v5634, %v5140
        %v5636 = vadd.f32 %v5635, %v5152
        %v5637 = vadd.f32 %v5636, %v5164
        %v5638 = vadd.f32 %v5637, %v5176
        %v5639 = vadd.f32 %v5638, %v5188
        %v5640 = vadd.f32 %v5639, %v5200
        %v5641 = vrot.slane %v5640, 4
        %v5642 = vadd.f32 %v5640, %v5641
        %v5643 = vrot.slane %v5642, 2
        %v5644 = vadd.f32 %v5642, %v5643
        %v5645 = vrot.slane %v5644, 1
        %v5646 = vadd.f32 %v5644, %v5645
        %v5659 = vcombine.low %v5239, %v5276
        %v5660 = vcombine.low %v5313, %v5350
        %v5661 = vcombine.low %v5387, %v5424
        %v5662 = vcombine.low %v5461, %v5498
        %v5664 = vunpack.c.l.s4 1966171168
        %v5665 = vunpack.c.0.s8 %v5664
        %v5666 = vlaneseq
        %v5667 = vshrl.u32 %v5666, 7
        %v5668 = vsub.s32 %v5665, %v5667
        %v5669 = vrot.slane %v5659, %v5668
        %v5671 = vunpack.c.l.s4 1966171168
        %v5672 = vunpack.c.0.s8 %v5671
        %v5673 = vlaneseq
        %v5674 = vshrl.u32 %v5673, 7
        %v5675 = vsub.s32 %v5672, %v5674
        %v5676 = vrot.slane %v5660, %v5675
        %v5678 = vunpack.c.l.s4 1966171168
        %v5679 = vunpack.c.0.s8 %v5678
        %v5680 = vlaneseq
        %v5681 = vshrl.u32 %v5680, 7
        %v5682 = vsub.s32 %v5679, %v5681
        %v5683 = vrot.slane %v5661, %v5682
        %v5685 = vunpack.c.l.s4 1966171168
        %v5686 = vunpack.c.0.s8 %v5685
        %v5687 = vlaneseq
        %v5688 = vshrl.u32 %v5687, 7
        %v5689 = vsub.s32 %v5686, %v5688
        %v5690 = vrot.slane %v5662, %v5689
        %v5691 = vcombine.low %v5669, %v5676
        %v5692 = vcombine.low %v5683, %v5690
        %v5694 = vunpack.c.l.s4 1966171168
        %v5695 = vunpack.c.0.s8 %v5694
        %v5696 = vlaneseq
        %v5697 = vshrl.u32 %v5696, 7
        %v5698 = vsub.s32 %v5695, %v5697
        %v5699 = vrot.slane %v5691, %v5698
        %v5701 = vunpack.c.l.s4 1966171168
        %v5702 = vunpack.c.0.s8 %v5701
        %v5703 = vlaneseq
        %v5704 = vshrl.u32 %v5703, 7
        %v5705 = vsub.s32 %v5702, %v5704
        %v5706 = vrot.slane %v5692, %v5705
        %v5707 = vcombine.low %v5699, %v5706
        %v5708 = vcombine.low %v5535, %v5572
        %v5709 = vcombine.low %v5609, %v5646
        %v5711 = vunpack.c.l.s4 1966171168
        %v5712 = vunpack.c.0.s8 %v5711
        %v5713 = vlaneseq
        %v5714 = vshrl.u32 %v5713, 7
        %v5715 = vsub.s32 %v5712, %v5714
        %v5716 = vrot.slane %v5708, %v5715
        %v5718 = vunpack.c.l.s4 1966171168
        %v5719 = vunpack.c.0.s8 %v5718
        %v5720 = vlaneseq
        %v5721 = vshrl.u32 %v5720, 7
        %v5722 = vsub.s32 %v5719, %v5721
        %v5723 = vrot.slane %v5709, %v5722
        %v5724 = vcombine.low %v5716, %v5723
        %v5726 = vunpack.c.l.s4 1966171168
        %v5727 = vunpack.c.0.s8 %v5726
        %v5728 = vlaneseq
        %v5729 = vshrl.u32 %v5728, 7
        %v5730 = vsub.s32 %v5727, %v5729
        %v5731 = vrot.slane %v5724, %v5730
        %v5734 = vadd.f32 %v5201, %v5707
        %v5735 = vadd.f32 %v5202, %v5731
        %5736 = vst [vmem:[#allocation2] sm:$0xff] %v5734
        %v5737 = vlaneseq
        %vm5738 = vcmp.ge.s32.totalorder %v5737, 0
        %vm5739 = vcmp.lt.s32.totalorder %v5737, 512
        %vm5740 = vmand %vm5738, %vm5739
        %5741 = vst.msk [vmem:[#allocation2 + $0x8] sm:$0xf] %vm5740, %v5735
        // Predicated region
        $region61: #{cable_attribute_forward.1} parent=55 // pred_check
          %p5742 = pneg %p359
        $region62: #{cable_attribute_forward.1} parent=55 // pred_check_branch
          %5744 = sbr.rel (%p5742) target = $region64
        $region63: #{cable_attribute_forward.1} parent=55 // pred_region
          %v5745 = vld [vmem:[#allocation2] sm:$0xff]
          %v5746 = vld [vmem:[#allocation2 + $0x8] sm:$0xf]
          %v5747 = vmul.f32 %v5745, 0.00390625
          %v5748 = vmul.f32 %v5746, 0.00390625
          %v5749 = vld [vmem:[%s5] sm:$0xff]
          %v5750 = vld [vmem:[%s5 + $0x8] sm:$0xff]
          %v5751 = vld [vmem:[%s5 + $0x10] sm:$0xff]
          %v5752 = vld [vmem:[%s5 + $0x18] sm:$0xff]
          %v5753 = vld [vmem:[%s5 + $0x20] sm:$0xff]
          %v5754 = vld [vmem:[%s5 + $0x28] sm:$0xff]
          %v5755 = vld [vmem:[%s5 + $0x30] sm:$0xff]
          %v5756 = vld [vmem:[%s5 + $0x38] sm:$0xff]
          %v5757 = vld [vmem:[%s5 + $0x40] sm:$0xff]
          %v5758 = vld [vmem:[%s5 + $0x48] sm:$0xff]
          %v5759 = vld [vmem:[%s5 + $0x50] sm:$0xff]
          %v5760 = vld [vmem:[%s5 + $0x58] sm:$0xff]
          %v5761 = vld [vmem:[%s5 + $0x60] sm:$0xff]
          %v5762 = vld [vmem:[%s5 + $0x68] sm:$0xff]
          %v5763 = vld [vmem:[%s5 + $0x70] sm:$0xff]
          %v5764 = vld [vmem:[%s5 + $0x78] sm:$0xff]
          %v5765 = vld [vmem:[%s5 + $0x80] sm:$0xff]
          %v5766 = vld [vmem:[%s5 + $0x88] sm:$0xff]
          %v5767 = vld [vmem:[%s5 + $0x90] sm:$0xff]
          %v5768 = vld [vmem:[%s5 + $0x98] sm:$0xff]
          %v5769 = vld [vmem:[%s5 + $0xa0] sm:$0xff]
          %v5770 = vld [vmem:[%s5 + $0xa8] sm:$0xff]
          %v5771 = vld [vmem:[%s5 + $0xb0] sm:$0xff]
          %v5772 = vld [vmem:[%s5 + $0xb8] sm:$0xff]
          %v5773 = vld [vmem:[%s5 + $0xc0] sm:$0xff]
          %v5774 = vld [vmem:[%s5 + $0xc8] sm:$0xff]
          %v5775 = vld [vmem:[%s5 + $0xd0] sm:$0xff]
          %v5776 = vld [vmem:[%s5 + $0xd8] sm:$0xff]
          %v5777 = vld [vmem:[%s5 + $0xe0] sm:$0xff]
          %v5778 = vld [vmem:[%s5 + $0xe8] sm:$0xff]
          %v5779 = vld [vmem:[%s5 + $0xf0] sm:$0xff]
          %v5780 = vld [vmem:[%s5 + $0xf8] sm:$0xff]
          %v5781 = vld [vmem:[%s5 + $0x100] sm:$0xff]
          %v5782 = vld [vmem:[%s5 + $0x108] sm:$0xff]
          %v5783 = vld [vmem:[%s5 + $0x110] sm:$0xff]
          %v5784 = vld [vmem:[%s5 + $0x118] sm:$0xff]
          %v5785 = vld [vmem:[%s5 + $0x120] sm:$0xff]
          %v5786 = vld [vmem:[%s5 + $0x128] sm:$0xff]
          %v5787 = vld [vmem:[%s5 + $0x130] sm:$0xff]
          %v5788 = vld [vmem:[%s5 + $0x138] sm:$0xff]
          %v5789 = vld [vmem:[%s5 + $0x140] sm:$0xff]
          %v5790 = vld [vmem:[%s5 + $0x148] sm:$0xff]
          %v5791 = vld [vmem:[%s5 + $0x150] sm:$0xff]
          %v5792 = vld [vmem:[%s5 + $0x158] sm:$0xff]
          %v5793 = vld [vmem:[%s5 + $0x160] sm:$0xff]
          %v5794 = vld [vmem:[%s5 + $0x168] sm:$0xff]
          %v5795 = vld [vmem:[%s5 + $0x170] sm:$0xff]
          %v5796 = vld [vmem:[%s5 + $0x178] sm:$0xff]
          %v5797 = vld [vmem:[%s5 + $0x180] sm:$0xff]
          %v5798 = vld [vmem:[%s5 + $0x188] sm:$0xff]
          %v5799 = vld [vmem:[%s5 + $0x190] sm:$0xff]
          %v5800 = vld [vmem:[%s5 + $0x198] sm:$0xff]
          %v5801 = vld [vmem:[%s5 + $0x1a0] sm:$0xff]
          %v5802 = vld [vmem:[%s5 + $0x1a8] sm:$0xff]
          %v5803 = vld [vmem:[%s5 + $0x1b0] sm:$0xff]
          %v5804 = vld [vmem:[%s5 + $0x1b8] sm:$0xff]
          %v5805 = vld [vmem:[%s5 + $0x1c0] sm:$0xff]
          %v5806 = vld [vmem:[%s5 + $0x1c8] sm:$0xff]
          %v5807 = vld [vmem:[%s5 + $0x1d0] sm:$0xff]
          %v5808 = vld [vmem:[%s5 + $0x1d8] sm:$0xff]
          %v5809 = vld [vmem:[%s5 + $0x1e0] sm:$0xff]
          %v5810 = vld [vmem:[%s5 + $0x1e8] sm:$0xff]
          %v5811 = vld [vmem:[%s5 + $0x1f0] sm:$0xff]
          %v5812 = vld [vmem:[%s5 + $0x1f8] sm:$0xff]
          %v5813 = vld [vmem:[%s5 + $0x200] sm:$0xff]
          %v5814 = vld [vmem:[%s5 + $0x208] sm:$0xff]
          %v5815 = vld [vmem:[%s5 + $0x210] sm:$0xff]
          %v5816 = vld [vmem:[%s5 + $0x218] sm:$0xff]
          %v5817 = vld [vmem:[%s5 + $0x220] sm:$0xff]
          %v5818 = vld [vmem:[%s5 + $0x228] sm:$0xff]
          %v5819 = vld [vmem:[%s5 + $0x230] sm:$0xff]
          %v5820 = vld [vmem:[%s5 + $0x238] sm:$0xff]
          %v5821 = vld [vmem:[%s5 + $0x240] sm:$0xff]
          %v5822 = vld [vmem:[%s5 + $0x248] sm:$0xff]
          %v5823 = vld [vmem:[%s5 + $0x250] sm:$0xff]
          %v5824 = vld [vmem:[%s5 + $0x258] sm:$0xff]
          %v5825 = vld [vmem:[%s5 + $0x260] sm:$0xff]
          %v5826 = vld [vmem:[%s5 + $0x268] sm:$0xff]
          %v5827 = vld [vmem:[%s5 + $0x270] sm:$0xff]
          %v5828 = vld [vmem:[%s5 + $0x278] sm:$0xff]
          %v5829 = vld [vmem:[%s5 + $0x280] sm:$0xff]
          %v5830 = vld [vmem:[%s5 + $0x288] sm:$0xff]
          %v5831 = vld [vmem:[%s5 + $0x290] sm:$0xff]
          %v5832 = vld [vmem:[%s5 + $0x298] sm:$0xff]
          %v5833 = vld [vmem:[%s5 + $0x2a0] sm:$0xff]
          %v5834 = vld [vmem:[%s5 + $0x2a8] sm:$0xff]
          %v5835 = vld [vmem:[%s5 + $0x2b0] sm:$0xff]
          %v5836 = vld [vmem:[%s5 + $0x2b8] sm:$0xff]
          %v5837 = vld [vmem:[%s5 + $0x2c0] sm:$0xff]
          %v5838 = vld [vmem:[%s5 + $0x2c8] sm:$0xff]
          %v5839 = vld [vmem:[%s5 + $0x2d0] sm:$0xff]
          %v5840 = vld [vmem:[%s5 + $0x2d8] sm:$0xff]
          %v5841 = vld [vmem:[%s5 + $0x2e0] sm:$0xff]
          %v5842 = vld [vmem:[%s5 + $0x2e8] sm:$0xff]
          %v5843 = vld [vmem:[%s5 + $0x2f0] sm:$0xff]
          %v5844 = vld [vmem:[%s5 + $0x2f8] sm:$0xff]
          %v5845 = vld [vmem:[%s5 + $0x300] sm:$0xff]
          %v5846 = vld [vmem:[%s5 + $0x308] sm:$0xff]
          %v5847 = vld [vmem:[%s5 + $0x310] sm:$0xff]
          %v5848 = vld [vmem:[%s5 + $0x318] sm:$0xff]
          %v5849 = vld [vmem:[%s5 + $0x320] sm:$0xff]
          %v5850 = vld [vmem:[%s5 + $0x328] sm:$0xff]
          %v5851 = vld [vmem:[%s5 + $0x330] sm:$0xff]
          %v5852 = vld [vmem:[%s5 + $0x338] sm:$0xff]
          %v5853 = vld [vmem:[%s5 + $0x340] sm:$0xff]
          %v5854 = vld [vmem:[%s5 + $0x348] sm:$0xff]
          %v5855 = vld [vmem:[%s5 + $0x350] sm:$0xff]
          %v5856 = vld [vmem:[%s5 + $0x358] sm:$0xff]
          %v5857 = vld [vmem:[%s5 + $0x360] sm:$0xff]
          %v5858 = vld [vmem:[%s5 + $0x368] sm:$0xff]
          %v5859 = vld [vmem:[%s5 + $0x370] sm:$0xff]
          %v5860 = vld [vmem:[%s5 + $0x378] sm:$0xff]
          %v5861 = vld [vmem:[%s5 + $0x380] sm:$0xff]
          %v5862 = vld [vmem:[%s5 + $0x388] sm:$0xff]
          %v5863 = vld [vmem:[%s5 + $0x390] sm:$0xff]
          %v5864 = vld [vmem:[%s5 + $0x398] sm:$0xff]
          %v5865 = vld [vmem:[%s5 + $0x3a0] sm:$0xff]
          %v5866 = vld [vmem:[%s5 + $0x3a8] sm:$0xff]
          %v5867 = vld [vmem:[%s5 + $0x3b0] sm:$0xff]
          %v5868 = vld [vmem:[%s5 + $0x3b8] sm:$0xff]
          %v5869 = vld [vmem:[%s5 + $0x3c0] sm:$0xff]
          %v5870 = vld [vmem:[%s5 + $0x3c8] sm:$0xff]
          %v5871 = vld [vmem:[%s5 + $0x3d0] sm:$0xff]
          %v5872 = vld [vmem:[%s5 + $0x3d8] sm:$0xff]
          %v5873 = vld [vmem:[%s5 + $0x3e0] sm:$0xff]
          %v5874 = vld [vmem:[%s5 + $0x3e8] sm:$0xff]
          %v5875 = vld [vmem:[%s5 + $0x3f0] sm:$0xff]
          %v5876 = vld [vmem:[%s5 + $0x3f8] sm:$0xff]
          %v5877 = vld [vmem:[%s5 + $0x400] sm:$0xff]
          %v5878 = vld [vmem:[%s5 + $0x408] sm:$0xff]
          %v5879 = vld [vmem:[%s5 + $0x410] sm:$0xff]
          %v5880 = vld [vmem:[%s5 + $0x418] sm:$0xff]
          %v5881 = vld [vmem:[%s5 + $0x420] sm:$0xff]
          %v5882 = vld [vmem:[%s5 + $0x428] sm:$0xff]
          %v5883 = vld [vmem:[%s5 + $0x430] sm:$0xff]
          %v5884 = vld [vmem:[%s5 + $0x438] sm:$0xff]
          %v5885 = vld [vmem:[%s5 + $0x440] sm:$0xff]
          %v5886 = vld [vmem:[%s5 + $0x448] sm:$0xff]
          %v5887 = vld [vmem:[%s5 + $0x450] sm:$0xff]
          %v5888 = vld [vmem:[%s5 + $0x458] sm:$0xff]
          %v5889 = vld [vmem:[%s5 + $0x460] sm:$0xff]
          %v5890 = vld [vmem:[%s5 + $0x468] sm:$0xff]
          %v5891 = vld [vmem:[%s5 + $0x470] sm:$0xff]
          %v5892 = vld [vmem:[%s5 + $0x478] sm:$0xff]
          %v5893 = vld [vmem:[%s5 + $0x480] sm:$0xff]
          %v5894 = vld [vmem:[%s5 + $0x488] sm:$0xff]
          %v5895 = vld [vmem:[%s5 + $0x490] sm:$0xff]
          %v5896 = vld [vmem:[%s5 + $0x498] sm:$0xff]
          %v5897 = vld [vmem:[%s5 + $0x4a0] sm:$0xff]
          %v5898 = vld [vmem:[%s5 + $0x4a8] sm:$0xff]
          %v5899 = vld [vmem:[%s5 + $0x4b0] sm:$0xff]
          %v5900 = vld [vmem:[%s5 + $0x4b8] sm:$0xff]
          %v5901 = vld [vmem:[%s5 + $0x4c0] sm:$0xff]
          %v5902 = vld [vmem:[%s5 + $0x4c8] sm:$0xff]
          %v5903 = vld [vmem:[%s5 + $0x4d0] sm:$0xff]
          %v5904 = vld [vmem:[%s5 + $0x4d8] sm:$0xff]
          %v5905 = vld [vmem:[%s5 + $0x4e0] sm:$0xff]
          %v5906 = vld [vmem:[%s5 + $0x4e8] sm:$0xff]
          %v5907 = vld [vmem:[%s5 + $0x4f0] sm:$0xff]
          %v5908 = vld [vmem:[%s5 + $0x4f8] sm:$0xff]
          %v5909 = vld [vmem:[%s5 + $0x500] sm:$0xff]
          %v5910 = vld [vmem:[%s5 + $0x508] sm:$0xff]
          %v5911 = vld [vmem:[%s5 + $0x510] sm:$0xff]
          %v5912 = vld [vmem:[%s5 + $0x518] sm:$0xff]
          %v5913 = vld [vmem:[%s5 + $0x520] sm:$0xff]
          %v5914 = vld [vmem:[%s5 + $0x528] sm:$0xff]
          %v5915 = vld [vmem:[%s5 + $0x530] sm:$0xff]
          %v5916 = vld [vmem:[%s5 + $0x538] sm:$0xff]
          %v5917 = vld [vmem:[%s5 + $0x540] sm:$0xff]
          %v5918 = vld [vmem:[%s5 + $0x548] sm:$0xff]
          %v5919 = vld [vmem:[%s5 + $0x550] sm:$0xff]
          %v5920 = vld [vmem:[%s5 + $0x558] sm:$0xff]
          %v5921 = vld [vmem:[%s5 + $0x560] sm:$0xff]
          %v5922 = vld [vmem:[%s5 + $0x568] sm:$0xff]
          %v5923 = vld [vmem:[%s5 + $0x570] sm:$0xff]
          %v5924 = vld [vmem:[%s5 + $0x578] sm:$0xff]
          %v5925 = vld [vmem:[%s5 + $0x580] sm:$0xff]
          %v5926 = vld [vmem:[%s5 + $0x588] sm:$0xff]
          %v5927 = vld [vmem:[%s5 + $0x590] sm:$0xff]
          %v5928 = vld [vmem:[%s5 + $0x598] sm:$0xff]
          %v5929 = vld [vmem:[%s5 + $0x5a0] sm:$0xff]
          %v5930 = vld [vmem:[%s5 + $0x5a8] sm:$0xff]
          %v5931 = vld [vmem:[%s5 + $0x5b0] sm:$0xff]
          %v5932 = vld [vmem:[%s5 + $0x5b8] sm:$0xff]
          %v5933 = vld [vmem:[%s5 + $0x5c0] sm:$0xff]
          %v5934 = vld [vmem:[%s5 + $0x5c8] sm:$0xff]
          %v5935 = vld [vmem:[%s5 + $0x5d0] sm:$0xff]
          %v5936 = vld [vmem:[%s5 + $0x5d8] sm:$0xff]
          %v5937 = vld [vmem:[%s5 + $0x5e0] sm:$0xff]
          %v5938 = vld [vmem:[%s5 + $0x5e8] sm:$0xff]
          %v5939 = vld [vmem:[%s5 + $0x5f0] sm:$0xff]
          %v5940 = vld [vmem:[%s5 + $0x5f8] sm:$0xff]
          %v5941 = vld [vmem:[%s5 + $0x600] sm:$0xff]
          %v5942 = vld [vmem:[%s5 + $0x608] sm:$0xff]
          %v5943 = vld [vmem:[%s5 + $0x610] sm:$0xff]
          %v5944 = vld [vmem:[%s5 + $0x618] sm:$0xff]
          %v5945 = vld [vmem:[%s5 + $0x620] sm:$0xff]
          %v5946 = vld [vmem:[%s5 + $0x628] sm:$0xff]
          %v5947 = vld [vmem:[%s5 + $0x630] sm:$0xff]
          %v5948 = vld [vmem:[%s5 + $0x638] sm:$0xff]
          %v5949 = vld [vmem:[%s5 + $0x640] sm:$0xff]
          %v5950 = vld [vmem:[%s5 + $0x648] sm:$0xff]
          %v5951 = vld [vmem:[%s5 + $0x650] sm:$0xff]
          %v5952 = vld [vmem:[%s5 + $0x658] sm:$0xff]
          %v5953 = vld [vmem:[%s5 + $0x660] sm:$0xff]
          %v5954 = vld [vmem:[%s5 + $0x668] sm:$0xff]
          %v5955 = vld [vmem:[%s5 + $0x670] sm:$0xff]
          %v5956 = vld [vmem:[%s5 + $0x678] sm:$0xff]
          %v5957 = vld [vmem:[%s5 + $0x680] sm:$0xff]
          %v5958 = vld [vmem:[%s5 + $0x688] sm:$0xff]
          %v5959 = vld [vmem:[%s5 + $0x690] sm:$0xff]
          %v5960 = vld [vmem:[%s5 + $0x698] sm:$0xff]
          %v5961 = vld [vmem:[%s5 + $0x6a0] sm:$0xff]
          %v5962 = vld [vmem:[%s5 + $0x6a8] sm:$0xff]
          %v5963 = vld [vmem:[%s5 + $0x6b0] sm:$0xff]
          %v5964 = vld [vmem:[%s5 + $0x6b8] sm:$0xff]
          %v5965 = vld [vmem:[%s5 + $0x6c0] sm:$0xff]
          %v5966 = vld [vmem:[%s5 + $0x6c8] sm:$0xff]
          %v5967 = vld [vmem:[%s5 + $0x6d0] sm:$0xff]
          %v5968 = vld [vmem:[%s5 + $0x6d8] sm:$0xff]
          %v5969 = vld [vmem:[%s5 + $0x6e0] sm:$0xff]
          %v5970 = vld [vmem:[%s5 + $0x6e8] sm:$0xff]
          %v5971 = vld [vmem:[%s5 + $0x6f0] sm:$0xff]
          %v5972 = vld [vmem:[%s5 + $0x6f8] sm:$0xff]
          %v5973 = vld [vmem:[%s5 + $0x700] sm:$0xff]
          %v5974 = vld [vmem:[%s5 + $0x708] sm:$0xff]
          %v5975 = vld [vmem:[%s5 + $0x710] sm:$0xff]
          %v5976 = vld [vmem:[%s5 + $0x718] sm:$0xff]
          %v5977 = vld [vmem:[%s5 + $0x720] sm:$0xff]
          %v5978 = vld [vmem:[%s5 + $0x728] sm:$0xff]
          %v5979 = vld [vmem:[%s5 + $0x730] sm:$0xff]
          %v5980 = vld [vmem:[%s5 + $0x738] sm:$0xff]
          %v5981 = vld [vmem:[%s5 + $0x740] sm:$0xff]
          %v5982 = vld [vmem:[%s5 + $0x748] sm:$0xff]
          %v5983 = vld [vmem:[%s5 + $0x750] sm:$0xff]
          %v5984 = vld [vmem:[%s5 + $0x758] sm:$0xff]
          %v5985 = vld [vmem:[%s5 + $0x760] sm:$0xff]
          %v5986 = vld [vmem:[%s5 + $0x768] sm:$0xff]
          %v5987 = vld [vmem:[%s5 + $0x770] sm:$0xff]
          %v5988 = vld [vmem:[%s5 + $0x778] sm:$0xff]
          %v5989 = vld [vmem:[%s5 + $0x780] sm:$0xff]
          %v5990 = vld [vmem:[%s5 + $0x788] sm:$0xff]
          %v5991 = vld [vmem:[%s5 + $0x790] sm:$0xff]
          %v5992 = vld [vmem:[%s5 + $0x798] sm:$0xff]
          %v5993 = vld [vmem:[%s5 + $0x7a0] sm:$0xff]
          %v5994 = vld [vmem:[%s5 + $0x7a8] sm:$0xff]
          %v5995 = vld [vmem:[%s5 + $0x7b0] sm:$0xff]
          %v5996 = vld [vmem:[%s5 + $0x7b8] sm:$0xff]
          %v5997 = vld [vmem:[%s5 + $0x7c0] sm:$0xff]
          %v5998 = vld [vmem:[%s5 + $0x7c8] sm:$0xff]
          %v5999 = vld [vmem:[%s5 + $0x7d0] sm:$0xff]
          %v6000 = vld [vmem:[%s5 + $0x7d8] sm:$0xff]
          %v6001 = vld [vmem:[%s5 + $0x7e0] sm:$0xff]
          %v6002 = vld [vmem:[%s5 + $0x7e8] sm:$0xff]
          %v6003 = vld [vmem:[%s5 + $0x7f0] sm:$0xff]
          %v6004 = vld [vmem:[%s5 + $0x7f8] sm:$0xff]
          %v6005 = vld [vmem:[%s5 + $0x800] sm:$0xff]
          %v6006 = vld [vmem:[%s5 + $0x808] sm:$0xff]
          %v6007 = vld [vmem:[%s5 + $0x810] sm:$0xff]
          %v6008 = vld [vmem:[%s5 + $0x818] sm:$0xff]
          %v6009 = vld [vmem:[%s5 + $0x820] sm:$0xff]
          %v6010 = vld [vmem:[%s5 + $0x828] sm:$0xff]
          %v6011 = vld [vmem:[%s5 + $0x830] sm:$0xff]
          %v6012 = vld [vmem:[%s5 + $0x838] sm:$0xff]
          %v6013 = vld [vmem:[%s5 + $0x840] sm:$0xff]
          %v6014 = vld [vmem:[%s5 + $0x848] sm:$0xff]
          %v6015 = vld [vmem:[%s5 + $0x850] sm:$0xff]
          %v6016 = vld [vmem:[%s5 + $0x858] sm:$0xff]
          %v6017 = vld [vmem:[%s5 + $0x860] sm:$0xff]
          %v6018 = vld [vmem:[%s5 + $0x868] sm:$0xff]
          %v6019 = vld [vmem:[%s5 + $0x870] sm:$0xff]
          %v6020 = vld [vmem:[%s5 + $0x878] sm:$0xff]
          %v6021 = vld [vmem:[%s5 + $0x880] sm:$0xff]
          %v6022 = vld [vmem:[%s5 + $0x888] sm:$0xff]
          %v6023 = vld [vmem:[%s5 + $0x890] sm:$0xff]
          %v6024 = vld [vmem:[%s5 + $0x898] sm:$0xff]
          %v6025 = vld [vmem:[%s5 + $0x8a0] sm:$0xff]
          %v6026 = vld [vmem:[%s5 + $0x8a8] sm:$0xff]
          %v6027 = vld [vmem:[%s5 + $0x8b0] sm:$0xff]
          %v6028 = vld [vmem:[%s5 + $0x8b8] sm:$0xff]
          %v6029 = vld [vmem:[%s5 + $0x8c0] sm:$0xff]
          %v6030 = vld [vmem:[%s5 + $0x8c8] sm:$0xff]
          %v6031 = vld [vmem:[%s5 + $0x8d0] sm:$0xff]
          %v6032 = vld [vmem:[%s5 + $0x8d8] sm:$0xff]
          %v6033 = vld [vmem:[%s5 + $0x8e0] sm:$0xff]
          %v6034 = vld [vmem:[%s5 + $0x8e8] sm:$0xff]
          %v6035 = vld [vmem:[%s5 + $0x8f0] sm:$0xff]
          %v6036 = vld [vmem:[%s5 + $0x8f8] sm:$0xff]
          %v6037 = vld [vmem:[%s5 + $0x900] sm:$0xff]
          %v6038 = vld [vmem:[%s5 + $0x908] sm:$0xff]
          %v6039 = vld [vmem:[%s5 + $0x910] sm:$0xff]
          %v6040 = vld [vmem:[%s5 + $0x918] sm:$0xff]
          %v6041 = vld [vmem:[%s5 + $0x920] sm:$0xff]
          %v6042 = vld [vmem:[%s5 + $0x928] sm:$0xff]
          %v6043 = vld [vmem:[%s5 + $0x930] sm:$0xff]
          %v6044 = vld [vmem:[%s5 + $0x938] sm:$0xff]
          %v6045 = vld [vmem:[%s5 + $0x940] sm:$0xff]
          %v6046 = vld [vmem:[%s5 + $0x948] sm:$0xff]
          %v6047 = vld [vmem:[%s5 + $0x950] sm:$0xff]
          %v6048 = vld [vmem:[%s5 + $0x958] sm:$0xff]
          %v6049 = vld [vmem:[%s5 + $0x960] sm:$0xff]
          %v6050 = vld [vmem:[%s5 + $0x968] sm:$0xff]
          %v6051 = vld [vmem:[%s5 + $0x970] sm:$0xff]
          %v6052 = vld [vmem:[%s5 + $0x978] sm:$0xff]
          %v6053 = vld [vmem:[%s5 + $0x980] sm:$0xff]
          %v6054 = vld [vmem:[%s5 + $0x988] sm:$0xff]
          %v6055 = vld [vmem:[%s5 + $0x990] sm:$0xff]
          %v6056 = vld [vmem:[%s5 + $0x998] sm:$0xff]
          %v6057 = vld [vmem:[%s5 + $0x9a0] sm:$0xff]
          %v6058 = vld [vmem:[%s5 + $0x9a8] sm:$0xff]
          %v6059 = vld [vmem:[%s5 + $0x9b0] sm:$0xff]
          %v6060 = vld [vmem:[%s5 + $0x9b8] sm:$0xff]
          %v6061 = vld [vmem:[%s5 + $0x9c0] sm:$0xff]
          %v6062 = vld [vmem:[%s5 + $0x9c8] sm:$0xff]
          %v6063 = vld [vmem:[%s5 + $0x9d0] sm:$0xff]
          %v6064 = vld [vmem:[%s5 + $0x9d8] sm:$0xff]
          %v6065 = vld [vmem:[%s5 + $0x9e0] sm:$0xff]
          %v6066 = vld [vmem:[%s5 + $0x9e8] sm:$0xff]
          %v6067 = vld [vmem:[%s5 + $0x9f0] sm:$0xff]
          %v6068 = vld [vmem:[%s5 + $0x9f8] sm:$0xff]
          %v6069 = vld [vmem:[%s5 + $0xa00] sm:$0xff]
          %v6070 = vld [vmem:[%s5 + $0xa08] sm:$0xff]
          %v6071 = vld [vmem:[%s5 + $0xa10] sm:$0xff]
          %v6072 = vld [vmem:[%s5 + $0xa18] sm:$0xff]
          %v6073 = vld [vmem:[%s5 + $0xa20] sm:$0xff]
          %v6074 = vld [vmem:[%s5 + $0xa28] sm:$0xff]
          %v6075 = vld [vmem:[%s5 + $0xa30] sm:$0xff]
          %v6076 = vld [vmem:[%s5 + $0xa38] sm:$0xff]
          %v6077 = vld [vmem:[%s5 + $0xa40] sm:$0xff]
          %v6078 = vld [vmem:[%s5 + $0xa48] sm:$0xff]
          %v6079 = vld [vmem:[%s5 + $0xa50] sm:$0xff]
          %v6080 = vld [vmem:[%s5 + $0xa58] sm:$0xff]
          %v6081 = vld [vmem:[%s5 + $0xa60] sm:$0xff]
          %v6082 = vld [vmem:[%s5 + $0xa68] sm:$0xff]
          %v6083 = vld [vmem:[%s5 + $0xa70] sm:$0xff]
          %v6084 = vld [vmem:[%s5 + $0xa78] sm:$0xff]
          %v6085 = vld [vmem:[%s5 + $0xa80] sm:$0xff]
          %v6086 = vld [vmem:[%s5 + $0xa88] sm:$0xff]
          %v6087 = vld [vmem:[%s5 + $0xa90] sm:$0xff]
          %v6088 = vld [vmem:[%s5 + $0xa98] sm:$0xff]
          %v6089 = vld [vmem:[%s5 + $0xaa0] sm:$0xff]
          %v6090 = vld [vmem:[%s5 + $0xaa8] sm:$0xff]
          %v6091 = vld [vmem:[%s5 + $0xab0] sm:$0xff]
          %v6092 = vld [vmem:[%s5 + $0xab8] sm:$0xff]
          %v6093 = vld [vmem:[%s5 + $0xac0] sm:$0xff]
          %v6094 = vld [vmem:[%s5 + $0xac8] sm:$0xff]
          %v6095 = vld [vmem:[%s5 + $0xad0] sm:$0xff]
          %v6096 = vld [vmem:[%s5 + $0xad8] sm:$0xff]
          %v6097 = vld [vmem:[%s5 + $0xae0] sm:$0xff]
          %v6098 = vld [vmem:[%s5 + $0xae8] sm:$0xff]
          %v6099 = vld [vmem:[%s5 + $0xaf0] sm:$0xff]
          %v6100 = vld [vmem:[%s5 + $0xaf8] sm:$0xff]
          %v6101 = vld [vmem:[%s5 + $0xb00] sm:$0xff]
          %v6102 = vld [vmem:[%s5 + $0xb08] sm:$0xff]
          %v6103 = vld [vmem:[%s5 + $0xb10] sm:$0xff]
          %v6104 = vld [vmem:[%s5 + $0xb18] sm:$0xff]
          %v6105 = vld [vmem:[%s5 + $0xb20] sm:$0xff]
          %v6106 = vld [vmem:[%s5 + $0xb28] sm:$0xff]
          %v6107 = vld [vmem:[%s5 + $0xb30] sm:$0xff]
          %v6108 = vld [vmem:[%s5 + $0xb38] sm:$0xff]
          %v6109 = vld [vmem:[%s5 + $0xb40] sm:$0xff]
          %v6110 = vld [vmem:[%s5 + $0xb48] sm:$0xff]
          %v6111 = vld [vmem:[%s5 + $0xb50] sm:$0xff]
          %v6112 = vld [vmem:[%s5 + $0xb58] sm:$0xff]
          %v6113 = vld [vmem:[%s5 + $0xb60] sm:$0xff]
          %v6114 = vld [vmem:[%s5 + $0xb68] sm:$0xff]
          %v6115 = vld [vmem:[%s5 + $0xb70] sm:$0xff]
          %v6116 = vld [vmem:[%s5 + $0xb78] sm:$0xff]
          %v6117 = vld [vmem:[%s5 + $0xb80] sm:$0xff]
          %v6118 = vld [vmem:[%s5 + $0xb88] sm:$0xff]
          %v6119 = vld [vmem:[%s5 + $0xb90] sm:$0xff]
          %v6120 = vld [vmem:[%s5 + $0xb98] sm:$0xff]
          %v6121 = vld [vmem:[%s5 + $0xba0] sm:$0xff]
          %v6122 = vld [vmem:[%s5 + $0xba8] sm:$0xff]
          %v6123 = vld [vmem:[%s5 + $0xbb0] sm:$0xff]
          %v6124 = vld [vmem:[%s5 + $0xbb8] sm:$0xff]
          %v6125 = vld [vmem:[%s5 + $0xbc0] sm:$0xff]
          %v6126 = vld [vmem:[%s5 + $0xbc8] sm:$0xff]
          %v6127 = vld [vmem:[%s5 + $0xbd0] sm:$0xff]
          %v6128 = vld [vmem:[%s5 + $0xbd8] sm:$0xff]
          %v6129 = vld [vmem:[%s5 + $0xbe0] sm:$0xff]
          %v6130 = vld [vmem:[%s5 + $0xbe8] sm:$0xff]
          %v6131 = vld [vmem:[%s5 + $0xbf0] sm:$0xff]
          %v6132 = vld [vmem:[%s5 + $0xbf8] sm:$0xff]
          %v6133 = vld [vmem:[%s6] sm:$0x3]
          %v6136 = vlaneseq
          %v6137 = vshrl.u32 %v6136, 7
          %v6138 = vsub.s32 0, %v6137
          %v6139 = vrot.slane %v5747, %v6138
          %v6140 = vlaneseq
          %v6141 = vshrl.u32 %v6140, 7
          %v6142 = vsub.s32 1, %v6141
          %v6143 = vrot.slane %v5747, %v6142
          %v6144 = vlaneseq
          %v6145 = vshrl.u32 %v6144, 7
          %v6146 = vsub.s32 2, %v6145
          %v6147 = vrot.slane %v5747, %v6146
          %v6148 = vlaneseq
          %v6149 = vshrl.u32 %v6148, 7
          %v6150 = vsub.s32 3, %v6149
          %v6151 = vrot.slane %v5747, %v6150
          %v6152 = vlaneseq
          %v6153 = vshrl.u32 %v6152, 7
          %v6154 = vsub.s32 4, %v6153
          %v6155 = vrot.slane %v5747, %v6154
          %v6156 = vlaneseq
          %v6157 = vshrl.u32 %v6156, 7
          %v6158 = vsub.s32 5, %v6157
          %v6159 = vrot.slane %v5747, %v6158
          %v6160 = vlaneseq
          %v6161 = vshrl.u32 %v6160, 7
          %v6162 = vsub.s32 6, %v6161
          %v6163 = vrot.slane %v5747, %v6162
          %v6164 = vlaneseq
          %v6165 = vshrl.u32 %v6164, 7
          %v6166 = vsub.s32 7, %v6165
          %v6167 = vrot.slane %v5747, %v6166
          %v6168 = vlaneseq
          %v6169 = vshrl.u32 %v6168, 7
          %v6170 = vsub.s32 0, %v6169
          %v6171 = vrot.slane %v5748, %v6170
          %v6172 = vlaneseq
          %v6173 = vshrl.u32 %v6172, 7
          %v6174 = vsub.s32 1, %v6173
          %v6175 = vrot.slane %v5748, %v6174
          %v6176 = vlaneseq
          %v6177 = vshrl.u32 %v6176, 7
          %v6178 = vsub.s32 2, %v6177
          %v6179 = vrot.slane %v5748, %v6178
          %v6180 = vlaneseq
          %v6181 = vshrl.u32 %v6180, 7
          %v6182 = vsub.s32 3, %v6181
          %v6183 = vrot.slane %v5748, %v6182
          %v6197 = vlaneseq
          %v6198 = vshrl.u32 %v6197, 7
          %v6199 = vsub.s32 0, %v6198
          %v6200 = vrot.slane %v6133, %v6199
          %v6201 = vlaneseq
          %v6202 = vshrl.u32 %v6201, 7
          %v6203 = vsub.s32 1, %v6202
          %v6204 = vrot.slane %v6133, %v6203
          %6207 = vmatprep.subr.mxu0 %v5780
          %6208 = vmatpush1.msra.mxu0 %v5779
          %6209 = vmatprep.subr.mxu0 %v5778
          %6210 = vmatpush1.msra.mxu0 %v5777
          %6211 = vmatprep.subr.mxu0 %v5776
          %6212 = vmatpush1.msra.mxu0 %v5775
          %6213 = vmatprep.subr.mxu0 %v5774
          %6214 = vmatpush1.msra.mxu0 %v5773
          %6215 = vmatprep.subr.mxu0 %v5772
          %6216 = vmatpush1.msra.mxu0 %v5771
          %6217 = vmatprep.subr.mxu0 %v5770
          %6218 = vmatpush1.msra.mxu0 %v5769
          %6219 = vmatprep.subr.mxu0 %v5768
          %6220 = vmatpush1.msra.mxu0 %v5767
          %6221 = vmatprep.subr.mxu0 %v5766
          %6222 = vmatpush1.msra.mxu0 %v5765
          %6223 = vmatprep.subr.mxu0 %v5764
          %6224 = vmatpush1.msra.mxu0 %v5763
          %6225 = vmatprep.subr.mxu0 %v5762
          %6226 = vmatpush1.msra.mxu0 %v5761
          %6227 = vmatprep.subr.mxu0 %v5760
          %6228 = vmatpush1.msra.mxu0 %v5759
          %6229 = vmatprep.subr.mxu0 %v5758
          %6230 = vmatpush1.msra.mxu0 %v5757
          %6231 = vmatprep.subr.mxu0 %v5756
          %6232 = vmatpush1.msra.mxu0 %v5755
          %6233 = vmatprep.subr.mxu0 %v5754
          %6234 = vmatpush1.msra.mxu0 %v5753
          %6235 = vmatprep.subr.mxu0 %v5752
          %6236 = vmatpush1.msra.mxu0 %v5751
          %6237 = vmatprep.subr.mxu0 %v5750
          %6238 = vmatpush1.msra.mxu0 %v5749
          %6239 = vmatprep.subr.mxu0 %v5812
          %6240 = vmatpush2.msra.mxu0 %v5811
          %6241 = vmatprep.subr.mxu0 %v5810
          %6242 = vmatpush2.msra.mxu0 %v5809
          %6243 = vmatprep.subr.mxu0 %v5808
          %6244 = vmatpush2.msra.mxu0 %v5807
          %6245 = vmatprep.subr.mxu0 %v5806
          %6246 = vmatpush2.msra.mxu0 %v5805
          %6247 = vmatprep.subr.mxu0 %v5804
          %6248 = vmatpush2.msra.mxu0 %v5803
          %6249 = vmatprep.subr.mxu0 %v5802
          %6250 = vmatpush2.msra.mxu0 %v5801
          %6251 = vmatprep.subr.mxu0 %v5800
          %6252 = vmatpush2.msra.mxu0 %v5799
          %6253 = vmatprep.subr.mxu0 %v5798
          %6254 = vmatpush2.msra.mxu0 %v5797
          %6255 = vmatprep.subr.mxu0 %v5796
          %6256 = vmatpush2.msra.mxu0 %v5795
          %6257 = vmatprep.subr.mxu0 %v5794
          %6258 = vmatpush2.msra.mxu0 %v5793
          %6259 = vmatprep.subr.mxu0 %v5792
          %6260 = vmatpush2.msra.mxu0 %v5791
          %6261 = vmatprep.subr.mxu0 %v5790
          %6262 = vmatpush2.msra.mxu0 %v5789
          %6263 = vmatprep.subr.mxu0 %v5788
          %6264 = vmatpush2.msra.mxu0 %v5787
          %6265 = vmatprep.subr.mxu0 %v5786
          %6266 = vmatpush2.msra.mxu0 %v5785
          %6267 = vmatprep.subr.mxu0 %v5784
          %6268 = vmatpush2.msra.mxu0 %v5783
          %6269 = vmatprep.subr.mxu0 %v5782
          %6270 = vmatpush2.msra.mxu0 %v5781
          %6271 = vmatprep.mubr.f32.mxu0 %v6143
          %6272 = vmatmul.mubr.f32.gmra.mxu0 %v6139
          %v6273 = vpop.f32.mrf.mxu0
          %v6274 = vadd.f32 %v6200, %v6273
          %v6275 = vpop.f32.mrf.mxu0
          %v6276 = vadd.f32 %v6204, %v6275
          %6277 = vdwg.mxu0
          %6278 = vmatprep.subr.mxu0 %v5844
          %6279 = vmatpush1.msra.mxu0 %v5843
          %6280 = vmatprep.subr.mxu0 %v5842
          %6281 = vmatpush1.msra.mxu0 %v5841
          %6282 = vmatprep.subr.mxu0 %v5840
          %6283 = vmatpush1.msra.mxu0 %v5839
          %6284 = vmatprep.subr.mxu0 %v5838
          %6285 = vmatpush1.msra.mxu0 %v5837
          %6286 = vmatprep.subr.mxu0 %v5836
          %6287 = vmatpush1.msra.mxu0 %v5835
          %6288 = vmatprep.subr.mxu0 %v5834
          %6289 = vmatpush1.msra.mxu0 %v5833
          %6290 = vmatprep.subr.mxu0 %v5832
          %6291 = vmatpush1.msra.mxu0 %v5831
          %6292 = vmatprep.subr.mxu0 %v5830
          %6293 = vmatpush1.msra.mxu0 %v5829
          %6294 = vmatprep.subr.mxu0 %v5828
          %6295 = vmatpush1.msra.mxu0 %v5827
          %6296 = vmatprep.subr.mxu0 %v5826
          %6297 = vmatpush1.msra.mxu0 %v5825
          %6298 = vmatprep.subr.mxu0 %v5824
          %6299 = vmatpush1.msra.mxu0 %v5823
          %6300 = vmatprep.subr.mxu0 %v5822
          %6301 = vmatpush1.msra.mxu0 %v5821
          %6302 = vmatprep.subr.mxu0 %v5820
          %6303 = vmatpush1.msra.mxu0 %v5819
          %6304 = vmatprep.subr.mxu0 %v5818
          %6305 = vmatpush1.msra.mxu0 %v5817
          %6306 = vmatprep.subr.mxu0 %v5816
          %6307 = vmatpush1.msra.mxu0 %v5815
          %6308 = vmatprep.subr.mxu0 %v5814
          %6309 = vmatpush1.msra.mxu0 %v5813
          %6310 = vmatprep.subr.mxu0 %v5876
          %6311 = vmatpush2.msra.mxu0 %v5875
          %6312 = vmatprep.subr.mxu0 %v5874
          %6313 = vmatpush2.msra.mxu0 %v5873
          %6314 = vmatprep.subr.mxu0 %v5872
          %6315 = vmatpush2.msra.mxu0 %v5871
          %6316 = vmatprep.subr.mxu0 %v5870
          %6317 = vmatpush2.msra.mxu0 %v5869
          %6318 = vmatprep.subr.mxu0 %v5868
          %6319 = vmatpush2.msra.mxu0 %v5867
          %6320 = vmatprep.subr.mxu0 %v5866
          %6321 = vmatpush2.msra.mxu0 %v5865
          %6322 = vmatprep.subr.mxu0 %v5864
          %6323 = vmatpush2.msra.mxu0 %v5863
          %6324 = vmatprep.subr.mxu0 %v5862
          %6325 = vmatpush2.msra.mxu0 %v5861
          %6326 = vmatprep.subr.mxu0 %v5860
          %6327 = vmatpush2.msra.mxu0 %v5859
          %6328 = vmatprep.subr.mxu0 %v5858
          %6329 = vmatpush2.msra.mxu0 %v5857
          %6330 = vmatprep.subr.mxu0 %v5856
          %6331 = vmatpush2.msra.mxu0 %v5855
          %6332 = vmatprep.subr.mxu0 %v5854
          %6333 = vmatpush2.msra.mxu0 %v5853
          %6334 = vmatprep.subr.mxu0 %v5852
          %6335 = vmatpush2.msra.mxu0 %v5851
          %6336 = vmatprep.subr.mxu0 %v5850
          %6337 = vmatpush2.msra.mxu0 %v5849
          %6338 = vmatprep.subr.mxu0 %v5848
          %6339 = vmatpush2.msra.mxu0 %v5847
          %6340 = vmatprep.subr.mxu0 %v5846
          %6341 = vmatpush2.msra.mxu0 %v5845
          %6342 = vmatprep.mubr.f32.mxu0 %v6151
          %6343 = vmatmul.mubr.f32.gmra.mxu0 %v6147
          %v6344 = vpop.f32.mrf.mxu0
          %v6345 = vadd.f32 %v6274, %v6344
          %v6346 = vpop.f32.mrf.mxu0
          %v6347 = vadd.f32 %v6276, %v6346
          %6348 = vdwg.mxu0
          %6349 = vmatprep.subr.mxu0 %v5908
          %6350 = vmatpush1.msra.mxu0 %v5907
          %6351 = vmatprep.subr.mxu0 %v5906
          %6352 = vmatpush1.msra.mxu0 %v5905
          %6353 = vmatprep.subr.mxu0 %v5904
          %6354 = vmatpush1.msra.mxu0 %v5903
          %6355 = vmatprep.subr.mxu0 %v5902
          %6356 = vmatpush1.msra.mxu0 %v5901
          %6357 = vmatprep.subr.mxu0 %v5900
          %6358 = vmatpush1.msra.mxu0 %v5899
          %6359 = vmatprep.subr.mxu0 %v5898
          %6360 = vmatpush1.msra.mxu0 %v5897
          %6361 = vmatprep.subr.mxu0 %v5896
          %6362 = vmatpush1.msra.mxu0 %v5895
          %6363 = vmatprep.subr.mxu0 %v5894
          %6364 = vmatpush1.msra.mxu0 %v5893
          %6365 = vmatprep.subr.mxu0 %v5892
          %6366 = vmatpush1.msra.mxu0 %v5891
          %6367 = vmatprep.subr.mxu0 %v5890
          %6368 = vmatpush1.msra.mxu0 %v5889
          %6369 = vmatprep.subr.mxu0 %v5888
          %6370 = vmatpush1.msra.mxu0 %v5887
          %6371 = vmatprep.subr.mxu0 %v5886
          %6372 = vmatpush1.msra.mxu0 %v5885
          %6373 = vmatprep.subr.mxu0 %v5884
          %6374 = vmatpush1.msra.mxu0 %v5883
          %6375 = vmatprep.subr.mxu0 %v5882
          %6376 = vmatpush1.msra.mxu0 %v5881
          %6377 = vmatprep.subr.mxu0 %v5880
          %6378 = vmatpush1.msra.mxu0 %v5879
          %6379 = vmatprep.subr.mxu0 %v5878
          %6380 = vmatpush1.msra.mxu0 %v5877
          %6381 = vmatprep.subr.mxu0 %v5940
          %6382 = vmatpush2.msra.mxu0 %v5939
          %6383 = vmatprep.subr.mxu0 %v5938
          %6384 = vmatpush2.msra.mxu0 %v5937
          %6385 = vmatprep.subr.mxu0 %v5936
          %6386 = vmatpush2.msra.mxu0 %v5935
          %6387 = vmatprep.subr.mxu0 %v5934
          %6388 = vmatpush2.msra.mxu0 %v5933
          %6389 = vmatprep.subr.mxu0 %v5932
          %6390 = vmatpush2.msra.mxu0 %v5931
          %6391 = vmatprep.subr.mxu0 %v5930
          %6392 = vmatpush2.msra.mxu0 %v5929
          %6393 = vmatprep.subr.mxu0 %v5928
          %6394 = vmatpush2.msra.mxu0 %v5927
          %6395 = vmatprep.subr.mxu0 %v5926
          %6396 = vmatpush2.msra.mxu0 %v5925
          %6397 = vmatprep.subr.mxu0 %v5924
          %6398 = vmatpush2.msra.mxu0 %v5923
          %6399 = vmatprep.subr.mxu0 %v5922
          %6400 = vmatpush2.msra.mxu0 %v5921
          %6401 = vmatprep.subr.mxu0 %v5920
          %6402 = vmatpush2.msra.mxu0 %v5919
          %6403 = vmatprep.subr.mxu0 %v5918
          %6404 = vmatpush2.msra.mxu0 %v5917
          %6405 = vmatprep.subr.mxu0 %v5916
          %6406 = vmatpush2.msra.mxu0 %v5915
          %6407 = vmatprep.subr.mxu0 %v5914
          %6408 = vmatpush2.msra.mxu0 %v5913
          %6409 = vmatprep.subr.mxu0 %v5912
          %6410 = vmatpush2.msra.mxu0 %v5911
          %6411 = vmatprep.subr.mxu0 %v5910
          %6412 = vmatpush2.msra.mxu0 %v5909
          %6413 = vmatprep.mubr.f32.mxu0 %v6159
          %6414 = vmatmul.mubr.f32.gmra.mxu0 %v6155
          %v6415 = vpop.f32.mrf.mxu0
          %v6416 = vadd.f32 %v6345, %v6415
          %v6417 = vpop.f32.mrf.mxu0
          %v6418 = vadd.f32 %v6347, %v6417
          %6419 = vdwg.mxu0
          %6420 = vmatprep.subr.mxu0 %v5972
          %6421 = vmatpush1.msra.mxu0 %v5971
          %6422 = vmatprep.subr.mxu0 %v5970
          %6423 = vmatpush1.msra.mxu0 %v5969
          %6424 = vmatprep.subr.mxu0 %v5968
          %6425 = vmatpush1.msra.mxu0 %v5967
          %6426 = vmatprep.subr.mxu0 %v5966
          %6427 = vmatpush1.msra.mxu0 %v5965
          %6428 = vmatprep.subr.mxu0 %v5964
          %6429 = vmatpush1.msra.mxu0 %v5963
          %6430 = vmatprep.subr.mxu0 %v5962
          %6431 = vmatpush1.msra.mxu0 %v5961
          %6432 = vmatprep.subr.mxu0 %v5960
          %6433 = vmatpush1.msra.mxu0 %v5959
          %6434 = vmatprep.subr.mxu0 %v5958
          %6435 = vmatpush1.msra.mxu0 %v5957
          %6436 = vmatprep.subr.mxu0 %v5956
          %6437 = vmatpush1.msra.mxu0 %v5955
          %6438 = vmatprep.subr.mxu0 %v5954
          %6439 = vmatpush1.msra.mxu0 %v5953
          %6440 = vmatprep.subr.mxu0 %v5952
          %6441 = vmatpush1.msra.mxu0 %v5951
          %6442 = vmatprep.subr.mxu0 %v5950
          %6443 = vmatpush1.msra.mxu0 %v5949
          %6444 = vmatprep.subr.mxu0 %v5948
          %6445 = vmatpush1.msra.mxu0 %v5947
          %6446 = vmatprep.subr.mxu0 %v5946
          %6447 = vmatpush1.msra.mxu0 %v5945
          %6448 = vmatprep.subr.mxu0 %v5944
          %6449 = vmatpush1.msra.mxu0 %v5943
          %6450 = vmatprep.subr.mxu0 %v5942
          %6451 = vmatpush1.msra.mxu0 %v5941
          %6452 = vmatprep.subr.mxu0 %v6004
          %6453 = vmatpush2.msra.mxu0 %v6003
          %6454 = vmatprep.subr.mxu0 %v6002
          %6455 = vmatpush2.msra.mxu0 %v6001
          %6456 = vmatprep.subr.mxu0 %v6000
          %6457 = vmatpush2.msra.mxu0 %v5999
          %6458 = vmatprep.subr.mxu0 %v5998
          %6459 = vmatpush2.msra.mxu0 %v5997
          %6460 = vmatprep.subr.mxu0 %v5996
          %6461 = vmatpush2.msra.mxu0 %v5995
          %6462 = vmatprep.subr.mxu0 %v5994
          %6463 = vmatpush2.msra.mxu0 %v5993
          %6464 = vmatprep.subr.mxu0 %v5992
          %6465 = vmatpush2.msra.mxu0 %v5991
          %6466 = vmatprep.subr.mxu0 %v5990
          %6467 = vmatpush2.msra.mxu0 %v5989
          %6468 = vmatprep.subr.mxu0 %v5988
          %6469 = vmatpush2.msra.mxu0 %v5987
          %6470 = vmatprep.subr.mxu0 %v5986
          %6471 = vmatpush2.msra.mxu0 %v5985
          %6472 = vmatprep.subr.mxu0 %v5984
          %6473 = vmatpush2.msra.mxu0 %v5983
          %6474 = vmatprep.subr.mxu0 %v5982
          %6475 = vmatpush2.msra.mxu0 %v5981
          %6476 = vmatprep.subr.mxu0 %v5980
          %6477 = vmatpush2.msra.mxu0 %v5979
          %6478 = vmatprep.subr.mxu0 %v5978
          %6479 = vmatpush2.msra.mxu0 %v5977
          %6480 = vmatprep.subr.mxu0 %v5976
          %6481 = vmatpush2.msra.mxu0 %v5975
          %6482 = vmatprep.subr.mxu0 %v5974
          %6483 = vmatpush2.msra.mxu0 %v5973
          %6484 = vmatprep.mubr.f32.mxu0 %v6167
          %6485 = vmatmul.mubr.f32.gmra.mxu0 %v6163
          %v6486 = vpop.f32.mrf.mxu0
          %v6487 = vadd.f32 %v6416, %v6486
          %v6488 = vpop.f32.mrf.mxu0
          %v6489 = vadd.f32 %v6418, %v6488
          %6490 = vdwg.mxu0
          %6491 = vmatprep.subr.mxu0 %v6036
          %6492 = vmatpush1.msra.mxu0 %v6035
          %6493 = vmatprep.subr.mxu0 %v6034
          %6494 = vmatpush1.msra.mxu0 %v6033
          %6495 = vmatprep.subr.mxu0 %v6032
          %6496 = vmatpush1.msra.mxu0 %v6031
          %6497 = vmatprep.subr.mxu0 %v6030
          %6498 = vmatpush1.msra.mxu0 %v6029
          %6499 = vmatprep.subr.mxu0 %v6028
          %6500 = vmatpush1.msra.mxu0 %v6027
          %6501 = vmatprep.subr.mxu0 %v6026
          %6502 = vmatpush1.msra.mxu0 %v6025
          %6503 = vmatprep.subr.mxu0 %v6024
          %6504 = vmatpush1.msra.mxu0 %v6023
          %6505 = vmatprep.subr.mxu0 %v6022
          %6506 = vmatpush1.msra.mxu0 %v6021
          %6507 = vmatprep.subr.mxu0 %v6020
          %6508 = vmatpush1.msra.mxu0 %v6019
          %6509 = vmatprep.subr.mxu0 %v6018
          %6510 = vmatpush1.msra.mxu0 %v6017
          %6511 = vmatprep.subr.mxu0 %v6016
          %6512 = vmatpush1.msra.mxu0 %v6015
          %6513 = vmatprep.subr.mxu0 %v6014
          %6514 = vmatpush1.msra.mxu0 %v6013
          %6515 = vmatprep.subr.mxu0 %v6012
          %6516 = vmatpush1.msra.mxu0 %v6011
          %6517 = vmatprep.subr.mxu0 %v6010
          %6518 = vmatpush1.msra.mxu0 %v6009
          %6519 = vmatprep.subr.mxu0 %v6008
          %6520 = vmatpush1.msra.mxu0 %v6007
          %6521 = vmatprep.subr.mxu0 %v6006
          %6522 = vmatpush1.msra.mxu0 %v6005
          %6523 = vmatprep.subr.mxu0 %v6068
          %6524 = vmatpush2.msra.mxu0 %v6067
          %6525 = vmatprep.subr.mxu0 %v6066
          %6526 = vmatpush2.msra.mxu0 %v6065
          %6527 = vmatprep.subr.mxu0 %v6064
          %6528 = vmatpush2.msra.mxu0 %v6063
          %6529 = vmatprep.subr.mxu0 %v6062
          %6530 = vmatpush2.msra.mxu0 %v6061
          %6531 = vmatprep.subr.mxu0 %v6060
          %6532 = vmatpush2.msra.mxu0 %v6059
          %6533 = vmatprep.subr.mxu0 %v6058
          %6534 = vmatpush2.msra.mxu0 %v6057
          %6535 = vmatprep.subr.mxu0 %v6056
          %6536 = vmatpush2.msra.mxu0 %v6055
          %6537 = vmatprep.subr.mxu0 %v6054
          %6538 = vmatpush2.msra.mxu0 %v6053
          %6539 = vmatprep.subr.mxu0 %v6052
          %6540 = vmatpush2.msra.mxu0 %v6051
          %6541 = vmatprep.subr.mxu0 %v6050
          %6542 = vmatpush2.msra.mxu0 %v6049
          %6543 = vmatprep.subr.mxu0 %v6048
          %6544 = vmatpush2.msra.mxu0 %v6047
          %6545 = vmatprep.subr.mxu0 %v6046
          %6546 = vmatpush2.msra.mxu0 %v6045
          %6547 = vmatprep.subr.mxu0 %v6044
          %6548 = vmatpush2.msra.mxu0 %v6043
          %6549 = vmatprep.subr.mxu0 %v6042
          %6550 = vmatpush2.msra.mxu0 %v6041
          %6551 = vmatprep.subr.mxu0 %v6040
          %6552 = vmatpush2.msra.mxu0 %v6039
          %6553 = vmatprep.subr.mxu0 %v6038
          %6554 = vmatpush2.msra.mxu0 %v6037
          %6555 = vmatprep.mubr.f32.mxu0 %v6175
          %6556 = vmatmul.mubr.f32.gmra.mxu0 %v6171
          %v6557 = vpop.f32.mrf.mxu0
          %v6558 = vadd.f32 %v6487, %v6557
          %v6559 = vpop.f32.mrf.mxu0
          %v6560 = vadd.f32 %v6489, %v6559
          %6561 = vdwg.mxu0
          %6562 = vmatprep.subr.mxu0 %v6100
          %6563 = vmatpush1.msra.mxu0 %v6099
          %6564 = vmatprep.subr.mxu0 %v6098
          %6565 = vmatpush1.msra.mxu0 %v6097
          %6566 = vmatprep.subr.mxu0 %v6096
          %6567 = vmatpush1.msra.mxu0 %v6095
          %6568 = vmatprep.subr.mxu0 %v6094
          %6569 = vmatpush1.msra.mxu0 %v6093
          %6570 = vmatprep.subr.mxu0 %v6092
          %6571 = vmatpush1.msra.mxu0 %v6091
          %6572 = vmatprep.subr.mxu0 %v6090
          %6573 = vmatpush1.msra.mxu0 %v6089
          %6574 = vmatprep.subr.mxu0 %v6088
          %6575 = vmatpush1.msra.mxu0 %v6087
          %6576 = vmatprep.subr.mxu0 %v6086
          %6577 = vmatpush1.msra.mxu0 %v6085
          %6578 = vmatprep.subr.mxu0 %v6084
          %6579 = vmatpush1.msra.mxu0 %v6083
          %6580 = vmatprep.subr.mxu0 %v6082
          %6581 = vmatpush1.msra.mxu0 %v6081
          %6582 = vmatprep.subr.mxu0 %v6080
          %6583 = vmatpush1.msra.mxu0 %v6079
          %6584 = vmatprep.subr.mxu0 %v6078
          %6585 = vmatpush1.msra.mxu0 %v6077
          %6586 = vmatprep.subr.mxu0 %v6076
          %6587 = vmatpush1.msra.mxu0 %v6075
          %6588 = vmatprep.subr.mxu0 %v6074
          %6589 = vmatpush1.msra.mxu0 %v6073
          %6590 = vmatprep.subr.mxu0 %v6072
          %6591 = vmatpush1.msra.mxu0 %v6071
          %6592 = vmatprep.subr.mxu0 %v6070
          %6593 = vmatpush1.msra.mxu0 %v6069
          %6594 = vmatprep.subr.mxu0 %v6132
          %6595 = vmatpush2.msra.mxu0 %v6131
          %6596 = vmatprep.subr.mxu0 %v6130
          %6597 = vmatpush2.msra.mxu0 %v6129
          %6598 = vmatprep.subr.mxu0 %v6128
          %6599 = vmatpush2.msra.mxu0 %v6127
          %6600 = vmatprep.subr.mxu0 %v6126
          %6601 = vmatpush2.msra.mxu0 %v6125
          %6602 = vmatprep.subr.mxu0 %v6124
          %6603 = vmatpush2.msra.mxu0 %v6123
          %6604 = vmatprep.subr.mxu0 %v6122
          %6605 = vmatpush2.msra.mxu0 %v6121
          %6606 = vmatprep.subr.mxu0 %v6120
          %6607 = vmatpush2.msra.mxu0 %v6119
          %6608 = vmatprep.subr.mxu0 %v6118
          %6609 = vmatpush2.msra.mxu0 %v6117
          %6610 = vmatprep.subr.mxu0 %v6116
          %6611 = vmatpush2.msra.mxu0 %v6115
          %6612 = vmatprep.subr.mxu0 %v6114
          %6613 = vmatpush2.msra.mxu0 %v6113
          %6614 = vmatprep.subr.mxu0 %v6112
          %6615 = vmatpush2.msra.mxu0 %v6111
          %6616 = vmatprep.subr.mxu0 %v6110
          %6617 = vmatpush2.msra.mxu0 %v6109
          %6618 = vmatprep.subr.mxu0 %v6108
          %6619 = vmatpush2.msra.mxu0 %v6107
          %6620 = vmatprep.subr.mxu0 %v6106
          %6621 = vmatpush2.msra.mxu0 %v6105
          %6622 = vmatprep.subr.mxu0 %v6104
          %6623 = vmatpush2.msra.mxu0 %v6103
          %6624 = vmatprep.subr.mxu0 %v6102
          %6625 = vmatpush2.msra.mxu0 %v6101
          %6626 = vmatprep.mubr.f32.mxu0 %v6183
          %6627 = vmatmul.mubr.f32.gmra.mxu0 %v6179
          %v6628 = vpop.f32.mrf.mxu0
          %v6629 = vadd.f32 %v6558, %v6628
          %v6630 = vpop.f32.mrf.mxu0
          %v6631 = vadd.f32 %v6560, %v6630
          %6632 = vdwg.mxu0
          %v6633 = vmax.f32 %v6629, 0.0
          %v6634 = vmax.f32 %v6631, 0.0
          %v6635 = vld [vmem:[%s7] sm:$0xff]
          %v6636 = vld [vmem:[%s7 + $0x8] sm:$0xff]
          %v6637 = vld [vmem:[%s7 + $0x10] sm:$0xff]
          %v6638 = vld [vmem:[%s7 + $0x18] sm:$0xff]
          %v6639 = vld [vmem:[%s7 + $0x20] sm:$0xff]
          %v6640 = vld [vmem:[%s7 + $0x28] sm:$0xff]
          %v6641 = vld [vmem:[%s7 + $0x30] sm:$0xff]
          %v6642 = vld [vmem:[%s7 + $0x38] sm:$0xff]
          %v6643 = vld [vmem:[%s7 + $0x40] sm:$0xff]
          %v6644 = vld [vmem:[%s7 + $0x48] sm:$0xff]
          %v6645 = vld [vmem:[%s7 + $0x50] sm:$0xff]
          %v6646 = vld [vmem:[%s7 + $0x58] sm:$0xff]
          %v6647 = vld [vmem:[%s7 + $0x60] sm:$0xff]
          %v6648 = vld [vmem:[%s7 + $0x68] sm:$0xff]
          %v6649 = vld [vmem:[%s7 + $0x70] sm:$0xff]
          %v6650 = vld [vmem:[%s7 + $0x78] sm:$0xff]
          %v6651 = vld [vmem:[%s7 + $0x80] sm:$0xff]
          %v6652 = vld [vmem:[%s7 + $0x88] sm:$0xff]
          %v6653 = vld [vmem:[%s7 + $0x90] sm:$0xff]
          %v6654 = vld [vmem:[%s7 + $0x98] sm:$0xff]
          %v6655 = vld [vmem:[%s7 + $0xa0] sm:$0xff]
          %v6656 = vld [vmem:[%s7 + $0xa8] sm:$0xff]
          %v6657 = vld [vmem:[%s7 + $0xb0] sm:$0xff]
          %v6658 = vld [vmem:[%s7 + $0xb8] sm:$0xff]
          %v6659 = vld [vmem:[%s7 + $0xc0] sm:$0xff]
          %v6660 = vld [vmem:[%s7 + $0xc8] sm:$0xff]
          %v6661 = vld [vmem:[%s7 + $0xd0] sm:$0xff]
          %v6662 = vld [vmem:[%s7 + $0xd8] sm:$0xff]
          %v6663 = vld [vmem:[%s7 + $0xe0] sm:$0xff]
          %v6664 = vld [vmem:[%s7 + $0xe8] sm:$0xff]
          %v6665 = vld [vmem:[%s7 + $0xf0] sm:$0xff]
          %v6666 = vld [vmem:[%s7 + $0xf8] sm:$0xff]
          %v6667 = vld [vmem:[%s8] sm:$0x1]
          %6668 = vmatprep.subr.mxu0 0.0
          %6669 = vmatpush1.msra.mxu0 %v6650
          %6670 = vmatprep.subr.mxu0 0.0
          %6671 = vmatpush1.msra.mxu0 %v6649
          %6672 = vmatprep.subr.mxu0 0.0
          %6673 = vmatpush1.msra.mxu0 %v6648
          %6674 = vmatprep.subr.mxu0 0.0
          %6675 = vmatpush1.msra.mxu0 %v6647
          %6676 = vmatprep.subr.mxu0 0.0
          %6677 = vmatpush1.msra.mxu0 %v6646
          %6678 = vmatprep.subr.mxu0 0.0
          %6679 = vmatpush1.msra.mxu0 %v6645
          %6680 = vmatprep.subr.mxu0 0.0
          %6681 = vmatpush1.msra.mxu0 %v6644
          %6682 = vmatprep.subr.mxu0 0.0
          %6683 = vmatpush1.msra.mxu0 %v6643
          %6684 = vmatprep.subr.mxu0 0.0
          %6685 = vmatpush1.msra.mxu0 %v6642
          %6686 = vmatprep.subr.mxu0 0.0
          %6687 = vmatpush1.msra.mxu0 %v6641
          %6688 = vmatprep.subr.mxu0 0.0
          %6689 = vmatpush1.msra.mxu0 %v6640
          %6690 = vmatprep.subr.mxu0 0.0
          %6691 = vmatpush1.msra.mxu0 %v6639
          %6692 = vmatprep.subr.mxu0 0.0
          %6693 = vmatpush1.msra.mxu0 %v6638
          %6694 = vmatprep.subr.mxu0 0.0
          %6695 = vmatpush1.msra.mxu0 %v6637
          %6696 = vmatprep.subr.mxu0 0.0
          %6697 = vmatpush1.msra.mxu0 %v6636
          %6698 = vmatprep.subr.mxu0 0.0
          %6699 = vmatpush1.msra.mxu0 %v6635
          %6700 = vmatprep.subr.mxu0 0.0
          %6701 = vmatpush2.msra.mxu0 %v6666
          %6702 = vmatprep.subr.mxu0 0.0
          %6703 = vmatpush2.msra.mxu0 %v6665
          %6704 = vmatprep.subr.mxu0 0.0
          %6705 = vmatpush2.msra.mxu0 %v6664
          %6706 = vmatprep.subr.mxu0 0.0
          %6707 = vmatpush2.msra.mxu0 %v6663
          %6708 = vmatprep.subr.mxu0 0.0
          %6709 = vmatpush2.msra.mxu0 %v6662
          %6710 = vmatprep.subr.mxu0 0.0
          %6711 = vmatpush2.msra.mxu0 %v6661
          %6712 = vmatprep.subr.mxu0 0.0
          %6713 = vmatpush2.msra.mxu0 %v6660
          %6714 = vmatprep.subr.mxu0 0.0
          %6715 = vmatpush2.msra.mxu0 %v6659
          %6716 = vmatprep.subr.mxu0 0.0
          %6717 = vmatpush2.msra.mxu0 %v6658
          %6718 = vmatprep.subr.mxu0 0.0
          %6719 = vmatpush2.msra.mxu0 %v6657
          %6720 = vmatprep.subr.mxu0 0.0
          %6721 = vmatpush2.msra.mxu0 %v6656
          %6722 = vmatprep.subr.mxu0 0.0
          %6723 = vmatpush2.msra.mxu0 %v6655
          %6724 = vmatprep.subr.mxu0 0.0
          %6725 = vmatpush2.msra.mxu0 %v6654
          %6726 = vmatprep.subr.mxu0 0.0
          %6727 = vmatpush2.msra.mxu0 %v6653
          %6728 = vmatprep.subr.mxu0 0.0
          %6729 = vmatpush2.msra.mxu0 %v6652
          %6730 = vmatprep.subr.mxu0 0.0
          %6731 = vmatpush2.msra.mxu0 %v6651
          %6732 = vmatprep.mubr.f32.mxu0 %v6634
          %6733 = vmatmul.mubr.f32.gmra.mxu0 %v6633
          %v6734 = vpop.f32.mrf.mxu0
          %v6735 = vadd.f32 %v6667, %v6734
          %v6736 = vpop.f32.mrf.mxu0
          %6737 = vdwg.mxu0
          %6738 = vst [vmem:[%s347] sm:$0x1] %v6735
        $region64: #{cable_attribute_forward.1} parent=55 // pred_fallthru
          _
        %s6739 = sand.u32 %s239, 1
        %s6740 = scalar_lea.sflag [#allocation4], %s6739
        %s6741 = sand.u32 %s239, 1
        %s6742 = scalar_lea.vmem [#allocation3], %s6741
        // Predicated region
        $region65: #{cable_attribute_forward.1} parent=55 // pred_check
          %p6743 = pneg %p249
        $region66: #{cable_attribute_forward.1} parent=55 // pred_check_branch
          %6745 = sbr.rel (%p6743) target = $region68
        $region67: #{cable_attribute_forward.1} parent=55 // pred_region
          %s6747 = ssub.s32 16, 16
          %6748 = vsyncadd %s6740, %s6747
          %s6749 = smul.addr %s27, 16
          %s6750 = scalar_lea.hbm %s9, %s6749
          %s6752 = sshll.u32 %s6742, 4
          %s6753 = int_to_ptr.vmem [resolvable:$true] %s6752
          %6755 = dma.vmem_to_hbm [thread:$0]  %s6753, 16, %s6750, %s6740
        $region68: #{cable_attribute_forward.1} parent=55 // pred_fallthru
          _
      $region56: #{cable_attribute_forward.1} parent=5 // pred_fallthru
        _
      %p6756 = scmp.le.s32.totalorder 2, %s18
      // Predicated region
      $region69: #{cable_attribute_forward.1} parent=5 // pred_check
        %p6757 = pneg %p6756
      $region70: #{cable_attribute_forward.1} parent=5 // pred_check_branch
        %6759 = sbr.rel (%p6757) target = $region72
      $region71: #{cable_attribute_forward.1} parent=5 // pred_region
        %s6760 = ssub.s32 %s18, 2
        // Predicated region
        $region73: #{cable_attribute_forward.1} parent=71 // pred_check
          %p6761 = pneg %p255
        $region74: #{cable_attribute_forward.1} parent=71 // pred_check_branch
          %6763 = sbr.rel (%p6761) target = $region76
        $region75: #{cable_attribute_forward.1} parent=71 // pred_region
          %s6764 = sand.u32 %s240, 1
          %s6765 = scalar_lea.sflag [#allocation4], %s6764
          %s6766 = sand.u32 %s240, 1
          %s6767 = scalar_lea.vmem [#allocation3], %s6766
          %6768 = dma.done %s6765, 16
        $region76: #{cable_attribute_forward.1} parent=71 // pred_fallthru
          _
      $region72: #{cable_attribute_forward.1} parent=5 // pred_fallthru
        _
    $region6: #{cable_attribute_forward.1} parent=1 // loop_footer
      %s22 = sadd.s32 1, %s18
    $region7: #{cable_attribute_forward.1} parent=1 // loop_footer_branch
      %17 = sbr.rel target = $region3
    $region8: #{cable_attribute_forward.1} parent=1 // loop_exit
      _
    %6769 = vsyncpa [#allocation4], 1
    %s6770 = scalar_lea.sflag [#allocation4], 1
    %6771 = vsyncpa %s6770, 1

</llo_original>
